<compile_context>
chip_gen: v7x
topology: tpu7x:2x2x1
jax: 0.10.0
libtpu: 0.0.40
codegen_flags: <defaults>
</compile_context>

<pallas_src>
import functools
import math

import jax
import jax.numpy as jnp
from jax.experimental import pallas as pl
from jax.experimental.pallas import tpu as pltpu


# ----------------------------- in-kernel helpers -----------------------------

def _l2_normalize(x):
    # F.normalize(p=2, dim=-1) with eps=1e-12:  x / max(||x||, 1e-12)
    ss = jnp.sum(x * x, axis=-1, keepdims=True)
    return x * jax.lax.rsqrt(jnp.maximum(ss, 1e-24))


def _layer_norm(x, gamma, beta):
    # PyTorch nn.LayerNorm: biased variance, eps=1e-5
    mu = jnp.mean(x, axis=-1, keepdims=True)
    var = jnp.mean((x - mu) ** 2, axis=-1, keepdims=True)
    return (x - mu) * jax.lax.rsqrt(var + 1e-5) * gamma + beta


def _mha(x_q, x_kv, w_qkv, b_qkv, w_o, b_o, mask, scale, n_heads, attn_ref):
    """Scaled-cosine multi-head attention on one batch element (all in VMEM).

    x_q: (Lq, D) f32; x_kv: (Lk, D) f32; w_qkv: (D, 3D) bf16; b_qkv: (1, 3D) f32
    w_o: (D, D) bf16; b_o: (1, D) f32; mask: (Lq, Lk) f32 (0 = masked)
    scale: (1, 1) f32 (ScaleUp parameter); attn_ref: optional (1, H, Lq, Lk) ref
    """
    D = x_q.shape[-1]
    Dh = D // n_heads

    q = jnp.dot(x_q.astype(jnp.bfloat16), w_qkv[:, :D],
                preferred_element_type=jnp.float32) + b_qkv[:, :D]
    kv = jnp.dot(x_kv.astype(jnp.bfloat16), w_qkv[:, D:],
                 preferred_element_type=jnp.float32) + b_qkv[:, D:]
    k, v = kv[:, :D], kv[:, D:]

    ctx_heads = []
    for h in range(n_heads):                      # static unroll (H is small)
        sl = slice(h * Dh, (h + 1) * Dh)
        qn = _l2_normalize(q[:, sl]) * scale      # fold ScaleUp into qn
        kn = _l2_normalize(k[:, sl])
        s = jax.lax.dot_general(                  # qn @ kn.T, no transpose op
            qn.astype(jnp.bfloat16), kn.astype(jnp.bfloat16),
            (((1,), (1,)), ((), ())), preferred_element_type=jnp.float32)
        s = jnp.where(mask == 0.0, -1e18, s)      # masked_fill(mask==0, -1e18)
        s = s - jnp.max(s, axis=-1, keepdims=True)
        p = jnp.exp(s)
        attn = p * pl.reciprocal(jnp.sum(p, axis=-1, keepdims=True), approx=True)
        if attn_ref is not None:
            attn_ref[0, h] = attn
        ctx_heads.append(
            jnp.dot(attn.astype(jnp.bfloat16), v[:, sl].astype(jnp.bfloat16),
                    preferred_element_type=jnp.float32))

    ctx = jnp.concatenate(ctx_heads, axis=-1)     # (Lq, D)
    return jnp.dot(ctx.astype(jnp.bfloat16), w_o,
                   preferred_element_type=jnp.float32) + b_o


# ----------------------------- fused decoder-block kernel --------------------

def _decoder_block_kernel(dest_ref, src_ref, dmask_ref, smask_ref, scales_ref,
                          wqkv_s_ref, bqkv_s_ref, wo_s_ref, bo_s_ref,
                          wqkv_x_ref, bqkv_x_ref, wo_x_ref, bo_x_ref,
                          ln_ref, win_ref, bin_ref, wou_ref, bou_ref,
                          out_ref, *attn_refs, n_heads):
    attn_ref = attn_refs[0] if attn_refs else None

    x = dest_ref[0]                    # (Ld, D)
    src = src_ref[0]                   # (Ls, D)
    dmask = dmask_ref[0]               # (Ld, Ld)
    smask = smask_ref[0]               # (Ld, Ls)
    ln = ln_ref[...]                   # (6, D): g1,b1,g2,b2,g3,b3
    scale_s = scales_ref[0:1, 0:1]     # (1,1)
    scale_x = scales_ref[0:1, 1:2]     # (1,1)

    # masked self-attention + residual + LayerNorm   (dropout = identity)
    sa = _mha(x, x, wqkv_s_ref[...], bqkv_s_ref[...], wo_s_ref[...],
              bo_s_ref[...], dmask, scale_s, n_heads, None)
    x1 = _layer_norm(sa + x, ln[0:1], ln[1:2])

    # cross-attention + residual + LayerNorm (attn weights emitted if requested)
    ca = _mha(x1, src, wqkv_x_ref[...], bqkv_x_ref[...], wo_x_ref[...],
              bo_x_ref[...], smask, scale_x, n_heads, attn_ref)
    x2 = _layer_norm(ca + x1, ln[2:3], ln[3:4])

    # position-wise feed-forward + residual + LayerNorm
    h = jnp.maximum(
        jnp.dot(x2.astype(jnp.bfloat16), win_ref[...],
                preferred_element_type=jnp.float32) + bin_ref[...], 0.0)
    f = jnp.dot(h.astype(jnp.bfloat16), wou_ref[...],
                preferred_element_type=jnp.float32) + bou_ref[...]
    out_ref[0] = _layer_norm(f + x2, ln[4:5], ln[5:6])


def decoder_block(p, dest, src_enc, dmask3, smask3, n_heads, want_attn):
    B, Ld, D = dest.shape
    Ls = src_enc.shape[1]
    H = n_heads
    Hid = p["w_in"].shape[1]
    bf16 = jnp.bfloat16

    sa, ca = p["self_attn"], p["cross_attn"]
    scales = jnp.stack([sa["scale"], ca["scale"]]).reshape(1, 2).astype(jnp.float32)
    ln = jnp.stack([p["ln1_g"], p["ln1_b"], p["ln2_g"], p["ln2_b"],
                    p["ln3_g"], p["ln3_b"]])                      # (6, D)

    const = lambda b: (0, 0)
    in_specs = [
        pl.BlockSpec((1, Ld, D), lambda b: (b, 0, 0)),      # dest
        pl.BlockSpec((1, Ls, D), lambda b: (b, 0, 0)),      # src_encoded
        pl.BlockSpec((1, Ld, Ld), lambda b: (b, 0, 0)),     # dest mask
        pl.BlockSpec((1, Ld, Ls), lambda b: (b, 0, 0)),     # src mask
        pl.BlockSpec((1, 2), const),                        # ScaleUp scales
        pl.BlockSpec((D, 3 * D), const),                    # self  W_qkv
        pl.BlockSpec((1, 3 * D), const),                    # self  b_qkv
        pl.BlockSpec((D, D), const),                        # self  W_o
        pl.BlockSpec((1, D), const),                        # self  b_o
        pl.BlockSpec((D, 3 * D), const),                    # cross W_qkv
        pl.BlockSpec((1, 3 * D), const),                    # cross b_qkv
        pl.BlockSpec((D, D), const),                        # cross W_o
        pl.BlockSpec((1, D), const),                        # cross b_o
        pl.BlockSpec((6, D), const),                        # LayerNorm params
        pl.BlockSpec((D, Hid), const),                      # FFN W_in
        pl.BlockSpec((1, Hid), const),                      # FFN b_in
        pl.BlockSpec((Hid, D), const),                      # FFN W_out
        pl.BlockSpec((1, D), const),                        # FFN b_out
    ]

    out_spec_x = pl.BlockSpec((1, Ld, D), lambda b: (b, 0, 0))
    if want_attn:
        out_shape = (jax.ShapeDtypeStruct((B, Ld, D), jnp.float32),
                     jax.ShapeDtypeStruct((B, H, Ld, Ls), jnp.float32))
        out_specs = (out_spec_x,
                     pl.BlockSpec((1, H, Ld, Ls), lambda b: (b, 0, 0, 0)))
    else:
        out_shape = jax.ShapeDtypeStruct((B, Ld, D), jnp.float32)
        out_specs = out_spec_x

    result = pl.pallas_call(
        functools.partial(_decoder_block_kernel, n_heads=H),
        out_shape=out_shape,
        grid=(B,),
        in_specs=in_specs,
        out_specs=out_specs,
        compiler_params=pltpu.CompilerParams(dimension_semantics=("parallel",)),
    )(dest, src_enc, dmask3, smask3, scales,
      sa["w_qkv"].astype(bf16), sa["b_qkv"].reshape(1, 3 * D),
      sa["w_o"].astype(bf16), sa["b_o"].reshape(1, D),
      ca["w_qkv"].astype(bf16), ca["b_qkv"].reshape(1, 3 * D),
      ca["w_o"].astype(bf16), ca["b_o"].reshape(1, D),
      ln,
      p["w_in"].astype(bf16), p["b_in"].reshape(1, Hid),
      p["w_ou"].astype(bf16), p["b_ou"].reshape(1, D))

    if want_attn:
        return result[0], result[1]
    return result, None


# ----------------------------- final vocab projection ------------------------

def _proj_kernel(x_ref, w_ref, b_ref, o_ref):
    o_ref[0] = jnp.dot(x_ref[0].astype(jnp.bfloat16), w_ref[...],
                       preferred_element_type=jnp.float32) + b_ref[...]


def final_projection(x, w, b):
    B, Ld, D = x.shape
    V = w.shape[1]
    return pl.pallas_call(
        _proj_kernel,
        out_shape=jax.ShapeDtypeStruct((B, Ld, V), jnp.float32),
        grid=(B,),
        in_specs=[
            pl.BlockSpec((1, Ld, D), lambda b: (b, 0, 0)),
            pl.BlockSpec((D, V), lambda b: (0, 0)),
            pl.BlockSpec((1, V), lambda b: (0, 0)),
        ],
        out_specs=pl.BlockSpec((1, Ld, V), lambda b: (b, 0, 0)),
        compiler_params=pltpu.CompilerParams(dimension_semantics=("parallel",)),
    )(x, w.astype(jnp.bfloat16), b.reshape(1, V))


# ----------------------------- model glue (plain JAX) ------------------------

def scaling_factor(sequence_threshold):
    return math.log2(sequence_threshold ** 2 - sequence_threshold)


def positional_encoding(batch, seq_len, d_model):
    positions = jnp.arange(seq_len, dtype=jnp.float32)[:, None]
    indexes = jnp.arange(d_model)[None, :]
    angle_rates = jnp.power(10000.0, (2 * (indexes // 2)).astype(jnp.float32) / d_model)
    angles = positions / angle_rates
    pe = jnp.where(indexes % 2 == 0, jnp.sin(angles), jnp.cos(angles))
    return jnp.broadcast_to(pe[None], (batch, seq_len, d_model))


def decoder_forward(params, dest_sequences, src_encoded, dest_mask, src_mask, n_heads):
    B, Ld = dest_sequences.shape
    D = params["embedding"].shape[1]
    Ls = src_encoded.shape[1]

    token_emb = jnp.take(params["embedding"], dest_sequences, axis=0)
    pos_enc = positional_encoding(B, Ld, D)
    x = token_emb + pos_enc                      # dropout = identity (eval)

    # broadcast masks once (per-batch, per-position; NOT per-head)
    dmask3 = jnp.broadcast_to(dest_mask, (B, 1, Ld, Ld))[:, 0].astype(jnp.float32)
    smask3 = jnp.broadcast_to(src_mask, (B, 1, Ld, Ls))[:, 0].astype(jnp.float32)

    n_layers = len(params["layers"])
    attn = None
    for i, layer_p in enumerate(params["layers"]):
        x, a = decoder_block(layer_p, x, src_encoded, dmask3, smask3, n_heads,
                             want_attn=(i == n_layers - 1))
        if a is not None:
            attn = a

    logits = final_projection(x, params["w_fc"], params["b_fc"])
    return logits, attn


# ----------------------------- parameter init --------------------------------

def init_mha(key, d_model, scale):
    ks = jax.random.split(key, 2)
    std = 0.02
    return {
        "w_qkv": std * jax.random.normal(ks[0], (d_model, 3 * d_model), jnp.float32),
        "b_qkv": jnp.zeros((3 * d_model,), jnp.float32),
        "w_o": std * jax.random.normal(ks[1], (d_model, d_model), jnp.float32),
        "b_o": jnp.zeros((d_model,), jnp.float32),
        "scale": jnp.float32(scale),   # ScaleUp parameter (traced, not static)
    }


def init_block(key, d_model, hidden_size, scale):
    ks = jax.random.split(key, 4)
    std = 0.02
    return {
        "self_attn": init_mha(ks[0], d_model, scale),
        "cross_attn": init_mha(ks[1], d_model, scale),
        "ln1_g": jnp.ones((d_model,), jnp.float32),
        "ln1_b": jnp.zeros((d_model,), jnp.float32),
        "ln2_g": jnp.ones((d_model,), jnp.float32),
        "ln2_b": jnp.zeros((d_model,), jnp.float32),
        "ln3_g": jnp.ones((d_model,), jnp.float32),
        "ln3_b": jnp.zeros((d_model,), jnp.float32),
        "w_in": std * jax.random.normal(ks[2], (d_model, hidden_size), jnp.float32),
        "b_in": jnp.zeros((hidden_size,), jnp.float32),
        "w_ou": std * jax.random.normal(ks[3], (hidden_size, d_model), jnp.float32),
        "b_ou": jnp.zeros((d_model,), jnp.float32),
    }


def init_decoder(key, vocab_size, d_model, hidden_size, n_layers, scale):
    ks = jax.random.split(key, n_layers + 2)
    std = 0.02
    return {
        "embedding": std * jax.random.normal(ks[0], (vocab_size, d_model), jnp.float32),
        "layers": [init_block(ks[1 + i], d_model, hidden_size, scale)
                   for i in range(n_layers)],
        "w_fc": std * jax.random.normal(ks[-1], (d_model, vocab_size), jnp.float32),
        "b_fc": jnp.zeros((vocab_size,), jnp.float32),
    }


# ----------------------------- main -------------------------------------------

if __name__ == "__main__":
    vocab_size = 50
    max_len = 50
    d_model = 32
    n_heads = 4
    hidden_size = 64
    n_layers = 2
    batch = 2
    dest_len = 8
    src_len = 10

    # TODO(synk): threshold_wordcount is corpus-derived (97.5th pct of src
    # lengths); replaced by the deterministic constant 50.0 (== max_len).
    scale = scaling_factor(50.0)

    key = jax.random.PRNGKey(0)
    k_par, k_seq, k_src = jax.random.split(key, 3)

    params = init_decoder(k_par, vocab_size, d_model, hidden_size, n_layers, scale)

    dest_sequences = jax.random.randint(k_seq, (batch, dest_len), 0, vocab_size)
    src_encoded = jax.random.normal(k_src, (batch, src_len, d_model), jnp.float32)

    # causal self-attention mask [B, 1, Ld, Ld]
    causal = jnp.tril(jnp.ones((dest_len, dest_len), jnp.float32))
    dest_mask = jnp.broadcast_to(causal[None, None], (batch, 1, dest_len, dest_len))
    # source padding mask [B, 1, 1, Ls] (batch 1 has last 2 positions padded)
    src_valid = jnp.array([[1.0] * src_len,
                           [1.0] * (src_len - 2) + [0.0] * 2], jnp.float32)
    src_mask = src_valid[:, None, None, :]

    fwd = jax.jit(functools.partial(decoder_forward, n_heads=n_heads))
    logits, attention_weights = fwd(params, dest_sequences, src_encoded,
                                    dest_mask, src_mask)
    jax.block_until_ready((logits, attention_weights))

    assert logits.shape == (batch, dest_len, vocab_size)
    assert attention_weights.shape == (batch, n_heads, dest_len, src_len)
    print("KERNEL_OK")
</pallas_src>

<mosaic_0001>
module attributes {stable_mosaic.version = 11 : i64} {
  func.func @_proj_kernel(%arg0: i32, %arg1: memref<1x8x32xf32, #tpu.memory_space<vmem>>, %arg2: memref<32x50xbf16, #tpu.memory_space<vmem>>, %arg3: memref<1x50xf32, #tpu.memory_space<vmem>>, %arg4: memref<1x8x50xf32, #tpu.memory_space<vmem>>) attributes {dimension_semantics = [#tpu.dimension_semantics<parallel>], iteration_bounds = array<i64: 2>, scalar_prefetch = 0 : i64, scratch_operands = 0 : i64, tpu.core_type = #tpu.core_type<tc>, window_params = [{transform_indices = @transform_0, window_bounds = array<i64: 1, 8, 32>}, {pipeline_mode = #tpu.pipeline_mode<synchronous>, transform_indices = @transform_1, window_bounds = array<i64: 32, 50>}, {pipeline_mode = #tpu.pipeline_mode<synchronous>, transform_indices = @transform_2, window_bounds = array<i64: 1, 50>}, {transform_indices = @transform_3, window_bounds = array<i64: 1, 8, 50>}]} {
    %c0 = arith.constant 0 : index
    %c0_0 = arith.constant 0 : index
    %c0_1 = arith.constant 0 : index
    %0 = vector.load %arg1[%c0, %c0_0, %c0_1] : memref<1x8x32xf32, #tpu.memory_space<vmem>>, vector<1x8x32xf32>
    %1 = vector.shape_cast %0 : vector<1x8x32xf32> to vector<8x32xf32>
    %2 = arith.truncf %1 : vector<8x32xf32> to vector<8x32xbf16>
    %c0_2 = arith.constant 0 : index
    %c0_3 = arith.constant 0 : index
    %3 = vector.load %arg2[%c0_2, %c0_3] : memref<32x50xbf16, #tpu.memory_space<vmem>>, vector<32x50xbf16>
    %cst = arith.constant dense<0.000000e+00> : vector<8x50xf32>
    %4 = tpu.matmul %2, %3, %cst {dimension_numbers = #tpu.dot_dimension_numbers<[1], [0], [0], [1], [0, 0, 1, 1], [], []>} : vector<8x32xbf16>, vector<32x50xbf16>, vector<8x50xf32> -> vector<8x50xf32>
    %c0_4 = arith.constant 0 : index
    %c0_5 = arith.constant 0 : index
    %5 = vector.load %arg3[%c0_4, %c0_5] : memref<1x50xf32, #tpu.memory_space<vmem>>, vector<1x50xf32>
    %6 = vector.broadcast %5 : vector<1x50xf32> to vector<8x50xf32>
    %7 = arith.addf %4, %6 : vector<8x50xf32>
    %c0_6 = arith.constant 0 : index
    %c0_7 = arith.constant 0 : index
    %c0_8 = arith.constant 0 : index
    %8 = vector.load %arg4[%c0_6, %c0_7, %c0_8] : memref<1x8x50xf32, #tpu.memory_space<vmem>>, vector<1x8x50xf32>
    %9 = vector.shape_cast %8 : vector<1x8x50xf32> to vector<8x50xf32>
    %10 = vector.shape_cast %7 : vector<8x50xf32> to vector<1x8x50xf32>
    tpu.vector_store %arg4[%c0_6, %c0_7, %c0_8], %10 {strides = array<i32>} : memref<1x8x50xf32, #tpu.memory_space<vmem>>, vector<1x8x50xf32>,
    return
  }
  func.func @transform_0(%arg0: i32) -> (i32, i32, i32) {
    %c0_i32 = arith.constant 0 : i32
    %c0_i32_0 = arith.constant 0 : i32
    %c0_i32_1 = arith.constant 0 : i32
    return %arg0, %c0_i32, %c0_i32_0 : i32, i32, i32
  }
  func.func @transform_1(%arg0: i32) -> (i32, i32) {
    %c0_i32 = arith.constant 0 : i32
    %c0_i32_0 = arith.constant 0 : i32
    %c0_i32_1 = arith.constant 0 : i32
    return %c0_i32, %c0_i32_0 : i32, i32
  }
  func.func @transform_2(%arg0: i32) -> (i32, i32) {
    %c0_i32 = arith.constant 0 : i32
    %c0_i32_0 = arith.constant 0 : i32
    %c0_i32_1 = arith.constant 0 : i32
    return %c0_i32, %c0_i32_0 : i32, i32
  }
  func.func @transform_3(%arg0: i32) -> (i32, i32, i32) {
    %c0_i32 = arith.constant 0 : i32
    %c0_i32_0 = arith.constant 0 : i32
    %c0_i32_1 = arith.constant 0 : i32
    return %arg0, %c0_i32, %c0_i32_0 : i32, i32, i32
  }
}

module attributes {stable_mosaic.version = 11 : i64} {
  func.func @_decoder_block_kernel(%arg0: i32, %arg1: memref<1x8x32xf32, #tpu.memory_space<vmem>>, %arg2: memref<1x10x32xf32, #tpu.memory_space<vmem>>, %arg3: memref<1x8x8xf32, #tpu.memory_space<vmem>>, %arg4: memref<1x8x10xf32, #tpu.memory_space<vmem>>, %arg5: memref<1x2xf32, #tpu.memory_space<vmem>>, %arg6: memref<32x96xbf16, #tpu.memory_space<vmem>>, %arg7: memref<1x96xf32, #tpu.memory_space<vmem>>, %arg8: memref<32x32xbf16, #tpu.memory_space<vmem>>, %arg9: memref<1x32xf32, #tpu.memory_space<vmem>>, %arg10: memref<32x96xbf16, #tpu.memory_space<vmem>>, %arg11: memref<1x96xf32, #tpu.memory_space<vmem>>, %arg12: memref<32x32xbf16, #tpu.memory_space<vmem>>, %arg13: memref<1x32xf32, #tpu.memory_space<vmem>>, %arg14: memref<6x32xf32, #tpu.memory_space<vmem>>, %arg15: memref<32x64xbf16, #tpu.memory_space<vmem>>, %arg16: memref<1x64xf32, #tpu.memory_space<vmem>>, %arg17: memref<64x32xbf16, #tpu.memory_space<vmem>>, %arg18: memref<1x32xf32, #tpu.memory_space<vmem>>, %arg19: memref<1x8x32xf32, #tpu.memory_space<vmem>>) attributes {dimension_semantics = [#tpu.dimension_semantics<parallel>], iteration_bounds = array<i64: 2>, scalar_prefetch = 0 : i64, scratch_operands = 0 : i64, tpu.core_type = #tpu.core_type<tc>, window_params = [{transform_indices = @transform_0, window_bounds = array<i64: 1, 8, 32>}, {transform_indices = @transform_1, window_bounds = array<i64: 1, 10, 32>}, {transform_indices = @transform_2, window_bounds = array<i64: 1, 8, 8>}, {transform_indices = @transform_3, window_bounds = array<i64: 1, 8, 10>}, {pipeline_mode = #tpu.pipeline_mode<synchronous>, transform_indices = @transform_4, window_bounds = array<i64: 1, 2>}, {pipeline_mode = #tpu.pipeline_mode<synchronous>, transform_indices = @transform_5, window_bounds = array<i64: 32, 96>}, {pipeline_mode = #tpu.pipeline_mode<synchronous>, transform_indices = @transform_6, window_bounds = array<i64: 1, 96>}, {pipeline_mode = #tpu.pipeline_mode<synchronous>, transform_indices = @transform_7, window_bounds = array<i64: 32, 32>}, {pipeline_mode = #tpu.pipeline_mode<synchronous>, transform_indices = @transform_8, window_bounds = array<i64: 1, 32>}, {pipeline_mode = #tpu.pipeline_mode<synchronous>, transform_indices = @transform_9, window_bounds = array<i64: 32, 96>}, {pipeline_mode = #tpu.pipeline_mode<synchronous>, transform_indices = @transform_10, window_bounds = array<i64: 1, 96>}, {pipeline_mode = #tpu.pipeline_mode<synchronous>, transform_indices = @transform_11, window_bounds = array<i64: 32, 32>}, {pipeline_mode = #tpu.pipeline_mode<synchronous>, transform_indices = @transform_12, window_bounds = array<i64: 1, 32>}, {pipeline_mode = #tpu.pipeline_mode<synchronous>, transform_indices = @transform_13, window_bounds = array<i64: 6, 32>}, {pipeline_mode = #tpu.pipeline_mode<synchronous>, transform_indices = @transform_14, window_bounds = array<i64: 32, 64>}, {pipeline_mode = #tpu.pipeline_mode<synchronous>, transform_indices = @transform_15, window_bounds = array<i64: 1, 64>}, {pipeline_mode = #tpu.pipeline_mode<synchronous>, transform_indices = @transform_16, window_bounds = array<i64: 64, 32>}, {pipeline_mode = #tpu.pipeline_mode<synchronous>, transform_indices = @transform_17, window_bounds = array<i64: 1, 32>}, {transform_indices = @transform_18, window_bounds = array<i64: 1, 8, 32>}]} {
    %c0 = arith.constant 0 : index
    %c0_0 = arith.constant 0 : index
    %c0_1 = arith.constant 0 : index
    %0 = vector.load %arg1[%c0, %c0_0, %c0_1] : memref<1x8x32xf32, #tpu.memory_space<vmem>>, vector<1x8x32xf32>
    %1 = vector.shape_cast %0 : vector<1x8x32xf32> to vector<8x32xf32>
    %c0_2 = arith.constant 0 : index
    %c0_3 = arith.constant 0 : index
    %c0_4 = arith.constant 0 : index
    %2 = vector.load %arg2[%c0_2, %c0_3, %c0_4] : memref<1x10x32xf32, #tpu.memory_space<vmem>>, vector<1x10x32xf32>
    %3 = vector.shape_cast %2 : vector<1x10x32xf32> to vector<10x32xf32>
    %c0_5 = arith.constant 0 : index
    %c0_6 = arith.constant 0 : index
    %c0_7 = arith.constant 0 : index
    %4 = vector.load %arg3[%c0_5, %c0_6, %c0_7] : memref<1x8x8xf32, #tpu.memory_space<vmem>>, vector<1x8x8xf32>
    %5 = vector.shape_cast %4 : vector<1x8x8xf32> to vector<8x8xf32>
    %c0_8 = arith.constant 0 : index
    %c0_9 = arith.constant 0 : index
    %c0_10 = arith.constant 0 : index
    %6 = vector.load %arg4[%c0_8, %c0_9, %c0_10] : memref<1x8x10xf32, #tpu.memory_space<vmem>>, vector<1x8x10xf32>
    %7 = vector.shape_cast %6 : vector<1x8x10xf32> to vector<8x10xf32>
    %c0_11 = arith.constant 0 : index
    %c0_12 = arith.constant 0 : index
    %8 = vector.load %arg14[%c0_11, %c0_12] : memref<6x32xf32, #tpu.memory_space<vmem>>, vector<6x32xf32>
    %c0_13 = arith.constant 0 : index
    %c0_14 = arith.constant 0 : index
    %9 = vector.load %arg5[%c0_13, %c0_14] : memref<1x2xf32, #tpu.memory_space<vmem>>, vector<1x1xf32>
    %c0_15 = arith.constant 0 : index
    %c1 = arith.constant 1 : index
    %10 = vector.load %arg5[%c0_15, %c1] : memref<1x2xf32, #tpu.memory_space<vmem>>, vector<1x1xf32>
    %c0_16 = arith.constant 0 : index
    %c0_17 = arith.constant 0 : index
    %11 = vector.load %arg6[%c0_16, %c0_17] : memref<32x96xbf16, #tpu.memory_space<vmem>>, vector<32x96xbf16>
    %c0_18 = arith.constant 0 : index
    %c0_19 = arith.constant 0 : index
    %12 = vector.load %arg7[%c0_18, %c0_19] : memref<1x96xf32, #tpu.memory_space<vmem>>, vector<1x96xf32>
    %c0_20 = arith.constant 0 : index
    %c0_21 = arith.constant 0 : index
    %13 = vector.load %arg8[%c0_20, %c0_21] : memref<32x32xbf16, #tpu.memory_space<vmem>>, vector<32x32xbf16>
    %c0_22 = arith.constant 0 : index
    %c0_23 = arith.constant 0 : index
    %14 = vector.load %arg9[%c0_22, %c0_23] : memref<1x32xf32, #tpu.memory_space<vmem>>, vector<1x32xf32>
    %15 = arith.truncf %1 : vector<8x32xf32> to vector<8x32xbf16>
    %16 = vector.extract_strided_slice %11 {offsets = [0, 0], sizes = [32, 32], strides = [1, 1]} : vector<32x96xbf16> to vector<32x32xbf16>
    %cst = arith.constant dense<0.000000e+00> : vector<8x32xf32>
    %17 = tpu.matmul %15, %16, %cst {dimension_numbers = #tpu.dot_dimension_numbers<[1], [0], [0], [1], [0, 0, 1, 1], [], []>} : vector<8x32xbf16>, vector<32x32xbf16>, vector<8x32xf32> -> vector<8x32xf32>
    %18 = vector.extract_strided_slice %12 {offsets = [0, 0], sizes = [1, 32], strides = [1, 1]} : vector<1x96xf32> to vector<1x32xf32>
    %19 = vector.broadcast %18 : vector<1x32xf32> to vector<8x32xf32>
    %20 = arith.addf %17, %19 : vector<8x32xf32>
    %21 = arith.truncf %1 : vector<8x32xf32> to vector<8x32xbf16>
    %22 = vector.extract_strided_slice %11 {offsets = [0, 32], sizes = [32, 64], strides = [1, 1]} : vector<32x96xbf16> to vector<32x64xbf16>
    %cst_24 = arith.constant dense<0.000000e+00> : vector<8x64xf32>
    %23 = tpu.matmul %21, %22, %cst_24 {dimension_numbers = #tpu.dot_dimension_numbers<[1], [0], [0], [1], [0, 0, 1, 1], [], []>} : vector<8x32xbf16>, vector<32x64xbf16>, vector<8x64xf32> -> vector<8x64xf32>
    %24 = vector.extract_strided_slice %12 {offsets = [0, 32], sizes = [1, 64], strides = [1, 1]} : vector<1x96xf32> to vector<1x64xf32>
    %25 = vector.broadcast %24 : vector<1x64xf32> to vector<8x64xf32>
    %26 = arith.addf %23, %25 : vector<8x64xf32>
    %27 = vector.extract_strided_slice %26 {offsets = [0, 0], sizes = [8, 32], strides = [1, 1]} : vector<8x64xf32> to vector<8x32xf32>
    %28 = vector.extract_strided_slice %26 {offsets = [0, 32], sizes = [8, 32], strides = [1, 1]} : vector<8x64xf32> to vector<8x32xf32>
    %29 = vector.extract_strided_slice %20 {offsets = [0, 0], sizes = [8, 8], strides = [1, 1]} : vector<8x32xf32> to vector<8x8xf32>
    %30 = arith.mulf %29, %29 : vector<8x8xf32>
    %cst_25 = arith.constant dense<0.000000e+00> : vector<8xf32>
    %31 = vector.multi_reduction <add>, %30, %cst_25 [1] : vector<8x8xf32> to vector<8xf32>
    %32 = vector.shape_cast %31 : vector<8xf32> to vector<8x1xf32>
    %cst_26 = arith.constant 1.000000e-24 : f32
    %33 = vector.broadcast %cst_26 : f32 to vector<8x1xf32>
    %34 = arith.maximumf %32, %33 : vector<8x1xf32>
    %35 = math.rsqrt %34 : vector<8x1xf32>
    %36 = vector.broadcast %35 : vector<8x1xf32> to vector<8x8xf32>
    %37 = arith.mulf %29, %36 : vector<8x8xf32>
    %38 = vector.broadcast %9 : vector<1x1xf32> to vector<8x8xf32>
    %39 = arith.mulf %37, %38 : vector<8x8xf32>
    %40 = vector.extract_strided_slice %27 {offsets = [0, 0], sizes = [8, 8], strides = [1, 1]} : vector<8x32xf32> to vector<8x8xf32>
    %41 = arith.mulf %40, %40 : vector<8x8xf32>
    %cst_27 = arith.constant dense<0.000000e+00> : vector<8xf32>
    %42 = vector.multi_reduction <add>, %41, %cst_27 [1] : vector<8x8xf32> to vector<8xf32>
    %43 = vector.shape_cast %42 : vector<8xf32> to vector<8x1xf32>
    %cst_28 = arith.constant 1.000000e-24 : f32
    %44 = vector.broadcast %cst_28 : f32 to vector<8x1xf32>
    %45 = arith.maximumf %43, %44 : vector<8x1xf32>
    %46 = math.rsqrt %45 : vector<8x1xf32>
    %47 = vector.broadcast %46 : vector<8x1xf32> to vector<8x8xf32>
    %48 = arith.mulf %40, %47 : vector<8x8xf32>
    %49 = arith.truncf %39 : vector<8x8xf32> to vector<8x8xbf16>
    %50 = arith.truncf %48 : vector<8x8xf32> to vector<8x8xbf16>
    %cst_29 = arith.constant dense<0.000000e+00> : vector<8x8xf32>
    %51 = tpu.matmul %49, %50, %cst_29 {dimension_numbers = #tpu.dot_dimension_numbers<[1], [1], [0], [0], [0, 0, 1, 0], [], []>} : vector<8x8xbf16>, vector<8x8xbf16>, vector<8x8xf32> -> vector<8x8xf32>
    %cst_30 = arith.constant 0.000000e+00 : f32
    %52 = vector.broadcast %cst_30 : f32 to vector<8x8xf32>
    %53 = arith.cmpf oeq, %5, %52 : vector<8x8xf32>
    %cst_31 = arith.constant -9.99999984E+17 : f32
    %54 = vector.broadcast %cst_31 : f32 to vector<8x8xf32>
    %55 = arith.select %53, %54, %51 : vector<8x8xi1>, vector<8x8xf32>
    %cst_32 = arith.constant dense<0xFF800000> : vector<8xf32>
    %56 = vector.multi_reduction <maximumf>, %55, %cst_32 [1] : vector<8x8xf32> to vector<8xf32>
    %57 = vector.shape_cast %56 : vector<8xf32> to vector<8x1xf32>
    %58 = vector.broadcast %57 : vector<8x1xf32> to vector<8x8xf32>
    %59 = arith.subf %55, %58 : vector<8x8xf32>
    %60 = math.exp %59 : vector<8x8xf32>
    %cst_33 = arith.constant dense<0.000000e+00> : vector<8xf32>
    %61 = vector.multi_reduction <add>, %60, %cst_33 [1] : vector<8x8xf32> to vector<8xf32>
    %62 = vector.shape_cast %61 : vector<8xf32> to vector<8x1xf32>
    %63 = tpu.reciprocal %62 {approx = true} : vector<8x1xf32> -> vector<8x1xf32>
    %64 = vector.broadcast %63 : vector<8x1xf32> to vector<8x8xf32>
    %65 = arith.mulf %60, %64 : vector<8x8xf32>
    %66 = arith.truncf %65 : vector<8x8xf32> to vector<8x8xbf16>
    %67 = vector.extract_strided_slice %28 {offsets = [0, 0], sizes = [8, 8], strides = [1, 1]} : vector<8x32xf32> to vector<8x8xf32>
    %68 = arith.truncf %67 : vector<8x8xf32> to vector<8x8xbf16>
    %cst_34 = arith.constant dense<0.000000e+00> : vector<8x8xf32>
    %69 = tpu.matmul %66, %68, %cst_34 {dimension_numbers = #tpu.dot_dimension_numbers<[1], [0], [0], [1], [0, 0, 1, 1], [], []>} : vector<8x8xbf16>, vector<8x8xbf16>, vector<8x8xf32> -> vector<8x8xf32>
    %70 = vector.extract_strided_slice %20 {offsets = [0, 8], sizes = [8, 8], strides = [1, 1]} : vector<8x32xf32> to vector<8x8xf32>
    %71 = arith.mulf %70, %70 : vector<8x8xf32>
    %cst_35 = arith.constant dense<0.000000e+00> : vector<8xf32>
    %72 = vector.multi_reduction <add>, %71, %cst_35 [1] : vector<8x8xf32> to vector<8xf32>
    %73 = vector.shape_cast %72 : vector<8xf32> to vector<8x1xf32>
    %cst_36 = arith.constant 1.000000e-24 : f32
    %74 = vector.broadcast %cst_36 : f32 to vector<8x1xf32>
    %75 = arith.maximumf %73, %74 : vector<8x1xf32>
    %76 = math.rsqrt %75 : vector<8x1xf32>
    %77 = vector.broadcast %76 : vector<8x1xf32> to vector<8x8xf32>
    %78 = arith.mulf %70, %77 : vector<8x8xf32>
    %79 = vector.broadcast %9 : vector<1x1xf32> to vector<8x8xf32>
    %80 = arith.mulf %78, %79 : vector<8x8xf32>
    %81 = vector.extract_strided_slice %27 {offsets = [0, 8], sizes = [8, 8], strides = [1, 1]} : vector<8x32xf32> to vector<8x8xf32>
    %82 = arith.mulf %81, %81 : vector<8x8xf32>
    %cst_37 = arith.constant dense<0.000000e+00> : vector<8xf32>
    %83 = vector.multi_reduction <add>, %82, %cst_37 [1] : vector<8x8xf32> to vector<8xf32>
    %84 = vector.shape_cast %83 : vector<8xf32> to vector<8x1xf32>
    %cst_38 = arith.constant 1.000000e-24 : f32
    %85 = vector.broadcast %cst_38 : f32 to vector<8x1xf32>
    %86 = arith.maximumf %84, %85 : vector<8x1xf32>
    %87 = math.rsqrt %86 : vector<8x1xf32>
    %88 = vector.broadcast %87 : vector<8x1xf32> to vector<8x8xf32>
    %89 = arith.mulf %81, %88 : vector<8x8xf32>
    %90 = arith.truncf %80 : vector<8x8xf32> to vector<8x8xbf16>
    %91 = arith.truncf %89 : vector<8x8xf32> to vector<8x8xbf16>
    %cst_39 = arith.constant dense<0.000000e+00> : vector<8x8xf32>
    %92 = tpu.matmul %90, %91, %cst_39 {dimension_numbers = #tpu.dot_dimension_numbers<[1], [1], [0], [0], [0, 0, 1, 0], [], []>} : vector<8x8xbf16>, vector<8x8xbf16>, vector<8x8xf32> -> vector<8x8xf32>
    %cst_40 = arith.constant 0.000000e+00 : f32
    %93 = vector.broadcast %cst_40 : f32 to vector<8x8xf32>
    %94 = arith.cmpf oeq, %5, %93 : vector<8x8xf32>
    %cst_41 = arith.constant -9.99999984E+17 : f32
    %95 = vector.broadcast %cst_41 : f32 to vector<8x8xf32>
    %96 = arith.select %94, %95, %92 : vector<8x8xi1>, vector<8x8xf32>
    %cst_42 = arith.constant dense<0xFF800000> : vector<8xf32>
    %97 = vector.multi_reduction <maximumf>, %96, %cst_42 [1] : vector<8x8xf32> to vector<8xf32>
    %98 = vector.shape_cast %97 : vector<8xf32> to vector<8x1xf32>
    %99 = vector.broadcast %98 : vector<8x1xf32> to vector<8x8xf32>
    %100 = arith.subf %96, %99 : vector<8x8xf32>
    %101 = math.exp %100 : vector<8x8xf32>
    %cst_43 = arith.constant dense<0.000000e+00> : vector<8xf32>
    %102 = vector.multi_reduction <add>, %101, %cst_43 [1] : vector<8x8xf32> to vector<8xf32>
    %103 = vector.shape_cast %102 : vector<8xf32> to vector<8x1xf32>
    %104 = tpu.reciprocal %103 {approx = true} : vector<8x1xf32> -> vector<8x1xf32>
    %105 = vector.broadcast %104 : vector<8x1xf32> to vector<8x8xf32>
    %106 = arith.mulf %101, %105 : vector<8x8xf32>
    %107 = arith.truncf %106 : vector<8x8xf32> to vector<8x8xbf16>
    %108 = vector.extract_strided_slice %28 {offsets = [0, 8], sizes = [8, 8], strides = [1, 1]} : vector<8x32xf32> to vector<8x8xf32>
    %109 = arith.truncf %108 : vector<8x8xf32> to vector<8x8xbf16>
    %cst_44 = arith.constant dense<0.000000e+00> : vector<8x8xf32>
    %110 = tpu.matmul %107, %109, %cst_44 {dimension_numbers = #tpu.dot_dimension_numbers<[1], [0], [0], [1], [0, 0, 1, 1], [], []>} : vector<8x8xbf16>, vector<8x8xbf16>, vector<8x8xf32> -> vector<8x8xf32>
    %111 = vector.extract_strided_slice %20 {offsets = [0, 16], sizes = [8, 8], strides = [1, 1]} : vector<8x32xf32> to vector<8x8xf32>
    %112 = arith.mulf %111, %111 : vector<8x8xf32>
    %cst_45 = arith.constant dense<0.000000e+00> : vector<8xf32>
    %113 = vector.multi_reduction <add>, %112, %cst_45 [1] : vector<8x8xf32> to vector<8xf32>
    %114 = vector.shape_cast %113 : vector<8xf32> to vector<8x1xf32>
    %cst_46 = arith.constant 1.000000e-24 : f32
    %115 = vector.broadcast %cst_46 : f32 to vector<8x1xf32>
    %116 = arith.maximumf %114, %115 : vector<8x1xf32>
    %117 = math.rsqrt %116 : vector<8x1xf32>
    %118 = vector.broadcast %117 : vector<8x1xf32> to vector<8x8xf32>
    %119 = arith.mulf %111, %118 : vector<8x8xf32>
    %120 = vector.broadcast %9 : vector<1x1xf32> to vector<8x8xf32>
    %121 = arith.mulf %119, %120 : vector<8x8xf32>
    %122 = vector.extract_strided_slice %27 {offsets = [0, 16], sizes = [8, 8], strides = [1, 1]} : vector<8x32xf32> to vector<8x8xf32>
    %123 = arith.mulf %122, %122 : vector<8x8xf32>
    %cst_47 = arith.constant dense<0.000000e+00> : vector<8xf32>
    %124 = vector.multi_reduction <add>, %123, %cst_47 [1] : vector<8x8xf32> to vector<8xf32>
    %125 = vector.shape_cast %124 : vector<8xf32> to vector<8x1xf32>
    %cst_48 = arith.constant 1.000000e-24 : f32
    %126 = vector.broadcast %cst_48 : f32 to vector<8x1xf32>
    %127 = arith.maximumf %125, %126 : vector<8x1xf32>
    %128 = math.rsqrt %127 : vector<8x1xf32>
    %129 = vector.broadcast %128 : vector<8x1xf32> to vector<8x8xf32>
    %130 = arith.mulf %122, %129 : vector<8x8xf32>
    %131 = arith.truncf %121 : vector<8x8xf32> to vector<8x8xbf16>
    %132 = arith.truncf %130 : vector<8x8xf32> to vector<8x8xbf16>
    %cst_49 = arith.constant dense<0.000000e+00> : vector<8x8xf32>
    %133 = tpu.matmul %131, %132, %cst_49 {dimension_numbers = #tpu.dot_dimension_numbers<[1], [1], [0], [0], [0, 0, 1, 0], [], []>} : vector<8x8xbf16>, vector<8x8xbf16>, vector<8x8xf32> -> vector<8x8xf32>
    %cst_50 = arith.constant 0.000000e+00 : f32
    %134 = vector.broadcast %cst_50 : f32 to vector<8x8xf32>
    %135 = arith.cmpf oeq, %5, %134 : vector<8x8xf32>
    %cst_51 = arith.constant -9.99999984E+17 : f32
    %136 = vector.broadcast %cst_51 : f32 to vector<8x8xf32>
    %137 = arith.select %135, %136, %133 : vector<8x8xi1>, vector<8x8xf32>
    %cst_52 = arith.constant dense<0xFF800000> : vector<8xf32>
    %138 = vector.multi_reduction <maximumf>, %137, %cst_52 [1] : vector<8x8xf32> to vector<8xf32>
    %139 = vector.shape_cast %138 : vector<8xf32> to vector<8x1xf32>
    %140 = vector.broadcast %139 : vector<8x1xf32> to vector<8x8xf32>
    %141 = arith.subf %137, %140 : vector<8x8xf32>
    %142 = math.exp %141 : vector<8x8xf32>
    %cst_53 = arith.constant dense<0.000000e+00> : vector<8xf32>
    %143 = vector.multi_reduction <add>, %142, %cst_53 [1] : vector<8x8xf32> to vector<8xf32>
    %144 = vector.shape_cast %143 : vector<8xf32> to vector<8x1xf32>
    %145 = tpu.reciprocal %144 {approx = true} : vector<8x1xf32> -> vector<8x1xf32>
    %146 = vector.broadcast %145 : vector<8x1xf32> to vector<8x8xf32>
    %147 = arith.mulf %142, %146 : vector<8x8xf32>
    %148 = arith.truncf %147 : vector<8x8xf32> to vector<8x8xbf16>
    %149 = vector.extract_strided_slice %28 {offsets = [0, 16], sizes = [8, 8], strides = [1, 1]} : vector<8x32xf32> to vector<8x8xf32>
    %150 = arith.truncf %149 : vector<8x8xf32> to vector<8x8xbf16>
    %cst_54 = arith.constant dense<0.000000e+00> : vector<8x8xf32>
    %151 = tpu.matmul %148, %150, %cst_54 {dimension_numbers = #tpu.dot_dimension_numbers<[1], [0], [0], [1], [0, 0, 1, 1], [], []>} : vector<8x8xbf16>, vector<8x8xbf16>, vector<8x8xf32> -> vector<8x8xf32>
    %152 = vector.extract_strided_slice %20 {offsets = [0, 24], sizes = [8, 8], strides = [1, 1]} : vector<8x32xf32> to vector<8x8xf32>
    %153 = arith.mulf %152, %152 : vector<8x8xf32>
    %cst_55 = arith.constant dense<0.000000e+00> : vector<8xf32>
    %154 = vector.multi_reduction <add>, %153, %cst_55 [1] : vector<8x8xf32> to vector<8xf32>
    %155 = vector.shape_cast %154 : vector<8xf32> to vector<8x1xf32>
    %cst_56 = arith.constant 1.000000e-24 : f32
    %156 = vector.broadcast %cst_56 : f32 to vector<8x1xf32>
    %157 = arith.maximumf %155, %156 : vector<8x1xf32>
    %158 = math.rsqrt %157 : vector<8x1xf32>
    %159 = vector.broadcast %158 : vector<8x1xf32> to vector<8x8xf32>
    %160 = arith.mulf %152, %159 : vector<8x8xf32>
    %161 = vector.broadcast %9 : vector<1x1xf32> to vector<8x8xf32>
    %162 = arith.mulf %160, %161 : vector<8x8xf32>
    %163 = vector.extract_strided_slice %27 {offsets = [0, 24], sizes = [8, 8], strides = [1, 1]} : vector<8x32xf32> to vector<8x8xf32>
    %164 = arith.mulf %163, %163 : vector<8x8xf32>
    %cst_57 = arith.constant dense<0.000000e+00> : vector<8xf32>
    %165 = vector.multi_reduction <add>, %164, %cst_57 [1] : vector<8x8xf32> to vector<8xf32>
    %166 = vector.shape_cast %165 : vector<8xf32> to vector<8x1xf32>
    %cst_58 = arith.constant 1.000000e-24 : f32
    %167 = vector.broadcast %cst_58 : f32 to vector<8x1xf32>
    %168 = arith.maximumf %166, %167 : vector<8x1xf32>
    %169 = math.rsqrt %168 : vector<8x1xf32>
    %170 = vector.broadcast %169 : vector<8x1xf32> to vector<8x8xf32>
    %171 = arith.mulf %163, %170 : vector<8x8xf32>
    %172 = arith.truncf %162 : vector<8x8xf32> to vector<8x8xbf16>
    %173 = arith.truncf %171 : vector<8x8xf32> to vector<8x8xbf16>
    %cst_59 = arith.constant dense<0.000000e+00> : vector<8x8xf32>
    %174 = tpu.matmul %172, %173, %cst_59 {dimension_numbers = #tpu.dot_dimension_numbers<[1], [1], [0], [0], [0, 0, 1, 0], [], []>} : vector<8x8xbf16>, vector<8x8xbf16>, vector<8x8xf32> -> vector<8x8xf32>
    %cst_60 = arith.constant 0.000000e+00 : f32
    %175 = vector.broadcast %cst_60 : f32 to vector<8x8xf32>
    %176 = arith.cmpf oeq, %5, %175 : vector<8x8xf32>
    %cst_61 = arith.constant -9.99999984E+17 : f32
    %177 = vector.broadcast %cst_61 : f32 to vector<8x8xf32>
    %178 = arith.select %176, %177, %174 : vector<8x8xi1>, vector<8x8xf32>
    %cst_62 = arith.constant dense<0xFF800000> : vector<8xf32>
    %179 = vector.multi_reduction <maximumf>, %178, %cst_62 [1] : vector<8x8xf32> to vector<8xf32>
    %180 = vector.shape_cast %179 : vector<8xf32> to vector<8x1xf32>
    %181 = vector.broadcast %180 : vector<8x1xf32> to vector<8x8xf32>
    %182 = arith.subf %178, %181 : vector<8x8xf32>
    %183 = math.exp %182 : vector<8x8xf32>
    %cst_63 = arith.constant dense<0.000000e+00> : vector<8xf32>
    %184 = vector.multi_reduction <add>, %183, %cst_63 [1] : vector<8x8xf32> to vector<8xf32>
    %185 = vector.shape_cast %184 : vector<8xf32> to vector<8x1xf32>
    %186 = tpu.reciprocal %185 {approx = true} : vector<8x1xf32> -> vector<8x1xf32>
    %187 = vector.broadcast %186 : vector<8x1xf32> to vector<8x8xf32>
    %188 = arith.mulf %183, %187 : vector<8x8xf32>
    %189 = arith.truncf %188 : vector<8x8xf32> to vector<8x8xbf16>
    %190 = vector.extract_strided_slice %28 {offsets = [0, 24], sizes = [8, 8], strides = [1, 1]} : vector<8x32xf32> to vector<8x8xf32>
    %191 = arith.truncf %190 : vector<8x8xf32> to vector<8x8xbf16>
    %cst_64 = arith.constant dense<0.000000e+00> : vector<8x8xf32>
    %192 = tpu.matmul %189, %191, %cst_64 {dimension_numbers = #tpu.dot_dimension_numbers<[1], [0], [0], [1], [0, 0, 1, 1], [], []>} : vector<8x8xbf16>, vector<8x8xbf16>, vector<8x8xf32> -> vector<8x8xf32>
    %193 = tpu.concatenate %69, %110, %151, %192 in 1 : vector<8x8xf32>, vector<8x8xf32>, vector<8x8xf32>, vector<8x8xf32> -> vector<8x32xf32>
    %194 = arith.truncf %193 : vector<8x32xf32> to vector<8x32xbf16>
    %cst_65 = arith.constant dense<0.000000e+00> : vector<8x32xf32>
    %195 = tpu.matmul %194, %13, %cst_65 {dimension_numbers = #tpu.dot_dimension_numbers<[1], [0], [0], [1], [0, 0, 1, 1], [], []>} : vector<8x32xbf16>, vector<32x32xbf16>, vector<8x32xf32> -> vector<8x32xf32>
    %196 = vector.broadcast %14 : vector<1x32xf32> to vector<8x32xf32>
    %197 = arith.addf %195, %196 : vector<8x32xf32>
    %198 = arith.addf %197, %1 : vector<8x32xf32>
    %199 = vector.extract_strided_slice %8 {offsets = [0, 0], sizes = [1, 32], strides = [1, 1]} : vector<6x32xf32> to vector<1x32xf32>
    %200 = vector.extract_strided_slice %8 {offsets = [1, 0], sizes = [1, 32], strides = [1, 1]} : vector<6x32xf32> to vector<1x32xf32>
    %cst_66 = arith.constant dense<0.000000e+00> : vector<8xf32>
    %201 = vector.multi_reduction <add>, %198, %cst_66 [1] : vector<8x32xf32> to vector<8xf32>
    %202 = vector.shape_cast %201 : vector<8xf32> to vector<8x1xf32>
    %cst_67 = arith.constant 3.200000e+01 : f32
    %203 = vector.broadcast %cst_67 : f32 to vector<8x1xf32>
    %204 = arith.divf %202, %203 : vector<8x1xf32>
    %205 = vector.broadcast %204 : vector<8x1xf32> to vector<8x32xf32>
    %206 = arith.subf %198, %205 : vector<8x32xf32>
    %207 = arith.mulf %206, %206 : vector<8x32xf32>
    %cst_68 = arith.constant dense<0.000000e+00> : vector<8xf32>
    %208 = vector.multi_reduction <add>, %207, %cst_68 [1] : vector<8x32xf32> to vector<8xf32>
    %209 = vector.shape_cast %208 : vector<8xf32> to vector<8x1xf32>
    %cst_69 = arith.constant 3.200000e+01 : f32
    %210 = vector.broadcast %cst_69 : f32 to vector<8x1xf32>
    %211 = arith.divf %209, %210 : vector<8x1xf32>
    %212 = vector.broadcast %204 : vector<8x1xf32> to vector<8x32xf32>
    %213 = arith.subf %198, %212 : vector<8x32xf32>
    %cst_70 = arith.constant 9.99999974E-6 : f32
    %214 = vector.broadcast %cst_70 : f32 to vector<8x1xf32>
    %215 = arith.addf %211, %214 : vector<8x1xf32>
    %216 = math.rsqrt %215 : vector<8x1xf32>
    %217 = vector.broadcast %216 : vector<8x1xf32> to vector<8x32xf32>
    %218 = arith.mulf %213, %217 : vector<8x32xf32>
    %219 = vector.broadcast %199 : vector<1x32xf32> to vector<8x32xf32>
    %220 = arith.mulf %218, %219 : vector<8x32xf32>
    %221 = vector.broadcast %200 : vector<1x32xf32> to vector<8x32xf32>
    %222 = arith.addf %220, %221 : vector<8x32xf32>
    %c0_71 = arith.constant 0 : index
    %c0_72 = arith.constant 0 : index
    %223 = vector.load %arg10[%c0_71, %c0_72] : memref<32x96xbf16, #tpu.memory_space<vmem>>, vector<32x96xbf16>
    %c0_73 = arith.constant 0 : index
    %c0_74 = arith.constant 0 : index
    %224 = vector.load %arg11[%c0_73, %c0_74] : memref<1x96xf32, #tpu.memory_space<vmem>>, vector<1x96xf32>
    %c0_75 = arith.constant 0 : index
    %c0_76 = arith.constant 0 : index
    %225 = vector.load %arg12[%c0_75, %c0_76] : memref<32x32xbf16, #tpu.memory_space<vmem>>, vector<32x32xbf16>
    %c0_77 = arith.constant 0 : index
    %c0_78 = arith.constant 0 : index
    %226 = vector.load %arg13[%c0_77, %c0_78] : memref<1x32xf32, #tpu.memory_space<vmem>>, vector<1x32xf32>
    %227 = arith.truncf %222 : vector<8x32xf32> to vector<8x32xbf16>
    %228 = vector.extract_strided_slice %223 {offsets = [0, 0], sizes = [32, 32], strides = [1, 1]} : vector<32x96xbf16> to vector<32x32xbf16>
    %cst_79 = arith.constant dense<0.000000e+00> : vector<8x32xf32>
    %229 = tpu.matmul %227, %228, %cst_79 {dimension_numbers = #tpu.dot_dimension_numbers<[1], [0], [0], [1], [0, 0, 1, 1], [], []>} : vector<8x32xbf16>, vector<32x32xbf16>, vector<8x32xf32> -> vector<8x32xf32>
    %230 = vector.extract_strided_slice %224 {offsets = [0, 0], sizes = [1, 32], strides = [1, 1]} : vector<1x96xf32> to vector<1x32xf32>
    %231 = vector.broadcast %230 : vector<1x32xf32> to vector<8x32xf32>
    %232 = arith.addf %229, %231 : vector<8x32xf32>
    %233 = arith.truncf %3 : vector<10x32xf32> to vector<10x32xbf16>
    %234 = vector.extract_strided_slice %223 {offsets = [0, 32], sizes = [32, 64], strides = [1, 1]} : vector<32x96xbf16> to vector<32x64xbf16>
    %cst_80 = arith.constant dense<0.000000e+00> : vector<10x64xf32>
    %235 = tpu.matmul %233, %234, %cst_80 {dimension_numbers = #tpu.dot_dimension_numbers<[1], [0], [0], [1], [0, 0, 1, 1], [], []>} : vector<10x32xbf16>, vector<32x64xbf16>, vector<10x64xf32> -> vector<10x64xf32>
    %236 = vector.extract_strided_slice %224 {offsets = [0, 32], sizes = [1, 64], strides = [1, 1]} : vector<1x96xf32> to vector<1x64xf32>
    %237 = vector.broadcast %236 : vector<1x64xf32> to vector<10x64xf32>
    %238 = arith.addf %235, %237 : vector<10x64xf32>
    %239 = vector.extract_strided_slice %238 {offsets = [0, 0], sizes = [10, 32], strides = [1, 1]} : vector<10x64xf32> to vector<10x32xf32>
    %240 = vector.extract_strided_slice %238 {offsets = [0, 32], sizes = [10, 32], strides = [1, 1]} : vector<10x64xf32> to vector<10x32xf32>
    %241 = vector.extract_strided_slice %232 {offsets = [0, 0], sizes = [8, 8], strides = [1, 1]} : vector<8x32xf32> to vector<8x8xf32>
    %242 = arith.mulf %241, %241 : vector<8x8xf32>
    %cst_81 = arith.constant dense<0.000000e+00> : vector<8xf32>
    %243 = vector.multi_reduction <add>, %242, %cst_81 [1] : vector<8x8xf32> to vector<8xf32>
    %244 = vector.shape_cast %243 : vector<8xf32> to vector<8x1xf32>
    %cst_82 = arith.constant 1.000000e-24 : f32
    %245 = vector.broadcast %cst_82 : f32 to vector<8x1xf32>
    %246 = arith.maximumf %244, %245 : vector<8x1xf32>
    %247 = math.rsqrt %246 : vector<8x1xf32>
    %248 = vector.broadcast %247 : vector<8x1xf32> to vector<8x8xf32>
    %249 = arith.mulf %241, %248 : vector<8x8xf32>
    %250 = vector.broadcast %10 : vector<1x1xf32> to vector<8x8xf32>
    %251 = arith.mulf %249, %250 : vector<8x8xf32>
    %252 = vector.extract_strided_slice %239 {offsets = [0, 0], sizes = [10, 8], strides = [1, 1]} : vector<10x32xf32> to vector<10x8xf32>
    %253 = arith.mulf %252, %252 : vector<10x8xf32>
    %cst_83 = arith.constant dense<0.000000e+00> : vector<10xf32>
    %254 = vector.multi_reduction <add>, %253, %cst_83 [1] : vector<10x8xf32> to vector<10xf32>
    %255 = vector.shape_cast %254 : vector<10xf32> to vector<10x1xf32>
    %cst_84 = arith.constant 1.000000e-24 : f32
    %256 = vector.broadcast %cst_84 : f32 to vector<10x1xf32>
    %257 = arith.maximumf %255, %256 : vector<10x1xf32>
    %258 = math.rsqrt %257 : vector<10x1xf32>
    %259 = vector.broadcast %258 : vector<10x1xf32> to vector<10x8xf32>
    %260 = arith.mulf %252, %259 : vector<10x8xf32>
    %261 = arith.truncf %251 : vector<8x8xf32> to vector<8x8xbf16>
    %262 = arith.truncf %260 : vector<10x8xf32> to vector<10x8xbf16>
    %cst_85 = arith.constant dense<0.000000e+00> : vector<8x10xf32>
    %263 = tpu.matmul %261, %262, %cst_85 {dimension_numbers = #tpu.dot_dimension_numbers<[1], [1], [0], [0], [0, 0, 1, 0], [], []>} : vector<8x8xbf16>, vector<10x8xbf16>, vector<8x10xf32> -> vector<8x10xf32>
    %cst_86 = arith.constant 0.000000e+00 : f32
    %264 = vector.broadcast %cst_86 : f32 to vector<8x10xf32>
    %265 = arith.cmpf oeq, %7, %264 : vector<8x10xf32>
    %cst_87 = arith.constant -9.99999984E+17 : f32
    %266 = vector.broadcast %cst_87 : f32 to vector<8x10xf32>
    %267 = arith.select %265, %266, %263 : vector<8x10xi1>, vector<8x10xf32>
    %cst_88 = arith.constant dense<0xFF800000> : vector<8xf32>
    %268 = vector.multi_reduction <maximumf>, %267, %cst_88 [1] : vector<8x10xf32> to vector<8xf32>
    %269 = vector.shape_cast %268 : vector<8xf32> to vector<8x1xf32>
    %270 = vector.broadcast %269 : vector<8x1xf32> to vector<8x10xf32>
    %271 = arith.subf %267, %270 : vector<8x10xf32>
    %272 = math.exp %271 : vector<8x10xf32>
    %cst_89 = arith.constant dense<0.000000e+00> : vector<8xf32>
    %273 = vector.multi_reduction <add>, %272, %cst_89 [1] : vector<8x10xf32> to vector<8xf32>
    %274 = vector.shape_cast %273 : vector<8xf32> to vector<8x1xf32>
    %275 = tpu.reciprocal %274 {approx = true} : vector<8x1xf32> -> vector<8x1xf32>
    %276 = vector.broadcast %275 : vector<8x1xf32> to vector<8x10xf32>
    %277 = arith.mulf %272, %276 : vector<8x10xf32>
    %278 = arith.truncf %277 : vector<8x10xf32> to vector<8x10xbf16>
    %279 = vector.extract_strided_slice %240 {offsets = [0, 0], sizes = [10, 8], strides = [1, 1]} : vector<10x32xf32> to vector<10x8xf32>
    %280 = arith.truncf %279 : vector<10x8xf32> to vector<10x8xbf16>
    %cst_90 = arith.constant dense<0.000000e+00> : vector<8x8xf32>
    %281 = tpu.matmul %278, %280, %cst_90 {dimension_numbers = #tpu.dot_dimension_numbers<[1], [0], [0], [1], [0, 0, 1, 1], [], []>} : vector<8x10xbf16>, vector<10x8xbf16>, vector<8x8xf32> -> vector<8x8xf32>
    %282 = vector.extract_strided_slice %232 {offsets = [0, 8], sizes = [8, 8], strides = [1, 1]} : vector<8x32xf32> to vector<8x8xf32>
    %283 = arith.mulf %282, %282 : vector<8x8xf32>
    %cst_91 = arith.constant dense<0.000000e+00> : vector<8xf32>
    %284 = vector.multi_reduction <add>, %283, %cst_91 [1] : vector<8x8xf32> to vector<8xf32>
    %285 = vector.shape_cast %284 : vector<8xf32> to vector<8x1xf32>
    %cst_92 = arith.constant 1.000000e-24 : f32
    %286 = vector.broadcast %cst_92 : f32 to vector<8x1xf32>
    %287 = arith.maximumf %285, %286 : vector<8x1xf32>
    %288 = math.rsqrt %287 : vector<8x1xf32>
    %289 = vector.broadcast %288 : vector<8x1xf32> to vector<8x8xf32>
    %290 = arith.mulf %282, %289 : vector<8x8xf32>
    %291 = vector.broadcast %10 : vector<1x1xf32> to vector<8x8xf32>
    %292 = arith.mulf %290, %291 : vector<8x8xf32>
    %293 = vector.extract_strided_slice %239 {offsets = [0, 8], sizes = [10, 8], strides = [1, 1]} : vector<10x32xf32> to vector<10x8xf32>
    %294 = arith.mulf %293, %293 : vector<10x8xf32>
    %cst_93 = arith.constant dense<0.000000e+00> : vector<10xf32>
    %295 = vector.multi_reduction <add>, %294, %cst_93 [1] : vector<10x8xf32> to vector<10xf32>
    %296 = vector.shape_cast %295 : vector<10xf32> to vector<10x1xf32>
    %cst_94 = arith.constant 1.000000e-24 : f32
    %297 = vector.broadcast %cst_94 : f32 to vector<10x1xf32>
    %298 = arith.maximumf %296, %297 : vector<10x1xf32>
    %299 = math.rsqrt %298 : vector<10x1xf32>
    %300 = vector.broadcast %299 : vector<10x1xf32> to vector<10x8xf32>
    %301 = arith.mulf %293, %300 : vector<10x8xf32>
    %302 = arith.truncf %292 : vector<8x8xf32> to vector<8x8xbf16>
    %303 = arith.truncf %301 : vector<10x8xf32> to vector<10x8xbf16>
    %cst_95 = arith.constant dense<0.000000e+00> : vector<8x10xf32>
    %304 = tpu.matmul %302, %303, %cst_95 {dimension_numbers = #tpu.dot_dimension_numbers<[1], [1], [0], [0], [0, 0, 1, 0], [], []>} : vector<8x8xbf16>, vector<10x8xbf16>, vector<8x10xf32> -> vector<8x10xf32>
    %cst_96 = arith.constant 0.000000e+00 : f32
    %305 = vector.broadcast %cst_96 : f32 to vector<8x10xf32>
    %306 = arith.cmpf oeq, %7, %305 : vector<8x10xf32>
    %cst_97 = arith.constant -9.99999984E+17 : f32
    %307 = vector.broadcast %cst_97 : f32 to vector<8x10xf32>
    %308 = arith.select %306, %307, %304 : vector<8x10xi1>, vector<8x10xf32>
    %cst_98 = arith.constant dense<0xFF800000> : vector<8xf32>
    %309 = vector.multi_reduction <maximumf>, %308, %cst_98 [1] : vector<8x10xf32> to vector<8xf32>
    %310 = vector.shape_cast %309 : vector<8xf32> to vector<8x1xf32>
    %311 = vector.broadcast %310 : vector<8x1xf32> to vector<8x10xf32>
    %312 = arith.subf %308, %311 : vector<8x10xf32>
    %313 = math.exp %312 : vector<8x10xf32>
    %cst_99 = arith.constant dense<0.000000e+00> : vector<8xf32>
    %314 = vector.multi_reduction <add>, %313, %cst_99 [1] : vector<8x10xf32> to vector<8xf32>
    %315 = vector.shape_cast %314 : vector<8xf32> to vector<8x1xf32>
    %316 = tpu.reciprocal %315 {approx = true} : vector<8x1xf32> -> vector<8x1xf32>
    %317 = vector.broadcast %316 : vector<8x1xf32> to vector<8x10xf32>
    %318 = arith.mulf %313, %317 : vector<8x10xf32>
    %319 = arith.truncf %318 : vector<8x10xf32> to vector<8x10xbf16>
    %320 = vector.extract_strided_slice %240 {offsets = [0, 8], sizes = [10, 8], strides = [1, 1]} : vector<10x32xf32> to vector<10x8xf32>
    %321 = arith.truncf %320 : vector<10x8xf32> to vector<10x8xbf16>
    %cst_100 = arith.constant dense<0.000000e+00> : vector<8x8xf32>
    %322 = tpu.matmul %319, %321, %cst_100 {dimension_numbers = #tpu.dot_dimension_numbers<[1], [0], [0], [1], [0, 0, 1, 1], [], []>} : vector<8x10xbf16>, vector<10x8xbf16>, vector<8x8xf32> -> vector<8x8xf32>
    %323 = vector.extract_strided_slice %232 {offsets = [0, 16], sizes = [8, 8], strides = [1, 1]} : vector<8x32xf32> to vector<8x8xf32>
    %324 = arith.mulf %323, %323 : vector<8x8xf32>
    %cst_101 = arith.constant dense<0.000000e+00> : vector<8xf32>
    %325 = vector.multi_reduction <add>, %324, %cst_101 [1] : vector<8x8xf32> to vector<8xf32>
    %326 = vector.shape_cast %325 : vector<8xf32> to vector<8x1xf32>
    %cst_102 = arith.constant 1.000000e-24 : f32
    %327 = vector.broadcast %cst_102 : f32 to vector<8x1xf32>
    %328 = arith.maximumf %326, %327 : vector<8x1xf32>
    %329 = math.rsqrt %328 : vector<8x1xf32>
    %330 = vector.broadcast %329 : vector<8x1xf32> to vector<8x8xf32>
    %331 = arith.mulf %323, %330 : vector<8x8xf32>
    %332 = vector.broadcast %10 : vector<1x1xf32> to vector<8x8xf32>
    %333 = arith.mulf %331, %332 : vector<8x8xf32>
    %334 = vector.extract_strided_slice %239 {offsets = [0, 16], sizes = [10, 8], strides = [1, 1]} : vector<10x32xf32> to vector<10x8xf32>
    %335 = arith.mulf %334, %334 : vector<10x8xf32>
    %cst_103 = arith.constant dense<0.000000e+00> : vector<10xf32>
    %336 = vector.multi_reduction <add>, %335, %cst_103 [1] : vector<10x8xf32> to vector<10xf32>
    %337 = vector.shape_cast %336 : vector<10xf32> to vector<10x1xf32>
    %cst_104 = arith.constant 1.000000e-24 : f32
    %338 = vector.broadcast %cst_104 : f32 to vector<10x1xf32>
    %339 = arith.maximumf %337, %338 : vector<10x1xf32>
    %340 = math.rsqrt %339 : vector<10x1xf32>
    %341 = vector.broadcast %340 : vector<10x1xf32> to vector<10x8xf32>
    %342 = arith.mulf %334, %341 : vector<10x8xf32>
    %343 = arith.truncf %333 : vector<8x8xf32> to vector<8x8xbf16>
    %344 = arith.truncf %342 : vector<10x8xf32> to vector<10x8xbf16>
    %cst_105 = arith.constant dense<0.000000e+00> : vector<8x10xf32>
    %345 = tpu.matmul %343, %344, %cst_105 {dimension_numbers = #tpu.dot_dimension_numbers<[1], [1], [0], [0], [0, 0, 1, 0], [], []>} : vector<8x8xbf16>, vector<10x8xbf16>, vector<8x10xf32> -> vector<8x10xf32>
    %cst_106 = arith.constant 0.000000e+00 : f32
    %346 = vector.broadcast %cst_106 : f32 to vector<8x10xf32>
    %347 = arith.cmpf oeq, %7, %346 : vector<8x10xf32>
    %cst_107 = arith.constant -9.99999984E+17 : f32
    %348 = vector.broadcast %cst_107 : f32 to vector<8x10xf32>
    %349 = arith.select %347, %348, %345 : vector<8x10xi1>, vector<8x10xf32>
    %cst_108 = arith.constant dense<0xFF800000> : vector<8xf32>
    %350 = vector.multi_reduction <maximumf>, %349, %cst_108 [1] : vector<8x10xf32> to vector<8xf32>
    %351 = vector.shape_cast %350 : vector<8xf32> to vector<8x1xf32>
    %352 = vector.broadcast %351 : vector<8x1xf32> to vector<8x10xf32>
    %353 = arith.subf %349, %352 : vector<8x10xf32>
    %354 = math.exp %353 : vector<8x10xf32>
    %cst_109 = arith.constant dense<0.000000e+00> : vector<8xf32>
    %355 = vector.multi_reduction <add>, %354, %cst_109 [1] : vector<8x10xf32> to vector<8xf32>
    %356 = vector.shape_cast %355 : vector<8xf32> to vector<8x1xf32>
    %357 = tpu.reciprocal %356 {approx = true} : vector<8x1xf32> -> vector<8x1xf32>
    %358 = vector.broadcast %357 : vector<8x1xf32> to vector<8x10xf32>
    %359 = arith.mulf %354, %358 : vector<8x10xf32>
    %360 = arith.truncf %359 : vector<8x10xf32> to vector<8x10xbf16>
    %361 = vector.extract_strided_slice %240 {offsets = [0, 16], sizes = [10, 8], strides = [1, 1]} : vector<10x32xf32> to vector<10x8xf32>
    %362 = arith.truncf %361 : vector<10x8xf32> to vector<10x8xbf16>
    %cst_110 = arith.constant dense<0.000000e+00> : vector<8x8xf32>
    %363 = tpu.matmul %360, %362, %cst_110 {dimension_numbers = #tpu.dot_dimension_numbers<[1], [0], [0], [1], [0, 0, 1, 1], [], []>} : vector<8x10xbf16>, vector<10x8xbf16>, vector<8x8xf32> -> vector<8x8xf32>
    %364 = vector.extract_strided_slice %232 {offsets = [0, 24], sizes = [8, 8], strides = [1, 1]} : vector<8x32xf32> to vector<8x8xf32>
    %365 = arith.mulf %364, %364 : vector<8x8xf32>
    %cst_111 = arith.constant dense<0.000000e+00> : vector<8xf32>
    %366 = vector.multi_reduction <add>, %365, %cst_111 [1] : vector<8x8xf32> to vector<8xf32>
    %367 = vector.shape_cast %366 : vector<8xf32> to vector<8x1xf32>
    %cst_112 = arith.constant 1.000000e-24 : f32
    %368 = vector.broadcast %cst_112 : f32 to vector<8x1xf32>
    %369 = arith.maximumf %367, %368 : vector<8x1xf32>
    %370 = math.rsqrt %369 : vector<8x1xf32>
    %371 = vector.broadcast %370 : vector<8x1xf32> to vector<8x8xf32>
    %372 = arith.mulf %364, %371 : vector<8x8xf32>
    %373 = vector.broadcast %10 : vector<1x1xf32> to vector<8x8xf32>
    %374 = arith.mulf %372, %373 : vector<8x8xf32>
    %375 = vector.extract_strided_slice %239 {offsets = [0, 24], sizes = [10, 8], strides = [1, 1]} : vector<10x32xf32> to vector<10x8xf32>
    %376 = arith.mulf %375, %375 : vector<10x8xf32>
    %cst_113 = arith.constant dense<0.000000e+00> : vector<10xf32>
    %377 = vector.multi_reduction <add>, %376, %cst_113 [1] : vector<10x8xf32> to vector<10xf32>
    %378 = vector.shape_cast %377 : vector<10xf32> to vector<10x1xf32>
    %cst_114 = arith.constant 1.000000e-24 : f32
    %379 = vector.broadcast %cst_114 : f32 to vector<10x1xf32>
    %380 = arith.maximumf %378, %379 : vector<10x1xf32>
    %381 = math.rsqrt %380 : vector<10x1xf32>
    %382 = vector.broadcast %381 : vector<10x1xf32> to vector<10x8xf32>
    %383 = arith.mulf %375, %382 : vector<10x8xf32>
    %384 = arith.truncf %374 : vector<8x8xf32> to vector<8x8xbf16>
    %385 = arith.truncf %383 : vector<10x8xf32> to vector<10x8xbf16>
    %cst_115 = arith.constant dense<0.000000e+00> : vector<8x10xf32>
    %386 = tpu.matmul %384, %385, %cst_115 {dimension_numbers = #tpu.dot_dimension_numbers<[1], [1], [0], [0], [0, 0, 1, 0], [], []>} : vector<8x8xbf16>, vector<10x8xbf16>, vector<8x10xf32> -> vector<8x10xf32>
    %cst_116 = arith.constant 0.000000e+00 : f32
    %387 = vector.broadcast %cst_116 : f32 to vector<8x10xf32>
    %388 = arith.cmpf oeq, %7, %387 : vector<8x10xf32>
    %cst_117 = arith.constant -9.99999984E+17 : f32
    %389 = vector.broadcast %cst_117 : f32 to vector<8x10xf32>
    %390 = arith.select %388, %389, %386 : vector<8x10xi1>, vector<8x10xf32>
    %cst_118 = arith.constant dense<0xFF800000> : vector<8xf32>
    %391 = vector.multi_reduction <maximumf>, %390, %cst_118 [1] : vector<8x10xf32> to vector<8xf32>
    %392 = vector.shape_cast %391 : vector<8xf32> to vector<8x1xf32>
    %393 = vector.broadcast %392 : vector<8x1xf32> to vector<8x10xf32>
    %394 = arith.subf %390, %393 : vector<8x10xf32>
    %395 = math.exp %394 : vector<8x10xf32>
    %cst_119 = arith.constant dense<0.000000e+00> : vector<8xf32>
    %396 = vector.multi_reduction <add>, %395, %cst_119 [1] : vector<8x10xf32> to vector<8xf32>
    %397 = vector.shape_cast %396 : vector<8xf32> to vector<8x1xf32>
    %398 = tpu.reciprocal %397 {approx = true} : vector<8x1xf32> -> vector<8x1xf32>
    %399 = vector.broadcast %398 : vector<8x1xf32> to vector<8x10xf32>
    %400 = arith.mulf %395, %399 : vector<8x10xf32>
    %401 = arith.truncf %400 : vector<8x10xf32> to vector<8x10xbf16>
    %402 = vector.extract_strided_slice %240 {offsets = [0, 24], sizes = [10, 8], strides = [1, 1]} : vector<10x32xf32> to vector<10x8xf32>
    %403 = arith.truncf %402 : vector<10x8xf32> to vector<10x8xbf16>
    %cst_120 = arith.constant dense<0.000000e+00> : vector<8x8xf32>
    %404 = tpu.matmul %401, %403, %cst_120 {dimension_numbers = #tpu.dot_dimension_numbers<[1], [0], [0], [1], [0, 0, 1, 1], [], []>} : vector<8x10xbf16>, vector<10x8xbf16>, vector<8x8xf32> -> vector<8x8xf32>
    %405 = tpu.concatenate %281, %322, %363, %404 in 1 : vector<8x8xf32>, vector<8x8xf32>, vector<8x8xf32>, vector<8x8xf32> -> vector<8x32xf32>
    %406 = arith.truncf %405 : vector<8x32xf32> to vector<8x32xbf16>
    %cst_121 = arith.constant dense<0.000000e+00> : vector<8x32xf32>
    %407 = tpu.matmul %406, %225, %cst_121 {dimension_numbers = #tpu.dot_dimension_numbers<[1], [0], [0], [1], [0, 0, 1, 1], [], []>} : vector<8x32xbf16>, vector<32x32xbf16>, vector<8x32xf32> -> vector<8x32xf32>
    %408 = vector.broadcast %226 : vector<1x32xf32> to vector<8x32xf32>
    %409 = arith.addf %407, %408 : vector<8x32xf32>
    %410 = arith.addf %409, %222 : vector<8x32xf32>
    %411 = vector.extract_strided_slice %8 {offsets = [2, 0], sizes = [1, 32], strides = [1, 1]} : vector<6x32xf32> to vector<1x32xf32>
    %412 = vector.extract_strided_slice %8 {offsets = [3, 0], sizes = [1, 32], strides = [1, 1]} : vector<6x32xf32> to vector<1x32xf32>
    %cst_122 = arith.constant dense<0.000000e+00> : vector<8xf32>
    %413 = vector.multi_reduction <add>, %410, %cst_122 [1] : vector<8x32xf32> to vector<8xf32>
    %414 = vector.shape_cast %413 : vector<8xf32> to vector<8x1xf32>
    %cst_123 = arith.constant 3.200000e+01 : f32
    %415 = vector.broadcast %cst_123 : f32 to vector<8x1xf32>
    %416 = arith.divf %414, %415 : vector<8x1xf32>
    %417 = vector.broadcast %416 : vector<8x1xf32> to vector<8x32xf32>
    %418 = arith.subf %410, %417 : vector<8x32xf32>
    %419 = arith.mulf %418, %418 : vector<8x32xf32>
    %cst_124 = arith.constant dense<0.000000e+00> : vector<8xf32>
    %420 = vector.multi_reduction <add>, %419, %cst_124 [1] : vector<8x32xf32> to vector<8xf32>
    %421 = vector.shape_cast %420 : vector<8xf32> to vector<8x1xf32>
    %cst_125 = arith.constant 3.200000e+01 : f32
    %422 = vector.broadcast %cst_125 : f32 to vector<8x1xf32>
    %423 = arith.divf %421, %422 : vector<8x1xf32>
    %424 = vector.broadcast %416 : vector<8x1xf32> to vector<8x32xf32>
    %425 = arith.subf %410, %424 : vector<8x32xf32>
    %cst_126 = arith.constant 9.99999974E-6 : f32
    %426 = vector.broadcast %cst_126 : f32 to vector<8x1xf32>
    %427 = arith.addf %423, %426 : vector<8x1xf32>
    %428 = math.rsqrt %427 : vector<8x1xf32>
    %429 = vector.broadcast %428 : vector<8x1xf32> to vector<8x32xf32>
    %430 = arith.mulf %425, %429 : vector<8x32xf32>
    %431 = vector.broadcast %411 : vector<1x32xf32> to vector<8x32xf32>
    %432 = arith.mulf %430, %431 : vector<8x32xf32>
    %433 = vector.broadcast %412 : vector<1x32xf32> to vector<8x32xf32>
    %434 = arith.addf %432, %433 : vector<8x32xf32>
    %435 = arith.truncf %434 : vector<8x32xf32> to vector<8x32xbf16>
    %c0_127 = arith.constant 0 : index
    %c0_128 = arith.constant 0 : index
    %436 = vector.load %arg15[%c0_127, %c0_128] : memref<32x64xbf16, #tpu.memory_space<vmem>>, vector<32x64xbf16>
    %cst_129 = arith.constant dense<0.000000e+00> : vector<8x64xf32>
    %437 = tpu.matmul %435, %436, %cst_129 {dimension_numbers = #tpu.dot_dimension_numbers<[1], [0], [0], [1], [0, 0, 1, 1], [], []>} : vector<8x32xbf16>, vector<32x64xbf16>, vector<8x64xf32> -> vector<8x64xf32>
    %c0_130 = arith.constant 0 : index
    %c0_131 = arith.constant 0 : index
    %438 = vector.load %arg16[%c0_130, %c0_131] : memref<1x64xf32, #tpu.memory_space<vmem>>, vector<1x64xf32>
    %439 = vector.broadcast %438 : vector<1x64xf32> to vector<8x64xf32>
    %440 = arith.addf %437, %439 : vector<8x64xf32>
    %cst_132 = arith.constant 0.000000e+00 : f32
    %441 = vector.broadcast %cst_132 : f32 to vector<8x64xf32>
    %442 = arith.maximumf %440, %441 : vector<8x64xf32>
    %443 = arith.truncf %442 : vector<8x64xf32> to vector<8x64xbf16>
    %c0_133 = arith.constant 0 : index
    %c0_134 = arith.constant 0 : index
    %444 = vector.load %arg17[%c0_133, %c0_134] : memref<64x32xbf16, #tpu.memory_space<vmem>>, vector<64x32xbf16>
    %cst_135 = arith.constant dense<0.000000e+00> : vector<8x32xf32>
    %445 = tpu.matmul %443, %444, %cst_135 {dimension_numbers = #tpu.dot_dimension_numbers<[1], [0], [0], [1], [0, 0, 1, 1], [], []>} : vector<8x64xbf16>, vector<64x32xbf16>, vector<8x32xf32> -> vector<8x32xf32>
    %c0_136 = arith.constant 0 : index
    %c0_137 = arith.constant 0 : index
    %446 = vector.load %arg18[%c0_136, %c0_137] : memref<1x32xf32, #tpu.memory_space<vmem>>, vector<1x32xf32>
    %447 = vector.broadcast %446 : vector<1x32xf32> to vector<8x32xf32>
    %448 = arith.addf %445, %447 : vector<8x32xf32>
    %449 = arith.addf %448, %434 : vector<8x32xf32>
    %450 = vector.extract_strided_slice %8 {offsets = [4, 0], sizes = [1, 32], strides = [1, 1]} : vector<6x32xf32> to vector<1x32xf32>
    %451 = vector.extract_strided_slice %8 {offsets = [5, 0], sizes = [1, 32], strides = [1, 1]} : vector<6x32xf32> to vector<1x32xf32>
    %cst_138 = arith.constant dense<0.000000e+00> : vector<8xf32>
    %452 = vector.multi_reduction <add>, %449, %cst_138 [1] : vector<8x32xf32> to vector<8xf32>
    %453 = vector.shape_cast %452 : vector<8xf32> to vector<8x1xf32>
    %cst_139 = arith.constant 3.200000e+01 : f32
    %454 = vector.broadcast %cst_139 : f32 to vector<8x1xf32>
    %455 = arith.divf %453, %454 : vector<8x1xf32>
    %456 = vector.broadcast %455 : vector<8x1xf32> to vector<8x32xf32>
    %457 = arith.subf %449, %456 : vector<8x32xf32>
    %458 = arith.mulf %457, %457 : vector<8x32xf32>
    %cst_140 = arith.constant dense<0.000000e+00> : vector<8xf32>
    %459 = vector.multi_reduction <add>, %458, %cst_140 [1] : vector<8x32xf32> to vector<8xf32>
    %460 = vector.shape_cast %459 : vector<8xf32> to vector<8x1xf32>
    %cst_141 = arith.constant 3.200000e+01 : f32
    %461 = vector.broadcast %cst_141 : f32 to vector<8x1xf32>
    %462 = arith.divf %460, %461 : vector<8x1xf32>
    %463 = vector.broadcast %455 : vector<8x1xf32> to vector<8x32xf32>
    %464 = arith.subf %449, %463 : vector<8x32xf32>
    %cst_142 = arith.constant 9.99999974E-6 : f32
    %465 = vector.broadcast %cst_142 : f32 to vector<8x1xf32>
    %466 = arith.addf %462, %465 : vector<8x1xf32>
    %467 = math.rsqrt %466 : vector<8x1xf32>
    %468 = vector.broadcast %467 : vector<8x1xf32> to vector<8x32xf32>
    %469 = arith.mulf %464, %468 : vector<8x32xf32>
    %470 = vector.broadcast %450 : vector<1x32xf32> to vector<8x32xf32>
    %471 = arith.mulf %469, %470 : vector<8x32xf32>
    %472 = vector.broadcast %451 : vector<1x32xf32> to vector<8x32xf32>
    %473 = arith.addf %471, %472 : vector<8x32xf32>
    %c0_143 = arith.constant 0 : index
    %c0_144 = arith.constant 0 : index
    %c0_145 = arith.constant 0 : index
    %474 = vector.load %arg19[%c0_143, %c0_144, %c0_145] : memref<1x8x32xf32, #tpu.memory_space<vmem>>, vector<1x8x32xf32>
    %475 = vector.shape_cast %474 : vector<1x8x32xf32> to vector<8x32xf32>
    %476 = vector.shape_cast %473 : vector<8x32xf32> to vector<1x8x32xf32>
    tpu.vector_store %arg19[%c0_143, %c0_144, %c0_145], %476 {strides = array<i32>} : memref<1x8x32xf32, #tpu.memory_space<vmem>>, vector<1x8x32xf32>,
    return
  }
  func.func @transform_0(%arg0: i32) -> (i32, i32, i32) {
    %c0_i32 = arith.constant 0 : i32
    %c0_i32_0 = arith.constant 0 : i32
    %c0_i32_1 = arith.constant 0 : i32
    return %arg0, %c0_i32, %c0_i32_0 : i32, i32, i32
  }
  func.func @transform_1(%arg0: i32) -> (i32, i32, i32) {
    %c0_i32 = arith.constant 0 : i32
    %c0_i32_0 = arith.constant 0 : i32
    %c0_i32_1 = arith.constant 0 : i32
    return %arg0, %c0_i32, %c0_i32_0 : i32, i32, i32
  }
  func.func @transform_2(%arg0: i32) -> (i32, i32, i32) {
    %c0_i32 = arith.constant 0 : i32
    %c0_i32_0 = arith.constant 0 : i32
    %c0_i32_1 = arith.constant 0 : i32
    return %arg0, %c0_i32, %c0_i32_0 : i32, i32, i32
  }
  func.func @transform_3(%arg0: i32) -> (i32, i32, i32) {
    %c0_i32 = arith.constant 0 : i32
    %c0_i32_0 = arith.constant 0 : i32
    %c0_i32_1 = arith.constant 0 : i32
    return %arg0, %c0_i32, %c0_i32_0 : i32, i32, i32
  }
  func.func @transform_4(%arg0: i32) -> (i32, i32) {
    %c0_i32 = arith.constant 0 : i32
    %c0_i32_0 = arith.constant 0 : i32
    %c0_i32_1 = arith.constant 0 : i32
    return %c0_i32, %c0_i32_0 : i32, i32
  }
  func.func @transform_5(%arg0: i32) -> (i32, i32) {
    %c0_i32 = arith.constant 0 : i32
    %c0_i32_0 = arith.constant 0 : i32
    %c0_i32_1 = arith.constant 0 : i32
    return %c0_i32, %c0_i32_0 : i32, i32
  }
  func.func @transform_6(%arg0: i32) -> (i32, i32) {
    %c0_i32 = arith.constant 0 : i32
    %c0_i32_0 = arith.constant 0 : i32
    %c0_i32_1 = arith.constant 0 : i32
    return %c0_i32, %c0_i32_0 : i32, i32
  }
  func.func @transform_7(%arg0: i32) -> (i32, i32) {
    %c0_i32 = arith.constant 0 : i32
    %c0_i32_0 = arith.constant 0 : i32
    %c0_i32_1 = arith.constant 0 : i32
    return %c0_i32, %c0_i32_0 : i32, i32
  }
  func.func @transform_8(%arg0: i32) -> (i32, i32) {
    %c0_i32 = arith.constant 0 : i32
    %c0_i32_0 = arith.constant 0 : i32
    %c0_i32_1 = arith.constant 0 : i32
    return %c0_i32, %c0_i32_0 : i32, i32
  }
  func.func @transform_9(%arg0: i32) -> (i32, i32) {
    %c0_i32 = arith.constant 0 : i32
    %c0_i32_0 = arith.constant 0 : i32
    %c0_i32_1 = arith.constant 0 : i32
    return %c0_i32, %c0_i32_0 : i32, i32
  }
  func.func @transform_10(%arg0: i32) -> (i32, i32) {
    %c0_i32 = arith.constant 0 : i32
    %c0_i32_0 = arith.constant 0 : i32
    %c0_i32_1 = arith.constant 0 : i32
    return %c0_i32, %c0_i32_0 : i32, i32
  }
  func.func @transform_11(%arg0: i32) -> (i32, i32) {
    %c0_i32 = arith.constant 0 : i32
    %c0_i32_0 = arith.constant 0 : i32
    %c0_i32_1 = arith.constant 0 : i32
    return %c0_i32, %c0_i32_0 : i32, i32
  }
  func.func @transform_12(%arg0: i32) -> (i32, i32) {
    %c0_i32 = arith.constant 0 : i32
    %c0_i32_0 = arith.constant 0 : i32
    %c0_i32_1 = arith.constant 0 : i32
    return %c0_i32, %c0_i32_0 : i32, i32
  }
  func.func @transform_13(%arg0: i32) -> (i32, i32) {
    %c0_i32 = arith.constant 0 : i32
    %c0_i32_0 = arith.constant 0 : i32
    %c0_i32_1 = arith.constant 0 : i32
    return %c0_i32, %c0_i32_0 : i32, i32
  }
  func.func @transform_14(%arg0: i32) -> (i32, i32) {
    %c0_i32 = arith.constant 0 : i32
    %c0_i32_0 = arith.constant 0 : i32
    %c0_i32_1 = arith.constant 0 : i32
    return %c0_i32, %c0_i32_0 : i32, i32
  }
  func.func @transform_15(%arg0: i32) -> (i32, i32) {
    %c0_i32 = arith.constant 0 : i32
    %c0_i32_0 = arith.constant 0 : i32
    %c0_i32_1 = arith.constant 0 : i32
    return %c0_i32, %c0_i32_0 : i32, i32
  }
  func.func @transform_16(%arg0: i32) -> (i32, i32) {
    %c0_i32 = arith.constant 0 : i32
    %c0_i32_0 = arith.constant 0 : i32
    %c0_i32_1 = arith.constant 0 : i32
    return %c0_i32, %c0_i32_0 : i32, i32
  }
  func.func @transform_17(%arg0: i32) -> (i32, i32) {
    %c0_i32 = arith.constant 0 : i32
    %c0_i32_0 = arith.constant 0 : i32
    %c0_i32_1 = arith.constant 0 : i32
    return %c0_i32, %c0_i32_0 : i32, i32
  }
  func.func @transform_18(%arg0: i32) -> (i32, i32, i32) {
    %c0_i32 = arith.constant 0 : i32
    %c0_i32_0 = arith.constant 0 : i32
    %c0_i32_1 = arith.constant 0 : i32
    return %arg0, %c0_i32, %c0_i32_0 : i32, i32, i32
  }
}

module attributes {stable_mosaic.version = 11 : i64} {
  func.func @_decoder_block_kernel(%arg0: i32, %arg1: memref<1x8x32xf32, #tpu.memory_space<vmem>>, %arg2: memref<1x10x32xf32, #tpu.memory_space<vmem>>, %arg3: memref<1x8x8xf32, #tpu.memory_space<vmem>>, %arg4: memref<1x8x10xf32, #tpu.memory_space<vmem>>, %arg5: memref<1x2xf32, #tpu.memory_space<vmem>>, %arg6: memref<32x96xbf16, #tpu.memory_space<vmem>>, %arg7: memref<1x96xf32, #tpu.memory_space<vmem>>, %arg8: memref<32x32xbf16, #tpu.memory_space<vmem>>, %arg9: memref<1x32xf32, #tpu.memory_space<vmem>>, %arg10: memref<32x96xbf16, #tpu.memory_space<vmem>>, %arg11: memref<1x96xf32, #tpu.memory_space<vmem>>, %arg12: memref<32x32xbf16, #tpu.memory_space<vmem>>, %arg13: memref<1x32xf32, #tpu.memory_space<vmem>>, %arg14: memref<6x32xf32, #tpu.memory_space<vmem>>, %arg15: memref<32x64xbf16, #tpu.memory_space<vmem>>, %arg16: memref<1x64xf32, #tpu.memory_space<vmem>>, %arg17: memref<64x32xbf16, #tpu.memory_space<vmem>>, %arg18: memref<1x32xf32, #tpu.memory_space<vmem>>, %arg19: memref<1x8x32xf32, #tpu.memory_space<vmem>>, %arg20: memref<1x4x8x10xf32, #tpu.memory_space<vmem>>) attributes {dimension_semantics = [#tpu.dimension_semantics<parallel>], iteration_bounds = array<i64: 2>, scalar_prefetch = 0 : i64, scratch_operands = 0 : i64, tpu.core_type = #tpu.core_type<tc>, window_params = [{transform_indices = @transform_0, window_bounds = array<i64: 1, 8, 32>}, {transform_indices = @transform_1, window_bounds = array<i64: 1, 10, 32>}, {transform_indices = @transform_2, window_bounds = array<i64: 1, 8, 8>}, {transform_indices = @transform_3, window_bounds = array<i64: 1, 8, 10>}, {pipeline_mode = #tpu.pipeline_mode<synchronous>, transform_indices = @transform_4, window_bounds = array<i64: 1, 2>}, {pipeline_mode = #tpu.pipeline_mode<synchronous>, transform_indices = @transform_5, window_bounds = array<i64: 32, 96>}, {pipeline_mode = #tpu.pipeline_mode<synchronous>, transform_indices = @transform_6, window_bounds = array<i64: 1, 96>}, {pipeline_mode = #tpu.pipeline_mode<synchronous>, transform_indices = @transform_7, window_bounds = array<i64: 32, 32>}, {pipeline_mode = #tpu.pipeline_mode<synchronous>, transform_indices = @transform_8, window_bounds = array<i64: 1, 32>}, {pipeline_mode = #tpu.pipeline_mode<synchronous>, transform_indices = @transform_9, window_bounds = array<i64: 32, 96>}, {pipeline_mode = #tpu.pipeline_mode<synchronous>, transform_indices = @transform_10, window_bounds = array<i64: 1, 96>}, {pipeline_mode = #tpu.pipeline_mode<synchronous>, transform_indices = @transform_11, window_bounds = array<i64: 32, 32>}, {pipeline_mode = #tpu.pipeline_mode<synchronous>, transform_indices = @transform_12, window_bounds = array<i64: 1, 32>}, {pipeline_mode = #tpu.pipeline_mode<synchronous>, transform_indices = @transform_13, window_bounds = array<i64: 6, 32>}, {pipeline_mode = #tpu.pipeline_mode<synchronous>, transform_indices = @transform_14, window_bounds = array<i64: 32, 64>}, {pipeline_mode = #tpu.pipeline_mode<synchronous>, transform_indices = @transform_15, window_bounds = array<i64: 1, 64>}, {pipeline_mode = #tpu.pipeline_mode<synchronous>, transform_indices = @transform_16, window_bounds = array<i64: 64, 32>}, {pipeline_mode = #tpu.pipeline_mode<synchronous>, transform_indices = @transform_17, window_bounds = array<i64: 1, 32>}, {transform_indices = @transform_18, window_bounds = array<i64: 1, 8, 32>}, {transform_indices = @transform_19, window_bounds = array<i64: 1, 4, 8, 10>}]} {
    %c0 = arith.constant 0 : index
    %c0_0 = arith.constant 0 : index
    %c0_1 = arith.constant 0 : index
    %0 = vector.load %arg1[%c0, %c0_0, %c0_1] : memref<1x8x32xf32, #tpu.memory_space<vmem>>, vector<1x8x32xf32>
    %1 = vector.shape_cast %0 : vector<1x8x32xf32> to vector<8x32xf32>
    %c0_2 = arith.constant 0 : index
    %c0_3 = arith.constant 0 : index
    %c0_4 = arith.constant 0 : index
    %2 = vector.load %arg2[%c0_2, %c0_3, %c0_4] : memref<1x10x32xf32, #tpu.memory_space<vmem>>, vector<1x10x32xf32>
    %3 = vector.shape_cast %2 : vector<1x10x32xf32> to vector<10x32xf32>
    %c0_5 = arith.constant 0 : index
    %c0_6 = arith.constant 0 : index
    %c0_7 = arith.constant 0 : index
    %4 = vector.load %arg3[%c0_5, %c0_6, %c0_7] : memref<1x8x8xf32, #tpu.memory_space<vmem>>, vector<1x8x8xf32>
    %5 = vector.shape_cast %4 : vector<1x8x8xf32> to vector<8x8xf32>
    %c0_8 = arith.constant 0 : index
    %c0_9 = arith.constant 0 : index
    %c0_10 = arith.constant 0 : index
    %6 = vector.load %arg4[%c0_8, %c0_9, %c0_10] : memref<1x8x10xf32, #tpu.memory_space<vmem>>, vector<1x8x10xf32>
    %7 = vector.shape_cast %6 : vector<1x8x10xf32> to vector<8x10xf32>
    %c0_11 = arith.constant 0 : index
    %c0_12 = arith.constant 0 : index
    %8 = vector.load %arg14[%c0_11, %c0_12] : memref<6x32xf32, #tpu.memory_space<vmem>>, vector<6x32xf32>
    %c0_13 = arith.constant 0 : index
    %c0_14 = arith.constant 0 : index
    %9 = vector.load %arg5[%c0_13, %c0_14] : memref<1x2xf32, #tpu.memory_space<vmem>>, vector<1x1xf32>
    %c0_15 = arith.constant 0 : index
    %c1 = arith.constant 1 : index
    %10 = vector.load %arg5[%c0_15, %c1] : memref<1x2xf32, #tpu.memory_space<vmem>>, vector<1x1xf32>
    %c0_16 = arith.constant 0 : index
    %c0_17 = arith.constant 0 : index
    %11 = vector.load %arg6[%c0_16, %c0_17] : memref<32x96xbf16, #tpu.memory_space<vmem>>, vector<32x96xbf16>
    %c0_18 = arith.constant 0 : index
    %c0_19 = arith.constant 0 : index
    %12 = vector.load %arg7[%c0_18, %c0_19] : memref<1x96xf32, #tpu.memory_space<vmem>>, vector<1x96xf32>
    %c0_20 = arith.constant 0 : index
    %c0_21 = arith.constant 0 : index
    %13 = vector.load %arg8[%c0_20, %c0_21] : memref<32x32xbf16, #tpu.memory_space<vmem>>, vector<32x32xbf16>
    %c0_22 = arith.constant 0 : index
    %c0_23 = arith.constant 0 : index
    %14 = vector.load %arg9[%c0_22, %c0_23] : memref<1x32xf32, #tpu.memory_space<vmem>>, vector<1x32xf32>
    %15 = arith.truncf %1 : vector<8x32xf32> to vector<8x32xbf16>
    %16 = vector.extract_strided_slice %11 {offsets = [0, 0], sizes = [32, 32], strides = [1, 1]} : vector<32x96xbf16> to vector<32x32xbf16>
    %cst = arith.constant dense<0.000000e+00> : vector<8x32xf32>
    %17 = tpu.matmul %15, %16, %cst {dimension_numbers = #tpu.dot_dimension_numbers<[1], [0], [0], [1], [0, 0, 1, 1], [], []>} : vector<8x32xbf16>, vector<32x32xbf16>, vector<8x32xf32> -> vector<8x32xf32>
    %18 = vector.extract_strided_slice %12 {offsets = [0, 0], sizes = [1, 32], strides = [1, 1]} : vector<1x96xf32> to vector<1x32xf32>
    %19 = vector.broadcast %18 : vector<1x32xf32> to vector<8x32xf32>
    %20 = arith.addf %17, %19 : vector<8x32xf32>
    %21 = arith.truncf %1 : vector<8x32xf32> to vector<8x32xbf16>
    %22 = vector.extract_strided_slice %11 {offsets = [0, 32], sizes = [32, 64], strides = [1, 1]} : vector<32x96xbf16> to vector<32x64xbf16>
    %cst_24 = arith.constant dense<0.000000e+00> : vector<8x64xf32>
    %23 = tpu.matmul %21, %22, %cst_24 {dimension_numbers = #tpu.dot_dimension_numbers<[1], [0], [0], [1], [0, 0, 1, 1], [], []>} : vector<8x32xbf16>, vector<32x64xbf16>, vector<8x64xf32> -> vector<8x64xf32>
    %24 = vector.extract_strided_slice %12 {offsets = [0, 32], sizes = [1, 64], strides = [1, 1]} : vector<1x96xf32> to vector<1x64xf32>
    %25 = vector.broadcast %24 : vector<1x64xf32> to vector<8x64xf32>
    %26 = arith.addf %23, %25 : vector<8x64xf32>
    %27 = vector.extract_strided_slice %26 {offsets = [0, 0], sizes = [8, 32], strides = [1, 1]} : vector<8x64xf32> to vector<8x32xf32>
    %28 = vector.extract_strided_slice %26 {offsets = [0, 32], sizes = [8, 32], strides = [1, 1]} : vector<8x64xf32> to vector<8x32xf32>
    %29 = vector.extract_strided_slice %20 {offsets = [0, 0], sizes = [8, 8], strides = [1, 1]} : vector<8x32xf32> to vector<8x8xf32>
    %30 = arith.mulf %29, %29 : vector<8x8xf32>
    %cst_25 = arith.constant dense<0.000000e+00> : vector<8xf32>
    %31 = vector.multi_reduction <add>, %30, %cst_25 [1] : vector<8x8xf32> to vector<8xf32>
    %32 = vector.shape_cast %31 : vector<8xf32> to vector<8x1xf32>
    %cst_26 = arith.constant 1.000000e-24 : f32
    %33 = vector.broadcast %cst_26 : f32 to vector<8x1xf32>
    %34 = arith.maximumf %32, %33 : vector<8x1xf32>
    %35 = math.rsqrt %34 : vector<8x1xf32>
    %36 = vector.broadcast %35 : vector<8x1xf32> to vector<8x8xf32>
    %37 = arith.mulf %29, %36 : vector<8x8xf32>
    %38 = vector.broadcast %9 : vector<1x1xf32> to vector<8x8xf32>
    %39 = arith.mulf %37, %38 : vector<8x8xf32>
    %40 = vector.extract_strided_slice %27 {offsets = [0, 0], sizes = [8, 8], strides = [1, 1]} : vector<8x32xf32> to vector<8x8xf32>
    %41 = arith.mulf %40, %40 : vector<8x8xf32>
    %cst_27 = arith.constant dense<0.000000e+00> : vector<8xf32>
    %42 = vector.multi_reduction <add>, %41, %cst_27 [1] : vector<8x8xf32> to vector<8xf32>
    %43 = vector.shape_cast %42 : vector<8xf32> to vector<8x1xf32>
    %cst_28 = arith.constant 1.000000e-24 : f32
    %44 = vector.broadcast %cst_28 : f32 to vector<8x1xf32>
    %45 = arith.maximumf %43, %44 : vector<8x1xf32>
    %46 = math.rsqrt %45 : vector<8x1xf32>
    %47 = vector.broadcast %46 : vector<8x1xf32> to vector<8x8xf32>
    %48 = arith.mulf %40, %47 : vector<8x8xf32>
    %49 = arith.truncf %39 : vector<8x8xf32> to vector<8x8xbf16>
    %50 = arith.truncf %48 : vector<8x8xf32> to vector<8x8xbf16>
    %cst_29 = arith.constant dense<0.000000e+00> : vector<8x8xf32>
    %51 = tpu.matmul %49, %50, %cst_29 {dimension_numbers = #tpu.dot_dimension_numbers<[1], [1], [0], [0], [0, 0, 1, 0], [], []>} : vector<8x8xbf16>, vector<8x8xbf16>, vector<8x8xf32> -> vector<8x8xf32>
    %cst_30 = arith.constant 0.000000e+00 : f32
    %52 = vector.broadcast %cst_30 : f32 to vector<8x8xf32>
    %53 = arith.cmpf oeq, %5, %52 : vector<8x8xf32>
    %cst_31 = arith.constant -9.99999984E+17 : f32
    %54 = vector.broadcast %cst_31 : f32 to vector<8x8xf32>
    %55 = arith.select %53, %54, %51 : vector<8x8xi1>, vector<8x8xf32>
    %cst_32 = arith.constant dense<0xFF800000> : vector<8xf32>
    %56 = vector.multi_reduction <maximumf>, %55, %cst_32 [1] : vector<8x8xf32> to vector<8xf32>
    %57 = vector.shape_cast %56 : vector<8xf32> to vector<8x1xf32>
    %58 = vector.broadcast %57 : vector<8x1xf32> to vector<8x8xf32>
    %59 = arith.subf %55, %58 : vector<8x8xf32>
    %60 = math.exp %59 : vector<8x8xf32>
    %cst_33 = arith.constant dense<0.000000e+00> : vector<8xf32>
    %61 = vector.multi_reduction <add>, %60, %cst_33 [1] : vector<8x8xf32> to vector<8xf32>
    %62 = vector.shape_cast %61 : vector<8xf32> to vector<8x1xf32>
    %63 = tpu.reciprocal %62 {approx = true} : vector<8x1xf32> -> vector<8x1xf32>
    %64 = vector.broadcast %63 : vector<8x1xf32> to vector<8x8xf32>
    %65 = arith.mulf %60, %64 : vector<8x8xf32>
    %66 = arith.truncf %65 : vector<8x8xf32> to vector<8x8xbf16>
    %67 = vector.extract_strided_slice %28 {offsets = [0, 0], sizes = [8, 8], strides = [1, 1]} : vector<8x32xf32> to vector<8x8xf32>
    %68 = arith.truncf %67 : vector<8x8xf32> to vector<8x8xbf16>
    %cst_34 = arith.constant dense<0.000000e+00> : vector<8x8xf32>
    %69 = tpu.matmul %66, %68, %cst_34 {dimension_numbers = #tpu.dot_dimension_numbers<[1], [0], [0], [1], [0, 0, 1, 1], [], []>} : vector<8x8xbf16>, vector<8x8xbf16>, vector<8x8xf32> -> vector<8x8xf32>
    %70 = vector.extract_strided_slice %20 {offsets = [0, 8], sizes = [8, 8], strides = [1, 1]} : vector<8x32xf32> to vector<8x8xf32>
    %71 = arith.mulf %70, %70 : vector<8x8xf32>
    %cst_35 = arith.constant dense<0.000000e+00> : vector<8xf32>
    %72 = vector.multi_reduction <add>, %71, %cst_35 [1] : vector<8x8xf32> to vector<8xf32>
    %73 = vector.shape_cast %72 : vector<8xf32> to vector<8x1xf32>
    %cst_36 = arith.constant 1.000000e-24 : f32
    %74 = vector.broadcast %cst_36 : f32 to vector<8x1xf32>
    %75 = arith.maximumf %73, %74 : vector<8x1xf32>
    %76 = math.rsqrt %75 : vector<8x1xf32>
    %77 = vector.broadcast %76 : vector<8x1xf32> to vector<8x8xf32>
    %78 = arith.mulf %70, %77 : vector<8x8xf32>
    %79 = vector.broadcast %9 : vector<1x1xf32> to vector<8x8xf32>
    %80 = arith.mulf %78, %79 : vector<8x8xf32>
    %81 = vector.extract_strided_slice %27 {offsets = [0, 8], sizes = [8, 8], strides = [1, 1]} : vector<8x32xf32> to vector<8x8xf32>
    %82 = arith.mulf %81, %81 : vector<8x8xf32>
    %cst_37 = arith.constant dense<0.000000e+00> : vector<8xf32>
    %83 = vector.multi_reduction <add>, %82, %cst_37 [1] : vector<8x8xf32> to vector<8xf32>
    %84 = vector.shape_cast %83 : vector<8xf32> to vector<8x1xf32>
    %cst_38 = arith.constant 1.000000e-24 : f32
    %85 = vector.broadcast %cst_38 : f32 to vector<8x1xf32>
    %86 = arith.maximumf %84, %85 : vector<8x1xf32>
    %87 = math.rsqrt %86 : vector<8x1xf32>
    %88 = vector.broadcast %87 : vector<8x1xf32> to vector<8x8xf32>
    %89 = arith.mulf %81, %88 : vector<8x8xf32>
    %90 = arith.truncf %80 : vector<8x8xf32> to vector<8x8xbf16>
    %91 = arith.truncf %89 : vector<8x8xf32> to vector<8x8xbf16>
    %cst_39 = arith.constant dense<0.000000e+00> : vector<8x8xf32>
    %92 = tpu.matmul %90, %91, %cst_39 {dimension_numbers = #tpu.dot_dimension_numbers<[1], [1], [0], [0], [0, 0, 1, 0], [], []>} : vector<8x8xbf16>, vector<8x8xbf16>, vector<8x8xf32> -> vector<8x8xf32>
    %cst_40 = arith.constant 0.000000e+00 : f32
    %93 = vector.broadcast %cst_40 : f32 to vector<8x8xf32>
    %94 = arith.cmpf oeq, %5, %93 : vector<8x8xf32>
    %cst_41 = arith.constant -9.99999984E+17 : f32
    %95 = vector.broadcast %cst_41 : f32 to vector<8x8xf32>
    %96 = arith.select %94, %95, %92 : vector<8x8xi1>, vector<8x8xf32>
    %cst_42 = arith.constant dense<0xFF800000> : vector<8xf32>
    %97 = vector.multi_reduction <maximumf>, %96, %cst_42 [1] : vector<8x8xf32> to vector<8xf32>
    %98 = vector.shape_cast %97 : vector<8xf32> to vector<8x1xf32>
    %99 = vector.broadcast %98 : vector<8x1xf32> to vector<8x8xf32>
    %100 = arith.subf %96, %99 : vector<8x8xf32>
    %101 = math.exp %100 : vector<8x8xf32>
    %cst_43 = arith.constant dense<0.000000e+00> : vector<8xf32>
    %102 = vector.multi_reduction <add>, %101, %cst_43 [1] : vector<8x8xf32> to vector<8xf32>
    %103 = vector.shape_cast %102 : vector<8xf32> to vector<8x1xf32>
    %104 = tpu.reciprocal %103 {approx = true} : vector<8x1xf32> -> vector<8x1xf32>
    %105 = vector.broadcast %104 : vector<8x1xf32> to vector<8x8xf32>
    %106 = arith.mulf %101, %105 : vector<8x8xf32>
    %107 = arith.truncf %106 : vector<8x8xf32> to vector<8x8xbf16>
    %108 = vector.extract_strided_slice %28 {offsets = [0, 8], sizes = [8, 8], strides = [1, 1]} : vector<8x32xf32> to vector<8x8xf32>
    %109 = arith.truncf %108 : vector<8x8xf32> to vector<8x8xbf16>
    %cst_44 = arith.constant dense<0.000000e+00> : vector<8x8xf32>
    %110 = tpu.matmul %107, %109, %cst_44 {dimension_numbers = #tpu.dot_dimension_numbers<[1], [0], [0], [1], [0, 0, 1, 1], [], []>} : vector<8x8xbf16>, vector<8x8xbf16>, vector<8x8xf32> -> vector<8x8xf32>
    %111 = vector.extract_strided_slice %20 {offsets = [0, 16], sizes = [8, 8], strides = [1, 1]} : vector<8x32xf32> to vector<8x8xf32>
    %112 = arith.mulf %111, %111 : vector<8x8xf32>
    %cst_45 = arith.constant dense<0.000000e+00> : vector<8xf32>
    %113 = vector.multi_reduction <add>, %112, %cst_45 [1] : vector<8x8xf32> to vector<8xf32>
    %114 = vector.shape_cast %113 : vector<8xf32> to vector<8x1xf32>
    %cst_46 = arith.constant 1.000000e-24 : f32
    %115 = vector.broadcast %cst_46 : f32 to vector<8x1xf32>
    %116 = arith.maximumf %114, %115 : vector<8x1xf32>
    %117 = math.rsqrt %116 : vector<8x1xf32>
    %118 = vector.broadcast %117 : vector<8x1xf32> to vector<8x8xf32>
    %119 = arith.mulf %111, %118 : vector<8x8xf32>
    %120 = vector.broadcast %9 : vector<1x1xf32> to vector<8x8xf32>
    %121 = arith.mulf %119, %120 : vector<8x8xf32>
    %122 = vector.extract_strided_slice %27 {offsets = [0, 16], sizes = [8, 8], strides = [1, 1]} : vector<8x32xf32> to vector<8x8xf32>
    %123 = arith.mulf %122, %122 : vector<8x8xf32>
    %cst_47 = arith.constant dense<0.000000e+00> : vector<8xf32>
    %124 = vector.multi_reduction <add>, %123, %cst_47 [1] : vector<8x8xf32> to vector<8xf32>
    %125 = vector.shape_cast %124 : vector<8xf32> to vector<8x1xf32>
    %cst_48 = arith.constant 1.000000e-24 : f32
    %126 = vector.broadcast %cst_48 : f32 to vector<8x1xf32>
    %127 = arith.maximumf %125, %126 : vector<8x1xf32>
    %128 = math.rsqrt %127 : vector<8x1xf32>
    %129 = vector.broadcast %128 : vector<8x1xf32> to vector<8x8xf32>
    %130 = arith.mulf %122, %129 : vector<8x8xf32>
    %131 = arith.truncf %121 : vector<8x8xf32> to vector<8x8xbf16>
    %132 = arith.truncf %130 : vector<8x8xf32> to vector<8x8xbf16>
    %cst_49 = arith.constant dense<0.000000e+00> : vector<8x8xf32>
    %133 = tpu.matmul %131, %132, %cst_49 {dimension_numbers = #tpu.dot_dimension_numbers<[1], [1], [0], [0], [0, 0, 1, 0], [], []>} : vector<8x8xbf16>, vector<8x8xbf16>, vector<8x8xf32> -> vector<8x8xf32>
    %cst_50 = arith.constant 0.000000e+00 : f32
    %134 = vector.broadcast %cst_50 : f32 to vector<8x8xf32>
    %135 = arith.cmpf oeq, %5, %134 : vector<8x8xf32>
    %cst_51 = arith.constant -9.99999984E+17 : f32
    %136 = vector.broadcast %cst_51 : f32 to vector<8x8xf32>
    %137 = arith.select %135, %136, %133 : vector<8x8xi1>, vector<8x8xf32>
    %cst_52 = arith.constant dense<0xFF800000> : vector<8xf32>
    %138 = vector.multi_reduction <maximumf>, %137, %cst_52 [1] : vector<8x8xf32> to vector<8xf32>
    %139 = vector.shape_cast %138 : vector<8xf32> to vector<8x1xf32>
    %140 = vector.broadcast %139 : vector<8x1xf32> to vector<8x8xf32>
    %141 = arith.subf %137, %140 : vector<8x8xf32>
    %142 = math.exp %141 : vector<8x8xf32>
    %cst_53 = arith.constant dense<0.000000e+00> : vector<8xf32>
    %143 = vector.multi_reduction <add>, %142, %cst_53 [1] : vector<8x8xf32> to vector<8xf32>
    %144 = vector.shape_cast %143 : vector<8xf32> to vector<8x1xf32>
    %145 = tpu.reciprocal %144 {approx = true} : vector<8x1xf32> -> vector<8x1xf32>
    %146 = vector.broadcast %145 : vector<8x1xf32> to vector<8x8xf32>
    %147 = arith.mulf %142, %146 : vector<8x8xf32>
    %148 = arith.truncf %147 : vector<8x8xf32> to vector<8x8xbf16>
    %149 = vector.extract_strided_slice %28 {offsets = [0, 16], sizes = [8, 8], strides = [1, 1]} : vector<8x32xf32> to vector<8x8xf32>
    %150 = arith.truncf %149 : vector<8x8xf32> to vector<8x8xbf16>
    %cst_54 = arith.constant dense<0.000000e+00> : vector<8x8xf32>
    %151 = tpu.matmul %148, %150, %cst_54 {dimension_numbers = #tpu.dot_dimension_numbers<[1], [0], [0], [1], [0, 0, 1, 1], [], []>} : vector<8x8xbf16>, vector<8x8xbf16>, vector<8x8xf32> -> vector<8x8xf32>
    %152 = vector.extract_strided_slice %20 {offsets = [0, 24], sizes = [8, 8], strides = [1, 1]} : vector<8x32xf32> to vector<8x8xf32>
    %153 = arith.mulf %152, %152 : vector<8x8xf32>
    %cst_55 = arith.constant dense<0.000000e+00> : vector<8xf32>
    %154 = vector.multi_reduction <add>, %153, %cst_55 [1] : vector<8x8xf32> to vector<8xf32>
    %155 = vector.shape_cast %154 : vector<8xf32> to vector<8x1xf32>
    %cst_56 = arith.constant 1.000000e-24 : f32
    %156 = vector.broadcast %cst_56 : f32 to vector<8x1xf32>
    %157 = arith.maximumf %155, %156 : vector<8x1xf32>
    %158 = math.rsqrt %157 : vector<8x1xf32>
    %159 = vector.broadcast %158 : vector<8x1xf32> to vector<8x8xf32>
    %160 = arith.mulf %152, %159 : vector<8x8xf32>
    %161 = vector.broadcast %9 : vector<1x1xf32> to vector<8x8xf32>
    %162 = arith.mulf %160, %161 : vector<8x8xf32>
    %163 = vector.extract_strided_slice %27 {offsets = [0, 24], sizes = [8, 8], strides = [1, 1]} : vector<8x32xf32> to vector<8x8xf32>
    %164 = arith.mulf %163, %163 : vector<8x8xf32>
    %cst_57 = arith.constant dense<0.000000e+00> : vector<8xf32>
    %165 = vector.multi_reduction <add>, %164, %cst_57 [1] : vector<8x8xf32> to vector<8xf32>
    %166 = vector.shape_cast %165 : vector<8xf32> to vector<8x1xf32>
    %cst_58 = arith.constant 1.000000e-24 : f32
    %167 = vector.broadcast %cst_58 : f32 to vector<8x1xf32>
    %168 = arith.maximumf %166, %167 : vector<8x1xf32>
    %169 = math.rsqrt %168 : vector<8x1xf32>
    %170 = vector.broadcast %169 : vector<8x1xf32> to vector<8x8xf32>
    %171 = arith.mulf %163, %170 : vector<8x8xf32>
    %172 = arith.truncf %162 : vector<8x8xf32> to vector<8x8xbf16>
    %173 = arith.truncf %171 : vector<8x8xf32> to vector<8x8xbf16>
    %cst_59 = arith.constant dense<0.000000e+00> : vector<8x8xf32>
    %174 = tpu.matmul %172, %173, %cst_59 {dimension_numbers = #tpu.dot_dimension_numbers<[1], [1], [0], [0], [0, 0, 1, 0], [], []>} : vector<8x8xbf16>, vector<8x8xbf16>, vector<8x8xf32> -> vector<8x8xf32>
    %cst_60 = arith.constant 0.000000e+00 : f32
    %175 = vector.broadcast %cst_60 : f32 to vector<8x8xf32>
    %176 = arith.cmpf oeq, %5, %175 : vector<8x8xf32>
    %cst_61 = arith.constant -9.99999984E+17 : f32
    %177 = vector.broadcast %cst_61 : f32 to vector<8x8xf32>
    %178 = arith.select %176, %177, %174 : vector<8x8xi1>, vector<8x8xf32>
    %cst_62 = arith.constant dense<0xFF800000> : vector<8xf32>
    %179 = vector.multi_reduction <maximumf>, %178, %cst_62 [1] : vector<8x8xf32> to vector<8xf32>
    %180 = vector.shape_cast %179 : vector<8xf32> to vector<8x1xf32>
    %181 = vector.broadcast %180 : vector<8x1xf32> to vector<8x8xf32>
    %182 = arith.subf %178, %181 : vector<8x8xf32>
    %183 = math.exp %182 : vector<8x8xf32>
    %cst_63 = arith.constant dense<0.000000e+00> : vector<8xf32>
    %184 = vector.multi_reduction <add>, %183, %cst_63 [1] : vector<8x8xf32> to vector<8xf32>
    %185 = vector.shape_cast %184 : vector<8xf32> to vector<8x1xf32>
    %186 = tpu.reciprocal %185 {approx = true} : vector<8x1xf32> -> vector<8x1xf32>
    %187 = vector.broadcast %186 : vector<8x1xf32> to vector<8x8xf32>
    %188 = arith.mulf %183, %187 : vector<8x8xf32>
    %189 = arith.truncf %188 : vector<8x8xf32> to vector<8x8xbf16>
    %190 = vector.extract_strided_slice %28 {offsets = [0, 24], sizes = [8, 8], strides = [1, 1]} : vector<8x32xf32> to vector<8x8xf32>
    %191 = arith.truncf %190 : vector<8x8xf32> to vector<8x8xbf16>
    %cst_64 = arith.constant dense<0.000000e+00> : vector<8x8xf32>
    %192 = tpu.matmul %189, %191, %cst_64 {dimension_numbers = #tpu.dot_dimension_numbers<[1], [0], [0], [1], [0, 0, 1, 1], [], []>} : vector<8x8xbf16>, vector<8x8xbf16>, vector<8x8xf32> -> vector<8x8xf32>
    %193 = tpu.concatenate %69, %110, %151, %192 in 1 : vector<8x8xf32>, vector<8x8xf32>, vector<8x8xf32>, vector<8x8xf32> -> vector<8x32xf32>
    %194 = arith.truncf %193 : vector<8x32xf32> to vector<8x32xbf16>
    %cst_65 = arith.constant dense<0.000000e+00> : vector<8x32xf32>
    %195 = tpu.matmul %194, %13, %cst_65 {dimension_numbers = #tpu.dot_dimension_numbers<[1], [0], [0], [1], [0, 0, 1, 1], [], []>} : vector<8x32xbf16>, vector<32x32xbf16>, vector<8x32xf32> -> vector<8x32xf32>
    %196 = vector.broadcast %14 : vector<1x32xf32> to vector<8x32xf32>
    %197 = arith.addf %195, %196 : vector<8x32xf32>
    %198 = arith.addf %197, %1 : vector<8x32xf32>
    %199 = vector.extract_strided_slice %8 {offsets = [0, 0], sizes = [1, 32], strides = [1, 1]} : vector<6x32xf32> to vector<1x32xf32>
    %200 = vector.extract_strided_slice %8 {offsets = [1, 0], sizes = [1, 32], strides = [1, 1]} : vector<6x32xf32> to vector<1x32xf32>
    %cst_66 = arith.constant dense<0.000000e+00> : vector<8xf32>
    %201 = vector.multi_reduction <add>, %198, %cst_66 [1] : vector<8x32xf32> to vector<8xf32>
    %202 = vector.shape_cast %201 : vector<8xf32> to vector<8x1xf32>
    %cst_67 = arith.constant 3.200000e+01 : f32
    %203 = vector.broadcast %cst_67 : f32 to vector<8x1xf32>
    %204 = arith.divf %202, %203 : vector<8x1xf32>
    %205 = vector.broadcast %204 : vector<8x1xf32> to vector<8x32xf32>
    %206 = arith.subf %198, %205 : vector<8x32xf32>
    %207 = arith.mulf %206, %206 : vector<8x32xf32>
    %cst_68 = arith.constant dense<0.000000e+00> : vector<8xf32>
    %208 = vector.multi_reduction <add>, %207, %cst_68 [1] : vector<8x32xf32> to vector<8xf32>
    %209 = vector.shape_cast %208 : vector<8xf32> to vector<8x1xf32>
    %cst_69 = arith.constant 3.200000e+01 : f32
    %210 = vector.broadcast %cst_69 : f32 to vector<8x1xf32>
    %211 = arith.divf %209, %210 : vector<8x1xf32>
    %212 = vector.broadcast %204 : vector<8x1xf32> to vector<8x32xf32>
    %213 = arith.subf %198, %212 : vector<8x32xf32>
    %cst_70 = arith.constant 9.99999974E-6 : f32
    %214 = vector.broadcast %cst_70 : f32 to vector<8x1xf32>
    %215 = arith.addf %211, %214 : vector<8x1xf32>
    %216 = math.rsqrt %215 : vector<8x1xf32>
    %217 = vector.broadcast %216 : vector<8x1xf32> to vector<8x32xf32>
    %218 = arith.mulf %213, %217 : vector<8x32xf32>
    %219 = vector.broadcast %199 : vector<1x32xf32> to vector<8x32xf32>
    %220 = arith.mulf %218, %219 : vector<8x32xf32>
    %221 = vector.broadcast %200 : vector<1x32xf32> to vector<8x32xf32>
    %222 = arith.addf %220, %221 : vector<8x32xf32>
    %c0_71 = arith.constant 0 : index
    %c0_72 = arith.constant 0 : index
    %223 = vector.load %arg10[%c0_71, %c0_72] : memref<32x96xbf16, #tpu.memory_space<vmem>>, vector<32x96xbf16>
    %c0_73 = arith.constant 0 : index
    %c0_74 = arith.constant 0 : index
    %224 = vector.load %arg11[%c0_73, %c0_74] : memref<1x96xf32, #tpu.memory_space<vmem>>, vector<1x96xf32>
    %c0_75 = arith.constant 0 : index
    %c0_76 = arith.constant 0 : index
    %225 = vector.load %arg12[%c0_75, %c0_76] : memref<32x32xbf16, #tpu.memory_space<vmem>>, vector<32x32xbf16>
    %c0_77 = arith.constant 0 : index
    %c0_78 = arith.constant 0 : index
    %226 = vector.load %arg13[%c0_77, %c0_78] : memref<1x32xf32, #tpu.memory_space<vmem>>, vector<1x32xf32>
    %227 = arith.truncf %222 : vector<8x32xf32> to vector<8x32xbf16>
    %228 = vector.extract_strided_slice %223 {offsets = [0, 0], sizes = [32, 32], strides = [1, 1]} : vector<32x96xbf16> to vector<32x32xbf16>
    %cst_79 = arith.constant dense<0.000000e+00> : vector<8x32xf32>
    %229 = tpu.matmul %227, %228, %cst_79 {dimension_numbers = #tpu.dot_dimension_numbers<[1], [0], [0], [1], [0, 0, 1, 1], [], []>} : vector<8x32xbf16>, vector<32x32xbf16>, vector<8x32xf32> -> vector<8x32xf32>
    %230 = vector.extract_strided_slice %224 {offsets = [0, 0], sizes = [1, 32], strides = [1, 1]} : vector<1x96xf32> to vector<1x32xf32>
    %231 = vector.broadcast %230 : vector<1x32xf32> to vector<8x32xf32>
    %232 = arith.addf %229, %231 : vector<8x32xf32>
    %233 = arith.truncf %3 : vector<10x32xf32> to vector<10x32xbf16>
    %234 = vector.extract_strided_slice %223 {offsets = [0, 32], sizes = [32, 64], strides = [1, 1]} : vector<32x96xbf16> to vector<32x64xbf16>
    %cst_80 = arith.constant dense<0.000000e+00> : vector<10x64xf32>
    %235 = tpu.matmul %233, %234, %cst_80 {dimension_numbers = #tpu.dot_dimension_numbers<[1], [0], [0], [1], [0, 0, 1, 1], [], []>} : vector<10x32xbf16>, vector<32x64xbf16>, vector<10x64xf32> -> vector<10x64xf32>
    %236 = vector.extract_strided_slice %224 {offsets = [0, 32], sizes = [1, 64], strides = [1, 1]} : vector<1x96xf32> to vector<1x64xf32>
    %237 = vector.broadcast %236 : vector<1x64xf32> to vector<10x64xf32>
    %238 = arith.addf %235, %237 : vector<10x64xf32>
    %239 = vector.extract_strided_slice %238 {offsets = [0, 0], sizes = [10, 32], strides = [1, 1]} : vector<10x64xf32> to vector<10x32xf32>
    %240 = vector.extract_strided_slice %238 {offsets = [0, 32], sizes = [10, 32], strides = [1, 1]} : vector<10x64xf32> to vector<10x32xf32>
    %241 = vector.extract_strided_slice %232 {offsets = [0, 0], sizes = [8, 8], strides = [1, 1]} : vector<8x32xf32> to vector<8x8xf32>
    %242 = arith.mulf %241, %241 : vector<8x8xf32>
    %cst_81 = arith.constant dense<0.000000e+00> : vector<8xf32>
    %243 = vector.multi_reduction <add>, %242, %cst_81 [1] : vector<8x8xf32> to vector<8xf32>
    %244 = vector.shape_cast %243 : vector<8xf32> to vector<8x1xf32>
    %cst_82 = arith.constant 1.000000e-24 : f32
    %245 = vector.broadcast %cst_82 : f32 to vector<8x1xf32>
    %246 = arith.maximumf %244, %245 : vector<8x1xf32>
    %247 = math.rsqrt %246 : vector<8x1xf32>
    %248 = vector.broadcast %247 : vector<8x1xf32> to vector<8x8xf32>
    %249 = arith.mulf %241, %248 : vector<8x8xf32>
    %250 = vector.broadcast %10 : vector<1x1xf32> to vector<8x8xf32>
    %251 = arith.mulf %249, %250 : vector<8x8xf32>
    %252 = vector.extract_strided_slice %239 {offsets = [0, 0], sizes = [10, 8], strides = [1, 1]} : vector<10x32xf32> to vector<10x8xf32>
    %253 = arith.mulf %252, %252 : vector<10x8xf32>
    %cst_83 = arith.constant dense<0.000000e+00> : vector<10xf32>
    %254 = vector.multi_reduction <add>, %253, %cst_83 [1] : vector<10x8xf32> to vector<10xf32>
    %255 = vector.shape_cast %254 : vector<10xf32> to vector<10x1xf32>
    %cst_84 = arith.constant 1.000000e-24 : f32
    %256 = vector.broadcast %cst_84 : f32 to vector<10x1xf32>
    %257 = arith.maximumf %255, %256 : vector<10x1xf32>
    %258 = math.rsqrt %257 : vector<10x1xf32>
    %259 = vector.broadcast %258 : vector<10x1xf32> to vector<10x8xf32>
    %260 = arith.mulf %252, %259 : vector<10x8xf32>
    %261 = arith.truncf %251 : vector<8x8xf32> to vector<8x8xbf16>
    %262 = arith.truncf %260 : vector<10x8xf32> to vector<10x8xbf16>
    %cst_85 = arith.constant dense<0.000000e+00> : vector<8x10xf32>
    %263 = tpu.matmul %261, %262, %cst_85 {dimension_numbers = #tpu.dot_dimension_numbers<[1], [1], [0], [0], [0, 0, 1, 0], [], []>} : vector<8x8xbf16>, vector<10x8xbf16>, vector<8x10xf32> -> vector<8x10xf32>
    %cst_86 = arith.constant 0.000000e+00 : f32
    %264 = vector.broadcast %cst_86 : f32 to vector<8x10xf32>
    %265 = arith.cmpf oeq, %7, %264 : vector<8x10xf32>
    %cst_87 = arith.constant -9.99999984E+17 : f32
    %266 = vector.broadcast %cst_87 : f32 to vector<8x10xf32>
    %267 = arith.select %265, %266, %263 : vector<8x10xi1>, vector<8x10xf32>
    %cst_88 = arith.constant dense<0xFF800000> : vector<8xf32>
    %268 = vector.multi_reduction <maximumf>, %267, %cst_88 [1] : vector<8x10xf32> to vector<8xf32>
    %269 = vector.shape_cast %268 : vector<8xf32> to vector<8x1xf32>
    %270 = vector.broadcast %269 : vector<8x1xf32> to vector<8x10xf32>
    %271 = arith.subf %267, %270 : vector<8x10xf32>
    %272 = math.exp %271 : vector<8x10xf32>
    %cst_89 = arith.constant dense<0.000000e+00> : vector<8xf32>
    %273 = vector.multi_reduction <add>, %272, %cst_89 [1] : vector<8x10xf32> to vector<8xf32>
    %274 = vector.shape_cast %273 : vector<8xf32> to vector<8x1xf32>
    %275 = tpu.reciprocal %274 {approx = true} : vector<8x1xf32> -> vector<8x1xf32>
    %276 = vector.broadcast %275 : vector<8x1xf32> to vector<8x10xf32>
    %277 = arith.mulf %272, %276 : vector<8x10xf32>
    %c0_90 = arith.constant 0 : index
    %c0_91 = arith.constant 0 : index
    %c0_92 = arith.constant 0 : index
    %c0_93 = arith.constant 0 : index
    %278 = vector.load %arg20[%c0_90, %c0_91, %c0_92, %c0_93] : memref<1x4x8x10xf32, #tpu.memory_space<vmem>>, vector<1x1x8x10xf32>
    %279 = vector.shape_cast %278 : vector<1x1x8x10xf32> to vector<8x10xf32>
    %280 = vector.shape_cast %277 : vector<8x10xf32> to vector<1x1x8x10xf32>
    tpu.vector_store %arg20[%c0_90, %c0_91, %c0_92, %c0_93], %280 {strides = array<i32>} : memref<1x4x8x10xf32, #tpu.memory_space<vmem>>, vector<1x1x8x10xf32>,
    %281 = arith.truncf %277 : vector<8x10xf32> to vector<8x10xbf16>
    %282 = vector.extract_strided_slice %240 {offsets = [0, 0], sizes = [10, 8], strides = [1, 1]} : vector<10x32xf32> to vector<10x8xf32>
    %283 = arith.truncf %282 : vector<10x8xf32> to vector<10x8xbf16>
    %cst_94 = arith.constant dense<0.000000e+00> : vector<8x8xf32>
    %284 = tpu.matmul %281, %283, %cst_94 {dimension_numbers = #tpu.dot_dimension_numbers<[1], [0], [0], [1], [0, 0, 1, 1], [], []>} : vector<8x10xbf16>, vector<10x8xbf16>, vector<8x8xf32> -> vector<8x8xf32>
    %285 = vector.extract_strided_slice %232 {offsets = [0, 8], sizes = [8, 8], strides = [1, 1]} : vector<8x32xf32> to vector<8x8xf32>
    %286 = arith.mulf %285, %285 : vector<8x8xf32>
    %cst_95 = arith.constant dense<0.000000e+00> : vector<8xf32>
    %287 = vector.multi_reduction <add>, %286, %cst_95 [1] : vector<8x8xf32> to vector<8xf32>
    %288 = vector.shape_cast %287 : vector<8xf32> to vector<8x1xf32>
    %cst_96 = arith.constant 1.000000e-24 : f32
    %289 = vector.broadcast %cst_96 : f32 to vector<8x1xf32>
    %290 = arith.maximumf %288, %289 : vector<8x1xf32>
    %291 = math.rsqrt %290 : vector<8x1xf32>
    %292 = vector.broadcast %291 : vector<8x1xf32> to vector<8x8xf32>
    %293 = arith.mulf %285, %292 : vector<8x8xf32>
    %294 = vector.broadcast %10 : vector<1x1xf32> to vector<8x8xf32>
    %295 = arith.mulf %293, %294 : vector<8x8xf32>
    %296 = vector.extract_strided_slice %239 {offsets = [0, 8], sizes = [10, 8], strides = [1, 1]} : vector<10x32xf32> to vector<10x8xf32>
    %297 = arith.mulf %296, %296 : vector<10x8xf32>
    %cst_97 = arith.constant dense<0.000000e+00> : vector<10xf32>
    %298 = vector.multi_reduction <add>, %297, %cst_97 [1] : vector<10x8xf32> to vector<10xf32>
    %299 = vector.shape_cast %298 : vector<10xf32> to vector<10x1xf32>
    %cst_98 = arith.constant 1.000000e-24 : f32
    %300 = vector.broadcast %cst_98 : f32 to vector<10x1xf32>
    %301 = arith.maximumf %299, %300 : vector<10x1xf32>
    %302 = math.rsqrt %301 : vector<10x1xf32>
    %303 = vector.broadcast %302 : vector<10x1xf32> to vector<10x8xf32>
    %304 = arith.mulf %296, %303 : vector<10x8xf32>
    %305 = arith.truncf %295 : vector<8x8xf32> to vector<8x8xbf16>
    %306 = arith.truncf %304 : vector<10x8xf32> to vector<10x8xbf16>
    %cst_99 = arith.constant dense<0.000000e+00> : vector<8x10xf32>
    %307 = tpu.matmul %305, %306, %cst_99 {dimension_numbers = #tpu.dot_dimension_numbers<[1], [1], [0], [0], [0, 0, 1, 0], [], []>} : vector<8x8xbf16>, vector<10x8xbf16>, vector<8x10xf32> -> vector<8x10xf32>
    %cst_100 = arith.constant 0.000000e+00 : f32
    %308 = vector.broadcast %cst_100 : f32 to vector<8x10xf32>
    %309 = arith.cmpf oeq, %7, %308 : vector<8x10xf32>
    %cst_101 = arith.constant -9.99999984E+17 : f32
    %310 = vector.broadcast %cst_101 : f32 to vector<8x10xf32>
    %311 = arith.select %309, %310, %307 : vector<8x10xi1>, vector<8x10xf32>
    %cst_102 = arith.constant dense<0xFF800000> : vector<8xf32>
    %312 = vector.multi_reduction <maximumf>, %311, %cst_102 [1] : vector<8x10xf32> to vector<8xf32>
    %313 = vector.shape_cast %312 : vector<8xf32> to vector<8x1xf32>
    %314 = vector.broadcast %313 : vector<8x1xf32> to vector<8x10xf32>
    %315 = arith.subf %311, %314 : vector<8x10xf32>
    %316 = math.exp %315 : vector<8x10xf32>
    %cst_103 = arith.constant dense<0.000000e+00> : vector<8xf32>
    %317 = vector.multi_reduction <add>, %316, %cst_103 [1] : vector<8x10xf32> to vector<8xf32>
    %318 = vector.shape_cast %317 : vector<8xf32> to vector<8x1xf32>
    %319 = tpu.reciprocal %318 {approx = true} : vector<8x1xf32> -> vector<8x1xf32>
    %320 = vector.broadcast %319 : vector<8x1xf32> to vector<8x10xf32>
    %321 = arith.mulf %316, %320 : vector<8x10xf32>
    %c0_104 = arith.constant 0 : index
    %c1_105 = arith.constant 1 : index
    %c0_106 = arith.constant 0 : index
    %c0_107 = arith.constant 0 : index
    %322 = vector.load %arg20[%c0_104, %c1_105, %c0_106, %c0_107] : memref<1x4x8x10xf32, #tpu.memory_space<vmem>>, vector<1x1x8x10xf32>
    %323 = vector.shape_cast %322 : vector<1x1x8x10xf32> to vector<8x10xf32>
    %324 = vector.shape_cast %321 : vector<8x10xf32> to vector<1x1x8x10xf32>
    tpu.vector_store %arg20[%c0_104, %c1_105, %c0_106, %c0_107], %324 {strides = array<i32>} : memref<1x4x8x10xf32, #tpu.memory_space<vmem>>, vector<1x1x8x10xf32>,
    %325 = arith.truncf %321 : vector<8x10xf32> to vector<8x10xbf16>
    %326 = vector.extract_strided_slice %240 {offsets = [0, 8], sizes = [10, 8], strides = [1, 1]} : vector<10x32xf32> to vector<10x8xf32>
    %327 = arith.truncf %326 : vector<10x8xf32> to vector<10x8xbf16>
    %cst_108 = arith.constant dense<0.000000e+00> : vector<8x8xf32>
    %328 = tpu.matmul %325, %327, %cst_108 {dimension_numbers = #tpu.dot_dimension_numbers<[1], [0], [0], [1], [0, 0, 1, 1], [], []>} : vector<8x10xbf16>, vector<10x8xbf16>, vector<8x8xf32> -> vector<8x8xf32>
    %329 = vector.extract_strided_slice %232 {offsets = [0, 16], sizes = [8, 8], strides = [1, 1]} : vector<8x32xf32> to vector<8x8xf32>
    %330 = arith.mulf %329, %329 : vector<8x8xf32>
    %cst_109 = arith.constant dense<0.000000e+00> : vector<8xf32>
    %331 = vector.multi_reduction <add>, %330, %cst_109 [1] : vector<8x8xf32> to vector<8xf32>
    %332 = vector.shape_cast %331 : vector<8xf32> to vector<8x1xf32>
    %cst_110 = arith.constant 1.000000e-24 : f32
    %333 = vector.broadcast %cst_110 : f32 to vector<8x1xf32>
    %334 = arith.maximumf %332, %333 : vector<8x1xf32>
    %335 = math.rsqrt %334 : vector<8x1xf32>
    %336 = vector.broadcast %335 : vector<8x1xf32> to vector<8x8xf32>
    %337 = arith.mulf %329, %336 : vector<8x8xf32>
    %338 = vector.broadcast %10 : vector<1x1xf32> to vector<8x8xf32>
    %339 = arith.mulf %337, %338 : vector<8x8xf32>
    %340 = vector.extract_strided_slice %239 {offsets = [0, 16], sizes = [10, 8], strides = [1, 1]} : vector<10x32xf32> to vector<10x8xf32>
    %341 = arith.mulf %340, %340 : vector<10x8xf32>
    %cst_111 = arith.constant dense<0.000000e+00> : vector<10xf32>
    %342 = vector.multi_reduction <add>, %341, %cst_111 [1] : vector<10x8xf32> to vector<10xf32>
    %343 = vector.shape_cast %342 : vector<10xf32> to vector<10x1xf32>
    %cst_112 = arith.constant 1.000000e-24 : f32
    %344 = vector.broadcast %cst_112 : f32 to vector<10x1xf32>
    %345 = arith.maximumf %343, %344 : vector<10x1xf32>
    %346 = math.rsqrt %345 : vector<10x1xf32>
    %347 = vector.broadcast %346 : vector<10x1xf32> to vector<10x8xf32>
    %348 = arith.mulf %340, %347 : vector<10x8xf32>
    %349 = arith.truncf %339 : vector<8x8xf32> to vector<8x8xbf16>
    %350 = arith.truncf %348 : vector<10x8xf32> to vector<10x8xbf16>
    %cst_113 = arith.constant dense<0.000000e+00> : vector<8x10xf32>
    %351 = tpu.matmul %349, %350, %cst_113 {dimension_numbers = #tpu.dot_dimension_numbers<[1], [1], [0], [0], [0, 0, 1, 0], [], []>} : vector<8x8xbf16>, vector<10x8xbf16>, vector<8x10xf32> -> vector<8x10xf32>
    %cst_114 = arith.constant 0.000000e+00 : f32
    %352 = vector.broadcast %cst_114 : f32 to vector<8x10xf32>
    %353 = arith.cmpf oeq, %7, %352 : vector<8x10xf32>
    %cst_115 = arith.constant -9.99999984E+17 : f32
    %354 = vector.broadcast %cst_115 : f32 to vector<8x10xf32>
    %355 = arith.select %353, %354, %351 : vector<8x10xi1>, vector<8x10xf32>
    %cst_116 = arith.constant dense<0xFF800000> : vector<8xf32>
    %356 = vector.multi_reduction <maximumf>, %355, %cst_116 [1] : vector<8x10xf32> to vector<8xf32>
    %357 = vector.shape_cast %356 : vector<8xf32> to vector<8x1xf32>
    %358 = vector.broadcast %357 : vector<8x1xf32> to vector<8x10xf32>
    %359 = arith.subf %355, %358 : vector<8x10xf32>
    %360 = math.exp %359 : vector<8x10xf32>
    %cst_117 = arith.constant dense<0.000000e+00> : vector<8xf32>
    %361 = vector.multi_reduction <add>, %360, %cst_117 [1] : vector<8x10xf32> to vector<8xf32>
    %362 = vector.shape_cast %361 : vector<8xf32> to vector<8x1xf32>
    %363 = tpu.reciprocal %362 {approx = true} : vector<8x1xf32> -> vector<8x1xf32>
    %364 = vector.broadcast %363 : vector<8x1xf32> to vector<8x10xf32>
    %365 = arith.mulf %360, %364 : vector<8x10xf32>
    %c0_118 = arith.constant 0 : index
    %c2 = arith.constant 2 : index
    %c0_119 = arith.constant 0 : index
    %c0_120 = arith.constant 0 : index
    %366 = vector.load %arg20[%c0_118, %c2, %c0_119, %c0_120] : memref<1x4x8x10xf32, #tpu.memory_space<vmem>>, vector<1x1x8x10xf32>
    %367 = vector.shape_cast %366 : vector<1x1x8x10xf32> to vector<8x10xf32>
    %368 = vector.shape_cast %365 : vector<8x10xf32> to vector<1x1x8x10xf32>
    tpu.vector_store %arg20[%c0_118, %c2, %c0_119, %c0_120], %368 {strides = array<i32>} : memref<1x4x8x10xf32, #tpu.memory_space<vmem>>, vector<1x1x8x10xf32>,
    %369 = arith.truncf %365 : vector<8x10xf32> to vector<8x10xbf16>
    %370 = vector.extract_strided_slice %240 {offsets = [0, 16], sizes = [10, 8], strides = [1, 1]} : vector<10x32xf32> to vector<10x8xf32>
    %371 = arith.truncf %370 : vector<10x8xf32> to vector<10x8xbf16>
    %cst_121 = arith.constant dense<0.000000e+00> : vector<8x8xf32>
    %372 = tpu.matmul %369, %371, %cst_121 {dimension_numbers = #tpu.dot_dimension_numbers<[1], [0], [0], [1], [0, 0, 1, 1], [], []>} : vector<8x10xbf16>, vector<10x8xbf16>, vector<8x8xf32> -> vector<8x8xf32>
    %373 = vector.extract_strided_slice %232 {offsets = [0, 24], sizes = [8, 8], strides = [1, 1]} : vector<8x32xf32> to vector<8x8xf32>
    %374 = arith.mulf %373, %373 : vector<8x8xf32>
    %cst_122 = arith.constant dense<0.000000e+00> : vector<8xf32>
    %375 = vector.multi_reduction <add>, %374, %cst_122 [1] : vector<8x8xf32> to vector<8xf32>
    %376 = vector.shape_cast %375 : vector<8xf32> to vector<8x1xf32>
    %cst_123 = arith.constant 1.000000e-24 : f32
    %377 = vector.broadcast %cst_123 : f32 to vector<8x1xf32>
    %378 = arith.maximumf %376, %377 : vector<8x1xf32>
    %379 = math.rsqrt %378 : vector<8x1xf32>
    %380 = vector.broadcast %379 : vector<8x1xf32> to vector<8x8xf32>
    %381 = arith.mulf %373, %380 : vector<8x8xf32>
    %382 = vector.broadcast %10 : vector<1x1xf32> to vector<8x8xf32>
    %383 = arith.mulf %381, %382 : vector<8x8xf32>
    %384 = vector.extract_strided_slice %239 {offsets = [0, 24], sizes = [10, 8], strides = [1, 1]} : vector<10x32xf32> to vector<10x8xf32>
    %385 = arith.mulf %384, %384 : vector<10x8xf32>
    %cst_124 = arith.constant dense<0.000000e+00> : vector<10xf32>
    %386 = vector.multi_reduction <add>, %385, %cst_124 [1] : vector<10x8xf32> to vector<10xf32>
    %387 = vector.shape_cast %386 : vector<10xf32> to vector<10x1xf32>
    %cst_125 = arith.constant 1.000000e-24 : f32
    %388 = vector.broadcast %cst_125 : f32 to vector<10x1xf32>
    %389 = arith.maximumf %387, %388 : vector<10x1xf32>
    %390 = math.rsqrt %389 : vector<10x1xf32>
    %391 = vector.broadcast %390 : vector<10x1xf32> to vector<10x8xf32>
    %392 = arith.mulf %384, %391 : vector<10x8xf32>
    %393 = arith.truncf %383 : vector<8x8xf32> to vector<8x8xbf16>
    %394 = arith.truncf %392 : vector<10x8xf32> to vector<10x8xbf16>
    %cst_126 = arith.constant dense<0.000000e+00> : vector<8x10xf32>
    %395 = tpu.matmul %393, %394, %cst_126 {dimension_numbers = #tpu.dot_dimension_numbers<[1], [1], [0], [0], [0, 0, 1, 0], [], []>} : vector<8x8xbf16>, vector<10x8xbf16>, vector<8x10xf32> -> vector<8x10xf32>
    %cst_127 = arith.constant 0.000000e+00 : f32
    %396 = vector.broadcast %cst_127 : f32 to vector<8x10xf32>
    %397 = arith.cmpf oeq, %7, %396 : vector<8x10xf32>
    %cst_128 = arith.constant -9.99999984E+17 : f32
    %398 = vector.broadcast %cst_128 : f32 to vector<8x10xf32>
    %399 = arith.select %397, %398, %395 : vector<8x10xi1>, vector<8x10xf32>
    %cst_129 = arith.constant dense<0xFF800000> : vector<8xf32>
    %400 = vector.multi_reduction <maximumf>, %399, %cst_129 [1] : vector<8x10xf32> to vector<8xf32>
    %401 = vector.shape_cast %400 : vector<8xf32> to vector<8x1xf32>
    %402 = vector.broadcast %401 : vector<8x1xf32> to vector<8x10xf32>
    %403 = arith.subf %399, %402 : vector<8x10xf32>
    %404 = math.exp %403 : vector<8x10xf32>
    %cst_130 = arith.constant dense<0.000000e+00> : vector<8xf32>
    %405 = vector.multi_reduction <add>, %404, %cst_130 [1] : vector<8x10xf32> to vector<8xf32>
    %406 = vector.shape_cast %405 : vector<8xf32> to vector<8x1xf32>
    %407 = tpu.reciprocal %406 {approx = true} : vector<8x1xf32> -> vector<8x1xf32>
    %408 = vector.broadcast %407 : vector<8x1xf32> to vector<8x10xf32>
    %409 = arith.mulf %404, %408 : vector<8x10xf32>
    %c0_131 = arith.constant 0 : index
    %c3 = arith.constant 3 : index
    %c0_132 = arith.constant 0 : index
    %c0_133 = arith.constant 0 : index
    %410 = vector.load %arg20[%c0_131, %c3, %c0_132, %c0_133] : memref<1x4x8x10xf32, #tpu.memory_space<vmem>>, vector<1x1x8x10xf32>
    %411 = vector.shape_cast %410 : vector<1x1x8x10xf32> to vector<8x10xf32>
    %412 = vector.shape_cast %409 : vector<8x10xf32> to vector<1x1x8x10xf32>
    tpu.vector_store %arg20[%c0_131, %c3, %c0_132, %c0_133], %412 {strides = array<i32>} : memref<1x4x8x10xf32, #tpu.memory_space<vmem>>, vector<1x1x8x10xf32>,
    %413 = arith.truncf %409 : vector<8x10xf32> to vector<8x10xbf16>
    %414 = vector.extract_strided_slice %240 {offsets = [0, 24], sizes = [10, 8], strides = [1, 1]} : vector<10x32xf32> to vector<10x8xf32>
    %415 = arith.truncf %414 : vector<10x8xf32> to vector<10x8xbf16>
    %cst_134 = arith.constant dense<0.000000e+00> : vector<8x8xf32>
    %416 = tpu.matmul %413, %415, %cst_134 {dimension_numbers = #tpu.dot_dimension_numbers<[1], [0], [0], [1], [0, 0, 1, 1], [], []>} : vector<8x10xbf16>, vector<10x8xbf16>, vector<8x8xf32> -> vector<8x8xf32>
    %417 = tpu.concatenate %284, %328, %372, %416 in 1 : vector<8x8xf32>, vector<8x8xf32>, vector<8x8xf32>, vector<8x8xf32> -> vector<8x32xf32>
    %418 = arith.truncf %417 : vector<8x32xf32> to vector<8x32xbf16>
    %cst_135 = arith.constant dense<0.000000e+00> : vector<8x32xf32>
    %419 = tpu.matmul %418, %225, %cst_135 {dimension_numbers = #tpu.dot_dimension_numbers<[1], [0], [0], [1], [0, 0, 1, 1], [], []>} : vector<8x32xbf16>, vector<32x32xbf16>, vector<8x32xf32> -> vector<8x32xf32>
    %420 = vector.broadcast %226 : vector<1x32xf32> to vector<8x32xf32>
    %421 = arith.addf %419, %420 : vector<8x32xf32>
    %422 = arith.addf %421, %222 : vector<8x32xf32>
    %423 = vector.extract_strided_slice %8 {offsets = [2, 0], sizes = [1, 32], strides = [1, 1]} : vector<6x32xf32> to vector<1x32xf32>
    %424 = vector.extract_strided_slice %8 {offsets = [3, 0], sizes = [1, 32], strides = [1, 1]} : vector<6x32xf32> to vector<1x32xf32>
    %cst_136 = arith.constant dense<0.000000e+00> : vector<8xf32>
    %425 = vector.multi_reduction <add>, %422, %cst_136 [1] : vector<8x32xf32> to vector<8xf32>
    %426 = vector.shape_cast %425 : vector<8xf32> to vector<8x1xf32>
    %cst_137 = arith.constant 3.200000e+01 : f32
    %427 = vector.broadcast %cst_137 : f32 to vector<8x1xf32>
    %428 = arith.divf %426, %427 : vector<8x1xf32>
    %429 = vector.broadcast %428 : vector<8x1xf32> to vector<8x32xf32>
    %430 = arith.subf %422, %429 : vector<8x32xf32>
    %431 = arith.mulf %430, %430 : vector<8x32xf32>
    %cst_138 = arith.constant dense<0.000000e+00> : vector<8xf32>
    %432 = vector.multi_reduction <add>, %431, %cst_138 [1] : vector<8x32xf32> to vector<8xf32>
    %433 = vector.shape_cast %432 : vector<8xf32> to vector<8x1xf32>
    %cst_139 = arith.constant 3.200000e+01 : f32
    %434 = vector.broadcast %cst_139 : f32 to vector<8x1xf32>
    %435 = arith.divf %433, %434 : vector<8x1xf32>
    %436 = vector.broadcast %428 : vector<8x1xf32> to vector<8x32xf32>
    %437 = arith.subf %422, %436 : vector<8x32xf32>
    %cst_140 = arith.constant 9.99999974E-6 : f32
    %438 = vector.broadcast %cst_140 : f32 to vector<8x1xf32>
    %439 = arith.addf %435, %438 : vector<8x1xf32>
    %440 = math.rsqrt %439 : vector<8x1xf32>
    %441 = vector.broadcast %440 : vector<8x1xf32> to vector<8x32xf32>
    %442 = arith.mulf %437, %441 : vector<8x32xf32>
    %443 = vector.broadcast %423 : vector<1x32xf32> to vector<8x32xf32>
    %444 = arith.mulf %442, %443 : vector<8x32xf32>
    %445 = vector.broadcast %424 : vector<1x32xf32> to vector<8x32xf32>
    %446 = arith.addf %444, %445 : vector<8x32xf32>
    %447 = arith.truncf %446 : vector<8x32xf32> to vector<8x32xbf16>
    %c0_141 = arith.constant 0 : index
    %c0_142 = arith.constant 0 : index
    %448 = vector.load %arg15[%c0_141, %c0_142] : memref<32x64xbf16, #tpu.memory_space<vmem>>, vector<32x64xbf16>
    %cst_143 = arith.constant dense<0.000000e+00> : vector<8x64xf32>
    %449 = tpu.matmul %447, %448, %cst_143 {dimension_numbers = #tpu.dot_dimension_numbers<[1], [0], [0], [1], [0, 0, 1, 1], [], []>} : vector<8x32xbf16>, vector<32x64xbf16>, vector<8x64xf32> -> vector<8x64xf32>
    %c0_144 = arith.constant 0 : index
    %c0_145 = arith.constant 0 : index
    %450 = vector.load %arg16[%c0_144, %c0_145] : memref<1x64xf32, #tpu.memory_space<vmem>>, vector<1x64xf32>
    %451 = vector.broadcast %450 : vector<1x64xf32> to vector<8x64xf32>
    %452 = arith.addf %449, %451 : vector<8x64xf32>
    %cst_146 = arith.constant 0.000000e+00 : f32
    %453 = vector.broadcast %cst_146 : f32 to vector<8x64xf32>
    %454 = arith.maximumf %452, %453 : vector<8x64xf32>
    %455 = arith.truncf %454 : vector<8x64xf32> to vector<8x64xbf16>
    %c0_147 = arith.constant 0 : index
    %c0_148 = arith.constant 0 : index
    %456 = vector.load %arg17[%c0_147, %c0_148] : memref<64x32xbf16, #tpu.memory_space<vmem>>, vector<64x32xbf16>
    %cst_149 = arith.constant dense<0.000000e+00> : vector<8x32xf32>
    %457 = tpu.matmul %455, %456, %cst_149 {dimension_numbers = #tpu.dot_dimension_numbers<[1], [0], [0], [1], [0, 0, 1, 1], [], []>} : vector<8x64xbf16>, vector<64x32xbf16>, vector<8x32xf32> -> vector<8x32xf32>
    %c0_150 = arith.constant 0 : index
    %c0_151 = arith.constant 0 : index
    %458 = vector.load %arg18[%c0_150, %c0_151] : memref<1x32xf32, #tpu.memory_space<vmem>>, vector<1x32xf32>
    %459 = vector.broadcast %458 : vector<1x32xf32> to vector<8x32xf32>
    %460 = arith.addf %457, %459 : vector<8x32xf32>
    %461 = arith.addf %460, %446 : vector<8x32xf32>
    %462 = vector.extract_strided_slice %8 {offsets = [4, 0], sizes = [1, 32], strides = [1, 1]} : vector<6x32xf32> to vector<1x32xf32>
    %463 = vector.extract_strided_slice %8 {offsets = [5, 0], sizes = [1, 32], strides = [1, 1]} : vector<6x32xf32> to vector<1x32xf32>
    %cst_152 = arith.constant dense<0.000000e+00> : vector<8xf32>
    %464 = vector.multi_reduction <add>, %461, %cst_152 [1] : vector<8x32xf32> to vector<8xf32>
    %465 = vector.shape_cast %464 : vector<8xf32> to vector<8x1xf32>
    %cst_153 = arith.constant 3.200000e+01 : f32
    %466 = vector.broadcast %cst_153 : f32 to vector<8x1xf32>
    %467 = arith.divf %465, %466 : vector<8x1xf32>
    %468 = vector.broadcast %467 : vector<8x1xf32> to vector<8x32xf32>
    %469 = arith.subf %461, %468 : vector<8x32xf32>
    %470 = arith.mulf %469, %469 : vector<8x32xf32>
    %cst_154 = arith.constant dense<0.000000e+00> : vector<8xf32>
    %471 = vector.multi_reduction <add>, %470, %cst_154 [1] : vector<8x32xf32> to vector<8xf32>
    %472 = vector.shape_cast %471 : vector<8xf32> to vector<8x1xf32>
    %cst_155 = arith.constant 3.200000e+01 : f32
    %473 = vector.broadcast %cst_155 : f32 to vector<8x1xf32>
    %474 = arith.divf %472, %473 : vector<8x1xf32>
    %475 = vector.broadcast %467 : vector<8x1xf32> to vector<8x32xf32>
    %476 = arith.subf %461, %475 : vector<8x32xf32>
    %cst_156 = arith.constant 9.99999974E-6 : f32
    %477 = vector.broadcast %cst_156 : f32 to vector<8x1xf32>
    %478 = arith.addf %474, %477 : vector<8x1xf32>
    %479 = math.rsqrt %478 : vector<8x1xf32>
    %480 = vector.broadcast %479 : vector<8x1xf32> to vector<8x32xf32>
    %481 = arith.mulf %476, %480 : vector<8x32xf32>
    %482 = vector.broadcast %462 : vector<1x32xf32> to vector<8x32xf32>
    %483 = arith.mulf %481, %482 : vector<8x32xf32>
    %484 = vector.broadcast %463 : vector<1x32xf32> to vector<8x32xf32>
    %485 = arith.addf %483, %484 : vector<8x32xf32>
    %c0_157 = arith.constant 0 : index
    %c0_158 = arith.constant 0 : index
    %c0_159 = arith.constant 0 : index
    %486 = vector.load %arg19[%c0_157, %c0_158, %c0_159] : memref<1x8x32xf32, #tpu.memory_space<vmem>>, vector<1x8x32xf32>
    %487 = vector.shape_cast %486 : vector<1x8x32xf32> to vector<8x32xf32>
    %488 = vector.shape_cast %485 : vector<8x32xf32> to vector<1x8x32xf32>
    tpu.vector_store %arg19[%c0_157, %c0_158, %c0_159], %488 {strides = array<i32>} : memref<1x8x32xf32, #tpu.memory_space<vmem>>, vector<1x8x32xf32>,
    return
  }
  func.func @transform_0(%arg0: i32) -> (i32, i32, i32) {
    %c0_i32 = arith.constant 0 : i32
    %c0_i32_0 = arith.constant 0 : i32
    %c0_i32_1 = arith.constant 0 : i32
    return %arg0, %c0_i32, %c0_i32_0 : i32, i32, i32
  }
  func.func @transform_1(%arg0: i32) -> (i32, i32, i32) {
    %c0_i32 = arith.constant 0 : i32
    %c0_i32_0 = arith.constant 0 : i32
    %c0_i32_1 = arith.constant 0 : i32
    return %arg0, %c0_i32, %c0_i32_0 : i32, i32, i32
  }
  func.func @transform_2(%arg0: i32) -> (i32, i32, i32) {
    %c0_i32 = arith.constant 0 : i32
    %c0_i32_0 = arith.constant 0 : i32
    %c0_i32_1 = arith.constant 0 : i32
    return %arg0, %c0_i32, %c0_i32_0 : i32, i32, i32
  }
  func.func @transform_3(%arg0: i32) -> (i32, i32, i32) {
    %c0_i32 = arith.constant 0 : i32
    %c0_i32_0 = arith.constant 0 : i32
    %c0_i32_1 = arith.constant 0 : i32
    return %arg0, %c0_i32, %c0_i32_0 : i32, i32, i32
  }
  func.func @transform_4(%arg0: i32) -> (i32, i32) {
    %c0_i32 = arith.constant 0 : i32
    %c0_i32_0 = arith.constant 0 : i32
    %c0_i32_1 = arith.constant 0 : i32
    return %c0_i32, %c0_i32_0 : i32, i32
  }
  func.func @transform_5(%arg0: i32) -> (i32, i32) {
    %c0_i32 = arith.constant 0 : i32
    %c0_i32_0 = arith.constant 0 : i32
    %c0_i32_1 = arith.constant 0 : i32
    return %c0_i32, %c0_i32_0 : i32, i32
  }
  func.func @transform_6(%arg0: i32) -> (i32, i32) {
    %c0_i32 = arith.constant 0 : i32
    %c0_i32_0 = arith.constant 0 : i32
    %c0_i32_1 = arith.constant 0 : i32
    return %c0_i32, %c0_i32_0 : i32, i32
  }
  func.func @transform_7(%arg0: i32) -> (i32, i32) {
    %c0_i32 = arith.constant 0 : i32
    %c0_i32_0 = arith.constant 0 : i32
    %c0_i32_1 = arith.constant 0 : i32
    return %c0_i32, %c0_i32_0 : i32, i32
  }
  func.func @transform_8(%arg0: i32) -> (i32, i32) {
    %c0_i32 = arith.constant 0 : i32
    %c0_i32_0 = arith.constant 0 : i32
    %c0_i32_1 = arith.constant 0 : i32
    return %c0_i32, %c0_i32_0 : i32, i32
  }
  func.func @transform_9(%arg0: i32) -> (i32, i32) {
    %c0_i32 = arith.constant 0 : i32
    %c0_i32_0 = arith.constant 0 : i32
    %c0_i32_1 = arith.constant 0 : i32
    return %c0_i32, %c0_i32_0 : i32, i32
  }
  func.func @transform_10(%arg0: i32) -> (i32, i32) {
    %c0_i32 = arith.constant 0 : i32
    %c0_i32_0 = arith.constant 0 : i32
    %c0_i32_1 = arith.constant 0 : i32
    return %c0_i32, %c0_i32_0 : i32, i32
  }
  func.func @transform_11(%arg0: i32) -> (i32, i32) {
    %c0_i32 = arith.constant 0 : i32
    %c0_i32_0 = arith.constant 0 : i32
    %c0_i32_1 = arith.constant 0 : i32
    return %c0_i32, %c0_i32_0 : i32, i32
  }
  func.func @transform_12(%arg0: i32) -> (i32, i32) {
    %c0_i32 = arith.constant 0 : i32
    %c0_i32_0 = arith.constant 0 : i32
    %c0_i32_1 = arith.constant 0 : i32
    return %c0_i32, %c0_i32_0 : i32, i32
  }
  func.func @transform_13(%arg0: i32) -> (i32, i32) {
    %c0_i32 = arith.constant 0 : i32
    %c0_i32_0 = arith.constant 0 : i32
    %c0_i32_1 = arith.constant 0 : i32
    return %c0_i32, %c0_i32_0 : i32, i32
  }
  func.func @transform_14(%arg0: i32) -> (i32, i32) {
    %c0_i32 = arith.constant 0 : i32
    %c0_i32_0 = arith.constant 0 : i32
    %c0_i32_1 = arith.constant 0 : i32
    return %c0_i32, %c0_i32_0 : i32, i32
  }
  func.func @transform_15(%arg0: i32) -> (i32, i32) {
    %c0_i32 = arith.constant 0 : i32
    %c0_i32_0 = arith.constant 0 : i32
    %c0_i32_1 = arith.constant 0 : i32
    return %c0_i32, %c0_i32_0 : i32, i32
  }
  func.func @transform_16(%arg0: i32) -> (i32, i32) {
    %c0_i32 = arith.constant 0 : i32
    %c0_i32_0 = arith.constant 0 : i32
    %c0_i32_1 = arith.constant 0 : i32
    return %c0_i32, %c0_i32_0 : i32, i32
  }
  func.func @transform_17(%arg0: i32) -> (i32, i32) {
    %c0_i32 = arith.constant 0 : i32
    %c0_i32_0 = arith.constant 0 : i32
    %c0_i32_1 = arith.constant 0 : i32
    return %c0_i32, %c0_i32_0 : i32, i32
  }
  func.func @transform_18(%arg0: i32) -> (i32, i32, i32) {
    %c0_i32 = arith.constant 0 : i32
    %c0_i32_0 = arith.constant 0 : i32
    %c0_i32_1 = arith.constant 0 : i32
    return %arg0, %c0_i32, %c0_i32_0 : i32, i32, i32
  }
  func.func @transform_19(%arg0: i32) -> (i32, i32, i32, i32) {
    %c0_i32 = arith.constant 0 : i32
    %c0_i32_0 = arith.constant 0 : i32
    %c0_i32_1 = arith.constant 0 : i32
    %c0_i32_2 = arith.constant 0 : i32
    return %arg0, %c0_i32, %c0_i32_0, %c0_i32_1 : i32, i32, i32, i32
  }
}

</mosaic_0001>

<llo_original>
// kernel: decoder_forward.5
$region0: #{decoder_forward.5}
  #allocation0 [shape = 'u32[]', space=smem, size = 0x4, offset = 0x4, fixed_abs, tag = 'smem constant byte address 0x4 - core index']
  #allocation1 [shape = 'u32[144,128]{1,0:T(1,128)}', space=vmem, size = 0x12000, scoped, tag = 'internal scratch']
  %s0 = inlined_call_operand.vmem [shape: f32[2,8,32], index: 0, kind: input, shape index: {}]
  %s1 = inlined_call_operand.vmem [shape: bf16[32,50], index: 1, kind: input, shape index: {}]
  %s2 = inlined_call_operand.vmem [shape: f32[1,50], index: 2, kind: input, shape index: {}]
  %s3 = inlined_call_operand.hbm [shape: f32[2,8,50], index: 3, kind: output, shape index: {}]
  %s4 = sld [smem:[#allocation0]]
  $region45: #{decoder_forward.5} parent=0
    _
  %s6 = ssub.s32 1, %s4
  %s7 = scalar_select 0, %s6, %s4
  $region1: #{decoder_forward.5} parent=0
    #allocation2 [shape = 'u8[8192]{0}', space=vmem, size = 0x2000, scoped, tag = 'output window, operand 0']
    #allocation3 [shape = 's32[2]{0}', space=sflag, size = 0x8, scoped, tag = 'scoped memory for decoder_forward.5']
    %8 = vsyncpa [#allocation3], 0
    %s9 = scalar_lea.sflag [#allocation3], 1
    %10 = vsyncpa %s9, 0
    loop: start=0, step=1, limit=4
    $region2: #{decoder_forward.5} parent=1 // loop_pre_header
      _
    $region3: #{decoder_forward.5} parent=1 // loop_header
      %s12 = sphi 0, %s16
      %p13 = scmp.ge.s32.totalorder %s12, 4
      %s22 = sphi 0, %s24
      %s25 = sphi 0, %s22
      %s26 = sphi 0, %s25
      %s42 = sphi 0, %s26
      %s46 = sphi 0, %s46
      %s48 = sphi 0, %s46
      %s49 = sphi 0, %s48
      %s63 = sphi 0, %s49
      %s67 = sphi 0, %s67
      %s69 = sphi 0, %s67
      %s70 = sphi 0, %s69
      %s84 = sphi 0, %s70
      %s90 = sphi 0, %s92
      %s93 = sphi 0, %s90
      %s94 = sphi 0, %s93
      %s110 = sphi 0, %s94
    $region4: #{decoder_forward.5} parent=1 // loop_header_branch
      %15 = sbr.rel (%p13) target = $region8
    $region5: #{decoder_forward.5} parent=1 // loop_body
      %s17 = ssub.s32 %s12, 1
      %s18 = ssub.s32 %s12, 2
      %s19 = sadd.s32 %s12, 1
      %s20 = ssub.s32 %s12, %s19
      %p21 = scmp.eq.s32.totalorder %s20, 0
      %s23 = sadd.s32 %s22, 1
      %s24 = scalar_select %p21, %s22, %s23
      %p27 = pneg %p21
      %p28 = scmp.eq.s32.totalorder %s12, 1
      %p29 = por %p27, %p28
      %p30 = scmp.ne.s32.totalorder %s22, %s25
      %p31 = scmp.eq.s32.totalorder %s12, 0
      %p32 = por %p30, %p31
      %p33 = scmp.ne.s32.totalorder %s22, %s25
      %p34 = scmp.eq.s32.totalorder %s17, 1
      %p35 = por %p33, %p34
      %p36 = scmp.ne.s32.totalorder %s25, %s26
      %p37 = scmp.eq.s32.totalorder %s17, 0
      %p38 = por %p36, %p37
      %p39 = scmp.ne.s32.totalorder %s25, %s26
      %p40 = scmp.eq.s32.totalorder %s18, 1
      %p41 = por %p39, %p40
      %p43 = scmp.ne.s32.totalorder %s26, %s42
      %p44 = scmp.eq.s32.totalorder %s18, 0
      %p45 = por %p43, %p44
      %s47 = sadd.s32 %s46, 1
      %p50 = scmp.eq.s32.totalorder %s12, 1
      %p51 = scmp.ne.s32.totalorder %s46, %s48
      %p52 = scmp.eq.s32.totalorder %s12, 0
      %p53 = por %p51, %p52
      %p54 = scmp.ne.s32.totalorder %s46, %s48
      %p55 = scmp.eq.s32.totalorder %s17, 1
      %p56 = por %p54, %p55
      %p57 = scmp.ne.s32.totalorder %s48, %s49
      %p58 = scmp.eq.s32.totalorder %s17, 0
      %p59 = por %p57, %p58
      %p60 = scmp.ne.s32.totalorder %s48, %s49
      %p61 = scmp.eq.s32.totalorder %s18, 1
      %p62 = por %p60, %p61
      %p64 = scmp.ne.s32.totalorder %s49, %s63
      %p65 = scmp.eq.s32.totalorder %s18, 0
      %p66 = por %p64, %p65
      %s68 = sadd.s32 %s67, 1
      %p71 = scmp.eq.s32.totalorder %s12, 1
      %p72 = scmp.ne.s32.totalorder %s67, %s69
      %p73 = scmp.eq.s32.totalorder %s12, 0
      %p74 = por %p72, %p73
      %p75 = scmp.ne.s32.totalorder %s67, %s69
      %p76 = scmp.eq.s32.totalorder %s17, 1
      %p77 = por %p75, %p76
      %p78 = scmp.ne.s32.totalorder %s69, %s70
      %p79 = scmp.eq.s32.totalorder %s17, 0
      %p80 = por %p78, %p79
      %p81 = scmp.ne.s32.totalorder %s69, %s70
      %p82 = scmp.eq.s32.totalorder %s18, 1
      %p83 = por %p81, %p82
      %p85 = scmp.ne.s32.totalorder %s70, %s84
      %p86 = scmp.eq.s32.totalorder %s18, 0
      %p87 = por %p85, %p86
      %s88 = ssub.s32 %s12, %s19
      %p89 = scmp.eq.s32.totalorder %s88, 0
      %s91 = sadd.s32 %s90, 1
      %s92 = scalar_select %p89, %s90, %s91
      %p95 = pneg %p89
      %p96 = scmp.eq.s32.totalorder %s12, 1
      %p97 = por %p95, %p96
      %p98 = scmp.ne.s32.totalorder %s90, %s93
      %p99 = scmp.eq.s32.totalorder %s12, 0
      %p100 = por %p98, %p99
      %p101 = scmp.ne.s32.totalorder %s90, %s93
      %p102 = scmp.eq.s32.totalorder %s17, 1
      %p103 = por %p101, %p102
      %p104 = scmp.ne.s32.totalorder %s93, %s94
      %p105 = scmp.eq.s32.totalorder %s17, 0
      %p106 = por %p104, %p105
      %p107 = scmp.ne.s32.totalorder %s93, %s94
      %p108 = scmp.eq.s32.totalorder %s18, 1
      %p109 = por %p107, %p108
      %p111 = scmp.ne.s32.totalorder %s94, %s110
      %p112 = scmp.eq.s32.totalorder %s18, 0
      %p113 = por %p111, %p112
      %p114 = scmp.le.s32.totalorder 1, %s12
      %p115 = scmp.lt.s32.totalorder %s12, 3
      %p116 = pnand %p114, %p115
      %p117 = pneg %p116
      // Predicated region
      $region9: #{decoder_forward.5} parent=5 // pred_check
        _
      $region10: #{decoder_forward.5} parent=5 // pred_check_branch
        %119 = sbr.rel (%p116) target = $region12
      $region11: #{decoder_forward.5} parent=5 // pred_region
        %s120 = ssub.s32 %s12, 1
        // Predicated region
        $region13: #{decoder_forward.5} parent=11 // pred_check
          %p121 = pneg %p59
        $region14: #{decoder_forward.5} parent=11 // pred_check_branch
          %123 = sbr.rel (%p121) target = $region16
        $region15: #{decoder_forward.5} parent=11 // pred_region
          _
        $region16: #{decoder_forward.5} parent=11 // pred_fallthru
          _
        // Predicated region
        $region17: #{decoder_forward.5} parent=11 // pred_check
          %p124 = pneg %p80
        $region18: #{decoder_forward.5} parent=11 // pred_check_branch
          %126 = sbr.rel (%p124) target = $region20
        $region19: #{decoder_forward.5} parent=11 // pred_region
          _
        $region20: #{decoder_forward.5} parent=11 // pred_fallthru
          _
      $region12: #{decoder_forward.5} parent=5 // pred_fallthru
        _
      %p127 = scmp.lt.s32.totalorder %s12, 2
      // Predicated region
      $region21: #{decoder_forward.5} parent=5 // pred_check
        %p128 = pneg %p127
      $region22: #{decoder_forward.5} parent=5 // pred_check_branch
        %130 = sbr.rel (%p128) target = $region24
      $region23: #{decoder_forward.5} parent=5 // pred_region
        // Predicated region
        $region25: #{decoder_forward.5} parent=23 // pred_check
          %p131 = pneg %p32
        $region26: #{decoder_forward.5} parent=23 // pred_check_branch
          %133 = sbr.rel (%p131) target = $region28
        $region27: #{decoder_forward.5} parent=23 // pred_region
          %p134 = scmp.lt.s32.totalorder %s12, 1
          %s135 = scalar_select %p134, %s12, 1
          %s136 = smul.addr %s135, 8
          %s137 = scalar_lea.vmem %s0, %s136
        $region28: #{decoder_forward.5} parent=23 // pred_fallthru
          _
      $region24: #{decoder_forward.5} parent=5 // pred_fallthru
        _
      %p138 = scmp.le.s32.totalorder 1, %s12
      %p139 = scmp.lt.s32.totalorder %s12, 3
      %p140 = pnand %p138, %p139
      %p141 = pneg %p140
      // Predicated region
      $region29: #{decoder_forward.5} parent=5 // pred_check
        _
      $region30: #{decoder_forward.5} parent=5 // pred_check_branch
        %143 = sbr.rel (%p140) target = $region32
      $region31: #{decoder_forward.5} parent=5 // pred_region
        %s144 = ssub.s32 %s12, 1
        %p145 = scmp.lt.s32.totalorder %s17, 1
        %s146 = scalar_select %p145, %s17, 1
        %s147 = smul.addr %s146, 8
        %s148 = scalar_lea.vmem %s0, %s147
        %p149 = pneg %p38
        %p150 = pneg %p35
        %p151 = pneg %p59
        %p152 = pneg %p56
        %p153 = pneg %p80
        %p154 = pneg %p77
        %p155 = pneg %p106
        %p156 = pneg %p103
        %s157 = sand.u32 %s93, 1
        %s158 = scalar_lea.sflag [#allocation3], %s157
        %s159 = sand.u32 %s93, 1
        %s160 = smul.addr %s159, 8
        %s161 = scalar_lea.vmem [#allocation2], %s160
        %p162 = scmp.lt.s32.totalorder %s17, 1
        %s163 = scalar_select %p162, %s17, 1
        %s164 = smul.addr %s163, 8
        %s165 = scalar_lea.vmem %s0, %s164
        %v167 = vld [vmem:[%s165] sm:$0xff]
        %v168 = vpack.c.bf16 %v167, %v167
        %v169 = vld [vmem:[%s1] sm:$0xf]
        %v170 = vld [vmem:[%s1 + $0x4] sm:$0xf]
        %v171 = vld [vmem:[%s1 + $0x8] sm:$0xf]
        %v172 = vld [vmem:[%s1 + $0xc] sm:$0xf]
        %v173 = vld [vmem:[%s2] sm:$0x1]
        %v175 = vlaneseq
        %v176 = vshrl.u32 %v175, 7
        %v177 = vsub.s32 0, %v176
        %v178 = vrot.slane %v173, %v177
        %v184 = vunpack.c.l.b16 %v169
        %v185 = vunpack.c.l.b16 %v170
        %v186 = vunpack.c.l.b16 %v171
        %v187 = vunpack.c.l.b16 %v172
        %v188 = vpack.c.b16 %v185, %v184
        %v189 = vpack.c.b16 %v187, %v186
        %vm192 = vcmask 261120
        %v194 = vsel %vm192, %v168, 0
        %196 = vmatprep.subr.bf16.mxu0 0
        %197 = vmatpush1.bf16.msra.mxu0 %v188
        %198 = vmatprep.subr.bf16.mxu0 0
        %199 = vmatpush1.bf16.msra.mxu0 %v189
        %200 = vmatprep.subr.bf16.mxu0 0
        %201 = vmatpush1.bf16.msra.mxu0 0
        %202 = vmatprep.subr.bf16.mxu0 0
        %203 = vmatpush1.bf16.msra.mxu0 0
        %204 = vmatprep.subr.bf16.mxu0 0
        %205 = vmatpush1.bf16.msra.mxu0 0
        %206 = vmatprep.subr.bf16.mxu0 0
        %207 = vmatpush1.bf16.msra.mxu0 0
        %208 = vmatprep.subr.bf16.mxu0 0
        %209 = vmatpush1.bf16.msra.mxu0 0
        %210 = vmatprep.subr.bf16.mxu0 0
        %211 = vmatpush1.bf16.msra.mxu0 0
        %212 = vmatprep.subr.bf16.mxu0 0
        %213 = vmatpush1.bf16.msra.mxu0 0
        %214 = vmatprep.subr.bf16.mxu0 0
        %215 = vmatpush1.bf16.msra.mxu0 0
        %216 = vmatprep.subr.bf16.mxu0 0
        %217 = vmatpush1.bf16.msra.mxu0 0
        %218 = vmatprep.subr.bf16.mxu0 0
        %219 = vmatpush1.bf16.msra.mxu0 0
        %220 = vmatprep.subr.bf16.mxu0 0
        %221 = vmatpush1.bf16.msra.mxu0 0
        %222 = vmatprep.subr.bf16.mxu0 0
        %223 = vmatpush1.bf16.msra.mxu0 0
        %224 = vmatprep.subr.bf16.mxu0 0
        %225 = vmatpush1.bf16.msra.mxu0 0
        %226 = vmatprep.subr.bf16.mxu0 0
        %227 = vmatpush1.bf16.msra.mxu0 0
        %228 = vmatprep.mubr.bf16.mxu0 0
        %229 = vmatmul.mubr.bf16.gmra.mrb[0].mxu0 %v194
        %v230 = vpop.f32.mrb[0].mxu0
        %v231 = vadd.f32 %v178, %v230
        %v232 = vpop.f32.mrb[0].mxu0
        %v233 = vpop.f32.mrb[0].mxu0
        %v234 = vpop.f32.mrb[0].mxu0
        %235 = vdwg.mxu0
        %vm236 = vcmask 408576
        %237 = vst.msk [vmem:[%s161] sm:$0xff] %vm236, %v231
        %s238 = sand.u32 %s93, 1
        %s239 = scalar_lea.sflag [#allocation3], %s238
        %s240 = sand.u32 %s93, 1
        %s241 = smul.addr %s240, 8
        %s242 = scalar_lea.vmem [#allocation2], %s241
        // Predicated region
        $region33: #{decoder_forward.5} parent=31 // pred_check
          %p243 = pneg %p103
        $region34: #{decoder_forward.5} parent=31 // pred_check_branch
          %245 = sbr.rel (%p243) target = $region36
        $region35: #{decoder_forward.5} parent=31 // pred_region
          %s247 = ssub.s32 128, 128
          %248 = vsyncadd %s239, %s247
          %s249 = smul.addr %s17, 128
          %s250 = scalar_lea.hbm %s3, %s249
          %s252 = sshll.u32 %s242, 4
          %s253 = int_to_ptr.vmem [resolvable:$true] %s252
          %255 = dma.vmem_to_hbm [thread:$0]  %s253, 128, %s250, %s239
        $region36: #{decoder_forward.5} parent=31 // pred_fallthru
          _
      $region32: #{decoder_forward.5} parent=5 // pred_fallthru
        _
      %p256 = scmp.le.s32.totalorder 2, %s12
      // Predicated region
      $region37: #{decoder_forward.5} parent=5 // pred_check
        %p257 = pneg %p256
      $region38: #{decoder_forward.5} parent=5 // pred_check_branch
        %259 = sbr.rel (%p257) target = $region40
      $region39: #{decoder_forward.5} parent=5 // pred_region
        %s260 = ssub.s32 %s12, 2
        // Predicated region
        $region41: #{decoder_forward.5} parent=39 // pred_check
          %p261 = pneg %p109
        $region42: #{decoder_forward.5} parent=39 // pred_check_branch
          %263 = sbr.rel (%p261) target = $region44
        $region43: #{decoder_forward.5} parent=39 // pred_region
          %s264 = sand.u32 %s94, 1
          %s265 = scalar_lea.sflag [#allocation3], %s264
          %s266 = sand.u32 %s94, 1
          %s267 = smul.addr %s266, 8
          %s268 = scalar_lea.vmem [#allocation2], %s267
          %269 = dma.done %s265, 128
        $region44: #{decoder_forward.5} parent=39 // pred_fallthru
          _
      $region40: #{decoder_forward.5} parent=5 // pred_fallthru
        _
    $region6: #{decoder_forward.5} parent=1 // loop_footer
      %s16 = sadd.s32 1, %s12
    $region7: #{decoder_forward.5} parent=1 // loop_footer_branch
      %11 = sbr.rel target = $region3
    $region8: #{decoder_forward.5} parent=1 // loop_exit
      _
    %270 = vsyncpa [#allocation3], 1
    %s271 = scalar_lea.sflag [#allocation3], 1
    %272 = vsyncpa %s271, 1

// kernel: decoder_forward.3
$region0: #{decoder_forward.3}
  #allocation0 [shape = 'u32[]', space=smem, size = 0x4, offset = 0x4, fixed_abs, tag = 'smem constant byte address 0x4 - core index']
  #allocation1 [shape = 'u32[144,128]{1,0:T(1,128)}', space=vmem, size = 0x12000, scoped, tag = 'internal scratch']
  %s0 = inlined_call_operand.vmem [shape: f32[2,8,32], index: 0, kind: input, shape index: {}]
  %s1 = inlined_call_operand.vmem [shape: f32[2,10,32], index: 1, kind: input, shape index: {}]
  %s2 = inlined_call_operand.vmem [shape: f32[2,8,8], index: 2, kind: input, shape index: {}]
  %s3 = inlined_call_operand.vmem [shape: f32[2,8,10], index: 3, kind: input, shape index: {}]
  %s4 = inlined_call_operand.vmem [shape: f32[1,2], index: 4, kind: input, shape index: {}]
  %s5 = inlined_call_operand.vmem [shape: bf16[32,96], index: 5, kind: input, shape index: {}]
  %s6 = inlined_call_operand.vmem [shape: f32[1,96], index: 6, kind: input, shape index: {}]
  %s7 = inlined_call_operand.vmem [shape: bf16[32,32], index: 7, kind: input, shape index: {}]
  %s8 = inlined_call_operand.vmem [shape: f32[1,32], index: 8, kind: input, shape index: {}]
  %s9 = inlined_call_operand.vmem [shape: bf16[32,96], index: 9, kind: input, shape index: {}]
  %s10 = inlined_call_operand.vmem [shape: f32[1,96], index: 10, kind: input, shape index: {}]
  %s11 = inlined_call_operand.vmem [shape: bf16[32,32], index: 11, kind: input, shape index: {}]
  %s12 = inlined_call_operand.vmem [shape: f32[1,32], index: 12, kind: input, shape index: {}]
  %s13 = inlined_call_operand.vmem [shape: f32[6,32], index: 13, kind: input, shape index: {}]
  %s14 = inlined_call_operand.vmem [shape: bf16[32,64], index: 14, kind: input, shape index: {}]
  %s15 = inlined_call_operand.vmem [shape: f32[1,64], index: 15, kind: input, shape index: {}]
  %s16 = inlined_call_operand.vmem [shape: bf16[64,32], index: 16, kind: input, shape index: {}]
  %s17 = inlined_call_operand.vmem [shape: f32[1,32], index: 17, kind: input, shape index: {}]
  %s18 = inlined_call_operand.vmem [shape: f32[2,8,32], index: 18, kind: output, shape index: {}]
  %s19 = sld [smem:[#allocation0]]
  $region105: #{decoder_forward.3} parent=0
    _
  %s21 = ssub.s32 1, %s19
  %s22 = scalar_select 0, %s21, %s19
  loop: start=0, step=1, limit=4
  $region2: #{decoder_forward.3} parent=0 // loop_pre_header
    _
  $region3: #{decoder_forward.3} parent=0 // loop_header
    %s24 = sphi 0, %s28
    %p25 = scmp.ge.s32.totalorder %s24, 4
    %s34 = sphi 0, %s36
    %s37 = sphi 0, %s34
    %s38 = sphi 0, %s37
    %s54 = sphi 0, %s38
    %s60 = sphi 0, %s62
    %s63 = sphi 0, %s60
    %s64 = sphi 0, %s63
    %s80 = sphi 0, %s64
    %s86 = sphi 0, %s88
    %s89 = sphi 0, %s86
    %s90 = sphi 0, %s89
    %s106 = sphi 0, %s90
    %s112 = sphi 0, %s114
    %s115 = sphi 0, %s112
    %s116 = sphi 0, %s115
    %s132 = sphi 0, %s116
    %s136 = sphi 0, %s136
    %s138 = sphi 0, %s136
    %s139 = sphi 0, %s138
    %s153 = sphi 0, %s139
    %s157 = sphi 0, %s157
    %s159 = sphi 0, %s157
    %s160 = sphi 0, %s159
    %s174 = sphi 0, %s160
    %s178 = sphi 0, %s178
    %s180 = sphi 0, %s178
    %s181 = sphi 0, %s180
    %s195 = sphi 0, %s181
    %s199 = sphi 0, %s199
    %s201 = sphi 0, %s199
    %s202 = sphi 0, %s201
    %s216 = sphi 0, %s202
    %s220 = sphi 0, %s220
    %s222 = sphi 0, %s220
    %s223 = sphi 0, %s222
    %s237 = sphi 0, %s223
    %s241 = sphi 0, %s241
    %s243 = sphi 0, %s241
    %s244 = sphi 0, %s243
    %s258 = sphi 0, %s244
    %s262 = sphi 0, %s262
    %s264 = sphi 0, %s262
    %s265 = sphi 0, %s264
    %s279 = sphi 0, %s265
    %s283 = sphi 0, %s283
    %s285 = sphi 0, %s283
    %s286 = sphi 0, %s285
    %s300 = sphi 0, %s286
    %s304 = sphi 0, %s304
    %s306 = sphi 0, %s304
    %s307 = sphi 0, %s306
    %s321 = sphi 0, %s307
    %s325 = sphi 0, %s325
    %s327 = sphi 0, %s325
    %s328 = sphi 0, %s327
    %s342 = sphi 0, %s328
    %s346 = sphi 0, %s346
    %s348 = sphi 0, %s346
    %s349 = sphi 0, %s348
    %s363 = sphi 0, %s349
    %s367 = sphi 0, %s367
    %s369 = sphi 0, %s367
    %s370 = sphi 0, %s369
    %s384 = sphi 0, %s370
    %s388 = sphi 0, %s388
    %s390 = sphi 0, %s388
    %s391 = sphi 0, %s390
    %s405 = sphi 0, %s391
    %s409 = sphi 0, %s409
    %s411 = sphi 0, %s409
    %s412 = sphi 0, %s411
    %s426 = sphi 0, %s412
    %s432 = sphi 0, %s434
    %s435 = sphi 0, %s432
    %s436 = sphi 0, %s435
    %s452 = sphi 0, %s436
  $region4: #{decoder_forward.3} parent=0 // loop_header_branch
    %27 = sbr.rel (%p25) target = $region8
  $region5: #{decoder_forward.3} parent=0 // loop_body
    %s29 = ssub.s32 %s24, 1
    %s30 = ssub.s32 %s24, 2
    %s31 = sadd.s32 %s24, 1
    %s32 = ssub.s32 %s24, %s31
    %p33 = scmp.eq.s32.totalorder %s32, 0
    %s35 = sadd.s32 %s34, 1
    %s36 = scalar_select %p33, %s34, %s35
    %p39 = pneg %p33
    %p40 = scmp.eq.s32.totalorder %s24, 1
    %p41 = por %p39, %p40
    %p42 = scmp.ne.s32.totalorder %s34, %s37
    %p43 = scmp.eq.s32.totalorder %s24, 0
    %p44 = por %p42, %p43
    %p45 = scmp.ne.s32.totalorder %s34, %s37
    %p46 = scmp.eq.s32.totalorder %s29, 1
    %p47 = por %p45, %p46
    %p48 = scmp.ne.s32.totalorder %s37, %s38
    %p49 = scmp.eq.s32.totalorder %s29, 0
    %p50 = por %p48, %p49
    %p51 = scmp.ne.s32.totalorder %s37, %s38
    %p52 = scmp.eq.s32.totalorder %s30, 1
    %p53 = por %p51, %p52
    %p55 = scmp.ne.s32.totalorder %s38, %s54
    %p56 = scmp.eq.s32.totalorder %s30, 0
    %p57 = por %p55, %p56
    %s58 = ssub.s32 %s24, %s31
    %p59 = scmp.eq.s32.totalorder %s58, 0
    %s61 = sadd.s32 %s60, 1
    %s62 = scalar_select %p59, %s60, %s61
    %p65 = pneg %p59
    %p66 = scmp.eq.s32.totalorder %s24, 1
    %p67 = por %p65, %p66
    %p68 = scmp.ne.s32.totalorder %s60, %s63
    %p69 = scmp.eq.s32.totalorder %s24, 0
    %p70 = por %p68, %p69
    %p71 = scmp.ne.s32.totalorder %s60, %s63
    %p72 = scmp.eq.s32.totalorder %s29, 1
    %p73 = por %p71, %p72
    %p74 = scmp.ne.s32.totalorder %s63, %s64
    %p75 = scmp.eq.s32.totalorder %s29, 0
    %p76 = por %p74, %p75
    %p77 = scmp.ne.s32.totalorder %s63, %s64
    %p78 = scmp.eq.s32.totalorder %s30, 1
    %p79 = por %p77, %p78
    %p81 = scmp.ne.s32.totalorder %s64, %s80
    %p82 = scmp.eq.s32.totalorder %s30, 0
    %p83 = por %p81, %p82
    %s84 = ssub.s32 %s24, %s31
    %p85 = scmp.eq.s32.totalorder %s84, 0
    %s87 = sadd.s32 %s86, 1
    %s88 = scalar_select %p85, %s86, %s87
    %p91 = pneg %p85
    %p92 = scmp.eq.s32.totalorder %s24, 1
    %p93 = por %p91, %p92
    %p94 = scmp.ne.s32.totalorder %s86, %s89
    %p95 = scmp.eq.s32.totalorder %s24, 0
    %p96 = por %p94, %p95
    %p97 = scmp.ne.s32.totalorder %s86, %s89
    %p98 = scmp.eq.s32.totalorder %s29, 1
    %p99 = por %p97, %p98
    %p100 = scmp.ne.s32.totalorder %s89, %s90
    %p101 = scmp.eq.s32.totalorder %s29, 0
    %p102 = por %p100, %p101
    %p103 = scmp.ne.s32.totalorder %s89, %s90
    %p104 = scmp.eq.s32.totalorder %s30, 1
    %p105 = por %p103, %p104
    %p107 = scmp.ne.s32.totalorder %s90, %s106
    %p108 = scmp.eq.s32.totalorder %s30, 0
    %p109 = por %p107, %p108
    %s110 = ssub.s32 %s24, %s31
    %p111 = scmp.eq.s32.totalorder %s110, 0
    %s113 = sadd.s32 %s112, 1
    %s114 = scalar_select %p111, %s112, %s113
    %p117 = pneg %p111
    %p118 = scmp.eq.s32.totalorder %s24, 1
    %p119 = por %p117, %p118
    %p120 = scmp.ne.s32.totalorder %s112, %s115
    %p121 = scmp.eq.s32.totalorder %s24, 0
    %p122 = por %p120, %p121
    %p123 = scmp.ne.s32.totalorder %s112, %s115
    %p124 = scmp.eq.s32.totalorder %s29, 1
    %p125 = por %p123, %p124
    %p126 = scmp.ne.s32.totalorder %s115, %s116
    %p127 = scmp.eq.s32.totalorder %s29, 0
    %p128 = por %p126, %p127
    %p129 = scmp.ne.s32.totalorder %s115, %s116
    %p130 = scmp.eq.s32.totalorder %s30, 1
    %p131 = por %p129, %p130
    %p133 = scmp.ne.s32.totalorder %s116, %s132
    %p134 = scmp.eq.s32.totalorder %s30, 0
    %p135 = por %p133, %p134
    %s137 = sadd.s32 %s136, 1
    %p140 = scmp.eq.s32.totalorder %s24, 1
    %p141 = scmp.ne.s32.totalorder %s136, %s138
    %p142 = scmp.eq.s32.totalorder %s24, 0
    %p143 = por %p141, %p142
    %p144 = scmp.ne.s32.totalorder %s136, %s138
    %p145 = scmp.eq.s32.totalorder %s29, 1
    %p146 = por %p144, %p145
    %p147 = scmp.ne.s32.totalorder %s138, %s139
    %p148 = scmp.eq.s32.totalorder %s29, 0
    %p149 = por %p147, %p148
    %p150 = scmp.ne.s32.totalorder %s138, %s139
    %p151 = scmp.eq.s32.totalorder %s30, 1
    %p152 = por %p150, %p151
    %p154 = scmp.ne.s32.totalorder %s139, %s153
    %p155 = scmp.eq.s32.totalorder %s30, 0
    %p156 = por %p154, %p155
    %s158 = sadd.s32 %s157, 1
    %p161 = scmp.eq.s32.totalorder %s24, 1
    %p162 = scmp.ne.s32.totalorder %s157, %s159
    %p163 = scmp.eq.s32.totalorder %s24, 0
    %p164 = por %p162, %p163
    %p165 = scmp.ne.s32.totalorder %s157, %s159
    %p166 = scmp.eq.s32.totalorder %s29, 1
    %p167 = por %p165, %p166
    %p168 = scmp.ne.s32.totalorder %s159, %s160
    %p169 = scmp.eq.s32.totalorder %s29, 0
    %p170 = por %p168, %p169
    %p171 = scmp.ne.s32.totalorder %s159, %s160
    %p172 = scmp.eq.s32.totalorder %s30, 1
    %p173 = por %p171, %p172
    %p175 = scmp.ne.s32.totalorder %s160, %s174
    %p176 = scmp.eq.s32.totalorder %s30, 0
    %p177 = por %p175, %p176
    %s179 = sadd.s32 %s178, 1
    %p182 = scmp.eq.s32.totalorder %s24, 1
    %p183 = scmp.ne.s32.totalorder %s178, %s180
    %p184 = scmp.eq.s32.totalorder %s24, 0
    %p185 = por %p183, %p184
    %p186 = scmp.ne.s32.totalorder %s178, %s180
    %p187 = scmp.eq.s32.totalorder %s29, 1
    %p188 = por %p186, %p187
    %p189 = scmp.ne.s32.totalorder %s180, %s181
    %p190 = scmp.eq.s32.totalorder %s29, 0
    %p191 = por %p189, %p190
    %p192 = scmp.ne.s32.totalorder %s180, %s181
    %p193 = scmp.eq.s32.totalorder %s30, 1
    %p194 = por %p192, %p193
    %p196 = scmp.ne.s32.totalorder %s181, %s195
    %p197 = scmp.eq.s32.totalorder %s30, 0
    %p198 = por %p196, %p197
    %s200 = sadd.s32 %s199, 1
    %p203 = scmp.eq.s32.totalorder %s24, 1
    %p204 = scmp.ne.s32.totalorder %s199, %s201
    %p205 = scmp.eq.s32.totalorder %s24, 0
    %p206 = por %p204, %p205
    %p207 = scmp.ne.s32.totalorder %s199, %s201
    %p208 = scmp.eq.s32.totalorder %s29, 1
    %p209 = por %p207, %p208
    %p210 = scmp.ne.s32.totalorder %s201, %s202
    %p211 = scmp.eq.s32.totalorder %s29, 0
    %p212 = por %p210, %p211
    %p213 = scmp.ne.s32.totalorder %s201, %s202
    %p214 = scmp.eq.s32.totalorder %s30, 1
    %p215 = por %p213, %p214
    %p217 = scmp.ne.s32.totalorder %s202, %s216
    %p218 = scmp.eq.s32.totalorder %s30, 0
    %p219 = por %p217, %p218
    %s221 = sadd.s32 %s220, 1
    %p224 = scmp.eq.s32.totalorder %s24, 1
    %p225 = scmp.ne.s32.totalorder %s220, %s222
    %p226 = scmp.eq.s32.totalorder %s24, 0
    %p227 = por %p225, %p226
    %p228 = scmp.ne.s32.totalorder %s220, %s222
    %p229 = scmp.eq.s32.totalorder %s29, 1
    %p230 = por %p228, %p229
    %p231 = scmp.ne.s32.totalorder %s222, %s223
    %p232 = scmp.eq.s32.totalorder %s29, 0
    %p233 = por %p231, %p232
    %p234 = scmp.ne.s32.totalorder %s222, %s223
    %p235 = scmp.eq.s32.totalorder %s30, 1
    %p236 = por %p234, %p235
    %p238 = scmp.ne.s32.totalorder %s223, %s237
    %p239 = scmp.eq.s32.totalorder %s30, 0
    %p240 = por %p238, %p239
    %s242 = sadd.s32 %s241, 1
    %p245 = scmp.eq.s32.totalorder %s24, 1
    %p246 = scmp.ne.s32.totalorder %s241, %s243
    %p247 = scmp.eq.s32.totalorder %s24, 0
    %p248 = por %p246, %p247
    %p249 = scmp.ne.s32.totalorder %s241, %s243
    %p250 = scmp.eq.s32.totalorder %s29, 1
    %p251 = por %p249, %p250
    %p252 = scmp.ne.s32.totalorder %s243, %s244
    %p253 = scmp.eq.s32.totalorder %s29, 0
    %p254 = por %p252, %p253
    %p255 = scmp.ne.s32.totalorder %s243, %s244
    %p256 = scmp.eq.s32.totalorder %s30, 1
    %p257 = por %p255, %p256
    %p259 = scmp.ne.s32.totalorder %s244, %s258
    %p260 = scmp.eq.s32.totalorder %s30, 0
    %p261 = por %p259, %p260
    %s263 = sadd.s32 %s262, 1
    %p266 = scmp.eq.s32.totalorder %s24, 1
    %p267 = scmp.ne.s32.totalorder %s262, %s264
    %p268 = scmp.eq.s32.totalorder %s24, 0
    %p269 = por %p267, %p268
    %p270 = scmp.ne.s32.totalorder %s262, %s264
    %p271 = scmp.eq.s32.totalorder %s29, 1
    %p272 = por %p270, %p271
    %p273 = scmp.ne.s32.totalorder %s264, %s265
    %p274 = scmp.eq.s32.totalorder %s29, 0
    %p275 = por %p273, %p274
    %p276 = scmp.ne.s32.totalorder %s264, %s265
    %p277 = scmp.eq.s32.totalorder %s30, 1
    %p278 = por %p276, %p277
    %p280 = scmp.ne.s32.totalorder %s265, %s279
    %p281 = scmp.eq.s32.totalorder %s30, 0
    %p282 = por %p280, %p281
    %s284 = sadd.s32 %s283, 1
    %p287 = scmp.eq.s32.totalorder %s24, 1
    %p288 = scmp.ne.s32.totalorder %s283, %s285
    %p289 = scmp.eq.s32.totalorder %s24, 0
    %p290 = por %p288, %p289
    %p291 = scmp.ne.s32.totalorder %s283, %s285
    %p292 = scmp.eq.s32.totalorder %s29, 1
    %p293 = por %p291, %p292
    %p294 = scmp.ne.s32.totalorder %s285, %s286
    %p295 = scmp.eq.s32.totalorder %s29, 0
    %p296 = por %p294, %p295
    %p297 = scmp.ne.s32.totalorder %s285, %s286
    %p298 = scmp.eq.s32.totalorder %s30, 1
    %p299 = por %p297, %p298
    %p301 = scmp.ne.s32.totalorder %s286, %s300
    %p302 = scmp.eq.s32.totalorder %s30, 0
    %p303 = por %p301, %p302
    %s305 = sadd.s32 %s304, 1
    %p308 = scmp.eq.s32.totalorder %s24, 1
    %p309 = scmp.ne.s32.totalorder %s304, %s306
    %p310 = scmp.eq.s32.totalorder %s24, 0
    %p311 = por %p309, %p310
    %p312 = scmp.ne.s32.totalorder %s304, %s306
    %p313 = scmp.eq.s32.totalorder %s29, 1
    %p314 = por %p312, %p313
    %p315 = scmp.ne.s32.totalorder %s306, %s307
    %p316 = scmp.eq.s32.totalorder %s29, 0
    %p317 = por %p315, %p316
    %p318 = scmp.ne.s32.totalorder %s306, %s307
    %p319 = scmp.eq.s32.totalorder %s30, 1
    %p320 = por %p318, %p319
    %p322 = scmp.ne.s32.totalorder %s307, %s321
    %p323 = scmp.eq.s32.totalorder %s30, 0
    %p324 = por %p322, %p323
    %s326 = sadd.s32 %s325, 1
    %p329 = scmp.eq.s32.totalorder %s24, 1
    %p330 = scmp.ne.s32.totalorder %s325, %s327
    %p331 = scmp.eq.s32.totalorder %s24, 0
    %p332 = por %p330, %p331
    %p333 = scmp.ne.s32.totalorder %s325, %s327
    %p334 = scmp.eq.s32.totalorder %s29, 1
    %p335 = por %p333, %p334
    %p336 = scmp.ne.s32.totalorder %s327, %s328
    %p337 = scmp.eq.s32.totalorder %s29, 0
    %p338 = por %p336, %p337
    %p339 = scmp.ne.s32.totalorder %s327, %s328
    %p340 = scmp.eq.s32.totalorder %s30, 1
    %p341 = por %p339, %p340
    %p343 = scmp.ne.s32.totalorder %s328, %s342
    %p344 = scmp.eq.s32.totalorder %s30, 0
    %p345 = por %p343, %p344
    %s347 = sadd.s32 %s346, 1
    %p350 = scmp.eq.s32.totalorder %s24, 1
    %p351 = scmp.ne.s32.totalorder %s346, %s348
    %p352 = scmp.eq.s32.totalorder %s24, 0
    %p353 = por %p351, %p352
    %p354 = scmp.ne.s32.totalorder %s346, %s348
    %p355 = scmp.eq.s32.totalorder %s29, 1
    %p356 = por %p354, %p355
    %p357 = scmp.ne.s32.totalorder %s348, %s349
    %p358 = scmp.eq.s32.totalorder %s29, 0
    %p359 = por %p357, %p358
    %p360 = scmp.ne.s32.totalorder %s348, %s349
    %p361 = scmp.eq.s32.totalorder %s30, 1
    %p362 = por %p360, %p361
    %p364 = scmp.ne.s32.totalorder %s349, %s363
    %p365 = scmp.eq.s32.totalorder %s30, 0
    %p366 = por %p364, %p365
    %s368 = sadd.s32 %s367, 1
    %p371 = scmp.eq.s32.totalorder %s24, 1
    %p372 = scmp.ne.s32.totalorder %s367, %s369
    %p373 = scmp.eq.s32.totalorder %s24, 0
    %p374 = por %p372, %p373
    %p375 = scmp.ne.s32.totalorder %s367, %s369
    %p376 = scmp.eq.s32.totalorder %s29, 1
    %p377 = por %p375, %p376
    %p378 = scmp.ne.s32.totalorder %s369, %s370
    %p379 = scmp.eq.s32.totalorder %s29, 0
    %p380 = por %p378, %p379
    %p381 = scmp.ne.s32.totalorder %s369, %s370
    %p382 = scmp.eq.s32.totalorder %s30, 1
    %p383 = por %p381, %p382
    %p385 = scmp.ne.s32.totalorder %s370, %s384
    %p386 = scmp.eq.s32.totalorder %s30, 0
    %p387 = por %p385, %p386
    %s389 = sadd.s32 %s388, 1
    %p392 = scmp.eq.s32.totalorder %s24, 1
    %p393 = scmp.ne.s32.totalorder %s388, %s390
    %p394 = scmp.eq.s32.totalorder %s24, 0
    %p395 = por %p393, %p394
    %p396 = scmp.ne.s32.totalorder %s388, %s390
    %p397 = scmp.eq.s32.totalorder %s29, 1
    %p398 = por %p396, %p397
    %p399 = scmp.ne.s32.totalorder %s390, %s391
    %p400 = scmp.eq.s32.totalorder %s29, 0
    %p401 = por %p399, %p400
    %p402 = scmp.ne.s32.totalorder %s390, %s391
    %p403 = scmp.eq.s32.totalorder %s30, 1
    %p404 = por %p402, %p403
    %p406 = scmp.ne.s32.totalorder %s391, %s405
    %p407 = scmp.eq.s32.totalorder %s30, 0
    %p408 = por %p406, %p407
    %s410 = sadd.s32 %s409, 1
    %p413 = scmp.eq.s32.totalorder %s24, 1
    %p414 = scmp.ne.s32.totalorder %s409, %s411
    %p415 = scmp.eq.s32.totalorder %s24, 0
    %p416 = por %p414, %p415
    %p417 = scmp.ne.s32.totalorder %s409, %s411
    %p418 = scmp.eq.s32.totalorder %s29, 1
    %p419 = por %p417, %p418
    %p420 = scmp.ne.s32.totalorder %s411, %s412
    %p421 = scmp.eq.s32.totalorder %s29, 0
    %p422 = por %p420, %p421
    %p423 = scmp.ne.s32.totalorder %s411, %s412
    %p424 = scmp.eq.s32.totalorder %s30, 1
    %p425 = por %p423, %p424
    %p427 = scmp.ne.s32.totalorder %s412, %s426
    %p428 = scmp.eq.s32.totalorder %s30, 0
    %p429 = por %p427, %p428
    %s430 = ssub.s32 %s24, %s31
    %p431 = scmp.eq.s32.totalorder %s430, 0
    %s433 = sadd.s32 %s432, 1
    %s434 = scalar_select %p431, %s432, %s433
    %p437 = pneg %p431
    %p438 = scmp.eq.s32.totalorder %s24, 1
    %p439 = por %p437, %p438
    %p440 = scmp.ne.s32.totalorder %s432, %s435
    %p441 = scmp.eq.s32.totalorder %s24, 0
    %p442 = por %p440, %p441
    %p443 = scmp.ne.s32.totalorder %s432, %s435
    %p444 = scmp.eq.s32.totalorder %s29, 1
    %p445 = por %p443, %p444
    %p446 = scmp.ne.s32.totalorder %s435, %s436
    %p447 = scmp.eq.s32.totalorder %s29, 0
    %p448 = por %p446, %p447
    %p449 = scmp.ne.s32.totalorder %s435, %s436
    %p450 = scmp.eq.s32.totalorder %s30, 1
    %p451 = por %p449, %p450
    %p453 = scmp.ne.s32.totalorder %s436, %s452
    %p454 = scmp.eq.s32.totalorder %s30, 0
    %p455 = por %p453, %p454
    %p456 = scmp.le.s32.totalorder 1, %s24
    %p457 = scmp.lt.s32.totalorder %s24, 3
    %p458 = pnand %p456, %p457
    %p459 = pneg %p458
    // Predicated region
    $region9: #{decoder_forward.3} parent=5 // pred_check
      _
    $region10: #{decoder_forward.3} parent=5 // pred_check_branch
      %461 = sbr.rel (%p458) target = $region12
    $region11: #{decoder_forward.3} parent=5 // pred_region
      %s462 = ssub.s32 %s24, 1
      // Predicated region
      $region13: #{decoder_forward.3} parent=11 // pred_check
        %p463 = pneg %p149
      $region14: #{decoder_forward.3} parent=11 // pred_check_branch
        %465 = sbr.rel (%p463) target = $region16
      $region15: #{decoder_forward.3} parent=11 // pred_region
        _
      $region16: #{decoder_forward.3} parent=11 // pred_fallthru
        _
      // Predicated region
      $region17: #{decoder_forward.3} parent=11 // pred_check
        %p466 = pneg %p170
      $region18: #{decoder_forward.3} parent=11 // pred_check_branch
        %468 = sbr.rel (%p466) target = $region20
      $region19: #{decoder_forward.3} parent=11 // pred_region
        _
      $region20: #{decoder_forward.3} parent=11 // pred_fallthru
        _
      // Predicated region
      $region21: #{decoder_forward.3} parent=11 // pred_check
        %p469 = pneg %p191
      $region22: #{decoder_forward.3} parent=11 // pred_check_branch
        %471 = sbr.rel (%p469) target = $region24
      $region23: #{decoder_forward.3} parent=11 // pred_region
        _
      $region24: #{decoder_forward.3} parent=11 // pred_fallthru
        _
      // Predicated region
      $region25: #{decoder_forward.3} parent=11 // pred_check
        %p472 = pneg %p212
      $region26: #{decoder_forward.3} parent=11 // pred_check_branch
        %474 = sbr.rel (%p472) target = $region28
      $region27: #{decoder_forward.3} parent=11 // pred_region
        _
      $region28: #{decoder_forward.3} parent=11 // pred_fallthru
        _
      // Predicated region
      $region29: #{decoder_forward.3} parent=11 // pred_check
        %p475 = pneg %p233
      $region30: #{decoder_forward.3} parent=11 // pred_check_branch
        %477 = sbr.rel (%p475) target = $region32
      $region31: #{decoder_forward.3} parent=11 // pred_region
        _
      $region32: #{decoder_forward.3} parent=11 // pred_fallthru
        _
      // Predicated region
      $region33: #{decoder_forward.3} parent=11 // pred_check
        %p478 = pneg %p254
      $region34: #{decoder_forward.3} parent=11 // pred_check_branch
        %480 = sbr.rel (%p478) target = $region36
      $region35: #{decoder_forward.3} parent=11 // pred_region
        _
      $region36: #{decoder_forward.3} parent=11 // pred_fallthru
        _
      // Predicated region
      $region37: #{decoder_forward.3} parent=11 // pred_check
        %p481 = pneg %p275
      $region38: #{decoder_forward.3} parent=11 // pred_check_branch
        %483 = sbr.rel (%p481) target = $region40
      $region39: #{decoder_forward.3} parent=11 // pred_region
        _
      $region40: #{decoder_forward.3} parent=11 // pred_fallthru
        _
      // Predicated region
      $region41: #{decoder_forward.3} parent=11 // pred_check
        %p484 = pneg %p296
      $region42: #{decoder_forward.3} parent=11 // pred_check_branch
        %486 = sbr.rel (%p484) target = $region44
      $region43: #{decoder_forward.3} parent=11 // pred_region
        _
      $region44: #{decoder_forward.3} parent=11 // pred_fallthru
        _
      // Predicated region
      $region45: #{decoder_forward.3} parent=11 // pred_check
        %p487 = pneg %p317
      $region46: #{decoder_forward.3} parent=11 // pred_check_branch
        %489 = sbr.rel (%p487) target = $region48
      $region47: #{decoder_forward.3} parent=11 // pred_region
        _
      $region48: #{decoder_forward.3} parent=11 // pred_fallthru
        _
      // Predicated region
      $region49: #{decoder_forward.3} parent=11 // pred_check
        %p490 = pneg %p338
      $region50: #{decoder_forward.3} parent=11 // pred_check_branch
        %492 = sbr.rel (%p490) target = $region52
      $region51: #{decoder_forward.3} parent=11 // pred_region
        _
      $region52: #{decoder_forward.3} parent=11 // pred_fallthru
        _
      // Predicated region
      $region53: #{decoder_forward.3} parent=11 // pred_check
        %p493 = pneg %p359
      $region54: #{decoder_forward.3} parent=11 // pred_check_branch
        %495 = sbr.rel (%p493) target = $region56
      $region55: #{decoder_forward.3} parent=11 // pred_region
        _
      $region56: #{decoder_forward.3} parent=11 // pred_fallthru
        _
      // Predicated region
      $region57: #{decoder_forward.3} parent=11 // pred_check
        %p496 = pneg %p380
      $region58: #{decoder_forward.3} parent=11 // pred_check_branch
        %498 = sbr.rel (%p496) target = $region60
      $region59: #{decoder_forward.3} parent=11 // pred_region
        _
      $region60: #{decoder_forward.3} parent=11 // pred_fallthru
        _
      // Predicated region
      $region61: #{decoder_forward.3} parent=11 // pred_check
        %p499 = pneg %p401
      $region62: #{decoder_forward.3} parent=11 // pred_check_branch
        %501 = sbr.rel (%p499) target = $region64
      $region63: #{decoder_forward.3} parent=11 // pred_region
        _
      $region64: #{decoder_forward.3} parent=11 // pred_fallthru
        _
      // Predicated region
      $region65: #{decoder_forward.3} parent=11 // pred_check
        %p502 = pneg %p422
      $region66: #{decoder_forward.3} parent=11 // pred_check_branch
        %504 = sbr.rel (%p502) target = $region68
      $region67: #{decoder_forward.3} parent=11 // pred_region
        _
      $region68: #{decoder_forward.3} parent=11 // pred_fallthru
        _
    $region12: #{decoder_forward.3} parent=5 // pred_fallthru
      _
    %p505 = scmp.lt.s32.totalorder %s24, 2
    // Predicated region
    $region69: #{decoder_forward.3} parent=5 // pred_check
      %p506 = pneg %p505
    $region70: #{decoder_forward.3} parent=5 // pred_check_branch
      %508 = sbr.rel (%p506) target = $region72
    $region71: #{decoder_forward.3} parent=5 // pred_region
      // Predicated region
      $region73: #{decoder_forward.3} parent=71 // pred_check
        %p509 = pneg %p44
      $region74: #{decoder_forward.3} parent=71 // pred_check_branch
        %511 = sbr.rel (%p509) target = $region76
      $region75: #{decoder_forward.3} parent=71 // pred_region
        %p512 = scmp.lt.s32.totalorder %s24, 1
        %s513 = scalar_select %p512, %s24, 1
        %s514 = smul.addr %s513, 8
        %s515 = scalar_lea.vmem %s0, %s514
      $region76: #{decoder_forward.3} parent=71 // pred_fallthru
        _
      // Predicated region
      $region77: #{decoder_forward.3} parent=71 // pred_check
        %p516 = pneg %p70
      $region78: #{decoder_forward.3} parent=71 // pred_check_branch
        %518 = sbr.rel (%p516) target = $region80
      $region79: #{decoder_forward.3} parent=71 // pred_region
        %p519 = scmp.lt.s32.totalorder %s24, 1
        %s520 = scalar_select %p519, %s24, 1
        %s521 = smul.addr %s520, 2
        %s522 = smul.addr %s521, 8
        %s523 = scalar_lea.vmem %s1, %s522
      $region80: #{decoder_forward.3} parent=71 // pred_fallthru
        _
      // Predicated region
      $region81: #{decoder_forward.3} parent=71 // pred_check
        %p524 = pneg %p96
      $region82: #{decoder_forward.3} parent=71 // pred_check_branch
        %526 = sbr.rel (%p524) target = $region84
      $region83: #{decoder_forward.3} parent=71 // pred_region
        %p527 = scmp.lt.s32.totalorder %s24, 1
        %s528 = scalar_select %p527, %s24, 1
        %s529 = smul.addr %s528, 8
        %s530 = scalar_lea.vmem %s2, %s529
      $region84: #{decoder_forward.3} parent=71 // pred_fallthru
        _
      // Predicated region
      $region85: #{decoder_forward.3} parent=71 // pred_check
        %p531 = pneg %p122
      $region86: #{decoder_forward.3} parent=71 // pred_check_branch
        %533 = sbr.rel (%p531) target = $region88
      $region87: #{decoder_forward.3} parent=71 // pred_region
        %p534 = scmp.lt.s32.totalorder %s24, 1
        %s535 = scalar_select %p534, %s24, 1
        %s536 = smul.addr %s535, 8
        %s537 = scalar_lea.vmem %s3, %s536
      $region88: #{decoder_forward.3} parent=71 // pred_fallthru
        _
    $region72: #{decoder_forward.3} parent=5 // pred_fallthru
      _
    %p538 = scmp.le.s32.totalorder 1, %s24
    %p539 = scmp.lt.s32.totalorder %s24, 3
    %p540 = pnand %p538, %p539
    %p541 = pneg %p540
    // Predicated region
    $region89: #{decoder_forward.3} parent=5 // pred_check
      _
    $region90: #{decoder_forward.3} parent=5 // pred_check_branch
      %543 = sbr.rel (%p540) target = $region92
    $region91: #{decoder_forward.3} parent=5 // pred_region
      %s544 = ssub.s32 %s24, 1
      %p545 = scmp.lt.s32.totalorder %s29, 1
      %s546 = scalar_select %p545, %s29, 1
      %s547 = smul.addr %s546, 8
      %s548 = scalar_lea.vmem %s0, %s547
      %p549 = pneg %p50
      %p550 = pneg %p47
      %p551 = scmp.lt.s32.totalorder %s29, 1
      %s552 = scalar_select %p551, %s29, 1
      %s553 = smul.addr %s552, 2
      %s554 = smul.addr %s553, 8
      %s555 = scalar_lea.vmem %s1, %s554
      %p556 = pneg %p76
      %p557 = pneg %p73
      %p558 = scmp.lt.s32.totalorder %s29, 1
      %s559 = scalar_select %p558, %s29, 1
      %s560 = smul.addr %s559, 8
      %s561 = scalar_lea.vmem %s2, %s560
      %p562 = pneg %p102
      %p563 = pneg %p99
      %p564 = scmp.lt.s32.totalorder %s29, 1
      %s565 = scalar_select %p564, %s29, 1
      %s566 = smul.addr %s565, 8
      %s567 = scalar_lea.vmem %s3, %s566
      %p568 = pneg %p128
      %p569 = pneg %p125
      %p570 = pneg %p149
      %p571 = pneg %p146
      %p572 = pneg %p170
      %p573 = pneg %p167
      %p574 = pneg %p191
      %p575 = pneg %p188
      %p576 = pneg %p212
      %p577 = pneg %p209
      %p578 = pneg %p233
      %p579 = pneg %p230
      %p580 = pneg %p254
      %p581 = pneg %p251
      %p582 = pneg %p275
      %p583 = pneg %p272
      %p584 = pneg %p296
      %p585 = pneg %p293
      %p586 = pneg %p317
      %p587 = pneg %p314
      %p588 = pneg %p338
      %p589 = pneg %p335
      %p590 = pneg %p359
      %p591 = pneg %p356
      %p592 = pneg %p380
      %p593 = pneg %p377
      %p594 = pneg %p401
      %p595 = pneg %p398
      %p596 = pneg %p422
      %p597 = pneg %p419
      %p598 = pneg %p448
      %p599 = pneg %p445
      %p600 = scmp.lt.s32.totalorder %s29, 1
      %s601 = scalar_select %p600, %s29, 1
      %s602 = smul.addr %s601, 8
      %s603 = scalar_lea.vmem %s18, %s602
      %p604 = scmp.lt.s32.totalorder %s29, 1
      %s605 = scalar_select %p604, %s29, 1
      %s606 = smul.addr %s605, 8
      %s607 = scalar_lea.vmem %s0, %s606
      %p608 = scmp.lt.s32.totalorder %s29, 1
      %s609 = scalar_select %p608, %s29, 1
      %s610 = smul.addr %s609, 2
      %s611 = smul.addr %s610, 8
      %s612 = scalar_lea.vmem %s1, %s611
      %p613 = scmp.lt.s32.totalorder %s29, 1
      %s614 = scalar_select %p613, %s29, 1
      %s615 = smul.addr %s614, 8
      %s616 = scalar_lea.vmem %s2, %s615
      %p617 = scmp.lt.s32.totalorder %s29, 1
      %s618 = scalar_select %p617, %s29, 1
      %s619 = smul.addr %s618, 8
      %s620 = scalar_lea.vmem %s3, %s619
      %p621 = scmp.lt.s32.totalorder %s29, 1
      %s622 = scalar_select %p621, %s29, 1
      %s623 = smul.addr %s622, 8
      %s624 = scalar_lea.vmem %s18, %s623
      %v626 = vld [vmem:[%s607] sm:$0xff]
      %v627 = vld [vmem:[%s612] sm:$0xff]
      %v628 = vld [vmem:[%s612 + $0x8] sm:$0x3]
      %v629 = vld [vmem:[%s616] sm:$0xff]
      %v630 = vld [vmem:[%s620] sm:$0xff]
      %v631 = vld [vmem:[%s13] sm:$0x3f]
      %v632 = vld [vmem:[%s4] sm:$0x1]
      %v633 = vld [vmem:[%s5] sm:$0xf]
      %v634 = vld [vmem:[%s5 + $0x4] sm:$0xf]
      %v635 = vld [vmem:[%s5 + $0x8] sm:$0xf]
      %v636 = vld [vmem:[%s5 + $0xc] sm:$0xf]
      %v637 = vld [vmem:[%s6] sm:$0x1]
      %v638 = vld [vmem:[%s7] sm:$0xf]
      %v639 = vld [vmem:[%s7 + $0x4] sm:$0xf]
      %v640 = vld [vmem:[%s7 + $0x8] sm:$0xf]
      %v641 = vld [vmem:[%s7 + $0xc] sm:$0xf]
      %v642 = vld [vmem:[%s8] sm:$0x1]
      %v643 = vpack.c.bf16 %v626, %v626
      %v645 = vlaneseq
      %v646 = vshrl.u32 %v645, 7
      %v647 = vsub.s32 0, %v646
      %v648 = vrot.slane %v637, %v647
      %v654 = vunpack.c.l.b16 %v633
      %v655 = vunpack.c.l.b16 %v634
      %v656 = vunpack.c.l.b16 %v635
      %v657 = vunpack.c.l.b16 %v636
      %v658 = vpack.c.b16 %v655, %v654
      %v659 = vpack.c.b16 %v657, %v656
      %vm662 = vcmask 261120
      %v664 = vsel %vm662, %v643, 0
      %666 = vmatprep.subr.bf16.mxu0 0
      %667 = vmatpush1.bf16.msra.mxu0 %v658
      %668 = vmatprep.subr.bf16.mxu0 0
      %669 = vmatpush1.bf16.msra.mxu0 %v659
      %670 = vmatprep.subr.bf16.mxu0 0
      %671 = vmatpush1.bf16.msra.mxu0 0
      %672 = vmatprep.subr.bf16.mxu0 0
      %673 = vmatpush1.bf16.msra.mxu0 0
      %674 = vmatprep.subr.bf16.mxu0 0
      %675 = vmatpush1.bf16.msra.mxu0 0
      %676 = vmatprep.subr.bf16.mxu0 0
      %677 = vmatpush1.bf16.msra.mxu0 0
      %678 = vmatprep.subr.bf16.mxu0 0
      %679 = vmatpush1.bf16.msra.mxu0 0
      %680 = vmatprep.subr.bf16.mxu0 0
      %681 = vmatpush1.bf16.msra.mxu0 0
      %682 = vmatprep.subr.bf16.mxu0 0
      %683 = vmatpush1.bf16.msra.mxu0 0
      %684 = vmatprep.subr.bf16.mxu0 0
      %685 = vmatpush1.bf16.msra.mxu0 0
      %686 = vmatprep.subr.bf16.mxu0 0
      %687 = vmatpush1.bf16.msra.mxu0 0
      %688 = vmatprep.subr.bf16.mxu0 0
      %689 = vmatpush1.bf16.msra.mxu0 0
      %690 = vmatprep.subr.bf16.mxu0 0
      %691 = vmatpush1.bf16.msra.mxu0 0
      %692 = vmatprep.subr.bf16.mxu0 0
      %693 = vmatpush1.bf16.msra.mxu0 0
      %694 = vmatprep.subr.bf16.mxu0 0
      %695 = vmatpush1.bf16.msra.mxu0 0
      %696 = vmatprep.subr.bf16.mxu0 0
      %697 = vmatpush1.bf16.msra.mxu0 0
      %698 = vmatprep.mubr.bf16.mxu0 0
      %699 = vmatmul.mubr.bf16.gmra.mrb[0].mxu0 %v664
      %v700 = vpop.f32.mrb[0].mxu0
      %v701 = vadd.f32 %v648, %v700
      %v702 = vpop.f32.mrb[0].mxu0
      %v703 = vpop.f32.mrb[0].mxu0
      %v704 = vpop.f32.mrb[0].mxu0
      %705 = vdwg.mxu0
      %706 = vrot.lane.b32.xlu0 %v658, 96
      %v707 = vpop.permute.xlu0 %706
      %708 = vrot.lane.b32.xlu0 %v659, 96
      %v709 = vpop.permute.xlu0 %708
      %712 = vrot.lane.b32.xlu0 %v648, 96
      %v713 = vpop.permute.xlu0 %712
      %715 = vmatprep.subr.bf16.mxu0 0
      %716 = vmatpush1.bf16.msra.mxu0 %v707
      %717 = vmatprep.subr.bf16.mxu0 0
      %718 = vmatpush1.bf16.msra.mxu0 %v709
      %719 = vmatprep.subr.bf16.mxu0 0
      %720 = vmatpush1.bf16.msra.mxu0 0
      %721 = vmatprep.subr.bf16.mxu0 0
      %722 = vmatpush1.bf16.msra.mxu0 0
      %723 = vmatprep.subr.bf16.mxu0 0
      %724 = vmatpush1.bf16.msra.mxu0 0
      %725 = vmatprep.subr.bf16.mxu0 0
      %726 = vmatpush1.bf16.msra.mxu0 0
      %727 = vmatprep.subr.bf16.mxu0 0
      %728 = vmatpush1.bf16.msra.mxu0 0
      %729 = vmatprep.subr.bf16.mxu0 0
      %730 = vmatpush1.bf16.msra.mxu0 0
      %731 = vmatprep.subr.bf16.mxu0 0
      %732 = vmatpush1.bf16.msra.mxu0 0
      %733 = vmatprep.subr.bf16.mxu0 0
      %734 = vmatpush1.bf16.msra.mxu0 0
      %735 = vmatprep.subr.bf16.mxu0 0
      %736 = vmatpush1.bf16.msra.mxu0 0
      %737 = vmatprep.subr.bf16.mxu0 0
      %738 = vmatpush1.bf16.msra.mxu0 0
      %739 = vmatprep.subr.bf16.mxu0 0
      %740 = vmatpush1.bf16.msra.mxu0 0
      %741 = vmatprep.subr.bf16.mxu0 0
      %742 = vmatpush1.bf16.msra.mxu0 0
      %743 = vmatprep.subr.bf16.mxu0 0
      %744 = vmatpush1.bf16.msra.mxu0 0
      %745 = vmatprep.subr.bf16.mxu0 0
      %746 = vmatpush1.bf16.msra.mxu0 0
      %747 = vmatprep.mubr.bf16.mxu0 0
      %748 = vmatmul.mubr.bf16.gmra.mrb[0].mxu0 %v664
      %v749 = vpop.f32.mrb[0].mxu0
      %v750 = vadd.f32 %v713, %v749
      %v751 = vpop.f32.mrb[0].mxu0
      %v752 = vpop.f32.mrb[0].mxu0
      %v753 = vpop.f32.mrb[0].mxu0
      %754 = vdwg.mxu0
      %v755 = vmul.f32 %v701, %v701
      %vm756 = vcmask 64512
      %v757 = vsel %vm756, %v755, 0.0
      %758 = vadd.xlane.f32.xlu0 %v757
      %v759 = vpop.xlane.xlu0 %758
      %v760 = vmax.f32 %v759, 1e-24
      %v761 = vrsqrt.pop %v760
      %v762 = vmul.f32 %v701, %v761
      %v764 = vlaneseq
      %v765 = vshrl.u32 %v764, 7
      %v766 = vsub.s32 0, %v765
      %v767 = vrot.slane %v632, %v766
      %768 = vset.pattern.permute.xlu0 0
      %769 = vperm.xlu0 %768, %v767
      %v770 = vpop.permute.xlu0 %769
      %v772 = vmul.f32 %v762, %v770
      %v773 = vmul.f32 %v750, %v750
      %v774 = vsel %vm756, %v773, 0.0
      %775 = vadd.xlane.f32.xlu0 %v774
      %v776 = vpop.xlane.xlu0 %775
      %v777 = vmax.f32 %v776, 1e-24
      %v778 = vrsqrt.pop %v777
      %v779 = vmul.f32 %v750, %v778
      %v780 = vpack.c.bf16 %v772, %v772
      %v781 = vpack.c.bf16 %v779, %v779
      %v783 = vsel %vm756, %v780, 0
      %v786 = vsel %vm756, %v781, 0
      %788 = vmatprep.subr.bf16.mxu0 0
      %789 = vmatpush1.bf16.xpose.msra.mxu0 %v786
      %790 = vmatprep.subr.bf16.mxu0 0
      %791 = vmatpush1.bf16.xpose.msra.mxu0 0
      %792 = vmatprep.subr.bf16.mxu0 0
      %793 = vmatpush1.bf16.xpose.msra.mxu0 0
      %794 = vmatprep.subr.bf16.mxu0 0
      %795 = vmatpush1.bf16.xpose.msra.mxu0 0
      %796 = vmatprep.subr.bf16.mxu0 0
      %797 = vmatpush1.bf16.xpose.msra.mxu0 0
      %798 = vmatprep.subr.bf16.mxu0 0
      %799 = vmatpush1.bf16.xpose.msra.mxu0 0
      %800 = vmatprep.subr.bf16.mxu0 0
      %801 = vmatpush1.bf16.xpose.msra.mxu0 0
      %802 = vmatprep.subr.bf16.mxu0 0
      %803 = vmatpush1.bf16.xpose.msra.mxu0 0
      %804 = vmatprep.subr.bf16.mxu0 0
      %805 = vmatpush1.bf16.xpose.msra.mxu0 0
      %806 = vmatprep.subr.bf16.mxu0 0
      %807 = vmatpush1.bf16.xpose.msra.mxu0 0
      %808 = vmatprep.subr.bf16.mxu0 0
      %809 = vmatpush1.bf16.xpose.msra.mxu0 0
      %810 = vmatprep.subr.bf16.mxu0 0
      %811 = vmatpush1.bf16.xpose.msra.mxu0 0
      %812 = vmatprep.subr.bf16.mxu0 0
      %813 = vmatpush1.bf16.xpose.msra.mxu0 0
      %814 = vmatprep.subr.bf16.mxu0 0
      %815 = vmatpush1.bf16.xpose.msra.mxu0 0
      %816 = vmatprep.subr.bf16.mxu0 0
      %817 = vmatpush1.bf16.xpose.msra.mxu0 0
      %818 = vmatprep.subr.bf16.mxu0 0
      %819 = vmatpush1.bf16.xpose.msra.mxu0 0
      %820 = vmatprep.mubr.bf16.mxu0 0
      %821 = vmatmul.mubr.bf16.gmra.mrb[0].mxu0 %v783
      %v822 = vpop.f32.mrb[0].mxu0
      %v823 = vadd.f32 0.0, %v822
      %v824 = vpop.f32.mrb[0].mxu0
      %v825 = vpop.f32.mrb[0].mxu0
      %v826 = vpop.f32.mrb[0].mxu0
      %827 = vdwg.mxu0
      %vm828 = vcmp.eq.f32.partialorder %v629, 0.0
      %v829 = vsel %vm828, -1e+18, %v823
      %v830 = vsel %vm756, %v829, -inf
      %831 = vmax.xlane.f32.xlu0 %v830
      %v832 = vpop.xlane.xlu0 %831
      %v833 = vsub.f32 %v829, %v832
      %v834 = vmul.f32 %v833, 1.442695
      %v835 = vpow.pop %v834
      %v836 = vsel %vm756, %v835, 0.0
      %837 = vadd.xlane.f32.xlu0 %v836
      %v838 = vpop.xlane.xlu0 %837
      %v839 = vrcp.pop %v838
      %v840 = vmul.f32 %v835, %v839
      %v841 = vpack.c.bf16 %v840, %v840
      %v842 = vpack.c.bf16 %v750, %v750
      %844 = vrot.lane.b32.xlu0 %v842, 96
      %v845 = vpop.permute.xlu0 %844
      %v847 = vsel %vm756, %v841, 0
      %vm849 = vcmask 1043456
      %v851 = vsel %vm849, %v845, 0
      %853 = vmatprep.subr.bf16.mxu0 0
      %854 = vmatpush1.bf16.msra.mxu0 %v851
      %855 = vmatprep.subr.bf16.mxu0 0
      %856 = vmatpush1.bf16.msra.mxu0 0
      %857 = vmatprep.subr.bf16.mxu0 0
      %858 = vmatpush1.bf16.msra.mxu0 0
      %859 = vmatprep.subr.bf16.mxu0 0
      %860 = vmatpush1.bf16.msra.mxu0 0
      %861 = vmatprep.subr.bf16.mxu0 0
      %862 = vmatpush1.bf16.msra.mxu0 0
      %863 = vmatprep.subr.bf16.mxu0 0
      %864 = vmatpush1.bf16.msra.mxu0 0
      %865 = vmatprep.subr.bf16.mxu0 0
      %866 = vmatpush1.bf16.msra.mxu0 0
      %867 = vmatprep.subr.bf16.mxu0 0
      %868 = vmatpush1.bf16.msra.mxu0 0
      %869 = vmatprep.subr.bf16.mxu0 0
      %870 = vmatpush1.bf16.msra.mxu0 0
      %871 = vmatprep.subr.bf16.mxu0 0
      %872 = vmatpush1.bf16.msra.mxu0 0
      %873 = vmatprep.subr.bf16.mxu0 0
      %874 = vmatpush1.bf16.msra.mxu0 0
      %875 = vmatprep.subr.bf16.mxu0 0
      %876 = vmatpush1.bf16.msra.mxu0 0
      %877 = vmatprep.subr.bf16.mxu0 0
      %878 = vmatpush1.bf16.msra.mxu0 0
      %879 = vmatprep.subr.bf16.mxu0 0
      %880 = vmatpush1.bf16.msra.mxu0 0
      %881 = vmatprep.subr.bf16.mxu0 0
      %882 = vmatpush1.bf16.msra.mxu0 0
      %883 = vmatprep.subr.bf16.mxu0 0
      %884 = vmatpush1.bf16.msra.mxu0 0
      %885 = vmatprep.mubr.bf16.mxu0 0
      %886 = vmatmul.mubr.bf16.gmra.mrb[0].mxu0 %v847
      %v887 = vpop.f32.mrb[0].mxu0
      %v888 = vadd.f32 0.0, %v887
      %v889 = vpop.f32.mrb[0].mxu0
      %v890 = vpop.f32.mrb[0].mxu0
      %v891 = vpop.f32.mrb[0].mxu0
      %892 = vdwg.mxu0
      %894 = vrot.lane.b32.xlu0 %v755, 120
      %v895 = vpop.permute.xlu0 %894
      %v897 = vsel %vm756, %v895, 0.0
      %898 = vadd.xlane.f32.xlu0 %v897
      %v899 = vpop.xlane.xlu0 %898
      %v900 = vmax.f32 %v899, 1e-24
      %v901 = vrsqrt.pop %v900
      %v902 = vmul.f32 %v701, %v901
      %v903 = vmul.f32 %v902, %v770
      %905 = vrot.lane.b32.xlu0 %v773, 120
      %v906 = vpop.permute.xlu0 %905
      %v908 = vsel %vm756, %v906, 0.0
      %909 = vadd.xlane.f32.xlu0 %v908
      %v910 = vpop.xlane.xlu0 %909
      %v911 = vmax.f32 %v910, 1e-24
      %v912 = vrsqrt.pop %v911
      %v913 = vmul.f32 %v750, %v912
      %v914 = vpack.c.bf16 %v903, %v903
      %v915 = vpack.c.bf16 %v913, %v913
      %917 = vrot.lane.b32.xlu0 %v914, 120
      %v918 = vpop.permute.xlu0 %917
      %920 = vrot.lane.b32.xlu0 %v915, 120
      %v921 = vpop.permute.xlu0 %920
      %v923 = vsel %vm756, %v918, 0
      %v926 = vsel %vm756, %v921, 0
      %928 = vmatprep.subr.bf16.mxu0 0
      %929 = vmatpush1.bf16.xpose.msra.mxu0 %v926
      %930 = vmatprep.subr.bf16.mxu0 0
      %931 = vmatpush1.bf16.xpose.msra.mxu0 0
      %932 = vmatprep.subr.bf16.mxu0 0
      %933 = vmatpush1.bf16.xpose.msra.mxu0 0
      %934 = vmatprep.subr.bf16.mxu0 0
      %935 = vmatpush1.bf16.xpose.msra.mxu0 0
      %936 = vmatprep.subr.bf16.mxu0 0
      %937 = vmatpush1.bf16.xpose.msra.mxu0 0
      %938 = vmatprep.subr.bf16.mxu0 0
      %939 = vmatpush1.bf16.xpose.msra.mxu0 0
      %940 = vmatprep.subr.bf16.mxu0 0
      %941 = vmatpush1.bf16.xpose.msra.mxu0 0
      %942 = vmatprep.subr.bf16.mxu0 0
      %943 = vmatpush1.bf16.xpose.msra.mxu0 0
      %944 = vmatprep.subr.bf16.mxu0 0
      %945 = vmatpush1.bf16.xpose.msra.mxu0 0
      %946 = vmatprep.subr.bf16.mxu0 0
      %947 = vmatpush1.bf16.xpose.msra.mxu0 0
      %948 = vmatprep.subr.bf16.mxu0 0
      %949 = vmatpush1.bf16.xpose.msra.mxu0 0
      %950 = vmatprep.subr.bf16.mxu0 0
      %951 = vmatpush1.bf16.xpose.msra.mxu0 0
      %952 = vmatprep.subr.bf16.mxu0 0
      %953 = vmatpush1.bf16.xpose.msra.mxu0 0
      %954 = vmatprep.subr.bf16.mxu0 0
      %955 = vmatpush1.bf16.xpose.msra.mxu0 0
      %956 = vmatprep.subr.bf16.mxu0 0
      %957 = vmatpush1.bf16.xpose.msra.mxu0 0
      %958 = vmatprep.subr.bf16.mxu0 0
      %959 = vmatpush1.bf16.xpose.msra.mxu0 0
      %960 = vmatprep.mubr.bf16.mxu0 0
      %961 = vmatmul.mubr.bf16.gmra.mrb[0].mxu0 %v923
      %v962 = vpop.f32.mrb[0].mxu0
      %v963 = vadd.f32 0.0, %v962
      %v964 = vpop.f32.mrb[0].mxu0
      %v965 = vpop.f32.mrb[0].mxu0
      %v966 = vpop.f32.mrb[0].mxu0
      %967 = vdwg.mxu0
      %v968 = vsel %vm828, -1e+18, %v963
      %v969 = vsel %vm756, %v968, -inf
      %970 = vmax.xlane.f32.xlu0 %v969
      %v971 = vpop.xlane.xlu0 %970
      %v972 = vsub.f32 %v968, %v971
      %v973 = vmul.f32 %v972, 1.442695
      %v974 = vpow.pop %v973
      %v975 = vsel %vm756, %v974, 0.0
      %976 = vadd.xlane.f32.xlu0 %v975
      %v977 = vpop.xlane.xlu0 %976
      %v978 = vrcp.pop %v977
      %v979 = vmul.f32 %v974, %v978
      %v980 = vpack.c.bf16 %v979, %v979
      %981 = vrot.lane.b32.xlu0 %v842, 88
      %v982 = vpop.permute.xlu0 %981
      %v984 = vsel %vm756, %v980, 0
      %v987 = vsel %vm849, %v982, 0
      %989 = vmatprep.subr.bf16.mxu0 0
      %990 = vmatpush1.bf16.msra.mxu0 %v987
      %991 = vmatprep.subr.bf16.mxu0 0
      %992 = vmatpush1.bf16.msra.mxu0 0
      %993 = vmatprep.subr.bf16.mxu0 0
      %994 = vmatpush1.bf16.msra.mxu0 0
      %995 = vmatprep.subr.bf16.mxu0 0
      %996 = vmatpush1.bf16.msra.mxu0 0
      %997 = vmatprep.subr.bf16.mxu0 0
      %998 = vmatpush1.bf16.msra.mxu0 0
      %999 = vmatprep.subr.bf16.mxu0 0
      %1000 = vmatpush1.bf16.msra.mxu0 0
      %1001 = vmatprep.subr.bf16.mxu0 0
      %1002 = vmatpush1.bf16.msra.mxu0 0
      %1003 = vmatprep.subr.bf16.mxu0 0
      %1004 = vmatpush1.bf16.msra.mxu0 0
      %1005 = vmatprep.subr.bf16.mxu0 0
      %1006 = vmatpush1.bf16.msra.mxu0 0
      %1007 = vmatprep.subr.bf16.mxu0 0
      %1008 = vmatpush1.bf16.msra.mxu0 0
      %1009 = vmatprep.subr.bf16.mxu0 0
      %1010 = vmatpush1.bf16.msra.mxu0 0
      %1011 = vmatprep.subr.bf16.mxu0 0
      %1012 = vmatpush1.bf16.msra.mxu0 0
      %1013 = vmatprep.subr.bf16.mxu0 0
      %1014 = vmatpush1.bf16.msra.mxu0 0
      %1015 = vmatprep.subr.bf16.mxu0 0
      %1016 = vmatpush1.bf16.msra.mxu0 0
      %1017 = vmatprep.subr.bf16.mxu0 0
      %1018 = vmatpush1.bf16.msra.mxu0 0
      %1019 = vmatprep.subr.bf16.mxu0 0
      %1020 = vmatpush1.bf16.msra.mxu0 0
      %1021 = vmatprep.mubr.bf16.mxu0 0
      %1022 = vmatmul.mubr.bf16.gmra.mrb[0].mxu0 %v984
      %v1023 = vpop.f32.mrb[0].mxu0
      %v1024 = vadd.f32 0.0, %v1023
      %v1025 = vpop.f32.mrb[0].mxu0
      %v1026 = vpop.f32.mrb[0].mxu0
      %v1027 = vpop.f32.mrb[0].mxu0
      %1028 = vdwg.mxu0
      %1029 = vrot.lane.b32.xlu0 %v755, 112
      %v1030 = vpop.permute.xlu0 %1029
      %v1032 = vsel %vm756, %v1030, 0.0
      %1033 = vadd.xlane.f32.xlu0 %v1032
      %v1034 = vpop.xlane.xlu0 %1033
      %v1035 = vmax.f32 %v1034, 1e-24
      %v1036 = vrsqrt.pop %v1035
      %v1037 = vmul.f32 %v701, %v1036
      %v1038 = vmul.f32 %v1037, %v770
      %1039 = vrot.lane.b32.xlu0 %v773, 112
      %v1040 = vpop.permute.xlu0 %1039
      %v1042 = vsel %vm756, %v1040, 0.0
      %1043 = vadd.xlane.f32.xlu0 %v1042
      %v1044 = vpop.xlane.xlu0 %1043
      %v1045 = vmax.f32 %v1044, 1e-24
      %v1046 = vrsqrt.pop %v1045
      %v1047 = vmul.f32 %v750, %v1046
      %v1048 = vpack.c.bf16 %v1038, %v1038
      %v1049 = vpack.c.bf16 %v1047, %v1047
      %1051 = vrot.lane.b32.xlu0 %v1048, 112
      %v1052 = vpop.permute.xlu0 %1051
      %1054 = vrot.lane.b32.xlu0 %v1049, 112
      %v1055 = vpop.permute.xlu0 %1054
      %v1057 = vsel %vm756, %v1052, 0
      %v1060 = vsel %vm756, %v1055, 0
      %1062 = vmatprep.subr.bf16.mxu0 0
      %1063 = vmatpush1.bf16.xpose.msra.mxu0 %v1060
      %1064 = vmatprep.subr.bf16.mxu0 0
      %1065 = vmatpush1.bf16.xpose.msra.mxu0 0
      %1066 = vmatprep.subr.bf16.mxu0 0
      %1067 = vmatpush1.bf16.xpose.msra.mxu0 0
      %1068 = vmatprep.subr.bf16.mxu0 0
      %1069 = vmatpush1.bf16.xpose.msra.mxu0 0
      %1070 = vmatprep.subr.bf16.mxu0 0
      %1071 = vmatpush1.bf16.xpose.msra.mxu0 0
      %1072 = vmatprep.subr.bf16.mxu0 0
      %1073 = vmatpush1.bf16.xpose.msra.mxu0 0
      %1074 = vmatprep.subr.bf16.mxu0 0
      %1075 = vmatpush1.bf16.xpose.msra.mxu0 0
      %1076 = vmatprep.subr.bf16.mxu0 0
      %1077 = vmatpush1.bf16.xpose.msra.mxu0 0
      %1078 = vmatprep.subr.bf16.mxu0 0
      %1079 = vmatpush1.bf16.xpose.msra.mxu0 0
      %1080 = vmatprep.subr.bf16.mxu0 0
      %1081 = vmatpush1.bf16.xpose.msra.mxu0 0
      %1082 = vmatprep.subr.bf16.mxu0 0
      %1083 = vmatpush1.bf16.xpose.msra.mxu0 0
      %1084 = vmatprep.subr.bf16.mxu0 0
      %1085 = vmatpush1.bf16.xpose.msra.mxu0 0
      %1086 = vmatprep.subr.bf16.mxu0 0
      %1087 = vmatpush1.bf16.xpose.msra.mxu0 0
      %1088 = vmatprep.subr.bf16.mxu0 0
      %1089 = vmatpush1.bf16.xpose.msra.mxu0 0
      %1090 = vmatprep.subr.bf16.mxu0 0
      %1091 = vmatpush1.bf16.xpose.msra.mxu0 0
      %1092 = vmatprep.subr.bf16.mxu0 0
      %1093 = vmatpush1.bf16.xpose.msra.mxu0 0
      %1094 = vmatprep.mubr.bf16.mxu0 0
      %1095 = vmatmul.mubr.bf16.gmra.mrb[0].mxu0 %v1057
      %v1096 = vpop.f32.mrb[0].mxu0
      %v1097 = vadd.f32 0.0, %v1096
      %v1098 = vpop.f32.mrb[0].mxu0
      %v1099 = vpop.f32.mrb[0].mxu0
      %v1100 = vpop.f32.mrb[0].mxu0
      %1101 = vdwg.mxu0
      %v1102 = vsel %vm828, -1e+18, %v1097
      %v1103 = vsel %vm756, %v1102, -inf
      %1104 = vmax.xlane.f32.xlu0 %v1103
      %v1105 = vpop.xlane.xlu0 %1104
      %v1106 = vsub.f32 %v1102, %v1105
      %v1107 = vmul.f32 %v1106, 1.442695
      %v1108 = vpow.pop %v1107
      %v1109 = vsel %vm756, %v1108, 0.0
      %1110 = vadd.xlane.f32.xlu0 %v1109
      %v1111 = vpop.xlane.xlu0 %1110
      %v1112 = vrcp.pop %v1111
      %v1113 = vmul.f32 %v1108, %v1112
      %v1114 = vpack.c.bf16 %v1113, %v1113
      %1115 = vrot.lane.b32.xlu0 %v842, 80
      %v1116 = vpop.permute.xlu0 %1115
      %v1118 = vsel %vm756, %v1114, 0
      %v1121 = vsel %vm849, %v1116, 0
      %1123 = vmatprep.subr.bf16.mxu0 0
      %1124 = vmatpush1.bf16.msra.mxu0 %v1121
      %1125 = vmatprep.subr.bf16.mxu0 0
      %1126 = vmatpush1.bf16.msra.mxu0 0
      %1127 = vmatprep.subr.bf16.mxu0 0
      %1128 = vmatpush1.bf16.msra.mxu0 0
      %1129 = vmatprep.subr.bf16.mxu0 0
      %1130 = vmatpush1.bf16.msra.mxu0 0
      %1131 = vmatprep.subr.bf16.mxu0 0
      %1132 = vmatpush1.bf16.msra.mxu0 0
      %1133 = vmatprep.subr.bf16.mxu0 0
      %1134 = vmatpush1.bf16.msra.mxu0 0
      %1135 = vmatprep.subr.bf16.mxu0 0
      %1136 = vmatpush1.bf16.msra.mxu0 0
      %1137 = vmatprep.subr.bf16.mxu0 0
      %1138 = vmatpush1.bf16.msra.mxu0 0
      %1139 = vmatprep.subr.bf16.mxu0 0
      %1140 = vmatpush1.bf16.msra.mxu0 0
      %1141 = vmatprep.subr.bf16.mxu0 0
      %1142 = vmatpush1.bf16.msra.mxu0 0
      %1143 = vmatprep.subr.bf16.mxu0 0
      %1144 = vmatpush1.bf16.msra.mxu0 0
      %1145 = vmatprep.subr.bf16.mxu0 0
      %1146 = vmatpush1.bf16.msra.mxu0 0
      %1147 = vmatprep.subr.bf16.mxu0 0
      %1148 = vmatpush1.bf16.msra.mxu0 0
      %1149 = vmatprep.subr.bf16.mxu0 0
      %1150 = vmatpush1.bf16.msra.mxu0 0
      %1151 = vmatprep.subr.bf16.mxu0 0
      %1152 = vmatpush1.bf16.msra.mxu0 0
      %1153 = vmatprep.subr.bf16.mxu0 0
      %1154 = vmatpush1.bf16.msra.mxu0 0
      %1155 = vmatprep.mubr.bf16.mxu0 0
      %1156 = vmatmul.mubr.bf16.gmra.mrb[0].mxu0 %v1118
      %v1157 = vpop.f32.mrb[0].mxu0
      %v1158 = vadd.f32 0.0, %v1157
      %v1159 = vpop.f32.mrb[0].mxu0
      %v1160 = vpop.f32.mrb[0].mxu0
      %v1161 = vpop.f32.mrb[0].mxu0
      %1162 = vdwg.mxu0
      %1163 = vrot.lane.b32.xlu0 %v755, 104
      %v1164 = vpop.permute.xlu0 %1163
      %v1166 = vsel %vm756, %v1164, 0.0
      %1167 = vadd.xlane.f32.xlu0 %v1166
      %v1168 = vpop.xlane.xlu0 %1167
      %v1169 = vmax.f32 %v1168, 1e-24
      %v1170 = vrsqrt.pop %v1169
      %v1171 = vmul.f32 %v701, %v1170
      %v1172 = vmul.f32 %v1171, %v770
      %1173 = vrot.lane.b32.xlu0 %v773, 104
      %v1174 = vpop.permute.xlu0 %1173
      %v1176 = vsel %vm756, %v1174, 0.0
      %1177 = vadd.xlane.f32.xlu0 %v1176
      %v1178 = vpop.xlane.xlu0 %1177
      %v1179 = vmax.f32 %v1178, 1e-24
      %v1180 = vrsqrt.pop %v1179
      %v1181 = vmul.f32 %v750, %v1180
      %v1182 = vpack.c.bf16 %v1172, %v1172
      %v1183 = vpack.c.bf16 %v1181, %v1181
      %1185 = vrot.lane.b32.xlu0 %v1182, 104
      %v1186 = vpop.permute.xlu0 %1185
      %1188 = vrot.lane.b32.xlu0 %v1183, 104
      %v1189 = vpop.permute.xlu0 %1188
      %v1191 = vsel %vm756, %v1186, 0
      %v1194 = vsel %vm756, %v1189, 0
      %1196 = vmatprep.subr.bf16.mxu0 0
      %1197 = vmatpush1.bf16.xpose.msra.mxu0 %v1194
      %1198 = vmatprep.subr.bf16.mxu0 0
      %1199 = vmatpush1.bf16.xpose.msra.mxu0 0
      %1200 = vmatprep.subr.bf16.mxu0 0
      %1201 = vmatpush1.bf16.xpose.msra.mxu0 0
      %1202 = vmatprep.subr.bf16.mxu0 0
      %1203 = vmatpush1.bf16.xpose.msra.mxu0 0
      %1204 = vmatprep.subr.bf16.mxu0 0
      %1205 = vmatpush1.bf16.xpose.msra.mxu0 0
      %1206 = vmatprep.subr.bf16.mxu0 0
      %1207 = vmatpush1.bf16.xpose.msra.mxu0 0
      %1208 = vmatprep.subr.bf16.mxu0 0
      %1209 = vmatpush1.bf16.xpose.msra.mxu0 0
      %1210 = vmatprep.subr.bf16.mxu0 0
      %1211 = vmatpush1.bf16.xpose.msra.mxu0 0
      %1212 = vmatprep.subr.bf16.mxu0 0
      %1213 = vmatpush1.bf16.xpose.msra.mxu0 0
      %1214 = vmatprep.subr.bf16.mxu0 0
      %1215 = vmatpush1.bf16.xpose.msra.mxu0 0
      %1216 = vmatprep.subr.bf16.mxu0 0
      %1217 = vmatpush1.bf16.xpose.msra.mxu0 0
      %1218 = vmatprep.subr.bf16.mxu0 0
      %1219 = vmatpush1.bf16.xpose.msra.mxu0 0
      %1220 = vmatprep.subr.bf16.mxu0 0
      %1221 = vmatpush1.bf16.xpose.msra.mxu0 0
      %1222 = vmatprep.subr.bf16.mxu0 0
      %1223 = vmatpush1.bf16.xpose.msra.mxu0 0
      %1224 = vmatprep.subr.bf16.mxu0 0
      %1225 = vmatpush1.bf16.xpose.msra.mxu0 0
      %1226 = vmatprep.subr.bf16.mxu0 0
      %1227 = vmatpush1.bf16.xpose.msra.mxu0 0
      %1228 = vmatprep.mubr.bf16.mxu0 0
      %1229 = vmatmul.mubr.bf16.gmra.mrb[0].mxu0 %v1191
      %v1230 = vpop.f32.mrb[0].mxu0
      %v1231 = vadd.f32 0.0, %v1230
      %v1232 = vpop.f32.mrb[0].mxu0
      %v1233 = vpop.f32.mrb[0].mxu0
      %v1234 = vpop.f32.mrb[0].mxu0
      %1235 = vdwg.mxu0
      %v1236 = vsel %vm828, -1e+18, %v1231
      %v1237 = vsel %vm756, %v1236, -inf
      %1238 = vmax.xlane.f32.xlu0 %v1237
      %v1239 = vpop.xlane.xlu0 %1238
      %v1240 = vsub.f32 %v1236, %v1239
      %v1241 = vmul.f32 %v1240, 1.442695
      %v1242 = vpow.pop %v1241
      %v1243 = vsel %vm756, %v1242, 0.0
      %1244 = vadd.xlane.f32.xlu0 %v1243
      %v1245 = vpop.xlane.xlu0 %1244
      %v1246 = vrcp.pop %v1245
      %v1247 = vmul.f32 %v1242, %v1246
      %v1248 = vpack.c.bf16 %v1247, %v1247
      %1249 = vrot.lane.b32.xlu0 %v842, 72
      %v1250 = vpop.permute.xlu0 %1249
      %v1252 = vsel %vm756, %v1248, 0
      %v1255 = vsel %vm849, %v1250, 0
      %1257 = vmatprep.subr.bf16.mxu0 0
      %1258 = vmatpush1.bf16.msra.mxu0 %v1255
      %1259 = vmatprep.subr.bf16.mxu0 0
      %1260 = vmatpush1.bf16.msra.mxu0 0
      %1261 = vmatprep.subr.bf16.mxu0 0
      %1262 = vmatpush1.bf16.msra.mxu0 0
      %1263 = vmatprep.subr.bf16.mxu0 0
      %1264 = vmatpush1.bf16.msra.mxu0 0
      %1265 = vmatprep.subr.bf16.mxu0 0
      %1266 = vmatpush1.bf16.msra.mxu0 0
      %1267 = vmatprep.subr.bf16.mxu0 0
      %1268 = vmatpush1.bf16.msra.mxu0 0
      %1269 = vmatprep.subr.bf16.mxu0 0
      %1270 = vmatpush1.bf16.msra.mxu0 0
      %1271 = vmatprep.subr.bf16.mxu0 0
      %1272 = vmatpush1.bf16.msra.mxu0 0
      %1273 = vmatprep.subr.bf16.mxu0 0
      %1274 = vmatpush1.bf16.msra.mxu0 0
      %1275 = vmatprep.subr.bf16.mxu0 0
      %1276 = vmatpush1.bf16.msra.mxu0 0
      %1277 = vmatprep.subr.bf16.mxu0 0
      %1278 = vmatpush1.bf16.msra.mxu0 0
      %1279 = vmatprep.subr.bf16.mxu0 0
      %1280 = vmatpush1.bf16.msra.mxu0 0
      %1281 = vmatprep.subr.bf16.mxu0 0
      %1282 = vmatpush1.bf16.msra.mxu0 0
      %1283 = vmatprep.subr.bf16.mxu0 0
      %1284 = vmatpush1.bf16.msra.mxu0 0
      %1285 = vmatprep.subr.bf16.mxu0 0
      %1286 = vmatpush1.bf16.msra.mxu0 0
      %1287 = vmatprep.subr.bf16.mxu0 0
      %1288 = vmatpush1.bf16.msra.mxu0 0
      %1289 = vmatprep.mubr.bf16.mxu0 0
      %1290 = vmatmul.mubr.bf16.gmra.mrb[0].mxu0 %v1252
      %v1291 = vpop.f32.mrb[0].mxu0
      %v1292 = vadd.f32 0.0, %v1291
      %v1293 = vpop.f32.mrb[0].mxu0
      %v1294 = vpop.f32.mrb[0].mxu0
      %v1295 = vpop.f32.mrb[0].mxu0
      %1296 = vdwg.mxu0
      %1298 = vrot.lane.b32.xlu0 %v1024, 8
      %v1299 = vpop.permute.xlu0 %1298
      %1302 = vrot.lane.b32.xlu0 %v1158, 16
      %v1303 = vpop.permute.xlu0 %1302
      %1306 = vrot.lane.b32.xlu0 %v1292, 24
      %v1307 = vpop.permute.xlu0 %1306
      %v1309 = vsel %vm756, %v888, %v1299
      %vm1310 = vcmask 130048
      %v1311 = vsel %vm1310, %v1309, %v1303
      %vm1312 = vcmask 195584
      %v1313 = vsel %vm1312, %v1311, %v1307
      %v1314 = vpack.c.bf16 %v1313, %v1313
      %v1316 = vlaneseq
      %v1317 = vshrl.u32 %v1316, 7
      %v1318 = vsub.s32 0, %v1317
      %v1319 = vrot.slane %v642, %v1318
      %v1325 = vunpack.c.l.b16 %v638
      %v1326 = vunpack.c.l.b16 %v639
      %v1327 = vunpack.c.l.b16 %v640
      %v1328 = vunpack.c.l.b16 %v641
      %v1329 = vpack.c.b16 %v1326, %v1325
      %v1330 = vpack.c.b16 %v1328, %v1327
      %v1334 = vsel %vm662, %v1314, 0
      %1336 = vmatprep.subr.bf16.mxu0 0
      %1337 = vmatpush1.bf16.msra.mxu0 %v1329
      %1338 = vmatprep.subr.bf16.mxu0 0
      %1339 = vmatpush1.bf16.msra.mxu0 %v1330
      %1340 = vmatprep.subr.bf16.mxu0 0
      %1341 = vmatpush1.bf16.msra.mxu0 0
      %1342 = vmatprep.subr.bf16.mxu0 0
      %1343 = vmatpush1.bf16.msra.mxu0 0
      %1344 = vmatprep.subr.bf16.mxu0 0
      %1345 = vmatpush1.bf16.msra.mxu0 0
      %1346 = vmatprep.subr.bf16.mxu0 0
      %1347 = vmatpush1.bf16.msra.mxu0 0
      %1348 = vmatprep.subr.bf16.mxu0 0
      %1349 = vmatpush1.bf16.msra.mxu0 0
      %1350 = vmatprep.subr.bf16.mxu0 0
      %1351 = vmatpush1.bf16.msra.mxu0 0
      %1352 = vmatprep.subr.bf16.mxu0 0
      %1353 = vmatpush1.bf16.msra.mxu0 0
      %1354 = vmatprep.subr.bf16.mxu0 0
      %1355 = vmatpush1.bf16.msra.mxu0 0
      %1356 = vmatprep.subr.bf16.mxu0 0
      %1357 = vmatpush1.bf16.msra.mxu0 0
      %1358 = vmatprep.subr.bf16.mxu0 0
      %1359 = vmatpush1.bf16.msra.mxu0 0
      %1360 = vmatprep.subr.bf16.mxu0 0
      %1361 = vmatpush1.bf16.msra.mxu0 0
      %1362 = vmatprep.subr.bf16.mxu0 0
      %1363 = vmatpush1.bf16.msra.mxu0 0
      %1364 = vmatprep.subr.bf16.mxu0 0
      %1365 = vmatpush1.bf16.msra.mxu0 0
      %1366 = vmatprep.subr.bf16.mxu0 0
      %1367 = vmatpush1.bf16.msra.mxu0 0
      %1368 = vmatprep.mubr.bf16.mxu0 0
      %1369 = vmatmul.mubr.bf16.gmra.mrb[0].mxu0 %v1334
      %v1370 = vpop.f32.mrb[0].mxu0
      %v1371 = vadd.f32 %v1319, %v1370
      %v1372 = vpop.f32.mrb[0].mxu0
      %v1373 = vpop.f32.mrb[0].mxu0
      %v1374 = vpop.f32.mrb[0].mxu0
      %1375 = vdwg.mxu0
      %v1376 = vadd.f32 %v1371, %v626
      %v1377 = vsel %vm662, %v1376, 0.0
      %1378 = vadd.xlane.f32.xlu0 %v1377
      %v1379 = vpop.xlane.xlu0 %1378
      %v1380 = vrcp.pop 32.0
      %v1381 = vmul.f32 %v1379, %v1380
      %v1382 = vsub.f32 %v1376, %v1381
      %v1383 = vmul.f32 %v1382, %v1382
      %v1384 = vsel %vm662, %v1383, 0.0
      %1385 = vadd.xlane.f32.xlu0 %v1384
      %v1386 = vpop.xlane.xlu0 %1385
      %v1387 = vmul.f32 %v1386, %v1380
      %v1388 = vadd.f32 %v1387, 1e-05
      %v1389 = vrsqrt.pop %v1388
      %v1390 = vmul.f32 %v1382, %v1389
      %v1391 = vlaneseq
      %v1392 = vshrl.u32 %v1391, 7
      %v1393 = vsub.s32 0, %v1392
      %v1394 = vrot.slane %v631, %v1393
      %v1395 = vmul.f32 %v1390, %v1394
      %v1396 = vlaneseq
      %v1397 = vshrl.u32 %v1396, 7
      %v1398 = vsub.s32 1, %v1397
      %v1399 = vrot.slane %v631, %v1398
      %v1400 = vadd.f32 %v1395, %v1399
      %v1401 = vld [vmem:[%s9] sm:$0xf]
      %v1402 = vld [vmem:[%s9 + $0x4] sm:$0xf]
      %v1403 = vld [vmem:[%s9 + $0x8] sm:$0xf]
      %v1404 = vld [vmem:[%s9 + $0xc] sm:$0xf]
      %v1405 = vld [vmem:[%s10] sm:$0x1]
      %v1406 = vld [vmem:[%s11] sm:$0xf]
      %v1407 = vld [vmem:[%s11 + $0x4] sm:$0xf]
      %v1408 = vld [vmem:[%s11 + $0x8] sm:$0xf]
      %v1409 = vld [vmem:[%s11 + $0xc] sm:$0xf]
      %v1410 = vld [vmem:[%s12] sm:$0x1]
      %v1411 = vpack.c.bf16 %v1400, %v1400
      %v1413 = vlaneseq
      %v1414 = vshrl.u32 %v1413, 7
      %v1415 = vsub.s32 0, %v1414
      %v1416 = vrot.slane %v1405, %v1415
      %v1422 = vunpack.c.l.b16 %v1401
      %v1423 = vunpack.c.l.b16 %v1402
      %v1424 = vunpack.c.l.b16 %v1403
      %v1425 = vunpack.c.l.b16 %v1404
      %v1426 = vpack.c.b16 %v1423, %v1422
      %v1427 = vpack.c.b16 %v1425, %v1424
      %v1431 = vsel %vm662, %v1411, 0
      %1433 = vmatprep.subr.bf16.mxu0 0
      %1434 = vmatpush1.bf16.msra.mxu0 %v1426
      %1435 = vmatprep.subr.bf16.mxu0 0
      %1436 = vmatpush1.bf16.msra.mxu0 %v1427
      %1437 = vmatprep.subr.bf16.mxu0 0
      %1438 = vmatpush1.bf16.msra.mxu0 0
      %1439 = vmatprep.subr.bf16.mxu0 0
      %1440 = vmatpush1.bf16.msra.mxu0 0
      %1441 = vmatprep.subr.bf16.mxu0 0
      %1442 = vmatpush1.bf16.msra.mxu0 0
      %1443 = vmatprep.subr.bf16.mxu0 0
      %1444 = vmatpush1.bf16.msra.mxu0 0
      %1445 = vmatprep.subr.bf16.mxu0 0
      %1446 = vmatpush1.bf16.msra.mxu0 0
      %1447 = vmatprep.subr.bf16.mxu0 0
      %1448 = vmatpush1.bf16.msra.mxu0 0
      %1449 = vmatprep.subr.bf16.mxu0 0
      %1450 = vmatpush1.bf16.msra.mxu0 0
      %1451 = vmatprep.subr.bf16.mxu0 0
      %1452 = vmatpush1.bf16.msra.mxu0 0
      %1453 = vmatprep.subr.bf16.mxu0 0
      %1454 = vmatpush1.bf16.msra.mxu0 0
      %1455 = vmatprep.subr.bf16.mxu0 0
      %1456 = vmatpush1.bf16.msra.mxu0 0
      %1457 = vmatprep.subr.bf16.mxu0 0
      %1458 = vmatpush1.bf16.msra.mxu0 0
      %1459 = vmatprep.subr.bf16.mxu0 0
      %1460 = vmatpush1.bf16.msra.mxu0 0
      %1461 = vmatprep.subr.bf16.mxu0 0
      %1462 = vmatpush1.bf16.msra.mxu0 0
      %1463 = vmatprep.subr.bf16.mxu0 0
      %1464 = vmatpush1.bf16.msra.mxu0 0
      %1465 = vmatprep.mubr.bf16.mxu0 0
      %1466 = vmatmul.mubr.bf16.gmra.mrb[0].mxu0 %v1431
      %v1467 = vpop.f32.mrb[0].mxu0
      %v1468 = vadd.f32 %v1416, %v1467
      %v1469 = vpop.f32.mrb[0].mxu0
      %v1470 = vpop.f32.mrb[0].mxu0
      %v1471 = vpop.f32.mrb[0].mxu0
      %1472 = vdwg.mxu0
      %v1473 = vpack.c.bf16 %v628, %v627
      %1474 = vrot.lane.b32.xlu0 %v1426, 96
      %v1475 = vpop.permute.xlu0 %1474
      %1476 = vrot.lane.b32.xlu0 %v1427, 96
      %v1477 = vpop.permute.xlu0 %1476
      %1480 = vrot.lane.b32.xlu0 %v1416, 96
      %v1481 = vpop.permute.xlu0 %1480
      %v1484 = vsel %vm662, %v1473, 0
      %1486 = vmatprep.subr.bf16.mxu0 0
      %1487 = vmatpush1.bf16.msra.mxu0 %v1475
      %1488 = vmatprep.subr.bf16.mxu0 0
      %1489 = vmatpush1.bf16.msra.mxu0 %v1477
      %1490 = vmatprep.subr.bf16.mxu0 0
      %1491 = vmatpush1.bf16.msra.mxu0 0
      %1492 = vmatprep.subr.bf16.mxu0 0
      %1493 = vmatpush1.bf16.msra.mxu0 0
      %1494 = vmatprep.subr.bf16.mxu0 0
      %1495 = vmatpush1.bf16.msra.mxu0 0
      %1496 = vmatprep.subr.bf16.mxu0 0
      %1497 = vmatpush1.bf16.msra.mxu0 0
      %1498 = vmatprep.subr.bf16.mxu0 0
      %1499 = vmatpush1.bf16.msra.mxu0 0
      %1500 = vmatprep.subr.bf16.mxu0 0
      %1501 = vmatpush1.bf16.msra.mxu0 0
      %1502 = vmatprep.subr.bf16.mxu0 0
      %1503 = vmatpush1.bf16.msra.mxu0 0
      %1504 = vmatprep.subr.bf16.mxu0 0
      %1505 = vmatpush1.bf16.msra.mxu0 0
      %1506 = vmatprep.subr.bf16.mxu0 0
      %1507 = vmatpush1.bf16.msra.mxu0 0
      %1508 = vmatprep.subr.bf16.mxu0 0
      %1509 = vmatpush1.bf16.msra.mxu0 0
      %1510 = vmatprep.subr.bf16.mxu0 0
      %1511 = vmatpush1.bf16.msra.mxu0 0
      %1512 = vmatprep.subr.bf16.mxu0 0
      %1513 = vmatpush1.bf16.msra.mxu0 0
      %1514 = vmatprep.subr.bf16.mxu0 0
      %1515 = vmatpush1.bf16.msra.mxu0 0
      %1516 = vmatprep.subr.bf16.mxu0 0
      %1517 = vmatpush1.bf16.msra.mxu0 0
      %1518 = vmatprep.mubr.bf16.mxu0 0
      %1519 = vmatmul.mubr.bf16.gmra.mrb[0].mxu0 %v1484
      %v1520 = vpop.f32.mrb[0].mxu0
      %v1521 = vadd.f32 %v1481, %v1520
      %v1522 = vpop.f32.mrb[0].mxu0
      %v1523 = vpop.f32.mrb[0].mxu0
      %v1524 = vadd.f32 %v1481, %v1523
      %v1525 = vpop.f32.mrb[0].mxu0
      %1526 = vdwg.mxu0
      %v1527 = vmul.f32 %v1468, %v1468
      %v1528 = vsel %vm756, %v1527, 0.0
      %1529 = vadd.xlane.f32.xlu0 %v1528
      %v1530 = vpop.xlane.xlu0 %1529
      %v1531 = vmax.f32 %v1530, 1e-24
      %v1532 = vrsqrt.pop %v1531
      %v1533 = vmul.f32 %v1468, %v1532
      %1534 = vset.pattern.permute.xlu0 1
      %1535 = vperm.xlu0 %1534, %v767
      %v1536 = vpop.permute.xlu0 %1535
      %v1538 = vmul.f32 %v1533, %v1536
      %v1539 = vmul.f32 %v1521, %v1521
      %v1540 = vmul.f32 %v1524, %v1524
      %v1541 = vsel %vm756, %v1539, 0.0
      %1542 = vadd.xlane.f32.xlu0 %v1541
      %v1543 = vpop.xlane.xlu0 %1542
      %vm1544 = vcmask 58368
      %v1545 = vsel %vm1544, %v1540, 0.0
      %1546 = vadd.xlane.f32.xlu0 %v1545
      %v1547 = vpop.xlane.xlu0 %1546
      %v1548 = vmax.f32 %v1543, 1e-24
      %v1549 = vmax.f32 %v1547, 1e-24
      %v1550 = vrsqrt.pop %v1548
      %v1551 = vrsqrt.pop %v1549
      %v1552 = vmul.f32 %v1521, %v1550
      %v1553 = vmul.f32 %v1524, %v1551
      %v1554 = vpack.c.bf16 %v1538, %v1538
      %v1555 = vpack.c.bf16 %v1553, %v1552
      %v1557 = vsel %vm756, %v1554, 0
      %v1560 = vsel %vm756, %v1555, 0
      %1562 = vmatprep.subr.bf16.mxu0 0
      %1563 = vmatpush1.bf16.xpose.msra.mxu0 %v1560
      %1564 = vmatprep.subr.bf16.mxu0 0
      %1565 = vmatpush1.bf16.xpose.msra.mxu0 0
      %1566 = vmatprep.subr.bf16.mxu0 0
      %1567 = vmatpush1.bf16.xpose.msra.mxu0 0
      %1568 = vmatprep.subr.bf16.mxu0 0
      %1569 = vmatpush1.bf16.xpose.msra.mxu0 0
      %1570 = vmatprep.subr.bf16.mxu0 0
      %1571 = vmatpush1.bf16.xpose.msra.mxu0 0
      %1572 = vmatprep.subr.bf16.mxu0 0
      %1573 = vmatpush1.bf16.xpose.msra.mxu0 0
      %1574 = vmatprep.subr.bf16.mxu0 0
      %1575 = vmatpush1.bf16.xpose.msra.mxu0 0
      %1576 = vmatprep.subr.bf16.mxu0 0
      %1577 = vmatpush1.bf16.xpose.msra.mxu0 0
      %1578 = vmatprep.subr.bf16.mxu0 0
      %1579 = vmatpush1.bf16.xpose.msra.mxu0 0
      %1580 = vmatprep.subr.bf16.mxu0 0
      %1581 = vmatpush1.bf16.xpose.msra.mxu0 0
      %1582 = vmatprep.subr.bf16.mxu0 0
      %1583 = vmatpush1.bf16.xpose.msra.mxu0 0
      %1584 = vmatprep.subr.bf16.mxu0 0
      %1585 = vmatpush1.bf16.xpose.msra.mxu0 0
      %1586 = vmatprep.subr.bf16.mxu0 0
      %1587 = vmatpush1.bf16.xpose.msra.mxu0 0
      %1588 = vmatprep.subr.bf16.mxu0 0
      %1589 = vmatpush1.bf16.xpose.msra.mxu0 0
      %1590 = vmatprep.subr.bf16.mxu0 0
      %1591 = vmatpush1.bf16.xpose.msra.mxu0 0
      %1592 = vmatprep.subr.bf16.mxu0 0
      %1593 = vmatpush1.bf16.xpose.msra.mxu0 0
      %1594 = vmatprep.mubr.bf16.mxu0 0
      %1595 = vmatmul.mubr.bf16.gmra.mrb[0].mxu0 %v1557
      %v1596 = vpop.f32.mrb[0].mxu0
      %v1597 = vadd.f32 0.0, %v1596
      %v1598 = vpop.f32.mrb[0].mxu0
      %v1599 = vpop.f32.mrb[0].mxu0
      %v1600 = vpop.f32.mrb[0].mxu0
      %1601 = vdwg.mxu0
      %vm1602 = vcmp.eq.f32.partialorder %v630, 0.0
      %v1603 = vsel %vm1602, -1e+18, %v1597
      %vm1604 = vcmask 80896
      %v1605 = vsel %vm1604, %v1603, -inf
      %1606 = vmax.xlane.f32.xlu0 %v1605
      %v1607 = vpop.xlane.xlu0 %1606
      %v1608 = vsub.f32 %v1603, %v1607
      %v1609 = vmul.f32 %v1608, 1.442695
      %v1610 = vpow.pop %v1609
      %v1611 = vsel %vm1604, %v1610, 0.0
      %1612 = vadd.xlane.f32.xlu0 %v1611
      %v1613 = vpop.xlane.xlu0 %1612
      %v1614 = vrcp.pop %v1613
      %v1615 = vmul.f32 %v1610, %v1614
      %v1616 = vpack.c.bf16 %v1615, %v1615
      %v1617 = vpack.c.bf16 %v1524, %v1521
      %1619 = vrot.lane.b32.xlu0 %v1617, 96
      %v1620 = vpop.permute.xlu0 %1619
      %v1622 = vsel %vm1604, %v1616, 0
      %vm1624 = vcmask 1044480
      %v1626 = vsel %vm1624, %v1620, 0
      %1628 = vmatprep.subr.bf16.mxu0 0
      %1629 = vmatpush1.bf16.msra.mxu0 %v1626
      %1630 = vmatprep.subr.bf16.mxu0 0
      %1631 = vmatpush1.bf16.msra.mxu0 0
      %1632 = vmatprep.subr.bf16.mxu0 0
      %1633 = vmatpush1.bf16.msra.mxu0 0
      %1634 = vmatprep.subr.bf16.mxu0 0
      %1635 = vmatpush1.bf16.msra.mxu0 0
      %1636 = vmatprep.subr.bf16.mxu0 0
      %1637 = vmatpush1.bf16.msra.mxu0 0
      %1638 = vmatprep.subr.bf16.mxu0 0
      %1639 = vmatpush1.bf16.msra.mxu0 0
      %1640 = vmatprep.subr.bf16.mxu0 0
      %1641 = vmatpush1.bf16.msra.mxu0 0
      %1642 = vmatprep.subr.bf16.mxu0 0
      %1643 = vmatpush1.bf16.msra.mxu0 0
      %1644 = vmatprep.subr.bf16.mxu0 0
      %1645 = vmatpush1.bf16.msra.mxu0 0
      %1646 = vmatprep.subr.bf16.mxu0 0
      %1647 = vmatpush1.bf16.msra.mxu0 0
      %1648 = vmatprep.subr.bf16.mxu0 0
      %1649 = vmatpush1.bf16.msra.mxu0 0
      %1650 = vmatprep.subr.bf16.mxu0 0
      %1651 = vmatpush1.bf16.msra.mxu0 0
      %1652 = vmatprep.subr.bf16.mxu0 0
      %1653 = vmatpush1.bf16.msra.mxu0 0
      %1654 = vmatprep.subr.bf16.mxu0 0
      %1655 = vmatpush1.bf16.msra.mxu0 0
      %1656 = vmatprep.subr.bf16.mxu0 0
      %1657 = vmatpush1.bf16.msra.mxu0 0
      %1658 = vmatprep.subr.bf16.mxu0 0
      %1659 = vmatpush1.bf16.msra.mxu0 0
      %1660 = vmatprep.mubr.bf16.mxu0 0
      %1661 = vmatmul.mubr.bf16.gmra.mrb[0].mxu0 %v1622
      %v1662 = vpop.f32.mrb[0].mxu0
      %v1663 = vadd.f32 0.0, %v1662
      %v1664 = vpop.f32.mrb[0].mxu0
      %v1665 = vpop.f32.mrb[0].mxu0
      %v1666 = vpop.f32.mrb[0].mxu0
      %1667 = vdwg.mxu0
      %1669 = vrot.lane.b32.xlu0 %v1527, 120
      %v1670 = vpop.permute.xlu0 %1669
      %v1672 = vsel %vm756, %v1670, 0.0
      %1673 = vadd.xlane.f32.xlu0 %v1672
      %v1674 = vpop.xlane.xlu0 %1673
      %v1675 = vmax.f32 %v1674, 1e-24
      %v1676 = vrsqrt.pop %v1675
      %v1677 = vmul.f32 %v1468, %v1676
      %v1678 = vmul.f32 %v1677, %v1536
      %1681 = vrot.lane.b32.xlu0 %v1539, 120
      %v1682 = vpop.permute.xlu0 %1681
      %1683 = vrot.lane.b32.xlu0 %v1540, 120
      %v1684 = vpop.permute.xlu0 %1683
      %v1687 = vsel %vm756, %v1682, 0.0
      %1688 = vadd.xlane.f32.xlu0 %v1687
      %v1689 = vpop.xlane.xlu0 %1688
      %v1690 = vsel %vm1544, %v1684, 0.0
      %1691 = vadd.xlane.f32.xlu0 %v1690
      %v1692 = vpop.xlane.xlu0 %1691
      %v1693 = vmax.f32 %v1689, 1e-24
      %v1694 = vmax.f32 %v1692, 1e-24
      %v1695 = vrsqrt.pop %v1693
      %v1696 = vrsqrt.pop %v1694
      %v1697 = vmul.f32 %v1521, %v1695
      %v1698 = vmul.f32 %v1524, %v1696
      %v1699 = vpack.c.bf16 %v1678, %v1678
      %v1700 = vpack.c.bf16 %v1698, %v1697
      %1702 = vrot.lane.b32.xlu0 %v1699, 120
      %v1703 = vpop.permute.xlu0 %1702
      %1705 = vrot.lane.b32.xlu0 %v1700, 120
      %v1706 = vpop.permute.xlu0 %1705
      %v1708 = vsel %vm756, %v1703, 0
      %v1711 = vsel %vm756, %v1706, 0
      %1713 = vmatprep.subr.bf16.mxu0 0
      %1714 = vmatpush1.bf16.xpose.msra.mxu0 %v1711
      %1715 = vmatprep.subr.bf16.mxu0 0
      %1716 = vmatpush1.bf16.xpose.msra.mxu0 0
      %1717 = vmatprep.subr.bf16.mxu0 0
      %1718 = vmatpush1.bf16.xpose.msra.mxu0 0
      %1719 = vmatprep.subr.bf16.mxu0 0
      %1720 = vmatpush1.bf16.xpose.msra.mxu0 0
      %1721 = vmatprep.subr.bf16.mxu0 0
      %1722 = vmatpush1.bf16.xpose.msra.mxu0 0
      %1723 = vmatprep.subr.bf16.mxu0 0
      %1724 = vmatpush1.bf16.xpose.msra.mxu0 0
      %1725 = vmatprep.subr.bf16.mxu0 0
      %1726 = vmatpush1.bf16.xpose.msra.mxu0 0
      %1727 = vmatprep.subr.bf16.mxu0 0
      %1728 = vmatpush1.bf16.xpose.msra.mxu0 0
      %1729 = vmatprep.subr.bf16.mxu0 0
      %1730 = vmatpush1.bf16.xpose.msra.mxu0 0
      %1731 = vmatprep.subr.bf16.mxu0 0
      %1732 = vmatpush1.bf16.xpose.msra.mxu0 0
      %1733 = vmatprep.subr.bf16.mxu0 0
      %1734 = vmatpush1.bf16.xpose.msra.mxu0 0
      %1735 = vmatprep.subr.bf16.mxu0 0
      %1736 = vmatpush1.bf16.xpose.msra.mxu0 0
      %1737 = vmatprep.subr.bf16.mxu0 0
      %1738 = vmatpush1.bf16.xpose.msra.mxu0 0
      %1739 = vmatprep.subr.bf16.mxu0 0
      %1740 = vmatpush1.bf16.xpose.msra.mxu0 0
      %1741 = vmatprep.subr.bf16.mxu0 0
      %1742 = vmatpush1.bf16.xpose.msra.mxu0 0
      %1743 = vmatprep.subr.bf16.mxu0 0
      %1744 = vmatpush1.bf16.xpose.msra.mxu0 0
      %1745 = vmatprep.mubr.bf16.mxu0 0
      %1746 = vmatmul.mubr.bf16.gmra.mrb[0].mxu0 %v1708
      %v1747 = vpop.f32.mrb[0].mxu0
      %v1748 = vadd.f32 0.0, %v1747
      %v1749 = vpop.f32.mrb[0].mxu0
      %v1750 = vpop.f32.mrb[0].mxu0
      %v1751 = vpop.f32.mrb[0].mxu0
      %1752 = vdwg.mxu0
      %v1753 = vsel %vm1602, -1e+18, %v1748
      %v1754 = vsel %vm1604, %v1753, -inf
      %1755 = vmax.xlane.f32.xlu0 %v1754
      %v1756 = vpop.xlane.xlu0 %1755
      %v1757 = vsub.f32 %v1753, %v1756
      %v1758 = vmul.f32 %v1757, 1.442695
      %v1759 = vpow.pop %v1758
      %v1760 = vsel %vm1604, %v1759, 0.0
      %1761 = vadd.xlane.f32.xlu0 %v1760
      %v1762 = vpop.xlane.xlu0 %1761
      %v1763 = vrcp.pop %v1762
      %v1764 = vmul.f32 %v1759, %v1763
      %v1765 = vpack.c.bf16 %v1764, %v1764
      %1766 = vrot.lane.b32.xlu0 %v1617, 88
      %v1767 = vpop.permute.xlu0 %1766
      %v1769 = vsel %vm1604, %v1765, 0
      %v1772 = vsel %vm1624, %v1767, 0
      %1774 = vmatprep.subr.bf16.mxu0 0
      %1775 = vmatpush1.bf16.msra.mxu0 %v1772
      %1776 = vmatprep.subr.bf16.mxu0 0
      %1777 = vmatpush1.bf16.msra.mxu0 0
      %1778 = vmatprep.subr.bf16.mxu0 0
      %1779 = vmatpush1.bf16.msra.mxu0 0
      %1780 = vmatprep.subr.bf16.mxu0 0
      %1781 = vmatpush1.bf16.msra.mxu0 0
      %1782 = vmatprep.subr.bf16.mxu0 0
      %1783 = vmatpush1.bf16.msra.mxu0 0
      %1784 = vmatprep.subr.bf16.mxu0 0
      %1785 = vmatpush1.bf16.msra.mxu0 0
      %1786 = vmatprep.subr.bf16.mxu0 0
      %1787 = vmatpush1.bf16.msra.mxu0 0
      %1788 = vmatprep.subr.bf16.mxu0 0
      %1789 = vmatpush1.bf16.msra.mxu0 0
      %1790 = vmatprep.subr.bf16.mxu0 0
      %1791 = vmatpush1.bf16.msra.mxu0 0
      %1792 = vmatprep.subr.bf16.mxu0 0
      %1793 = vmatpush1.bf16.msra.mxu0 0
      %1794 = vmatprep.subr.bf16.mxu0 0
      %1795 = vmatpush1.bf16.msra.mxu0 0
      %1796 = vmatprep.subr.bf16.mxu0 0
      %1797 = vmatpush1.bf16.msra.mxu0 0
      %1798 = vmatprep.subr.bf16.mxu0 0
      %1799 = vmatpush1.bf16.msra.mxu0 0
      %1800 = vmatprep.subr.bf16.mxu0 0
      %1801 = vmatpush1.bf16.msra.mxu0 0
      %1802 = vmatprep.subr.bf16.mxu0 0
      %1803 = vmatpush1.bf16.msra.mxu0 0
      %1804 = vmatprep.subr.bf16.mxu0 0
      %1805 = vmatpush1.bf16.msra.mxu0 0
      %1806 = vmatprep.mubr.bf16.mxu0 0
      %1807 = vmatmul.mubr.bf16.gmra.mrb[0].mxu0 %v1769
      %v1808 = vpop.f32.mrb[0].mxu0
      %v1809 = vadd.f32 0.0, %v1808
      %v1810 = vpop.f32.mrb[0].mxu0
      %v1811 = vpop.f32.mrb[0].mxu0
      %v1812 = vpop.f32.mrb[0].mxu0
      %1813 = vdwg.mxu0
      %1814 = vrot.lane.b32.xlu0 %v1527, 112
      %v1815 = vpop.permute.xlu0 %1814
      %v1817 = vsel %vm756, %v1815, 0.0
      %1818 = vadd.xlane.f32.xlu0 %v1817
      %v1819 = vpop.xlane.xlu0 %1818
      %v1820 = vmax.f32 %v1819, 1e-24
      %v1821 = vrsqrt.pop %v1820
      %v1822 = vmul.f32 %v1468, %v1821
      %v1823 = vmul.f32 %v1822, %v1536
      %1824 = vrot.lane.b32.xlu0 %v1539, 112
      %v1825 = vpop.permute.xlu0 %1824
      %1826 = vrot.lane.b32.xlu0 %v1540, 112
      %v1827 = vpop.permute.xlu0 %1826
      %v1830 = vsel %vm756, %v1825, 0.0
      %1831 = vadd.xlane.f32.xlu0 %v1830
      %v1832 = vpop.xlane.xlu0 %1831
      %v1833 = vsel %vm1544, %v1827, 0.0
      %1834 = vadd.xlane.f32.xlu0 %v1833
      %v1835 = vpop.xlane.xlu0 %1834
      %v1836 = vmax.f32 %v1832, 1e-24
      %v1837 = vmax.f32 %v1835, 1e-24
      %v1838 = vrsqrt.pop %v1836
      %v1839 = vrsqrt.pop %v1837
      %v1840 = vmul.f32 %v1521, %v1838
      %v1841 = vmul.f32 %v1524, %v1839
      %v1842 = vpack.c.bf16 %v1823, %v1823
      %v1843 = vpack.c.bf16 %v1841, %v1840
      %1845 = vrot.lane.b32.xlu0 %v1842, 112
      %v1846 = vpop.permute.xlu0 %1845
      %1848 = vrot.lane.b32.xlu0 %v1843, 112
      %v1849 = vpop.permute.xlu0 %1848
      %v1851 = vsel %vm756, %v1846, 0
      %v1854 = vsel %vm756, %v1849, 0
      %1856 = vmatprep.subr.bf16.mxu0 0
      %1857 = vmatpush1.bf16.xpose.msra.mxu0 %v1854
      %1858 = vmatprep.subr.bf16.mxu0 0
      %1859 = vmatpush1.bf16.xpose.msra.mxu0 0
      %1860 = vmatprep.subr.bf16.mxu0 0
      %1861 = vmatpush1.bf16.xpose.msra.mxu0 0
      %1862 = vmatprep.subr.bf16.mxu0 0
      %1863 = vmatpush1.bf16.xpose.msra.mxu0 0
      %1864 = vmatprep.subr.bf16.mxu0 0
      %1865 = vmatpush1.bf16.xpose.msra.mxu0 0
      %1866 = vmatprep.subr.bf16.mxu0 0
      %1867 = vmatpush1.bf16.xpose.msra.mxu0 0
      %1868 = vmatprep.subr.bf16.mxu0 0
      %1869 = vmatpush1.bf16.xpose.msra.mxu0 0
      %1870 = vmatprep.subr.bf16.mxu0 0
      %1871 = vmatpush1.bf16.xpose.msra.mxu0 0
      %1872 = vmatprep.subr.bf16.mxu0 0
      %1873 = vmatpush1.bf16.xpose.msra.mxu0 0
      %1874 = vmatprep.subr.bf16.mxu0 0
      %1875 = vmatpush1.bf16.xpose.msra.mxu0 0
      %1876 = vmatprep.subr.bf16.mxu0 0
      %1877 = vmatpush1.bf16.xpose.msra.mxu0 0
      %1878 = vmatprep.subr.bf16.mxu0 0
      %1879 = vmatpush1.bf16.xpose.msra.mxu0 0
      %1880 = vmatprep.subr.bf16.mxu0 0
      %1881 = vmatpush1.bf16.xpose.msra.mxu0 0
      %1882 = vmatprep.subr.bf16.mxu0 0
      %1883 = vmatpush1.bf16.xpose.msra.mxu0 0
      %1884 = vmatprep.subr.bf16.mxu0 0
      %1885 = vmatpush1.bf16.xpose.msra.mxu0 0
      %1886 = vmatprep.subr.bf16.mxu0 0
      %1887 = vmatpush1.bf16.xpose.msra.mxu0 0
      %1888 = vmatprep.mubr.bf16.mxu0 0
      %1889 = vmatmul.mubr.bf16.gmra.mrb[0].mxu0 %v1851
      %v1890 = vpop.f32.mrb[0].mxu0
      %v1891 = vadd.f32 0.0, %v1890
      %v1892 = vpop.f32.mrb[0].mxu0
      %v1893 = vpop.f32.mrb[0].mxu0
      %v1894 = vpop.f32.mrb[0].mxu0
      %1895 = vdwg.mxu0
      %v1896 = vsel %vm1602, -1e+18, %v1891
      %v1897 = vsel %vm1604, %v1896, -inf
      %1898 = vmax.xlane.f32.xlu0 %v1897
      %v1899 = vpop.xlane.xlu0 %1898
      %v1900 = vsub.f32 %v1896, %v1899
      %v1901 = vmul.f32 %v1900, 1.442695
      %v1902 = vpow.pop %v1901
      %v1903 = vsel %vm1604, %v1902, 0.0
      %1904 = vadd.xlane.f32.xlu0 %v1903
      %v1905 = vpop.xlane.xlu0 %1904
      %v1906 = vrcp.pop %v1905
      %v1907 = vmul.f32 %v1902, %v1906
      %v1908 = vpack.c.bf16 %v1907, %v1907
      %1909 = vrot.lane.b32.xlu0 %v1617, 80
      %v1910 = vpop.permute.xlu0 %1909
      %v1912 = vsel %vm1604, %v1908, 0
      %v1915 = vsel %vm1624, %v1910, 0
      %1917 = vmatprep.subr.bf16.mxu0 0
      %1918 = vmatpush1.bf16.msra.mxu0 %v1915
      %1919 = vmatprep.subr.bf16.mxu0 0
      %1920 = vmatpush1.bf16.msra.mxu0 0
      %1921 = vmatprep.subr.bf16.mxu0 0
      %1922 = vmatpush1.bf16.msra.mxu0 0
      %1923 = vmatprep.subr.bf16.mxu0 0
      %1924 = vmatpush1.bf16.msra.mxu0 0
      %1925 = vmatprep.subr.bf16.mxu0 0
      %1926 = vmatpush1.bf16.msra.mxu0 0
      %1927 = vmatprep.subr.bf16.mxu0 0
      %1928 = vmatpush1.bf16.msra.mxu0 0
      %1929 = vmatprep.subr.bf16.mxu0 0
      %1930 = vmatpush1.bf16.msra.mxu0 0
      %1931 = vmatprep.subr.bf16.mxu0 0
      %1932 = vmatpush1.bf16.msra.mxu0 0
      %1933 = vmatprep.subr.bf16.mxu0 0
      %1934 = vmatpush1.bf16.msra.mxu0 0
      %1935 = vmatprep.subr.bf16.mxu0 0
      %1936 = vmatpush1.bf16.msra.mxu0 0
      %1937 = vmatprep.subr.bf16.mxu0 0
      %1938 = vmatpush1.bf16.msra.mxu0 0
      %1939 = vmatprep.subr.bf16.mxu0 0
      %1940 = vmatpush1.bf16.msra.mxu0 0
      %1941 = vmatprep.subr.bf16.mxu0 0
      %1942 = vmatpush1.bf16.msra.mxu0 0
      %1943 = vmatprep.subr.bf16.mxu0 0
      %1944 = vmatpush1.bf16.msra.mxu0 0
      %1945 = vmatprep.subr.bf16.mxu0 0
      %1946 = vmatpush1.bf16.msra.mxu0 0
      %1947 = vmatprep.subr.bf16.mxu0 0
      %1948 = vmatpush1.bf16.msra.mxu0 0
      %1949 = vmatprep.mubr.bf16.mxu0 0
      %1950 = vmatmul.mubr.bf16.gmra.mrb[0].mxu0 %v1912
      %v1951 = vpop.f32.mrb[0].mxu0
      %v1952 = vadd.f32 0.0, %v1951
      %v1953 = vpop.f32.mrb[0].mxu0
      %v1954 = vpop.f32.mrb[0].mxu0
      %v1955 = vpop.f32.mrb[0].mxu0
      %1956 = vdwg.mxu0
      %1957 = vrot.lane.b32.xlu0 %v1527, 104
      %v1958 = vpop.permute.xlu0 %1957
      %v1960 = vsel %vm756, %v1958, 0.0
      %1961 = vadd.xlane.f32.xlu0 %v1960
      %v1962 = vpop.xlane.xlu0 %1961
      %v1963 = vmax.f32 %v1962, 1e-24
      %v1964 = vrsqrt.pop %v1963
      %v1965 = vmul.f32 %v1468, %v1964
      %v1966 = vmul.f32 %v1965, %v1536
      %1967 = vrot.lane.b32.xlu0 %v1539, 104
      %v1968 = vpop.permute.xlu0 %1967
      %1969 = vrot.lane.b32.xlu0 %v1540, 104
      %v1970 = vpop.permute.xlu0 %1969
      %v1973 = vsel %vm756, %v1968, 0.0
      %1974 = vadd.xlane.f32.xlu0 %v1973
      %v1975 = vpop.xlane.xlu0 %1974
      %v1976 = vsel %vm1544, %v1970, 0.0
      %1977 = vadd.xlane.f32.xlu0 %v1976
      %v1978 = vpop.xlane.xlu0 %1977
      %v1979 = vmax.f32 %v1975, 1e-24
      %v1980 = vmax.f32 %v1978, 1e-24
      %v1981 = vrsqrt.pop %v1979
      %v1982 = vrsqrt.pop %v1980
      %v1983 = vmul.f32 %v1521, %v1981
      %v1984 = vmul.f32 %v1524, %v1982
      %v1985 = vpack.c.bf16 %v1966, %v1966
      %v1986 = vpack.c.bf16 %v1984, %v1983
      %1988 = vrot.lane.b32.xlu0 %v1985, 104
      %v1989 = vpop.permute.xlu0 %1988
      %1991 = vrot.lane.b32.xlu0 %v1986, 104
      %v1992 = vpop.permute.xlu0 %1991
      %v1994 = vsel %vm756, %v1989, 0
      %v1997 = vsel %vm756, %v1992, 0
      %1999 = vmatprep.subr.bf16.mxu0 0
      %2000 = vmatpush1.bf16.xpose.msra.mxu0 %v1997
      %2001 = vmatprep.subr.bf16.mxu0 0
      %2002 = vmatpush1.bf16.xpose.msra.mxu0 0
      %2003 = vmatprep.subr.bf16.mxu0 0
      %2004 = vmatpush1.bf16.xpose.msra.mxu0 0
      %2005 = vmatprep.subr.bf16.mxu0 0
      %2006 = vmatpush1.bf16.xpose.msra.mxu0 0
      %2007 = vmatprep.subr.bf16.mxu0 0
      %2008 = vmatpush1.bf16.xpose.msra.mxu0 0
      %2009 = vmatprep.subr.bf16.mxu0 0
      %2010 = vmatpush1.bf16.xpose.msra.mxu0 0
      %2011 = vmatprep.subr.bf16.mxu0 0
      %2012 = vmatpush1.bf16.xpose.msra.mxu0 0
      %2013 = vmatprep.subr.bf16.mxu0 0
      %2014 = vmatpush1.bf16.xpose.msra.mxu0 0
      %2015 = vmatprep.subr.bf16.mxu0 0
      %2016 = vmatpush1.bf16.xpose.msra.mxu0 0
      %2017 = vmatprep.subr.bf16.mxu0 0
      %2018 = vmatpush1.bf16.xpose.msra.mxu0 0
      %2019 = vmatprep.subr.bf16.mxu0 0
      %2020 = vmatpush1.bf16.xpose.msra.mxu0 0
      %2021 = vmatprep.subr.bf16.mxu0 0
      %2022 = vmatpush1.bf16.xpose.msra.mxu0 0
      %2023 = vmatprep.subr.bf16.mxu0 0
      %2024 = vmatpush1.bf16.xpose.msra.mxu0 0
      %2025 = vmatprep.subr.bf16.mxu0 0
      %2026 = vmatpush1.bf16.xpose.msra.mxu0 0
      %2027 = vmatprep.subr.bf16.mxu0 0
      %2028 = vmatpush1.bf16.xpose.msra.mxu0 0
      %2029 = vmatprep.subr.bf16.mxu0 0
      %2030 = vmatpush1.bf16.xpose.msra.mxu0 0
      %2031 = vmatprep.mubr.bf16.mxu0 0
      %2032 = vmatmul.mubr.bf16.gmra.mrb[0].mxu0 %v1994
      %v2033 = vpop.f32.mrb[0].mxu0
      %v2034 = vadd.f32 0.0, %v2033
      %v2035 = vpop.f32.mrb[0].mxu0
      %v2036 = vpop.f32.mrb[0].mxu0
      %v2037 = vpop.f32.mrb[0].mxu0
      %2038 = vdwg.mxu0
      %v2039 = vsel %vm1602, -1e+18, %v2034
      %v2040 = vsel %vm1604, %v2039, -inf
      %2041 = vmax.xlane.f32.xlu0 %v2040
      %v2042 = vpop.xlane.xlu0 %2041
      %v2043 = vsub.f32 %v2039, %v2042
      %v2044 = vmul.f32 %v2043, 1.442695
      %v2045 = vpow.pop %v2044
      %v2046 = vsel %vm1604, %v2045, 0.0
      %2047 = vadd.xlane.f32.xlu0 %v2046
      %v2048 = vpop.xlane.xlu0 %2047
      %v2049 = vrcp.pop %v2048
      %v2050 = vmul.f32 %v2045, %v2049
      %v2051 = vpack.c.bf16 %v2050, %v2050
      %2052 = vrot.lane.b32.xlu0 %v1617, 72
      %v2053 = vpop.permute.xlu0 %2052
      %v2055 = vsel %vm1604, %v2051, 0
      %v2058 = vsel %vm1624, %v2053, 0
      %2060 = vmatprep.subr.bf16.mxu0 0
      %2061 = vmatpush1.bf16.msra.mxu0 %v2058
      %2062 = vmatprep.subr.bf16.mxu0 0
      %2063 = vmatpush1.bf16.msra.mxu0 0
      %2064 = vmatprep.subr.bf16.mxu0 0
      %2065 = vmatpush1.bf16.msra.mxu0 0
      %2066 = vmatprep.subr.bf16.mxu0 0
      %2067 = vmatpush1.bf16.msra.mxu0 0
      %2068 = vmatprep.subr.bf16.mxu0 0
      %2069 = vmatpush1.bf16.msra.mxu0 0
      %2070 = vmatprep.subr.bf16.mxu0 0
      %2071 = vmatpush1.bf16.msra.mxu0 0
      %2072 = vmatprep.subr.bf16.mxu0 0
      %2073 = vmatpush1.bf16.msra.mxu0 0
      %2074 = vmatprep.subr.bf16.mxu0 0
      %2075 = vmatpush1.bf16.msra.mxu0 0
      %2076 = vmatprep.subr.bf16.mxu0 0
      %2077 = vmatpush1.bf16.msra.mxu0 0
      %2078 = vmatprep.subr.bf16.mxu0 0
      %2079 = vmatpush1.bf16.msra.mxu0 0
      %2080 = vmatprep.subr.bf16.mxu0 0
      %2081 = vmatpush1.bf16.msra.mxu0 0
      %2082 = vmatprep.subr.bf16.mxu0 0
      %2083 = vmatpush1.bf16.msra.mxu0 0
      %2084 = vmatprep.subr.bf16.mxu0 0
      %2085 = vmatpush1.bf16.msra.mxu0 0
      %2086 = vmatprep.subr.bf16.mxu0 0
      %2087 = vmatpush1.bf16.msra.mxu0 0
      %2088 = vmatprep.subr.bf16.mxu0 0
      %2089 = vmatpush1.bf16.msra.mxu0 0
      %2090 = vmatprep.subr.bf16.mxu0 0
      %2091 = vmatpush1.bf16.msra.mxu0 0
      %2092 = vmatprep.mubr.bf16.mxu0 0
      %2093 = vmatmul.mubr.bf16.gmra.mrb[0].mxu0 %v2055
      %v2094 = vpop.f32.mrb[0].mxu0
      %v2095 = vadd.f32 0.0, %v2094
      %v2096 = vpop.f32.mrb[0].mxu0
      %v2097 = vpop.f32.mrb[0].mxu0
      %v2098 = vpop.f32.mrb[0].mxu0
      %2099 = vdwg.mxu0
      %2101 = vrot.lane.b32.xlu0 %v1809, 8
      %v2102 = vpop.permute.xlu0 %2101
      %2105 = vrot.lane.b32.xlu0 %v1952, 16
      %v2106 = vpop.permute.xlu0 %2105
      %2109 = vrot.lane.b32.xlu0 %v2095, 24
      %v2110 = vpop.permute.xlu0 %2109
      %v2112 = vsel %vm756, %v1663, %v2102
      %v2113 = vsel %vm1310, %v2112, %v2106
      %v2114 = vsel %vm1312, %v2113, %v2110
      %v2115 = vpack.c.bf16 %v2114, %v2114
      %v2117 = vlaneseq
      %v2118 = vshrl.u32 %v2117, 7
      %v2119 = vsub.s32 0, %v2118
      %v2120 = vrot.slane %v1410, %v2119
      %v2126 = vunpack.c.l.b16 %v1406
      %v2127 = vunpack.c.l.b16 %v1407
      %v2128 = vunpack.c.l.b16 %v1408
      %v2129 = vunpack.c.l.b16 %v1409
      %v2130 = vpack.c.b16 %v2127, %v2126
      %v2131 = vpack.c.b16 %v2129, %v2128
      %v2135 = vsel %vm662, %v2115, 0
      %2137 = vmatprep.subr.bf16.mxu0 0
      %2138 = vmatpush1.bf16.msra.mxu0 %v2130
      %2139 = vmatprep.subr.bf16.mxu0 0
      %2140 = vmatpush1.bf16.msra.mxu0 %v2131
      %2141 = vmatprep.subr.bf16.mxu0 0
      %2142 = vmatpush1.bf16.msra.mxu0 0
      %2143 = vmatprep.subr.bf16.mxu0 0
      %2144 = vmatpush1.bf16.msra.mxu0 0
      %2145 = vmatprep.subr.bf16.mxu0 0
      %2146 = vmatpush1.bf16.msra.mxu0 0
      %2147 = vmatprep.subr.bf16.mxu0 0
      %2148 = vmatpush1.bf16.msra.mxu0 0
      %2149 = vmatprep.subr.bf16.mxu0 0
      %2150 = vmatpush1.bf16.msra.mxu0 0
      %2151 = vmatprep.subr.bf16.mxu0 0
      %2152 = vmatpush1.bf16.msra.mxu0 0
      %2153 = vmatprep.subr.bf16.mxu0 0
      %2154 = vmatpush1.bf16.msra.mxu0 0
      %2155 = vmatprep.subr.bf16.mxu0 0
      %2156 = vmatpush1.bf16.msra.mxu0 0
      %2157 = vmatprep.subr.bf16.mxu0 0
      %2158 = vmatpush1.bf16.msra.mxu0 0
      %2159 = vmatprep.subr.bf16.mxu0 0
      %2160 = vmatpush1.bf16.msra.mxu0 0
      %2161 = vmatprep.subr.bf16.mxu0 0
      %2162 = vmatpush1.bf16.msra.mxu0 0
      %2163 = vmatprep.subr.bf16.mxu0 0
      %2164 = vmatpush1.bf16.msra.mxu0 0
      %2165 = vmatprep.subr.bf16.mxu0 0
      %2166 = vmatpush1.bf16.msra.mxu0 0
      %2167 = vmatprep.subr.bf16.mxu0 0
      %2168 = vmatpush1.bf16.msra.mxu0 0
      %2169 = vmatprep.mubr.bf16.mxu0 0
      %2170 = vmatmul.mubr.bf16.gmra.mrb[0].mxu0 %v2135
      %v2171 = vpop.f32.mrb[0].mxu0
      %v2172 = vadd.f32 %v2120, %v2171
      %v2173 = vpop.f32.mrb[0].mxu0
      %v2174 = vpop.f32.mrb[0].mxu0
      %v2175 = vpop.f32.mrb[0].mxu0
      %2176 = vdwg.mxu0
      %v2177 = vadd.f32 %v2172, %v1400
      %v2178 = vsel %vm662, %v2177, 0.0
      %2179 = vadd.xlane.f32.xlu0 %v2178
      %v2180 = vpop.xlane.xlu0 %2179
      %v2181 = vmul.f32 %v2180, %v1380
      %v2182 = vsub.f32 %v2177, %v2181
      %v2183 = vmul.f32 %v2182, %v2182
      %v2184 = vsel %vm662, %v2183, 0.0
      %2185 = vadd.xlane.f32.xlu0 %v2184
      %v2186 = vpop.xlane.xlu0 %2185
      %v2187 = vmul.f32 %v2186, %v1380
      %v2188 = vadd.f32 %v2187, 1e-05
      %v2189 = vrsqrt.pop %v2188
      %v2190 = vmul.f32 %v2182, %v2189
      %v2191 = vlaneseq
      %v2192 = vshrl.u32 %v2191, 7
      %v2193 = vsub.s32 2, %v2192
      %v2194 = vrot.slane %v631, %v2193
      %v2195 = vmul.f32 %v2190, %v2194
      %v2196 = vlaneseq
      %v2197 = vshrl.u32 %v2196, 7
      %v2198 = vsub.s32 3, %v2197
      %v2199 = vrot.slane %v631, %v2198
      %v2200 = vadd.f32 %v2195, %v2199
      %v2201 = vpack.c.bf16 %v2200, %v2200
      %v2202 = vld [vmem:[%s14] sm:$0xf]
      %v2203 = vld [vmem:[%s14 + $0x4] sm:$0xf]
      %v2204 = vld [vmem:[%s14 + $0x8] sm:$0xf]
      %v2205 = vld [vmem:[%s14 + $0xc] sm:$0xf]
      %v2206 = vld [vmem:[%s15] sm:$0x1]
      %v2208 = vlaneseq
      %v2209 = vshrl.u32 %v2208, 7
      %v2210 = vsub.s32 0, %v2209
      %v2211 = vrot.slane %v2206, %v2210
      %v2217 = vunpack.c.l.b16 %v2202
      %v2218 = vunpack.c.l.b16 %v2203
      %v2219 = vunpack.c.l.b16 %v2204
      %v2220 = vunpack.c.l.b16 %v2205
      %v2221 = vpack.c.b16 %v2218, %v2217
      %v2222 = vpack.c.b16 %v2220, %v2219
      %v2226 = vsel %vm662, %v2201, 0
      %2228 = vmatprep.subr.bf16.mxu0 0
      %2229 = vmatpush1.bf16.msra.mxu0 %v2221
      %2230 = vmatprep.subr.bf16.mxu0 0
      %2231 = vmatpush1.bf16.msra.mxu0 %v2222
      %2232 = vmatprep.subr.bf16.mxu0 0
      %2233 = vmatpush1.bf16.msra.mxu0 0
      %2234 = vmatprep.subr.bf16.mxu0 0
      %2235 = vmatpush1.bf16.msra.mxu0 0
      %2236 = vmatprep.subr.bf16.mxu0 0
      %2237 = vmatpush1.bf16.msra.mxu0 0
      %2238 = vmatprep.subr.bf16.mxu0 0
      %2239 = vmatpush1.bf16.msra.mxu0 0
      %2240 = vmatprep.subr.bf16.mxu0 0
      %2241 = vmatpush1.bf16.msra.mxu0 0
      %2242 = vmatprep.subr.bf16.mxu0 0
      %2243 = vmatpush1.bf16.msra.mxu0 0
      %2244 = vmatprep.subr.bf16.mxu0 0
      %2245 = vmatpush1.bf16.msra.mxu0 0
      %2246 = vmatprep.subr.bf16.mxu0 0
      %2247 = vmatpush1.bf16.msra.mxu0 0
      %2248 = vmatprep.subr.bf16.mxu0 0
      %2249 = vmatpush1.bf16.msra.mxu0 0
      %2250 = vmatprep.subr.bf16.mxu0 0
      %2251 = vmatpush1.bf16.msra.mxu0 0
      %2252 = vmatprep.subr.bf16.mxu0 0
      %2253 = vmatpush1.bf16.msra.mxu0 0
      %2254 = vmatprep.subr.bf16.mxu0 0
      %2255 = vmatpush1.bf16.msra.mxu0 0
      %2256 = vmatprep.subr.bf16.mxu0 0
      %2257 = vmatpush1.bf16.msra.mxu0 0
      %2258 = vmatprep.subr.bf16.mxu0 0
      %2259 = vmatpush1.bf16.msra.mxu0 0
      %2260 = vmatprep.mubr.bf16.mxu0 0
      %2261 = vmatmul.mubr.bf16.gmra.mrb[0].mxu0 %v2226
      %v2262 = vpop.f32.mrb[0].mxu0
      %v2263 = vadd.f32 %v2211, %v2262
      %v2264 = vpop.f32.mrb[0].mxu0
      %v2265 = vpop.f32.mrb[0].mxu0
      %v2266 = vpop.f32.mrb[0].mxu0
      %2267 = vdwg.mxu0
      %v2268 = vmax.f32 %v2263, 0.0
      %v2269 = vpack.c.bf16 %v2268, %v2268
      %v2270 = vld [vmem:[%s16] sm:$0xf]
      %v2271 = vld [vmem:[%s16 + $0x4] sm:$0xf]
      %v2272 = vld [vmem:[%s16 + $0x8] sm:$0xf]
      %v2273 = vld [vmem:[%s16 + $0xc] sm:$0xf]
      %v2274 = vld [vmem:[%s16 + $0x10] sm:$0xf]
      %v2275 = vld [vmem:[%s16 + $0x14] sm:$0xf]
      %v2276 = vld [vmem:[%s16 + $0x18] sm:$0xf]
      %v2277 = vld [vmem:[%s16 + $0x1c] sm:$0xf]
      %v2278 = vld [vmem:[%s17] sm:$0x1]
      %v2280 = vlaneseq
      %v2281 = vshrl.u32 %v2280, 7
      %v2282 = vsub.s32 0, %v2281
      %v2283 = vrot.slane %v2278, %v2282
      %v2293 = vunpack.c.l.b16 %v2270
      %v2294 = vunpack.c.l.b16 %v2271
      %v2295 = vunpack.c.l.b16 %v2272
      %v2296 = vunpack.c.l.b16 %v2273
      %v2297 = vunpack.c.l.b16 %v2274
      %v2298 = vunpack.c.l.b16 %v2275
      %v2299 = vunpack.c.l.b16 %v2276
      %v2300 = vunpack.c.l.b16 %v2277
      %v2301 = vpack.c.b16 %v2294, %v2293
      %v2302 = vpack.c.b16 %v2296, %v2295
      %v2303 = vpack.c.b16 %v2298, %v2297
      %v2304 = vpack.c.b16 %v2300, %v2299
      %vm2309 = vcmask 523264
      %v2311 = vsel %vm2309, %v2269, 0
      %2313 = vmatprep.subr.bf16.mxu0 0
      %2314 = vmatpush1.bf16.msra.mxu0 %v2301
      %2315 = vmatprep.subr.bf16.mxu0 0
      %2316 = vmatpush1.bf16.msra.mxu0 %v2302
      %2317 = vmatprep.subr.bf16.mxu0 0
      %2318 = vmatpush1.bf16.msra.mxu0 %v2303
      %2319 = vmatprep.subr.bf16.mxu0 0
      %2320 = vmatpush1.bf16.msra.mxu0 %v2304
      %2321 = vmatprep.subr.bf16.mxu0 0
      %2322 = vmatpush1.bf16.msra.mxu0 0
      %2323 = vmatprep.subr.bf16.mxu0 0
      %2324 = vmatpush1.bf16.msra.mxu0 0
      %2325 = vmatprep.subr.bf16.mxu0 0
      %2326 = vmatpush1.bf16.msra.mxu0 0
      %2327 = vmatprep.subr.bf16.mxu0 0
      %2328 = vmatpush1.bf16.msra.mxu0 0
      %2329 = vmatprep.subr.bf16.mxu0 0
      %2330 = vmatpush1.bf16.msra.mxu0 0
      %2331 = vmatprep.subr.bf16.mxu0 0
      %2332 = vmatpush1.bf16.msra.mxu0 0
      %2333 = vmatprep.subr.bf16.mxu0 0
      %2334 = vmatpush1.bf16.msra.mxu0 0
      %2335 = vmatprep.subr.bf16.mxu0 0
      %2336 = vmatpush1.bf16.msra.mxu0 0
      %2337 = vmatprep.subr.bf16.mxu0 0
      %2338 = vmatpush1.bf16.msra.mxu0 0
      %2339 = vmatprep.subr.bf16.mxu0 0
      %2340 = vmatpush1.bf16.msra.mxu0 0
      %2341 = vmatprep.subr.bf16.mxu0 0
      %2342 = vmatpush1.bf16.msra.mxu0 0
      %2343 = vmatprep.subr.bf16.mxu0 0
      %2344 = vmatpush1.bf16.msra.mxu0 0
      %2345 = vmatprep.mubr.bf16.mxu0 0
      %2346 = vmatmul.mubr.bf16.gmra.mrb[0].mxu0 %v2311
      %v2347 = vpop.f32.mrb[0].mxu0
      %v2348 = vadd.f32 %v2283, %v2347
      %v2349 = vpop.f32.mrb[0].mxu0
      %v2350 = vpop.f32.mrb[0].mxu0
      %v2351 = vpop.f32.mrb[0].mxu0
      %2352 = vdwg.mxu0
      %v2353 = vadd.f32 %v2348, %v2200
      %v2354 = vsel %vm662, %v2353, 0.0
      %2355 = vadd.xlane.f32.xlu0 %v2354
      %v2356 = vpop.xlane.xlu0 %2355
      %v2357 = vmul.f32 %v2356, %v1380
      %v2358 = vsub.f32 %v2353, %v2357
      %v2359 = vmul.f32 %v2358, %v2358
      %v2360 = vsel %vm662, %v2359, 0.0
      %2361 = vadd.xlane.f32.xlu0 %v2360
      %v2362 = vpop.xlane.xlu0 %2361
      %v2363 = vmul.f32 %v2362, %v1380
      %v2364 = vadd.f32 %v2363, 1e-05
      %v2365 = vrsqrt.pop %v2364
      %v2366 = vmul.f32 %v2358, %v2365
      %v2367 = vlaneseq
      %v2368 = vshrl.u32 %v2367, 7
      %v2369 = vsub.s32 4, %v2368
      %v2370 = vrot.slane %v631, %v2369
      %v2371 = vmul.f32 %v2366, %v2370
      %v2372 = vlaneseq
      %v2373 = vshrl.u32 %v2372, 7
      %v2374 = vsub.s32 5, %v2373
      %v2375 = vrot.slane %v631, %v2374
      %v2376 = vadd.f32 %v2371, %v2375
      %2377 = vst.msk [vmem:[%s624] sm:$0xff] %vm662, %v2376
      %p2378 = scmp.lt.s32.totalorder %s29, 1
      %s2379 = scalar_select %p2378, %s29, 1
      %s2380 = smul.addr %s2379, 8
      %s2381 = scalar_lea.vmem %s18, %s2380
      // Predicated region
      $region93: #{decoder_forward.3} parent=91 // pred_check
        %p2382 = pneg %p445
      $region94: #{decoder_forward.3} parent=91 // pred_check_branch
        %2384 = sbr.rel (%p2382) target = $region96
      $region95: #{decoder_forward.3} parent=91 // pred_region
        _
      $region96: #{decoder_forward.3} parent=91 // pred_fallthru
        _
    $region92: #{decoder_forward.3} parent=5 // pred_fallthru
      _
    %p2385 = scmp.le.s32.totalorder 2, %s24
    // Predicated region
    $region97: #{decoder_forward.3} parent=5 // pred_check
      %p2386 = pneg %p2385
    $region98: #{decoder_forward.3} parent=5 // pred_check_branch
      %2388 = sbr.rel (%p2386) target = $region100
    $region99: #{decoder_forward.3} parent=5 // pred_region
      %s2389 = ssub.s32 %s24, 2
      // Predicated region
      $region101: #{decoder_forward.3} parent=99 // pred_check
        %p2390 = pneg %p451
      $region102: #{decoder_forward.3} parent=99 // pred_check_branch
        %2392 = sbr.rel (%p2390) target = $region104
      $region103: #{decoder_forward.3} parent=99 // pred_region
        %p2393 = scmp.lt.s32.totalorder %s30, 1
        %s2394 = scalar_select %p2393, %s30, 1
        %s2395 = smul.addr %s2394, 8
        %s2396 = scalar_lea.vmem %s18, %s2395
      $region104: #{decoder_forward.3} parent=99 // pred_fallthru
        _
    $region100: #{decoder_forward.3} parent=5 // pred_fallthru
      _
  $region6: #{decoder_forward.3} parent=0 // loop_footer
    %s28 = sadd.s32 1, %s24
  $region7: #{decoder_forward.3} parent=0 // loop_footer_branch
    %23 = sbr.rel target = $region3
  $region8: #{decoder_forward.3} parent=0 // loop_exit
    _

// kernel: decoder_forward.4
$region0: #{decoder_forward.4}
  #allocation0 [shape = 'u32[]', space=smem, size = 0x4, offset = 0x4, fixed_abs, tag = 'smem constant byte address 0x4 - core index']
  #allocation1 [shape = 'u32[144,128]{1,0:T(1,128)}', space=vmem, size = 0x12000, scoped, tag = 'internal scratch']
  %s0 = inlined_call_operand.vmem [shape: f32[2,8,32], index: 0, kind: input, shape index: {}]
  %s1 = inlined_call_operand.vmem [shape: f32[2,10,32], index: 1, kind: input, shape index: {}]
  %s2 = inlined_call_operand.vmem [shape: f32[2,8,8], index: 2, kind: input, shape index: {}]
  %s3 = inlined_call_operand.vmem [shape: f32[2,8,10], index: 3, kind: input, shape index: {}]
  %s4 = inlined_call_operand.vmem [shape: f32[1,2], index: 4, kind: input, shape index: {}]
  %s5 = inlined_call_operand.vmem [shape: bf16[32,96], index: 5, kind: input, shape index: {}]
  %s6 = inlined_call_operand.vmem [shape: f32[1,96], index: 6, kind: input, shape index: {}]
  %s7 = inlined_call_operand.vmem [shape: bf16[32,32], index: 7, kind: input, shape index: {}]
  %s8 = inlined_call_operand.vmem [shape: f32[1,32], index: 8, kind: input, shape index: {}]
  %s9 = inlined_call_operand.vmem [shape: bf16[32,96], index: 9, kind: input, shape index: {}]
  %s10 = inlined_call_operand.vmem [shape: f32[1,96], index: 10, kind: input, shape index: {}]
  %s11 = inlined_call_operand.vmem [shape: bf16[32,32], index: 11, kind: input, shape index: {}]
  %s12 = inlined_call_operand.vmem [shape: f32[1,32], index: 12, kind: input, shape index: {}]
  %s13 = inlined_call_operand.vmem [shape: f32[6,32], index: 13, kind: input, shape index: {}]
  %s14 = inlined_call_operand.vmem [shape: bf16[32,64], index: 14, kind: input, shape index: {}]
  %s15 = inlined_call_operand.vmem [shape: f32[1,64], index: 15, kind: input, shape index: {}]
  %s16 = inlined_call_operand.vmem [shape: bf16[64,32], index: 16, kind: input, shape index: {}]
  %s17 = inlined_call_operand.vmem [shape: f32[1,32], index: 17, kind: input, shape index: {}]
  %s18 = inlined_call_operand.vmem [shape: f32[2,8,32], index: 18, kind: output, shape index: {0}]
  %s19 = inlined_call_operand.hbm [shape: f32[2,4,8,10], index: 19, kind: output, shape index: {1}]
  %20 = xla_tuple %s18, %s19
  %s21 = sld [smem:[#allocation0]]
  $region113: #{decoder_forward.4} parent=0
    _
  %s23 = ssub.s32 1, %s21
  %s24 = scalar_select 0, %s23, %s21
  $region1: #{decoder_forward.4} parent=0
    #allocation2 [shape = 'u8[32768]{0}', space=vmem, size = 0x8000, scoped, tag = 'output window, operand 1']
    #allocation3 [shape = 's32[2]{0}', space=sflag, size = 0x8, scoped, tag = 'scoped memory for decoder_forward.4']
    %25 = vsyncpa [#allocation3], 0
    %s26 = scalar_lea.sflag [#allocation3], 1
    %27 = vsyncpa %s26, 0
    loop: start=0, step=1, limit=4
    $region2: #{decoder_forward.4} parent=1 // loop_pre_header
      _
    $region3: #{decoder_forward.4} parent=1 // loop_header
      %s29 = sphi 0, %s33
      %p30 = scmp.ge.s32.totalorder %s29, 4
      %s39 = sphi 0, %s41
      %s42 = sphi 0, %s39
      %s43 = sphi 0, %s42
      %s59 = sphi 0, %s43
      %s65 = sphi 0, %s67
      %s68 = sphi 0, %s65
      %s69 = sphi 0, %s68
      %s85 = sphi 0, %s69
      %s91 = sphi 0, %s93
      %s94 = sphi 0, %s91
      %s95 = sphi 0, %s94
      %s111 = sphi 0, %s95
      %s117 = sphi 0, %s119
      %s120 = sphi 0, %s117
      %s121 = sphi 0, %s120
      %s137 = sphi 0, %s121
      %s141 = sphi 0, %s141
      %s143 = sphi 0, %s141
      %s144 = sphi 0, %s143
      %s158 = sphi 0, %s144
      %s162 = sphi 0, %s162
      %s164 = sphi 0, %s162
      %s165 = sphi 0, %s164
      %s179 = sphi 0, %s165
      %s183 = sphi 0, %s183
      %s185 = sphi 0, %s183
      %s186 = sphi 0, %s185
      %s200 = sphi 0, %s186
      %s204 = sphi 0, %s204
      %s206 = sphi 0, %s204
      %s207 = sphi 0, %s206
      %s221 = sphi 0, %s207
      %s225 = sphi 0, %s225
      %s227 = sphi 0, %s225
      %s228 = sphi 0, %s227
      %s242 = sphi 0, %s228
      %s246 = sphi 0, %s246
      %s248 = sphi 0, %s246
      %s249 = sphi 0, %s248
      %s263 = sphi 0, %s249
      %s267 = sphi 0, %s267
      %s269 = sphi 0, %s267
      %s270 = sphi 0, %s269
      %s284 = sphi 0, %s270
      %s288 = sphi 0, %s288
      %s290 = sphi 0, %s288
      %s291 = sphi 0, %s290
      %s305 = sphi 0, %s291
      %s309 = sphi 0, %s309
      %s311 = sphi 0, %s309
      %s312 = sphi 0, %s311
      %s326 = sphi 0, %s312
      %s330 = sphi 0, %s330
      %s332 = sphi 0, %s330
      %s333 = sphi 0, %s332
      %s347 = sphi 0, %s333
      %s351 = sphi 0, %s351
      %s353 = sphi 0, %s351
      %s354 = sphi 0, %s353
      %s368 = sphi 0, %s354
      %s372 = sphi 0, %s372
      %s374 = sphi 0, %s372
      %s375 = sphi 0, %s374
      %s389 = sphi 0, %s375
      %s393 = sphi 0, %s393
      %s395 = sphi 0, %s393
      %s396 = sphi 0, %s395
      %s410 = sphi 0, %s396
      %s414 = sphi 0, %s414
      %s416 = sphi 0, %s414
      %s417 = sphi 0, %s416
      %s431 = sphi 0, %s417
      %s437 = sphi 0, %s439
      %s440 = sphi 0, %s437
      %s441 = sphi 0, %s440
      %s457 = sphi 0, %s441
      %s463 = sphi 0, %s465
      %s466 = sphi 0, %s463
      %s467 = sphi 0, %s466
      %s483 = sphi 0, %s467
    $region4: #{decoder_forward.4} parent=1 // loop_header_branch
      %32 = sbr.rel (%p30) target = $region8
    $region5: #{decoder_forward.4} parent=1 // loop_body
      %s34 = ssub.s32 %s29, 1
      %s35 = ssub.s32 %s29, 2
      %s36 = sadd.s32 %s29, 1
      %s37 = ssub.s32 %s29, %s36
      %p38 = scmp.eq.s32.totalorder %s37, 0
      %s40 = sadd.s32 %s39, 1
      %s41 = scalar_select %p38, %s39, %s40
      %p44 = pneg %p38
      %p45 = scmp.eq.s32.totalorder %s29, 1
      %p46 = por %p44, %p45
      %p47 = scmp.ne.s32.totalorder %s39, %s42
      %p48 = scmp.eq.s32.totalorder %s29, 0
      %p49 = por %p47, %p48
      %p50 = scmp.ne.s32.totalorder %s39, %s42
      %p51 = scmp.eq.s32.totalorder %s34, 1
      %p52 = por %p50, %p51
      %p53 = scmp.ne.s32.totalorder %s42, %s43
      %p54 = scmp.eq.s32.totalorder %s34, 0
      %p55 = por %p53, %p54
      %p56 = scmp.ne.s32.totalorder %s42, %s43
      %p57 = scmp.eq.s32.totalorder %s35, 1
      %p58 = por %p56, %p57
      %p60 = scmp.ne.s32.totalorder %s43, %s59
      %p61 = scmp.eq.s32.totalorder %s35, 0
      %p62 = por %p60, %p61
      %s63 = ssub.s32 %s29, %s36
      %p64 = scmp.eq.s32.totalorder %s63, 0
      %s66 = sadd.s32 %s65, 1
      %s67 = scalar_select %p64, %s65, %s66
      %p70 = pneg %p64
      %p71 = scmp.eq.s32.totalorder %s29, 1
      %p72 = por %p70, %p71
      %p73 = scmp.ne.s32.totalorder %s65, %s68
      %p74 = scmp.eq.s32.totalorder %s29, 0
      %p75 = por %p73, %p74
      %p76 = scmp.ne.s32.totalorder %s65, %s68
      %p77 = scmp.eq.s32.totalorder %s34, 1
      %p78 = por %p76, %p77
      %p79 = scmp.ne.s32.totalorder %s68, %s69
      %p80 = scmp.eq.s32.totalorder %s34, 0
      %p81 = por %p79, %p80
      %p82 = scmp.ne.s32.totalorder %s68, %s69
      %p83 = scmp.eq.s32.totalorder %s35, 1
      %p84 = por %p82, %p83
      %p86 = scmp.ne.s32.totalorder %s69, %s85
      %p87 = scmp.eq.s32.totalorder %s35, 0
      %p88 = por %p86, %p87
      %s89 = ssub.s32 %s29, %s36
      %p90 = scmp.eq.s32.totalorder %s89, 0
      %s92 = sadd.s32 %s91, 1
      %s93 = scalar_select %p90, %s91, %s92
      %p96 = pneg %p90
      %p97 = scmp.eq.s32.totalorder %s29, 1
      %p98 = por %p96, %p97
      %p99 = scmp.ne.s32.totalorder %s91, %s94
      %p100 = scmp.eq.s32.totalorder %s29, 0
      %p101 = por %p99, %p100
      %p102 = scmp.ne.s32.totalorder %s91, %s94
      %p103 = scmp.eq.s32.totalorder %s34, 1
      %p104 = por %p102, %p103
      %p105 = scmp.ne.s32.totalorder %s94, %s95
      %p106 = scmp.eq.s32.totalorder %s34, 0
      %p107 = por %p105, %p106
      %p108 = scmp.ne.s32.totalorder %s94, %s95
      %p109 = scmp.eq.s32.totalorder %s35, 1
      %p110 = por %p108, %p109
      %p112 = scmp.ne.s32.totalorder %s95, %s111
      %p113 = scmp.eq.s32.totalorder %s35, 0
      %p114 = por %p112, %p113
      %s115 = ssub.s32 %s29, %s36
      %p116 = scmp.eq.s32.totalorder %s115, 0
      %s118 = sadd.s32 %s117, 1
      %s119 = scalar_select %p116, %s117, %s118
      %p122 = pneg %p116
      %p123 = scmp.eq.s32.totalorder %s29, 1
      %p124 = por %p122, %p123
      %p125 = scmp.ne.s32.totalorder %s117, %s120
      %p126 = scmp.eq.s32.totalorder %s29, 0
      %p127 = por %p125, %p126
      %p128 = scmp.ne.s32.totalorder %s117, %s120
      %p129 = scmp.eq.s32.totalorder %s34, 1
      %p130 = por %p128, %p129
      %p131 = scmp.ne.s32.totalorder %s120, %s121
      %p132 = scmp.eq.s32.totalorder %s34, 0
      %p133 = por %p131, %p132
      %p134 = scmp.ne.s32.totalorder %s120, %s121
      %p135 = scmp.eq.s32.totalorder %s35, 1
      %p136 = por %p134, %p135
      %p138 = scmp.ne.s32.totalorder %s121, %s137
      %p139 = scmp.eq.s32.totalorder %s35, 0
      %p140 = por %p138, %p139
      %s142 = sadd.s32 %s141, 1
      %p145 = scmp.eq.s32.totalorder %s29, 1
      %p146 = scmp.ne.s32.totalorder %s141, %s143
      %p147 = scmp.eq.s32.totalorder %s29, 0
      %p148 = por %p146, %p147
      %p149 = scmp.ne.s32.totalorder %s141, %s143
      %p150 = scmp.eq.s32.totalorder %s34, 1
      %p151 = por %p149, %p150
      %p152 = scmp.ne.s32.totalorder %s143, %s144
      %p153 = scmp.eq.s32.totalorder %s34, 0
      %p154 = por %p152, %p153
      %p155 = scmp.ne.s32.totalorder %s143, %s144
      %p156 = scmp.eq.s32.totalorder %s35, 1
      %p157 = por %p155, %p156
      %p159 = scmp.ne.s32.totalorder %s144, %s158
      %p160 = scmp.eq.s32.totalorder %s35, 0
      %p161 = por %p159, %p160
      %s163 = sadd.s32 %s162, 1
      %p166 = scmp.eq.s32.totalorder %s29, 1
      %p167 = scmp.ne.s32.totalorder %s162, %s164
      %p168 = scmp.eq.s32.totalorder %s29, 0
      %p169 = por %p167, %p168
      %p170 = scmp.ne.s32.totalorder %s162, %s164
      %p171 = scmp.eq.s32.totalorder %s34, 1
      %p172 = por %p170, %p171
      %p173 = scmp.ne.s32.totalorder %s164, %s165
      %p174 = scmp.eq.s32.totalorder %s34, 0
      %p175 = por %p173, %p174
      %p176 = scmp.ne.s32.totalorder %s164, %s165
      %p177 = scmp.eq.s32.totalorder %s35, 1
      %p178 = por %p176, %p177
      %p180 = scmp.ne.s32.totalorder %s165, %s179
      %p181 = scmp.eq.s32.totalorder %s35, 0
      %p182 = por %p180, %p181
      %s184 = sadd.s32 %s183, 1
      %p187 = scmp.eq.s32.totalorder %s29, 1
      %p188 = scmp.ne.s32.totalorder %s183, %s185
      %p189 = scmp.eq.s32.totalorder %s29, 0
      %p190 = por %p188, %p189
      %p191 = scmp.ne.s32.totalorder %s183, %s185
      %p192 = scmp.eq.s32.totalorder %s34, 1
      %p193 = por %p191, %p192
      %p194 = scmp.ne.s32.totalorder %s185, %s186
      %p195 = scmp.eq.s32.totalorder %s34, 0
      %p196 = por %p194, %p195
      %p197 = scmp.ne.s32.totalorder %s185, %s186
      %p198 = scmp.eq.s32.totalorder %s35, 1
      %p199 = por %p197, %p198
      %p201 = scmp.ne.s32.totalorder %s186, %s200
      %p202 = scmp.eq.s32.totalorder %s35, 0
      %p203 = por %p201, %p202
      %s205 = sadd.s32 %s204, 1
      %p208 = scmp.eq.s32.totalorder %s29, 1
      %p209 = scmp.ne.s32.totalorder %s204, %s206
      %p210 = scmp.eq.s32.totalorder %s29, 0
      %p211 = por %p209, %p210
      %p212 = scmp.ne.s32.totalorder %s204, %s206
      %p213 = scmp.eq.s32.totalorder %s34, 1
      %p214 = por %p212, %p213
      %p215 = scmp.ne.s32.totalorder %s206, %s207
      %p216 = scmp.eq.s32.totalorder %s34, 0
      %p217 = por %p215, %p216
      %p218 = scmp.ne.s32.totalorder %s206, %s207
      %p219 = scmp.eq.s32.totalorder %s35, 1
      %p220 = por %p218, %p219
      %p222 = scmp.ne.s32.totalorder %s207, %s221
      %p223 = scmp.eq.s32.totalorder %s35, 0
      %p224 = por %p222, %p223
      %s226 = sadd.s32 %s225, 1
      %p229 = scmp.eq.s32.totalorder %s29, 1
      %p230 = scmp.ne.s32.totalorder %s225, %s227
      %p231 = scmp.eq.s32.totalorder %s29, 0
      %p232 = por %p230, %p231
      %p233 = scmp.ne.s32.totalorder %s225, %s227
      %p234 = scmp.eq.s32.totalorder %s34, 1
      %p235 = por %p233, %p234
      %p236 = scmp.ne.s32.totalorder %s227, %s228
      %p237 = scmp.eq.s32.totalorder %s34, 0
      %p238 = por %p236, %p237
      %p239 = scmp.ne.s32.totalorder %s227, %s228
      %p240 = scmp.eq.s32.totalorder %s35, 1
      %p241 = por %p239, %p240
      %p243 = scmp.ne.s32.totalorder %s228, %s242
      %p244 = scmp.eq.s32.totalorder %s35, 0
      %p245 = por %p243, %p244
      %s247 = sadd.s32 %s246, 1
      %p250 = scmp.eq.s32.totalorder %s29, 1
      %p251 = scmp.ne.s32.totalorder %s246, %s248
      %p252 = scmp.eq.s32.totalorder %s29, 0
      %p253 = por %p251, %p252
      %p254 = scmp.ne.s32.totalorder %s246, %s248
      %p255 = scmp.eq.s32.totalorder %s34, 1
      %p256 = por %p254, %p255
      %p257 = scmp.ne.s32.totalorder %s248, %s249
      %p258 = scmp.eq.s32.totalorder %s34, 0
      %p259 = por %p257, %p258
      %p260 = scmp.ne.s32.totalorder %s248, %s249
      %p261 = scmp.eq.s32.totalorder %s35, 1
      %p262 = por %p260, %p261
      %p264 = scmp.ne.s32.totalorder %s249, %s263
      %p265 = scmp.eq.s32.totalorder %s35, 0
      %p266 = por %p264, %p265
      %s268 = sadd.s32 %s267, 1
      %p271 = scmp.eq.s32.totalorder %s29, 1
      %p272 = scmp.ne.s32.totalorder %s267, %s269
      %p273 = scmp.eq.s32.totalorder %s29, 0
      %p274 = por %p272, %p273
      %p275 = scmp.ne.s32.totalorder %s267, %s269
      %p276 = scmp.eq.s32.totalorder %s34, 1
      %p277 = por %p275, %p276
      %p278 = scmp.ne.s32.totalorder %s269, %s270
      %p279 = scmp.eq.s32.totalorder %s34, 0
      %p280 = por %p278, %p279
      %p281 = scmp.ne.s32.totalorder %s269, %s270
      %p282 = scmp.eq.s32.totalorder %s35, 1
      %p283 = por %p281, %p282
      %p285 = scmp.ne.s32.totalorder %s270, %s284
      %p286 = scmp.eq.s32.totalorder %s35, 0
      %p287 = por %p285, %p286
      %s289 = sadd.s32 %s288, 1
      %p292 = scmp.eq.s32.totalorder %s29, 1
      %p293 = scmp.ne.s32.totalorder %s288, %s290
      %p294 = scmp.eq.s32.totalorder %s29, 0
      %p295 = por %p293, %p294
      %p296 = scmp.ne.s32.totalorder %s288, %s290
      %p297 = scmp.eq.s32.totalorder %s34, 1
      %p298 = por %p296, %p297
      %p299 = scmp.ne.s32.totalorder %s290, %s291
      %p300 = scmp.eq.s32.totalorder %s34, 0
      %p301 = por %p299, %p300
      %p302 = scmp.ne.s32.totalorder %s290, %s291
      %p303 = scmp.eq.s32.totalorder %s35, 1
      %p304 = por %p302, %p303
      %p306 = scmp.ne.s32.totalorder %s291, %s305
      %p307 = scmp.eq.s32.totalorder %s35, 0
      %p308 = por %p306, %p307
      %s310 = sadd.s32 %s309, 1
      %p313 = scmp.eq.s32.totalorder %s29, 1
      %p314 = scmp.ne.s32.totalorder %s309, %s311
      %p315 = scmp.eq.s32.totalorder %s29, 0
      %p316 = por %p314, %p315
      %p317 = scmp.ne.s32.totalorder %s309, %s311
      %p318 = scmp.eq.s32.totalorder %s34, 1
      %p319 = por %p317, %p318
      %p320 = scmp.ne.s32.totalorder %s311, %s312
      %p321 = scmp.eq.s32.totalorder %s34, 0
      %p322 = por %p320, %p321
      %p323 = scmp.ne.s32.totalorder %s311, %s312
      %p324 = scmp.eq.s32.totalorder %s35, 1
      %p325 = por %p323, %p324
      %p327 = scmp.ne.s32.totalorder %s312, %s326
      %p328 = scmp.eq.s32.totalorder %s35, 0
      %p329 = por %p327, %p328
      %s331 = sadd.s32 %s330, 1
      %p334 = scmp.eq.s32.totalorder %s29, 1
      %p335 = scmp.ne.s32.totalorder %s330, %s332
      %p336 = scmp.eq.s32.totalorder %s29, 0
      %p337 = por %p335, %p336
      %p338 = scmp.ne.s32.totalorder %s330, %s332
      %p339 = scmp.eq.s32.totalorder %s34, 1
      %p340 = por %p338, %p339
      %p341 = scmp.ne.s32.totalorder %s332, %s333
      %p342 = scmp.eq.s32.totalorder %s34, 0
      %p343 = por %p341, %p342
      %p344 = scmp.ne.s32.totalorder %s332, %s333
      %p345 = scmp.eq.s32.totalorder %s35, 1
      %p346 = por %p344, %p345
      %p348 = scmp.ne.s32.totalorder %s333, %s347
      %p349 = scmp.eq.s32.totalorder %s35, 0
      %p350 = por %p348, %p349
      %s352 = sadd.s32 %s351, 1
      %p355 = scmp.eq.s32.totalorder %s29, 1
      %p356 = scmp.ne.s32.totalorder %s351, %s353
      %p357 = scmp.eq.s32.totalorder %s29, 0
      %p358 = por %p356, %p357
      %p359 = scmp.ne.s32.totalorder %s351, %s353
      %p360 = scmp.eq.s32.totalorder %s34, 1
      %p361 = por %p359, %p360
      %p362 = scmp.ne.s32.totalorder %s353, %s354
      %p363 = scmp.eq.s32.totalorder %s34, 0
      %p364 = por %p362, %p363
      %p365 = scmp.ne.s32.totalorder %s353, %s354
      %p366 = scmp.eq.s32.totalorder %s35, 1
      %p367 = por %p365, %p366
      %p369 = scmp.ne.s32.totalorder %s354, %s368
      %p370 = scmp.eq.s32.totalorder %s35, 0
      %p371 = por %p369, %p370
      %s373 = sadd.s32 %s372, 1
      %p376 = scmp.eq.s32.totalorder %s29, 1
      %p377 = scmp.ne.s32.totalorder %s372, %s374
      %p378 = scmp.eq.s32.totalorder %s29, 0
      %p379 = por %p377, %p378
      %p380 = scmp.ne.s32.totalorder %s372, %s374
      %p381 = scmp.eq.s32.totalorder %s34, 1
      %p382 = por %p380, %p381
      %p383 = scmp.ne.s32.totalorder %s374, %s375
      %p384 = scmp.eq.s32.totalorder %s34, 0
      %p385 = por %p383, %p384
      %p386 = scmp.ne.s32.totalorder %s374, %s375
      %p387 = scmp.eq.s32.totalorder %s35, 1
      %p388 = por %p386, %p387
      %p390 = scmp.ne.s32.totalorder %s375, %s389
      %p391 = scmp.eq.s32.totalorder %s35, 0
      %p392 = por %p390, %p391
      %s394 = sadd.s32 %s393, 1
      %p397 = scmp.eq.s32.totalorder %s29, 1
      %p398 = scmp.ne.s32.totalorder %s393, %s395
      %p399 = scmp.eq.s32.totalorder %s29, 0
      %p400 = por %p398, %p399
      %p401 = scmp.ne.s32.totalorder %s393, %s395
      %p402 = scmp.eq.s32.totalorder %s34, 1
      %p403 = por %p401, %p402
      %p404 = scmp.ne.s32.totalorder %s395, %s396
      %p405 = scmp.eq.s32.totalorder %s34, 0
      %p406 = por %p404, %p405
      %p407 = scmp.ne.s32.totalorder %s395, %s396
      %p408 = scmp.eq.s32.totalorder %s35, 1
      %p409 = por %p407, %p408
      %p411 = scmp.ne.s32.totalorder %s396, %s410
      %p412 = scmp.eq.s32.totalorder %s35, 0
      %p413 = por %p411, %p412
      %s415 = sadd.s32 %s414, 1
      %p418 = scmp.eq.s32.totalorder %s29, 1
      %p419 = scmp.ne.s32.totalorder %s414, %s416
      %p420 = scmp.eq.s32.totalorder %s29, 0
      %p421 = por %p419, %p420
      %p422 = scmp.ne.s32.totalorder %s414, %s416
      %p423 = scmp.eq.s32.totalorder %s34, 1
      %p424 = por %p422, %p423
      %p425 = scmp.ne.s32.totalorder %s416, %s417
      %p426 = scmp.eq.s32.totalorder %s34, 0
      %p427 = por %p425, %p426
      %p428 = scmp.ne.s32.totalorder %s416, %s417
      %p429 = scmp.eq.s32.totalorder %s35, 1
      %p430 = por %p428, %p429
      %p432 = scmp.ne.s32.totalorder %s417, %s431
      %p433 = scmp.eq.s32.totalorder %s35, 0
      %p434 = por %p432, %p433
      %s435 = ssub.s32 %s29, %s36
      %p436 = scmp.eq.s32.totalorder %s435, 0
      %s438 = sadd.s32 %s437, 1
      %s439 = scalar_select %p436, %s437, %s438
      %p442 = pneg %p436
      %p443 = scmp.eq.s32.totalorder %s29, 1
      %p444 = por %p442, %p443
      %p445 = scmp.ne.s32.totalorder %s437, %s440
      %p446 = scmp.eq.s32.totalorder %s29, 0
      %p447 = por %p445, %p446
      %p448 = scmp.ne.s32.totalorder %s437, %s440
      %p449 = scmp.eq.s32.totalorder %s34, 1
      %p450 = por %p448, %p449
      %p451 = scmp.ne.s32.totalorder %s440, %s441
      %p452 = scmp.eq.s32.totalorder %s34, 0
      %p453 = por %p451, %p452
      %p454 = scmp.ne.s32.totalorder %s440, %s441
      %p455 = scmp.eq.s32.totalorder %s35, 1
      %p456 = por %p454, %p455
      %p458 = scmp.ne.s32.totalorder %s441, %s457
      %p459 = scmp.eq.s32.totalorder %s35, 0
      %p460 = por %p458, %p459
      %s461 = ssub.s32 %s29, %s36
      %p462 = scmp.eq.s32.totalorder %s461, 0
      %s464 = sadd.s32 %s463, 1
      %s465 = scalar_select %p462, %s463, %s464
      %p468 = pneg %p462
      %p469 = scmp.eq.s32.totalorder %s29, 1
      %p470 = por %p468, %p469
      %p471 = scmp.ne.s32.totalorder %s463, %s466
      %p472 = scmp.eq.s32.totalorder %s29, 0
      %p473 = por %p471, %p472
      %p474 = scmp.ne.s32.totalorder %s463, %s466
      %p475 = scmp.eq.s32.totalorder %s34, 1
      %p476 = por %p474, %p475
      %p477 = scmp.ne.s32.totalorder %s466, %s467
      %p478 = scmp.eq.s32.totalorder %s34, 0
      %p479 = por %p477, %p478
      %p480 = scmp.ne.s32.totalorder %s466, %s467
      %p481 = scmp.eq.s32.totalorder %s35, 1
      %p482 = por %p480, %p481
      %p484 = scmp.ne.s32.totalorder %s467, %s483
      %p485 = scmp.eq.s32.totalorder %s35, 0
      %p486 = por %p484, %p485
      %p487 = scmp.le.s32.totalorder 1, %s29
      %p488 = scmp.lt.s32.totalorder %s29, 3
      %p489 = pnand %p487, %p488
      %p490 = pneg %p489
      // Predicated region
      $region9: #{decoder_forward.4} parent=5 // pred_check
        _
      $region10: #{decoder_forward.4} parent=5 // pred_check_branch
        %492 = sbr.rel (%p489) target = $region12
      $region11: #{decoder_forward.4} parent=5 // pred_region
        %s493 = ssub.s32 %s29, 1
        // Predicated region
        $region13: #{decoder_forward.4} parent=11 // pred_check
          %p494 = pneg %p154
        $region14: #{decoder_forward.4} parent=11 // pred_check_branch
          %496 = sbr.rel (%p494) target = $region16
        $region15: #{decoder_forward.4} parent=11 // pred_region
          _
        $region16: #{decoder_forward.4} parent=11 // pred_fallthru
          _
        // Predicated region
        $region17: #{decoder_forward.4} parent=11 // pred_check
          %p497 = pneg %p175
        $region18: #{decoder_forward.4} parent=11 // pred_check_branch
          %499 = sbr.rel (%p497) target = $region20
        $region19: #{decoder_forward.4} parent=11 // pred_region
          _
        $region20: #{decoder_forward.4} parent=11 // pred_fallthru
          _
        // Predicated region
        $region21: #{decoder_forward.4} parent=11 // pred_check
          %p500 = pneg %p196
        $region22: #{decoder_forward.4} parent=11 // pred_check_branch
          %502 = sbr.rel (%p500) target = $region24
        $region23: #{decoder_forward.4} parent=11 // pred_region
          _
        $region24: #{decoder_forward.4} parent=11 // pred_fallthru
          _
        // Predicated region
        $region25: #{decoder_forward.4} parent=11 // pred_check
          %p503 = pneg %p217
        $region26: #{decoder_forward.4} parent=11 // pred_check_branch
          %505 = sbr.rel (%p503) target = $region28
        $region27: #{decoder_forward.4} parent=11 // pred_region
          _
        $region28: #{decoder_forward.4} parent=11 // pred_fallthru
          _
        // Predicated region
        $region29: #{decoder_forward.4} parent=11 // pred_check
          %p506 = pneg %p238
        $region30: #{decoder_forward.4} parent=11 // pred_check_branch
          %508 = sbr.rel (%p506) target = $region32
        $region31: #{decoder_forward.4} parent=11 // pred_region
          _
        $region32: #{decoder_forward.4} parent=11 // pred_fallthru
          _
        // Predicated region
        $region33: #{decoder_forward.4} parent=11 // pred_check
          %p509 = pneg %p259
        $region34: #{decoder_forward.4} parent=11 // pred_check_branch
          %511 = sbr.rel (%p509) target = $region36
        $region35: #{decoder_forward.4} parent=11 // pred_region
          _
        $region36: #{decoder_forward.4} parent=11 // pred_fallthru
          _
        // Predicated region
        $region37: #{decoder_forward.4} parent=11 // pred_check
          %p512 = pneg %p280
        $region38: #{decoder_forward.4} parent=11 // pred_check_branch
          %514 = sbr.rel (%p512) target = $region40
        $region39: #{decoder_forward.4} parent=11 // pred_region
          _
        $region40: #{decoder_forward.4} parent=11 // pred_fallthru
          _
        // Predicated region
        $region41: #{decoder_forward.4} parent=11 // pred_check
          %p515 = pneg %p301
        $region42: #{decoder_forward.4} parent=11 // pred_check_branch
          %517 = sbr.rel (%p515) target = $region44
        $region43: #{decoder_forward.4} parent=11 // pred_region
          _
        $region44: #{decoder_forward.4} parent=11 // pred_fallthru
          _
        // Predicated region
        $region45: #{decoder_forward.4} parent=11 // pred_check
          %p518 = pneg %p322
        $region46: #{decoder_forward.4} parent=11 // pred_check_branch
          %520 = sbr.rel (%p518) target = $region48
        $region47: #{decoder_forward.4} parent=11 // pred_region
          _
        $region48: #{decoder_forward.4} parent=11 // pred_fallthru
          _
        // Predicated region
        $region49: #{decoder_forward.4} parent=11 // pred_check
          %p521 = pneg %p343
        $region50: #{decoder_forward.4} parent=11 // pred_check_branch
          %523 = sbr.rel (%p521) target = $region52
        $region51: #{decoder_forward.4} parent=11 // pred_region
          _
        $region52: #{decoder_forward.4} parent=11 // pred_fallthru
          _
        // Predicated region
        $region53: #{decoder_forward.4} parent=11 // pred_check
          %p524 = pneg %p364
        $region54: #{decoder_forward.4} parent=11 // pred_check_branch
          %526 = sbr.rel (%p524) target = $region56
        $region55: #{decoder_forward.4} parent=11 // pred_region
          _
        $region56: #{decoder_forward.4} parent=11 // pred_fallthru
          _
        // Predicated region
        $region57: #{decoder_forward.4} parent=11 // pred_check
          %p527 = pneg %p385
        $region58: #{decoder_forward.4} parent=11 // pred_check_branch
          %529 = sbr.rel (%p527) target = $region60
        $region59: #{decoder_forward.4} parent=11 // pred_region
          _
        $region60: #{decoder_forward.4} parent=11 // pred_fallthru
          _
        // Predicated region
        $region61: #{decoder_forward.4} parent=11 // pred_check
          %p530 = pneg %p406
        $region62: #{decoder_forward.4} parent=11 // pred_check_branch
          %532 = sbr.rel (%p530) target = $region64
        $region63: #{decoder_forward.4} parent=11 // pred_region
          _
        $region64: #{decoder_forward.4} parent=11 // pred_fallthru
          _
        // Predicated region
        $region65: #{decoder_forward.4} parent=11 // pred_check
          %p533 = pneg %p427
        $region66: #{decoder_forward.4} parent=11 // pred_check_branch
          %535 = sbr.rel (%p533) target = $region68
        $region67: #{decoder_forward.4} parent=11 // pred_region
          _
        $region68: #{decoder_forward.4} parent=11 // pred_fallthru
          _
      $region12: #{decoder_forward.4} parent=5 // pred_fallthru
        _
      %p536 = scmp.lt.s32.totalorder %s29, 2
      // Predicated region
      $region69: #{decoder_forward.4} parent=5 // pred_check
        %p537 = pneg %p536
      $region70: #{decoder_forward.4} parent=5 // pred_check_branch
        %539 = sbr.rel (%p537) target = $region72
      $region71: #{decoder_forward.4} parent=5 // pred_region
        // Predicated region
        $region73: #{decoder_forward.4} parent=71 // pred_check
          %p540 = pneg %p49
        $region74: #{decoder_forward.4} parent=71 // pred_check_branch
          %542 = sbr.rel (%p540) target = $region76
        $region75: #{decoder_forward.4} parent=71 // pred_region
          %p543 = scmp.lt.s32.totalorder %s29, 1
          %s544 = scalar_select %p543, %s29, 1
          %s545 = smul.addr %s544, 8
          %s546 = scalar_lea.vmem %s0, %s545
        $region76: #{decoder_forward.4} parent=71 // pred_fallthru
          _
        // Predicated region
        $region77: #{decoder_forward.4} parent=71 // pred_check
          %p547 = pneg %p75
        $region78: #{decoder_forward.4} parent=71 // pred_check_branch
          %549 = sbr.rel (%p547) target = $region80
        $region79: #{decoder_forward.4} parent=71 // pred_region
          %p550 = scmp.lt.s32.totalorder %s29, 1
          %s551 = scalar_select %p550, %s29, 1
          %s552 = smul.addr %s551, 2
          %s553 = smul.addr %s552, 8
          %s554 = scalar_lea.vmem %s1, %s553
        $region80: #{decoder_forward.4} parent=71 // pred_fallthru
          _
        // Predicated region
        $region81: #{decoder_forward.4} parent=71 // pred_check
          %p555 = pneg %p101
        $region82: #{decoder_forward.4} parent=71 // pred_check_branch
          %557 = sbr.rel (%p555) target = $region84
        $region83: #{decoder_forward.4} parent=71 // pred_region
          %p558 = scmp.lt.s32.totalorder %s29, 1
          %s559 = scalar_select %p558, %s29, 1
          %s560 = smul.addr %s559, 8
          %s561 = scalar_lea.vmem %s2, %s560
        $region84: #{decoder_forward.4} parent=71 // pred_fallthru
          _
        // Predicated region
        $region85: #{decoder_forward.4} parent=71 // pred_check
          %p562 = pneg %p127
        $region86: #{decoder_forward.4} parent=71 // pred_check_branch
          %564 = sbr.rel (%p562) target = $region88
        $region87: #{decoder_forward.4} parent=71 // pred_region
          %p565 = scmp.lt.s32.totalorder %s29, 1
          %s566 = scalar_select %p565, %s29, 1
          %s567 = smul.addr %s566, 8
          %s568 = scalar_lea.vmem %s3, %s567
        $region88: #{decoder_forward.4} parent=71 // pred_fallthru
          _
      $region72: #{decoder_forward.4} parent=5 // pred_fallthru
        _
      %p569 = scmp.le.s32.totalorder 1, %s29
      %p570 = scmp.lt.s32.totalorder %s29, 3
      %p571 = pnand %p569, %p570
      %p572 = pneg %p571
      // Predicated region
      $region89: #{decoder_forward.4} parent=5 // pred_check
        _
      $region90: #{decoder_forward.4} parent=5 // pred_check_branch
        %574 = sbr.rel (%p571) target = $region92
      $region91: #{decoder_forward.4} parent=5 // pred_region
        %s575 = ssub.s32 %s29, 1
        %p576 = scmp.lt.s32.totalorder %s34, 1
        %s577 = scalar_select %p576, %s34, 1
        %s578 = smul.addr %s577, 8
        %s579 = scalar_lea.vmem %s0, %s578
        %p580 = pneg %p55
        %p581 = pneg %p52
        %p582 = scmp.lt.s32.totalorder %s34, 1
        %s583 = scalar_select %p582, %s34, 1
        %s584 = smul.addr %s583, 2
        %s585 = smul.addr %s584, 8
        %s586 = scalar_lea.vmem %s1, %s585
        %p587 = pneg %p81
        %p588 = pneg %p78
        %p589 = scmp.lt.s32.totalorder %s34, 1
        %s590 = scalar_select %p589, %s34, 1
        %s591 = smul.addr %s590, 8
        %s592 = scalar_lea.vmem %s2, %s591
        %p593 = pneg %p107
        %p594 = pneg %p104
        %p595 = scmp.lt.s32.totalorder %s34, 1
        %s596 = scalar_select %p595, %s34, 1
        %s597 = smul.addr %s596, 8
        %s598 = scalar_lea.vmem %s3, %s597
        %p599 = pneg %p133
        %p600 = pneg %p130
        %p601 = pneg %p154
        %p602 = pneg %p151
        %p603 = pneg %p175
        %p604 = pneg %p172
        %p605 = pneg %p196
        %p606 = pneg %p193
        %p607 = pneg %p217
        %p608 = pneg %p214
        %p609 = pneg %p238
        %p610 = pneg %p235
        %p611 = pneg %p259
        %p612 = pneg %p256
        %p613 = pneg %p280
        %p614 = pneg %p277
        %p615 = pneg %p301
        %p616 = pneg %p298
        %p617 = pneg %p322
        %p618 = pneg %p319
        %p619 = pneg %p343
        %p620 = pneg %p340
        %p621 = pneg %p364
        %p622 = pneg %p361
        %p623 = pneg %p385
        %p624 = pneg %p382
        %p625 = pneg %p406
        %p626 = pneg %p403
        %p627 = pneg %p427
        %p628 = pneg %p424
        %p629 = pneg %p453
        %p630 = pneg %p450
        %p631 = scmp.lt.s32.totalorder %s34, 1
        %s632 = scalar_select %p631, %s34, 1
        %s633 = smul.addr %s632, 8
        %s634 = scalar_lea.vmem %s18, %s633
        %p635 = pneg %p479
        %p636 = pneg %p476
        %s637 = sand.u32 %s466, 1
        %s638 = scalar_lea.sflag [#allocation3], %s637
        %s639 = sand.u32 %s466, 1
        %s640 = smul.addr %s639, 32
        %s641 = scalar_lea.vmem [#allocation2], %s640
        %p642 = scmp.lt.s32.totalorder %s34, 1
        %s643 = scalar_select %p642, %s34, 1
        %s644 = smul.addr %s643, 8
        %s645 = scalar_lea.vmem %s0, %s644
        %p646 = scmp.lt.s32.totalorder %s34, 1
        %s647 = scalar_select %p646, %s34, 1
        %s648 = smul.addr %s647, 2
        %s649 = smul.addr %s648, 8
        %s650 = scalar_lea.vmem %s1, %s649
        %p651 = scmp.lt.s32.totalorder %s34, 1
        %s652 = scalar_select %p651, %s34, 1
        %s653 = smul.addr %s652, 8
        %s654 = scalar_lea.vmem %s2, %s653
        %p655 = scmp.lt.s32.totalorder %s34, 1
        %s656 = scalar_select %p655, %s34, 1
        %s657 = smul.addr %s656, 8
        %s658 = scalar_lea.vmem %s3, %s657
        %p659 = scmp.lt.s32.totalorder %s34, 1
        %s660 = scalar_select %p659, %s34, 1
        %s661 = smul.addr %s660, 8
        %s662 = scalar_lea.vmem %s18, %s661
        %v664 = vld [vmem:[%s645] sm:$0xff]
        %v665 = vld [vmem:[%s650] sm:$0xff]
        %v666 = vld [vmem:[%s650 + $0x8] sm:$0x3]
        %v667 = vld [vmem:[%s654] sm:$0xff]
        %v668 = vld [vmem:[%s658] sm:$0xff]
        %v669 = vld [vmem:[%s13] sm:$0x3f]
        %v670 = vld [vmem:[%s4] sm:$0x1]
        %v671 = vld [vmem:[%s5] sm:$0xf]
        %v672 = vld [vmem:[%s5 + $0x4] sm:$0xf]
        %v673 = vld [vmem:[%s5 + $0x8] sm:$0xf]
        %v674 = vld [vmem:[%s5 + $0xc] sm:$0xf]
        %v675 = vld [vmem:[%s6] sm:$0x1]
        %v676 = vld [vmem:[%s7] sm:$0xf]
        %v677 = vld [vmem:[%s7 + $0x4] sm:$0xf]
        %v678 = vld [vmem:[%s7 + $0x8] sm:$0xf]
        %v679 = vld [vmem:[%s7 + $0xc] sm:$0xf]
        %v680 = vld [vmem:[%s8] sm:$0x1]
        %v681 = vpack.c.bf16 %v664, %v664
        %v683 = vlaneseq
        %v684 = vshrl.u32 %v683, 7
        %v685 = vsub.s32 0, %v684
        %v686 = vrot.slane %v675, %v685
        %v692 = vunpack.c.l.b16 %v671
        %v693 = vunpack.c.l.b16 %v672
        %v694 = vunpack.c.l.b16 %v673
        %v695 = vunpack.c.l.b16 %v674
        %v696 = vpack.c.b16 %v693, %v692
        %v697 = vpack.c.b16 %v695, %v694
        %vm700 = vcmask 261120
        %v702 = vsel %vm700, %v681, 0
        %704 = vmatprep.subr.bf16.mxu0 0
        %705 = vmatpush1.bf16.msra.mxu0 %v696
        %706 = vmatprep.subr.bf16.mxu0 0
        %707 = vmatpush1.bf16.msra.mxu0 %v697
        %708 = vmatprep.subr.bf16.mxu0 0
        %709 = vmatpush1.bf16.msra.mxu0 0
        %710 = vmatprep.subr.bf16.mxu0 0
        %711 = vmatpush1.bf16.msra.mxu0 0
        %712 = vmatprep.subr.bf16.mxu0 0
        %713 = vmatpush1.bf16.msra.mxu0 0
        %714 = vmatprep.subr.bf16.mxu0 0
        %715 = vmatpush1.bf16.msra.mxu0 0
        %716 = vmatprep.subr.bf16.mxu0 0
        %717 = vmatpush1.bf16.msra.mxu0 0
        %718 = vmatprep.subr.bf16.mxu0 0
        %719 = vmatpush1.bf16.msra.mxu0 0
        %720 = vmatprep.subr.bf16.mxu0 0
        %721 = vmatpush1.bf16.msra.mxu0 0
        %722 = vmatprep.subr.bf16.mxu0 0
        %723 = vmatpush1.bf16.msra.mxu0 0
        %724 = vmatprep.subr.bf16.mxu0 0
        %725 = vmatpush1.bf16.msra.mxu0 0
        %726 = vmatprep.subr.bf16.mxu0 0
        %727 = vmatpush1.bf16.msra.mxu0 0
        %728 = vmatprep.subr.bf16.mxu0 0
        %729 = vmatpush1.bf16.msra.mxu0 0
        %730 = vmatprep.subr.bf16.mxu0 0
        %731 = vmatpush1.bf16.msra.mxu0 0
        %732 = vmatprep.subr.bf16.mxu0 0
        %733 = vmatpush1.bf16.msra.mxu0 0
        %734 = vmatprep.subr.bf16.mxu0 0
        %735 = vmatpush1.bf16.msra.mxu0 0
        %736 = vmatprep.mubr.bf16.mxu0 0
        %737 = vmatmul.mubr.bf16.gmra.mrb[0].mxu0 %v702
        %v738 = vpop.f32.mrb[0].mxu0
        %v739 = vadd.f32 %v686, %v738
        %v740 = vpop.f32.mrb[0].mxu0
        %v741 = vpop.f32.mrb[0].mxu0
        %v742 = vpop.f32.mrb[0].mxu0
        %743 = vdwg.mxu0
        %744 = vrot.lane.b32.xlu0 %v696, 96
        %v745 = vpop.permute.xlu0 %744
        %746 = vrot.lane.b32.xlu0 %v697, 96
        %v747 = vpop.permute.xlu0 %746
        %750 = vrot.lane.b32.xlu0 %v686, 96
        %v751 = vpop.permute.xlu0 %750
        %753 = vmatprep.subr.bf16.mxu0 0
        %754 = vmatpush1.bf16.msra.mxu0 %v745
        %755 = vmatprep.subr.bf16.mxu0 0
        %756 = vmatpush1.bf16.msra.mxu0 %v747
        %757 = vmatprep.subr.bf16.mxu0 0
        %758 = vmatpush1.bf16.msra.mxu0 0
        %759 = vmatprep.subr.bf16.mxu0 0
        %760 = vmatpush1.bf16.msra.mxu0 0
        %761 = vmatprep.subr.bf16.mxu0 0
        %762 = vmatpush1.bf16.msra.mxu0 0
        %763 = vmatprep.subr.bf16.mxu0 0
        %764 = vmatpush1.bf16.msra.mxu0 0
        %765 = vmatprep.subr.bf16.mxu0 0
        %766 = vmatpush1.bf16.msra.mxu0 0
        %767 = vmatprep.subr.bf16.mxu0 0
        %768 = vmatpush1.bf16.msra.mxu0 0
        %769 = vmatprep.subr.bf16.mxu0 0
        %770 = vmatpush1.bf16.msra.mxu0 0
        %771 = vmatprep.subr.bf16.mxu0 0
        %772 = vmatpush1.bf16.msra.mxu0 0
        %773 = vmatprep.subr.bf16.mxu0 0
        %774 = vmatpush1.bf16.msra.mxu0 0
        %775 = vmatprep.subr.bf16.mxu0 0
        %776 = vmatpush1.bf16.msra.mxu0 0
        %777 = vmatprep.subr.bf16.mxu0 0
        %778 = vmatpush1.bf16.msra.mxu0 0
        %779 = vmatprep.subr.bf16.mxu0 0
        %780 = vmatpush1.bf16.msra.mxu0 0
        %781 = vmatprep.subr.bf16.mxu0 0
        %782 = vmatpush1.bf16.msra.mxu0 0
        %783 = vmatprep.subr.bf16.mxu0 0
        %784 = vmatpush1.bf16.msra.mxu0 0
        %785 = vmatprep.mubr.bf16.mxu0 0
        %786 = vmatmul.mubr.bf16.gmra.mrb[0].mxu0 %v702
        %v787 = vpop.f32.mrb[0].mxu0
        %v788 = vadd.f32 %v751, %v787
        %v789 = vpop.f32.mrb[0].mxu0
        %v790 = vpop.f32.mrb[0].mxu0
        %v791 = vpop.f32.mrb[0].mxu0
        %792 = vdwg.mxu0
        %v793 = vmul.f32 %v739, %v739
        %vm794 = vcmask 64512
        %v795 = vsel %vm794, %v793, 0.0
        %796 = vadd.xlane.f32.xlu0 %v795
        %v797 = vpop.xlane.xlu0 %796
        %v798 = vmax.f32 %v797, 1e-24
        %v799 = vrsqrt.pop %v798
        %v800 = vmul.f32 %v739, %v799
        %v802 = vlaneseq
        %v803 = vshrl.u32 %v802, 7
        %v804 = vsub.s32 0, %v803
        %v805 = vrot.slane %v670, %v804
        %806 = vset.pattern.permute.xlu0 0
        %807 = vperm.xlu0 %806, %v805
        %v808 = vpop.permute.xlu0 %807
        %v810 = vmul.f32 %v800, %v808
        %v811 = vmul.f32 %v788, %v788
        %v812 = vsel %vm794, %v811, 0.0
        %813 = vadd.xlane.f32.xlu0 %v812
        %v814 = vpop.xlane.xlu0 %813
        %v815 = vmax.f32 %v814, 1e-24
        %v816 = vrsqrt.pop %v815
        %v817 = vmul.f32 %v788, %v816
        %v818 = vpack.c.bf16 %v810, %v810
        %v819 = vpack.c.bf16 %v817, %v817
        %v821 = vsel %vm794, %v818, 0
        %v824 = vsel %vm794, %v819, 0
        %826 = vmatprep.subr.bf16.mxu0 0
        %827 = vmatpush1.bf16.xpose.msra.mxu0 %v824
        %828 = vmatprep.subr.bf16.mxu0 0
        %829 = vmatpush1.bf16.xpose.msra.mxu0 0
        %830 = vmatprep.subr.bf16.mxu0 0
        %831 = vmatpush1.bf16.xpose.msra.mxu0 0
        %832 = vmatprep.subr.bf16.mxu0 0
        %833 = vmatpush1.bf16.xpose.msra.mxu0 0
        %834 = vmatprep.subr.bf16.mxu0 0
        %835 = vmatpush1.bf16.xpose.msra.mxu0 0
        %836 = vmatprep.subr.bf16.mxu0 0
        %837 = vmatpush1.bf16.xpose.msra.mxu0 0
        %838 = vmatprep.subr.bf16.mxu0 0
        %839 = vmatpush1.bf16.xpose.msra.mxu0 0
        %840 = vmatprep.subr.bf16.mxu0 0
        %841 = vmatpush1.bf16.xpose.msra.mxu0 0
        %842 = vmatprep.subr.bf16.mxu0 0
        %843 = vmatpush1.bf16.xpose.msra.mxu0 0
        %844 = vmatprep.subr.bf16.mxu0 0
        %845 = vmatpush1.bf16.xpose.msra.mxu0 0
        %846 = vmatprep.subr.bf16.mxu0 0
        %847 = vmatpush1.bf16.xpose.msra.mxu0 0
        %848 = vmatprep.subr.bf16.mxu0 0
        %849 = vmatpush1.bf16.xpose.msra.mxu0 0
        %850 = vmatprep.subr.bf16.mxu0 0
        %851 = vmatpush1.bf16.xpose.msra.mxu0 0
        %852 = vmatprep.subr.bf16.mxu0 0
        %853 = vmatpush1.bf16.xpose.msra.mxu0 0
        %854 = vmatprep.subr.bf16.mxu0 0
        %855 = vmatpush1.bf16.xpose.msra.mxu0 0
        %856 = vmatprep.subr.bf16.mxu0 0
        %857 = vmatpush1.bf16.xpose.msra.mxu0 0
        %858 = vmatprep.mubr.bf16.mxu0 0
        %859 = vmatmul.mubr.bf16.gmra.mrb[0].mxu0 %v821
        %v860 = vpop.f32.mrb[0].mxu0
        %v861 = vadd.f32 0.0, %v860
        %v862 = vpop.f32.mrb[0].mxu0
        %v863 = vpop.f32.mrb[0].mxu0
        %v864 = vpop.f32.mrb[0].mxu0
        %865 = vdwg.mxu0
        %vm866 = vcmp.eq.f32.partialorder %v667, 0.0
        %v867 = vsel %vm866, -1e+18, %v861
        %v868 = vsel %vm794, %v867, -inf
        %869 = vmax.xlane.f32.xlu0 %v868
        %v870 = vpop.xlane.xlu0 %869
        %v871 = vsub.f32 %v867, %v870
        %v872 = vmul.f32 %v871, 1.442695
        %v873 = vpow.pop %v872
        %v874 = vsel %vm794, %v873, 0.0
        %875 = vadd.xlane.f32.xlu0 %v874
        %v876 = vpop.xlane.xlu0 %875
        %v877 = vrcp.pop %v876
        %v878 = vmul.f32 %v873, %v877
        %v879 = vpack.c.bf16 %v878, %v878
        %v880 = vpack.c.bf16 %v788, %v788
        %882 = vrot.lane.b32.xlu0 %v880, 96
        %v883 = vpop.permute.xlu0 %882
        %v885 = vsel %vm794, %v879, 0
        %vm887 = vcmask 1043456
        %v889 = vsel %vm887, %v883, 0
        %891 = vmatprep.subr.bf16.mxu0 0
        %892 = vmatpush1.bf16.msra.mxu0 %v889
        %893 = vmatprep.subr.bf16.mxu0 0
        %894 = vmatpush1.bf16.msra.mxu0 0
        %895 = vmatprep.subr.bf16.mxu0 0
        %896 = vmatpush1.bf16.msra.mxu0 0
        %897 = vmatprep.subr.bf16.mxu0 0
        %898 = vmatpush1.bf16.msra.mxu0 0
        %899 = vmatprep.subr.bf16.mxu0 0
        %900 = vmatpush1.bf16.msra.mxu0 0
        %901 = vmatprep.subr.bf16.mxu0 0
        %902 = vmatpush1.bf16.msra.mxu0 0
        %903 = vmatprep.subr.bf16.mxu0 0
        %904 = vmatpush1.bf16.msra.mxu0 0
        %905 = vmatprep.subr.bf16.mxu0 0
        %906 = vmatpush1.bf16.msra.mxu0 0
        %907 = vmatprep.subr.bf16.mxu0 0
        %908 = vmatpush1.bf16.msra.mxu0 0
        %909 = vmatprep.subr.bf16.mxu0 0
        %910 = vmatpush1.bf16.msra.mxu0 0
        %911 = vmatprep.subr.bf16.mxu0 0
        %912 = vmatpush1.bf16.msra.mxu0 0
        %913 = vmatprep.subr.bf16.mxu0 0
        %914 = vmatpush1.bf16.msra.mxu0 0
        %915 = vmatprep.subr.bf16.mxu0 0
        %916 = vmatpush1.bf16.msra.mxu0 0
        %917 = vmatprep.subr.bf16.mxu0 0
        %918 = vmatpush1.bf16.msra.mxu0 0
        %919 = vmatprep.subr.bf16.mxu0 0
        %920 = vmatpush1.bf16.msra.mxu0 0
        %921 = vmatprep.subr.bf16.mxu0 0
        %922 = vmatpush1.bf16.msra.mxu0 0
        %923 = vmatprep.mubr.bf16.mxu0 0
        %924 = vmatmul.mubr.bf16.gmra.mrb[0].mxu0 %v885
        %v925 = vpop.f32.mrb[0].mxu0
        %v926 = vadd.f32 0.0, %v925
        %v927 = vpop.f32.mrb[0].mxu0
        %v928 = vpop.f32.mrb[0].mxu0
        %v929 = vpop.f32.mrb[0].mxu0
        %930 = vdwg.mxu0
        %932 = vrot.lane.b32.xlu0 %v793, 120
        %v933 = vpop.permute.xlu0 %932
        %v935 = vsel %vm794, %v933, 0.0
        %936 = vadd.xlane.f32.xlu0 %v935
        %v937 = vpop.xlane.xlu0 %936
        %v938 = vmax.f32 %v937, 1e-24
        %v939 = vrsqrt.pop %v938
        %v940 = vmul.f32 %v739, %v939
        %v941 = vmul.f32 %v940, %v808
        %943 = vrot.lane.b32.xlu0 %v811, 120
        %v944 = vpop.permute.xlu0 %943
        %v946 = vsel %vm794, %v944, 0.0
        %947 = vadd.xlane.f32.xlu0 %v946
        %v948 = vpop.xlane.xlu0 %947
        %v949 = vmax.f32 %v948, 1e-24
        %v950 = vrsqrt.pop %v949
        %v951 = vmul.f32 %v788, %v950
        %v952 = vpack.c.bf16 %v941, %v941
        %v953 = vpack.c.bf16 %v951, %v951
        %955 = vrot.lane.b32.xlu0 %v952, 120
        %v956 = vpop.permute.xlu0 %955
        %958 = vrot.lane.b32.xlu0 %v953, 120
        %v959 = vpop.permute.xlu0 %958
        %v961 = vsel %vm794, %v956, 0
        %v964 = vsel %vm794, %v959, 0
        %966 = vmatprep.subr.bf16.mxu0 0
        %967 = vmatpush1.bf16.xpose.msra.mxu0 %v964
        %968 = vmatprep.subr.bf16.mxu0 0
        %969 = vmatpush1.bf16.xpose.msra.mxu0 0
        %970 = vmatprep.subr.bf16.mxu0 0
        %971 = vmatpush1.bf16.xpose.msra.mxu0 0
        %972 = vmatprep.subr.bf16.mxu0 0
        %973 = vmatpush1.bf16.xpose.msra.mxu0 0
        %974 = vmatprep.subr.bf16.mxu0 0
        %975 = vmatpush1.bf16.xpose.msra.mxu0 0
        %976 = vmatprep.subr.bf16.mxu0 0
        %977 = vmatpush1.bf16.xpose.msra.mxu0 0
        %978 = vmatprep.subr.bf16.mxu0 0
        %979 = vmatpush1.bf16.xpose.msra.mxu0 0
        %980 = vmatprep.subr.bf16.mxu0 0
        %981 = vmatpush1.bf16.xpose.msra.mxu0 0
        %982 = vmatprep.subr.bf16.mxu0 0
        %983 = vmatpush1.bf16.xpose.msra.mxu0 0
        %984 = vmatprep.subr.bf16.mxu0 0
        %985 = vmatpush1.bf16.xpose.msra.mxu0 0
        %986 = vmatprep.subr.bf16.mxu0 0
        %987 = vmatpush1.bf16.xpose.msra.mxu0 0
        %988 = vmatprep.subr.bf16.mxu0 0
        %989 = vmatpush1.bf16.xpose.msra.mxu0 0
        %990 = vmatprep.subr.bf16.mxu0 0
        %991 = vmatpush1.bf16.xpose.msra.mxu0 0
        %992 = vmatprep.subr.bf16.mxu0 0
        %993 = vmatpush1.bf16.xpose.msra.mxu0 0
        %994 = vmatprep.subr.bf16.mxu0 0
        %995 = vmatpush1.bf16.xpose.msra.mxu0 0
        %996 = vmatprep.subr.bf16.mxu0 0
        %997 = vmatpush1.bf16.xpose.msra.mxu0 0
        %998 = vmatprep.mubr.bf16.mxu0 0
        %999 = vmatmul.mubr.bf16.gmra.mrb[0].mxu0 %v961
        %v1000 = vpop.f32.mrb[0].mxu0
        %v1001 = vadd.f32 0.0, %v1000
        %v1002 = vpop.f32.mrb[0].mxu0
        %v1003 = vpop.f32.mrb[0].mxu0
        %v1004 = vpop.f32.mrb[0].mxu0
        %1005 = vdwg.mxu0
        %v1006 = vsel %vm866, -1e+18, %v1001
        %v1007 = vsel %vm794, %v1006, -inf
        %1008 = vmax.xlane.f32.xlu0 %v1007
        %v1009 = vpop.xlane.xlu0 %1008
        %v1010 = vsub.f32 %v1006, %v1009
        %v1011 = vmul.f32 %v1010, 1.442695
        %v1012 = vpow.pop %v1011
        %v1013 = vsel %vm794, %v1012, 0.0
        %1014 = vadd.xlane.f32.xlu0 %v1013
        %v1015 = vpop.xlane.xlu0 %1014
        %v1016 = vrcp.pop %v1015
        %v1017 = vmul.f32 %v1012, %v1016
        %v1018 = vpack.c.bf16 %v1017, %v1017
        %1019 = vrot.lane.b32.xlu0 %v880, 88
        %v1020 = vpop.permute.xlu0 %1019
        %v1022 = vsel %vm794, %v1018, 0
        %v1025 = vsel %vm887, %v1020, 0
        %1027 = vmatprep.subr.bf16.mxu0 0
        %1028 = vmatpush1.bf16.msra.mxu0 %v1025
        %1029 = vmatprep.subr.bf16.mxu0 0
        %1030 = vmatpush1.bf16.msra.mxu0 0
        %1031 = vmatprep.subr.bf16.mxu0 0
        %1032 = vmatpush1.bf16.msra.mxu0 0
        %1033 = vmatprep.subr.bf16.mxu0 0
        %1034 = vmatpush1.bf16.msra.mxu0 0
        %1035 = vmatprep.subr.bf16.mxu0 0
        %1036 = vmatpush1.bf16.msra.mxu0 0
        %1037 = vmatprep.subr.bf16.mxu0 0
        %1038 = vmatpush1.bf16.msra.mxu0 0
        %1039 = vmatprep.subr.bf16.mxu0 0
        %1040 = vmatpush1.bf16.msra.mxu0 0
        %1041 = vmatprep.subr.bf16.mxu0 0
        %1042 = vmatpush1.bf16.msra.mxu0 0
        %1043 = vmatprep.subr.bf16.mxu0 0
        %1044 = vmatpush1.bf16.msra.mxu0 0
        %1045 = vmatprep.subr.bf16.mxu0 0
        %1046 = vmatpush1.bf16.msra.mxu0 0
        %1047 = vmatprep.subr.bf16.mxu0 0
        %1048 = vmatpush1.bf16.msra.mxu0 0
        %1049 = vmatprep.subr.bf16.mxu0 0
        %1050 = vmatpush1.bf16.msra.mxu0 0
        %1051 = vmatprep.subr.bf16.mxu0 0
        %1052 = vmatpush1.bf16.msra.mxu0 0
        %1053 = vmatprep.subr.bf16.mxu0 0
        %1054 = vmatpush1.bf16.msra.mxu0 0
        %1055 = vmatprep.subr.bf16.mxu0 0
        %1056 = vmatpush1.bf16.msra.mxu0 0
        %1057 = vmatprep.subr.bf16.mxu0 0
        %1058 = vmatpush1.bf16.msra.mxu0 0
        %1059 = vmatprep.mubr.bf16.mxu0 0
        %1060 = vmatmul.mubr.bf16.gmra.mrb[0].mxu0 %v1022
        %v1061 = vpop.f32.mrb[0].mxu0
        %v1062 = vadd.f32 0.0, %v1061
        %v1063 = vpop.f32.mrb[0].mxu0
        %v1064 = vpop.f32.mrb[0].mxu0
        %v1065 = vpop.f32.mrb[0].mxu0
        %1066 = vdwg.mxu0
        %1067 = vrot.lane.b32.xlu0 %v793, 112
        %v1068 = vpop.permute.xlu0 %1067
        %v1070 = vsel %vm794, %v1068, 0.0
        %1071 = vadd.xlane.f32.xlu0 %v1070
        %v1072 = vpop.xlane.xlu0 %1071
        %v1073 = vmax.f32 %v1072, 1e-24
        %v1074 = vrsqrt.pop %v1073
        %v1075 = vmul.f32 %v739, %v1074
        %v1076 = vmul.f32 %v1075, %v808
        %1077 = vrot.lane.b32.xlu0 %v811, 112
        %v1078 = vpop.permute.xlu0 %1077
        %v1080 = vsel %vm794, %v1078, 0.0
        %1081 = vadd.xlane.f32.xlu0 %v1080
        %v1082 = vpop.xlane.xlu0 %1081
        %v1083 = vmax.f32 %v1082, 1e-24
        %v1084 = vrsqrt.pop %v1083
        %v1085 = vmul.f32 %v788, %v1084
        %v1086 = vpack.c.bf16 %v1076, %v1076
        %v1087 = vpack.c.bf16 %v1085, %v1085
        %1089 = vrot.lane.b32.xlu0 %v1086, 112
        %v1090 = vpop.permute.xlu0 %1089
        %1092 = vrot.lane.b32.xlu0 %v1087, 112
        %v1093 = vpop.permute.xlu0 %1092
        %v1095 = vsel %vm794, %v1090, 0
        %v1098 = vsel %vm794, %v1093, 0
        %1100 = vmatprep.subr.bf16.mxu0 0
        %1101 = vmatpush1.bf16.xpose.msra.mxu0 %v1098
        %1102 = vmatprep.subr.bf16.mxu0 0
        %1103 = vmatpush1.bf16.xpose.msra.mxu0 0
        %1104 = vmatprep.subr.bf16.mxu0 0
        %1105 = vmatpush1.bf16.xpose.msra.mxu0 0
        %1106 = vmatprep.subr.bf16.mxu0 0
        %1107 = vmatpush1.bf16.xpose.msra.mxu0 0
        %1108 = vmatprep.subr.bf16.mxu0 0
        %1109 = vmatpush1.bf16.xpose.msra.mxu0 0
        %1110 = vmatprep.subr.bf16.mxu0 0
        %1111 = vmatpush1.bf16.xpose.msra.mxu0 0
        %1112 = vmatprep.subr.bf16.mxu0 0
        %1113 = vmatpush1.bf16.xpose.msra.mxu0 0
        %1114 = vmatprep.subr.bf16.mxu0 0
        %1115 = vmatpush1.bf16.xpose.msra.mxu0 0
        %1116 = vmatprep.subr.bf16.mxu0 0
        %1117 = vmatpush1.bf16.xpose.msra.mxu0 0
        %1118 = vmatprep.subr.bf16.mxu0 0
        %1119 = vmatpush1.bf16.xpose.msra.mxu0 0
        %1120 = vmatprep.subr.bf16.mxu0 0
        %1121 = vmatpush1.bf16.xpose.msra.mxu0 0
        %1122 = vmatprep.subr.bf16.mxu0 0
        %1123 = vmatpush1.bf16.xpose.msra.mxu0 0
        %1124 = vmatprep.subr.bf16.mxu0 0
        %1125 = vmatpush1.bf16.xpose.msra.mxu0 0
        %1126 = vmatprep.subr.bf16.mxu0 0
        %1127 = vmatpush1.bf16.xpose.msra.mxu0 0
        %1128 = vmatprep.subr.bf16.mxu0 0
        %1129 = vmatpush1.bf16.xpose.msra.mxu0 0
        %1130 = vmatprep.subr.bf16.mxu0 0
        %1131 = vmatpush1.bf16.xpose.msra.mxu0 0
        %1132 = vmatprep.mubr.bf16.mxu0 0
        %1133 = vmatmul.mubr.bf16.gmra.mrb[0].mxu0 %v1095
        %v1134 = vpop.f32.mrb[0].mxu0
        %v1135 = vadd.f32 0.0, %v1134
        %v1136 = vpop.f32.mrb[0].mxu0
        %v1137 = vpop.f32.mrb[0].mxu0
        %v1138 = vpop.f32.mrb[0].mxu0
        %1139 = vdwg.mxu0
        %v1140 = vsel %vm866, -1e+18, %v1135
        %v1141 = vsel %vm794, %v1140, -inf
        %1142 = vmax.xlane.f32.xlu0 %v1141
        %v1143 = vpop.xlane.xlu0 %1142
        %v1144 = vsub.f32 %v1140, %v1143
        %v1145 = vmul.f32 %v1144, 1.442695
        %v1146 = vpow.pop %v1145
        %v1147 = vsel %vm794, %v1146, 0.0
        %1148 = vadd.xlane.f32.xlu0 %v1147
        %v1149 = vpop.xlane.xlu0 %1148
        %v1150 = vrcp.pop %v1149
        %v1151 = vmul.f32 %v1146, %v1150
        %v1152 = vpack.c.bf16 %v1151, %v1151
        %1153 = vrot.lane.b32.xlu0 %v880, 80
        %v1154 = vpop.permute.xlu0 %1153
        %v1156 = vsel %vm794, %v1152, 0
        %v1159 = vsel %vm887, %v1154, 0
        %1161 = vmatprep.subr.bf16.mxu0 0
        %1162 = vmatpush1.bf16.msra.mxu0 %v1159
        %1163 = vmatprep.subr.bf16.mxu0 0
        %1164 = vmatpush1.bf16.msra.mxu0 0
        %1165 = vmatprep.subr.bf16.mxu0 0
        %1166 = vmatpush1.bf16.msra.mxu0 0
        %1167 = vmatprep.subr.bf16.mxu0 0
        %1168 = vmatpush1.bf16.msra.mxu0 0
        %1169 = vmatprep.subr.bf16.mxu0 0
        %1170 = vmatpush1.bf16.msra.mxu0 0
        %1171 = vmatprep.subr.bf16.mxu0 0
        %1172 = vmatpush1.bf16.msra.mxu0 0
        %1173 = vmatprep.subr.bf16.mxu0 0
        %1174 = vmatpush1.bf16.msra.mxu0 0
        %1175 = vmatprep.subr.bf16.mxu0 0
        %1176 = vmatpush1.bf16.msra.mxu0 0
        %1177 = vmatprep.subr.bf16.mxu0 0
        %1178 = vmatpush1.bf16.msra.mxu0 0
        %1179 = vmatprep.subr.bf16.mxu0 0
        %1180 = vmatpush1.bf16.msra.mxu0 0
        %1181 = vmatprep.subr.bf16.mxu0 0
        %1182 = vmatpush1.bf16.msra.mxu0 0
        %1183 = vmatprep.subr.bf16.mxu0 0
        %1184 = vmatpush1.bf16.msra.mxu0 0
        %1185 = vmatprep.subr.bf16.mxu0 0
        %1186 = vmatpush1.bf16.msra.mxu0 0
        %1187 = vmatprep.subr.bf16.mxu0 0
        %1188 = vmatpush1.bf16.msra.mxu0 0
        %1189 = vmatprep.subr.bf16.mxu0 0
        %1190 = vmatpush1.bf16.msra.mxu0 0
        %1191 = vmatprep.subr.bf16.mxu0 0
        %1192 = vmatpush1.bf16.msra.mxu0 0
        %1193 = vmatprep.mubr.bf16.mxu0 0
        %1194 = vmatmul.mubr.bf16.gmra.mrb[0].mxu0 %v1156
        %v1195 = vpop.f32.mrb[0].mxu0
        %v1196 = vadd.f32 0.0, %v1195
        %v1197 = vpop.f32.mrb[0].mxu0
        %v1198 = vpop.f32.mrb[0].mxu0
        %v1199 = vpop.f32.mrb[0].mxu0
        %1200 = vdwg.mxu0
        %1201 = vrot.lane.b32.xlu0 %v793, 104
        %v1202 = vpop.permute.xlu0 %1201
        %v1204 = vsel %vm794, %v1202, 0.0
        %1205 = vadd.xlane.f32.xlu0 %v1204
        %v1206 = vpop.xlane.xlu0 %1205
        %v1207 = vmax.f32 %v1206, 1e-24
        %v1208 = vrsqrt.pop %v1207
        %v1209 = vmul.f32 %v739, %v1208
        %v1210 = vmul.f32 %v1209, %v808
        %1211 = vrot.lane.b32.xlu0 %v811, 104
        %v1212 = vpop.permute.xlu0 %1211
        %v1214 = vsel %vm794, %v1212, 0.0
        %1215 = vadd.xlane.f32.xlu0 %v1214
        %v1216 = vpop.xlane.xlu0 %1215
        %v1217 = vmax.f32 %v1216, 1e-24
        %v1218 = vrsqrt.pop %v1217
        %v1219 = vmul.f32 %v788, %v1218
        %v1220 = vpack.c.bf16 %v1210, %v1210
        %v1221 = vpack.c.bf16 %v1219, %v1219
        %1223 = vrot.lane.b32.xlu0 %v1220, 104
        %v1224 = vpop.permute.xlu0 %1223
        %1226 = vrot.lane.b32.xlu0 %v1221, 104
        %v1227 = vpop.permute.xlu0 %1226
        %v1229 = vsel %vm794, %v1224, 0
        %v1232 = vsel %vm794, %v1227, 0
        %1234 = vmatprep.subr.bf16.mxu0 0
        %1235 = vmatpush1.bf16.xpose.msra.mxu0 %v1232
        %1236 = vmatprep.subr.bf16.mxu0 0
        %1237 = vmatpush1.bf16.xpose.msra.mxu0 0
        %1238 = vmatprep.subr.bf16.mxu0 0
        %1239 = vmatpush1.bf16.xpose.msra.mxu0 0
        %1240 = vmatprep.subr.bf16.mxu0 0
        %1241 = vmatpush1.bf16.xpose.msra.mxu0 0
        %1242 = vmatprep.subr.bf16.mxu0 0
        %1243 = vmatpush1.bf16.xpose.msra.mxu0 0
        %1244 = vmatprep.subr.bf16.mxu0 0
        %1245 = vmatpush1.bf16.xpose.msra.mxu0 0
        %1246 = vmatprep.subr.bf16.mxu0 0
        %1247 = vmatpush1.bf16.xpose.msra.mxu0 0
        %1248 = vmatprep.subr.bf16.mxu0 0
        %1249 = vmatpush1.bf16.xpose.msra.mxu0 0
        %1250 = vmatprep.subr.bf16.mxu0 0
        %1251 = vmatpush1.bf16.xpose.msra.mxu0 0
        %1252 = vmatprep.subr.bf16.mxu0 0
        %1253 = vmatpush1.bf16.xpose.msra.mxu0 0
        %1254 = vmatprep.subr.bf16.mxu0 0
        %1255 = vmatpush1.bf16.xpose.msra.mxu0 0
        %1256 = vmatprep.subr.bf16.mxu0 0
        %1257 = vmatpush1.bf16.xpose.msra.mxu0 0
        %1258 = vmatprep.subr.bf16.mxu0 0
        %1259 = vmatpush1.bf16.xpose.msra.mxu0 0
        %1260 = vmatprep.subr.bf16.mxu0 0
        %1261 = vmatpush1.bf16.xpose.msra.mxu0 0
        %1262 = vmatprep.subr.bf16.mxu0 0
        %1263 = vmatpush1.bf16.xpose.msra.mxu0 0
        %1264 = vmatprep.subr.bf16.mxu0 0
        %1265 = vmatpush1.bf16.xpose.msra.mxu0 0
        %1266 = vmatprep.mubr.bf16.mxu0 0
        %1267 = vmatmul.mubr.bf16.gmra.mrb[0].mxu0 %v1229
        %v1268 = vpop.f32.mrb[0].mxu0
        %v1269 = vadd.f32 0.0, %v1268
        %v1270 = vpop.f32.mrb[0].mxu0
        %v1271 = vpop.f32.mrb[0].mxu0
        %v1272 = vpop.f32.mrb[0].mxu0
        %1273 = vdwg.mxu0
        %v1274 = vsel %vm866, -1e+18, %v1269
        %v1275 = vsel %vm794, %v1274, -inf
        %1276 = vmax.xlane.f32.xlu0 %v1275
        %v1277 = vpop.xlane.xlu0 %1276
        %v1278 = vsub.f32 %v1274, %v1277
        %v1279 = vmul.f32 %v1278, 1.442695
        %v1280 = vpow.pop %v1279
        %v1281 = vsel %vm794, %v1280, 0.0
        %1282 = vadd.xlane.f32.xlu0 %v1281
        %v1283 = vpop.xlane.xlu0 %1282
        %v1284 = vrcp.pop %v1283
        %v1285 = vmul.f32 %v1280, %v1284
        %v1286 = vpack.c.bf16 %v1285, %v1285
        %1287 = vrot.lane.b32.xlu0 %v880, 72
        %v1288 = vpop.permute.xlu0 %1287
        %v1290 = vsel %vm794, %v1286, 0
        %v1293 = vsel %vm887, %v1288, 0
        %1295 = vmatprep.subr.bf16.mxu0 0
        %1296 = vmatpush1.bf16.msra.mxu0 %v1293
        %1297 = vmatprep.subr.bf16.mxu0 0
        %1298 = vmatpush1.bf16.msra.mxu0 0
        %1299 = vmatprep.subr.bf16.mxu0 0
        %1300 = vmatpush1.bf16.msra.mxu0 0
        %1301 = vmatprep.subr.bf16.mxu0 0
        %1302 = vmatpush1.bf16.msra.mxu0 0
        %1303 = vmatprep.subr.bf16.mxu0 0
        %1304 = vmatpush1.bf16.msra.mxu0 0
        %1305 = vmatprep.subr.bf16.mxu0 0
        %1306 = vmatpush1.bf16.msra.mxu0 0
        %1307 = vmatprep.subr.bf16.mxu0 0
        %1308 = vmatpush1.bf16.msra.mxu0 0
        %1309 = vmatprep.subr.bf16.mxu0 0
        %1310 = vmatpush1.bf16.msra.mxu0 0
        %1311 = vmatprep.subr.bf16.mxu0 0
        %1312 = vmatpush1.bf16.msra.mxu0 0
        %1313 = vmatprep.subr.bf16.mxu0 0
        %1314 = vmatpush1.bf16.msra.mxu0 0
        %1315 = vmatprep.subr.bf16.mxu0 0
        %1316 = vmatpush1.bf16.msra.mxu0 0
        %1317 = vmatprep.subr.bf16.mxu0 0
        %1318 = vmatpush1.bf16.msra.mxu0 0
        %1319 = vmatprep.subr.bf16.mxu0 0
        %1320 = vmatpush1.bf16.msra.mxu0 0
        %1321 = vmatprep.subr.bf16.mxu0 0
        %1322 = vmatpush1.bf16.msra.mxu0 0
        %1323 = vmatprep.subr.bf16.mxu0 0
        %1324 = vmatpush1.bf16.msra.mxu0 0
        %1325 = vmatprep.subr.bf16.mxu0 0
        %1326 = vmatpush1.bf16.msra.mxu0 0
        %1327 = vmatprep.mubr.bf16.mxu0 0
        %1328 = vmatmul.mubr.bf16.gmra.mrb[0].mxu0 %v1290
        %v1329 = vpop.f32.mrb[0].mxu0
        %v1330 = vadd.f32 0.0, %v1329
        %v1331 = vpop.f32.mrb[0].mxu0
        %v1332 = vpop.f32.mrb[0].mxu0
        %v1333 = vpop.f32.mrb[0].mxu0
        %1334 = vdwg.mxu0
        %1336 = vrot.lane.b32.xlu0 %v1062, 8
        %v1337 = vpop.permute.xlu0 %1336
        %1340 = vrot.lane.b32.xlu0 %v1196, 16
        %v1341 = vpop.permute.xlu0 %1340
        %1344 = vrot.lane.b32.xlu0 %v1330, 24
        %v1345 = vpop.permute.xlu0 %1344
        %v1347 = vsel %vm794, %v926, %v1337
        %vm1348 = vcmask 130048
        %v1349 = vsel %vm1348, %v1347, %v1341
        %vm1350 = vcmask 195584
        %v1351 = vsel %vm1350, %v1349, %v1345
        %v1352 = vpack.c.bf16 %v1351, %v1351
        %v1354 = vlaneseq
        %v1355 = vshrl.u32 %v1354, 7
        %v1356 = vsub.s32 0, %v1355
        %v1357 = vrot.slane %v680, %v1356
        %v1363 = vunpack.c.l.b16 %v676
        %v1364 = vunpack.c.l.b16 %v677
        %v1365 = vunpack.c.l.b16 %v678
        %v1366 = vunpack.c.l.b16 %v679
        %v1367 = vpack.c.b16 %v1364, %v1363
        %v1368 = vpack.c.b16 %v1366, %v1365
        %v1372 = vsel %vm700, %v1352, 0
        %1374 = vmatprep.subr.bf16.mxu0 0
        %1375 = vmatpush1.bf16.msra.mxu0 %v1367
        %1376 = vmatprep.subr.bf16.mxu0 0
        %1377 = vmatpush1.bf16.msra.mxu0 %v1368
        %1378 = vmatprep.subr.bf16.mxu0 0
        %1379 = vmatpush1.bf16.msra.mxu0 0
        %1380 = vmatprep.subr.bf16.mxu0 0
        %1381 = vmatpush1.bf16.msra.mxu0 0
        %1382 = vmatprep.subr.bf16.mxu0 0
        %1383 = vmatpush1.bf16.msra.mxu0 0
        %1384 = vmatprep.subr.bf16.mxu0 0
        %1385 = vmatpush1.bf16.msra.mxu0 0
        %1386 = vmatprep.subr.bf16.mxu0 0
        %1387 = vmatpush1.bf16.msra.mxu0 0
        %1388 = vmatprep.subr.bf16.mxu0 0
        %1389 = vmatpush1.bf16.msra.mxu0 0
        %1390 = vmatprep.subr.bf16.mxu0 0
        %1391 = vmatpush1.bf16.msra.mxu0 0
        %1392 = vmatprep.subr.bf16.mxu0 0
        %1393 = vmatpush1.bf16.msra.mxu0 0
        %1394 = vmatprep.subr.bf16.mxu0 0
        %1395 = vmatpush1.bf16.msra.mxu0 0
        %1396 = vmatprep.subr.bf16.mxu0 0
        %1397 = vmatpush1.bf16.msra.mxu0 0
        %1398 = vmatprep.subr.bf16.mxu0 0
        %1399 = vmatpush1.bf16.msra.mxu0 0
        %1400 = vmatprep.subr.bf16.mxu0 0
        %1401 = vmatpush1.bf16.msra.mxu0 0
        %1402 = vmatprep.subr.bf16.mxu0 0
        %1403 = vmatpush1.bf16.msra.mxu0 0
        %1404 = vmatprep.subr.bf16.mxu0 0
        %1405 = vmatpush1.bf16.msra.mxu0 0
        %1406 = vmatprep.mubr.bf16.mxu0 0
        %1407 = vmatmul.mubr.bf16.gmra.mrb[0].mxu0 %v1372
        %v1408 = vpop.f32.mrb[0].mxu0
        %v1409 = vadd.f32 %v1357, %v1408
        %v1410 = vpop.f32.mrb[0].mxu0
        %v1411 = vpop.f32.mrb[0].mxu0
        %v1412 = vpop.f32.mrb[0].mxu0
        %1413 = vdwg.mxu0
        %v1414 = vadd.f32 %v1409, %v664
        %v1415 = vsel %vm700, %v1414, 0.0
        %1416 = vadd.xlane.f32.xlu0 %v1415
        %v1417 = vpop.xlane.xlu0 %1416
        %v1418 = vrcp.pop 32.0
        %v1419 = vmul.f32 %v1417, %v1418
        %v1420 = vsub.f32 %v1414, %v1419
        %v1421 = vmul.f32 %v1420, %v1420
        %v1422 = vsel %vm700, %v1421, 0.0
        %1423 = vadd.xlane.f32.xlu0 %v1422
        %v1424 = vpop.xlane.xlu0 %1423
        %v1425 = vmul.f32 %v1424, %v1418
        %v1426 = vadd.f32 %v1425, 1e-05
        %v1427 = vrsqrt.pop %v1426
        %v1428 = vmul.f32 %v1420, %v1427
        %v1429 = vlaneseq
        %v1430 = vshrl.u32 %v1429, 7
        %v1431 = vsub.s32 0, %v1430
        %v1432 = vrot.slane %v669, %v1431
        %v1433 = vmul.f32 %v1428, %v1432
        %v1434 = vlaneseq
        %v1435 = vshrl.u32 %v1434, 7
        %v1436 = vsub.s32 1, %v1435
        %v1437 = vrot.slane %v669, %v1436
        %v1438 = vadd.f32 %v1433, %v1437
        %v1439 = vld [vmem:[%s9] sm:$0xf]
        %v1440 = vld [vmem:[%s9 + $0x4] sm:$0xf]
        %v1441 = vld [vmem:[%s9 + $0x8] sm:$0xf]
        %v1442 = vld [vmem:[%s9 + $0xc] sm:$0xf]
        %v1443 = vld [vmem:[%s10] sm:$0x1]
        %v1444 = vld [vmem:[%s11] sm:$0xf]
        %v1445 = vld [vmem:[%s11 + $0x4] sm:$0xf]
        %v1446 = vld [vmem:[%s11 + $0x8] sm:$0xf]
        %v1447 = vld [vmem:[%s11 + $0xc] sm:$0xf]
        %v1448 = vld [vmem:[%s12] sm:$0x1]
        %v1449 = vpack.c.bf16 %v1438, %v1438
        %v1451 = vlaneseq
        %v1452 = vshrl.u32 %v1451, 7
        %v1453 = vsub.s32 0, %v1452
        %v1454 = vrot.slane %v1443, %v1453
        %v1460 = vunpack.c.l.b16 %v1439
        %v1461 = vunpack.c.l.b16 %v1440
        %v1462 = vunpack.c.l.b16 %v1441
        %v1463 = vunpack.c.l.b16 %v1442
        %v1464 = vpack.c.b16 %v1461, %v1460
        %v1465 = vpack.c.b16 %v1463, %v1462
        %v1469 = vsel %vm700, %v1449, 0
        %1471 = vmatprep.subr.bf16.mxu0 0
        %1472 = vmatpush1.bf16.msra.mxu0 %v1464
        %1473 = vmatprep.subr.bf16.mxu0 0
        %1474 = vmatpush1.bf16.msra.mxu0 %v1465
        %1475 = vmatprep.subr.bf16.mxu0 0
        %1476 = vmatpush1.bf16.msra.mxu0 0
        %1477 = vmatprep.subr.bf16.mxu0 0
        %1478 = vmatpush1.bf16.msra.mxu0 0
        %1479 = vmatprep.subr.bf16.mxu0 0
        %1480 = vmatpush1.bf16.msra.mxu0 0
        %1481 = vmatprep.subr.bf16.mxu0 0
        %1482 = vmatpush1.bf16.msra.mxu0 0
        %1483 = vmatprep.subr.bf16.mxu0 0
        %1484 = vmatpush1.bf16.msra.mxu0 0
        %1485 = vmatprep.subr.bf16.mxu0 0
        %1486 = vmatpush1.bf16.msra.mxu0 0
        %1487 = vmatprep.subr.bf16.mxu0 0
        %1488 = vmatpush1.bf16.msra.mxu0 0
        %1489 = vmatprep.subr.bf16.mxu0 0
        %1490 = vmatpush1.bf16.msra.mxu0 0
        %1491 = vmatprep.subr.bf16.mxu0 0
        %1492 = vmatpush1.bf16.msra.mxu0 0
        %1493 = vmatprep.subr.bf16.mxu0 0
        %1494 = vmatpush1.bf16.msra.mxu0 0
        %1495 = vmatprep.subr.bf16.mxu0 0
        %1496 = vmatpush1.bf16.msra.mxu0 0
        %1497 = vmatprep.subr.bf16.mxu0 0
        %1498 = vmatpush1.bf16.msra.mxu0 0
        %1499 = vmatprep.subr.bf16.mxu0 0
        %1500 = vmatpush1.bf16.msra.mxu0 0
        %1501 = vmatprep.subr.bf16.mxu0 0
        %1502 = vmatpush1.bf16.msra.mxu0 0
        %1503 = vmatprep.mubr.bf16.mxu0 0
        %1504 = vmatmul.mubr.bf16.gmra.mrb[0].mxu0 %v1469
        %v1505 = vpop.f32.mrb[0].mxu0
        %v1506 = vadd.f32 %v1454, %v1505
        %v1507 = vpop.f32.mrb[0].mxu0
        %v1508 = vpop.f32.mrb[0].mxu0
        %v1509 = vpop.f32.mrb[0].mxu0
        %1510 = vdwg.mxu0
        %v1511 = vpack.c.bf16 %v666, %v665
        %1512 = vrot.lane.b32.xlu0 %v1464, 96
        %v1513 = vpop.permute.xlu0 %1512
        %1514 = vrot.lane.b32.xlu0 %v1465, 96
        %v1515 = vpop.permute.xlu0 %1514
        %1518 = vrot.lane.b32.xlu0 %v1454, 96
        %v1519 = vpop.permute.xlu0 %1518
        %v1522 = vsel %vm700, %v1511, 0
        %1524 = vmatprep.subr.bf16.mxu0 0
        %1525 = vmatpush1.bf16.msra.mxu0 %v1513
        %1526 = vmatprep.subr.bf16.mxu0 0
        %1527 = vmatpush1.bf16.msra.mxu0 %v1515
        %1528 = vmatprep.subr.bf16.mxu0 0
        %1529 = vmatpush1.bf16.msra.mxu0 0
        %1530 = vmatprep.subr.bf16.mxu0 0
        %1531 = vmatpush1.bf16.msra.mxu0 0
        %1532 = vmatprep.subr.bf16.mxu0 0
        %1533 = vmatpush1.bf16.msra.mxu0 0
        %1534 = vmatprep.subr.bf16.mxu0 0
        %1535 = vmatpush1.bf16.msra.mxu0 0
        %1536 = vmatprep.subr.bf16.mxu0 0
        %1537 = vmatpush1.bf16.msra.mxu0 0
        %1538 = vmatprep.subr.bf16.mxu0 0
        %1539 = vmatpush1.bf16.msra.mxu0 0
        %1540 = vmatprep.subr.bf16.mxu0 0
        %1541 = vmatpush1.bf16.msra.mxu0 0
        %1542 = vmatprep.subr.bf16.mxu0 0
        %1543 = vmatpush1.bf16.msra.mxu0 0
        %1544 = vmatprep.subr.bf16.mxu0 0
        %1545 = vmatpush1.bf16.msra.mxu0 0
        %1546 = vmatprep.subr.bf16.mxu0 0
        %1547 = vmatpush1.bf16.msra.mxu0 0
        %1548 = vmatprep.subr.bf16.mxu0 0
        %1549 = vmatpush1.bf16.msra.mxu0 0
        %1550 = vmatprep.subr.bf16.mxu0 0
        %1551 = vmatpush1.bf16.msra.mxu0 0
        %1552 = vmatprep.subr.bf16.mxu0 0
        %1553 = vmatpush1.bf16.msra.mxu0 0
        %1554 = vmatprep.subr.bf16.mxu0 0
        %1555 = vmatpush1.bf16.msra.mxu0 0
        %1556 = vmatprep.mubr.bf16.mxu0 0
        %1557 = vmatmul.mubr.bf16.gmra.mrb[0].mxu0 %v1522
        %v1558 = vpop.f32.mrb[0].mxu0
        %v1559 = vadd.f32 %v1519, %v1558
        %v1560 = vpop.f32.mrb[0].mxu0
        %v1561 = vpop.f32.mrb[0].mxu0
        %v1562 = vadd.f32 %v1519, %v1561
        %v1563 = vpop.f32.mrb[0].mxu0
        %1564 = vdwg.mxu0
        %v1565 = vmul.f32 %v1506, %v1506
        %v1566 = vsel %vm794, %v1565, 0.0
        %1567 = vadd.xlane.f32.xlu0 %v1566
        %v1568 = vpop.xlane.xlu0 %1567
        %v1569 = vmax.f32 %v1568, 1e-24
        %v1570 = vrsqrt.pop %v1569
        %v1571 = vmul.f32 %v1506, %v1570
        %1572 = vset.pattern.permute.xlu0 1
        %1573 = vperm.xlu0 %1572, %v805
        %v1574 = vpop.permute.xlu0 %1573
        %v1576 = vmul.f32 %v1571, %v1574
        %v1577 = vmul.f32 %v1559, %v1559
        %v1578 = vmul.f32 %v1562, %v1562
        %v1579 = vsel %vm794, %v1577, 0.0
        %1580 = vadd.xlane.f32.xlu0 %v1579
        %v1581 = vpop.xlane.xlu0 %1580
        %vm1582 = vcmask 58368
        %v1583 = vsel %vm1582, %v1578, 0.0
        %1584 = vadd.xlane.f32.xlu0 %v1583
        %v1585 = vpop.xlane.xlu0 %1584
        %v1586 = vmax.f32 %v1581, 1e-24
        %v1587 = vmax.f32 %v1585, 1e-24
        %v1588 = vrsqrt.pop %v1586
        %v1589 = vrsqrt.pop %v1587
        %v1590 = vmul.f32 %v1559, %v1588
        %v1591 = vmul.f32 %v1562, %v1589
        %v1592 = vpack.c.bf16 %v1576, %v1576
        %v1593 = vpack.c.bf16 %v1591, %v1590
        %v1595 = vsel %vm794, %v1592, 0
        %v1598 = vsel %vm794, %v1593, 0
        %1600 = vmatprep.subr.bf16.mxu0 0
        %1601 = vmatpush1.bf16.xpose.msra.mxu0 %v1598
        %1602 = vmatprep.subr.bf16.mxu0 0
        %1603 = vmatpush1.bf16.xpose.msra.mxu0 0
        %1604 = vmatprep.subr.bf16.mxu0 0
        %1605 = vmatpush1.bf16.xpose.msra.mxu0 0
        %1606 = vmatprep.subr.bf16.mxu0 0
        %1607 = vmatpush1.bf16.xpose.msra.mxu0 0
        %1608 = vmatprep.subr.bf16.mxu0 0
        %1609 = vmatpush1.bf16.xpose.msra.mxu0 0
        %1610 = vmatprep.subr.bf16.mxu0 0
        %1611 = vmatpush1.bf16.xpose.msra.mxu0 0
        %1612 = vmatprep.subr.bf16.mxu0 0
        %1613 = vmatpush1.bf16.xpose.msra.mxu0 0
        %1614 = vmatprep.subr.bf16.mxu0 0
        %1615 = vmatpush1.bf16.xpose.msra.mxu0 0
        %1616 = vmatprep.subr.bf16.mxu0 0
        %1617 = vmatpush1.bf16.xpose.msra.mxu0 0
        %1618 = vmatprep.subr.bf16.mxu0 0
        %1619 = vmatpush1.bf16.xpose.msra.mxu0 0
        %1620 = vmatprep.subr.bf16.mxu0 0
        %1621 = vmatpush1.bf16.xpose.msra.mxu0 0
        %1622 = vmatprep.subr.bf16.mxu0 0
        %1623 = vmatpush1.bf16.xpose.msra.mxu0 0
        %1624 = vmatprep.subr.bf16.mxu0 0
        %1625 = vmatpush1.bf16.xpose.msra.mxu0 0
        %1626 = vmatprep.subr.bf16.mxu0 0
        %1627 = vmatpush1.bf16.xpose.msra.mxu0 0
        %1628 = vmatprep.subr.bf16.mxu0 0
        %1629 = vmatpush1.bf16.xpose.msra.mxu0 0
        %1630 = vmatprep.subr.bf16.mxu0 0
        %1631 = vmatpush1.bf16.xpose.msra.mxu0 0
        %1632 = vmatprep.mubr.bf16.mxu0 0
        %1633 = vmatmul.mubr.bf16.gmra.mrb[0].mxu0 %v1595
        %v1634 = vpop.f32.mrb[0].mxu0
        %v1635 = vadd.f32 0.0, %v1634
        %v1636 = vpop.f32.mrb[0].mxu0
        %v1637 = vpop.f32.mrb[0].mxu0
        %v1638 = vpop.f32.mrb[0].mxu0
        %1639 = vdwg.mxu0
        %vm1640 = vcmp.eq.f32.partialorder %v668, 0.0
        %v1641 = vsel %vm1640, -1e+18, %v1635
        %vm1642 = vcmask 80896
        %v1643 = vsel %vm1642, %v1641, -inf
        %1644 = vmax.xlane.f32.xlu0 %v1643
        %v1645 = vpop.xlane.xlu0 %1644
        %v1646 = vsub.f32 %v1641, %v1645
        %v1647 = vmul.f32 %v1646, 1.442695
        %v1648 = vpow.pop %v1647
        %v1649 = vsel %vm1642, %v1648, 0.0
        %1650 = vadd.xlane.f32.xlu0 %v1649
        %v1651 = vpop.xlane.xlu0 %1650
        %v1652 = vrcp.pop %v1651
        %v1653 = vmul.f32 %v1648, %v1652
        %1654 = vst.msk [vmem:[%s641] sm:$0xff] %vm1642, %v1653
        %v1655 = vpack.c.bf16 %v1653, %v1653
        %v1656 = vpack.c.bf16 %v1562, %v1559
        %1658 = vrot.lane.b32.xlu0 %v1656, 96
        %v1659 = vpop.permute.xlu0 %1658
        %v1661 = vsel %vm1642, %v1655, 0
        %vm1663 = vcmask 1044480
        %v1665 = vsel %vm1663, %v1659, 0
        %1667 = vmatprep.subr.bf16.mxu0 0
        %1668 = vmatpush1.bf16.msra.mxu0 %v1665
        %1669 = vmatprep.subr.bf16.mxu0 0
        %1670 = vmatpush1.bf16.msra.mxu0 0
        %1671 = vmatprep.subr.bf16.mxu0 0
        %1672 = vmatpush1.bf16.msra.mxu0 0
        %1673 = vmatprep.subr.bf16.mxu0 0
        %1674 = vmatpush1.bf16.msra.mxu0 0
        %1675 = vmatprep.subr.bf16.mxu0 0
        %1676 = vmatpush1.bf16.msra.mxu0 0
        %1677 = vmatprep.subr.bf16.mxu0 0
        %1678 = vmatpush1.bf16.msra.mxu0 0
        %1679 = vmatprep.subr.bf16.mxu0 0
        %1680 = vmatpush1.bf16.msra.mxu0 0
        %1681 = vmatprep.subr.bf16.mxu0 0
        %1682 = vmatpush1.bf16.msra.mxu0 0
        %1683 = vmatprep.subr.bf16.mxu0 0
        %1684 = vmatpush1.bf16.msra.mxu0 0
        %1685 = vmatprep.subr.bf16.mxu0 0
        %1686 = vmatpush1.bf16.msra.mxu0 0
        %1687 = vmatprep.subr.bf16.mxu0 0
        %1688 = vmatpush1.bf16.msra.mxu0 0
        %1689 = vmatprep.subr.bf16.mxu0 0
        %1690 = vmatpush1.bf16.msra.mxu0 0
        %1691 = vmatprep.subr.bf16.mxu0 0
        %1692 = vmatpush1.bf16.msra.mxu0 0
        %1693 = vmatprep.subr.bf16.mxu0 0
        %1694 = vmatpush1.bf16.msra.mxu0 0
        %1695 = vmatprep.subr.bf16.mxu0 0
        %1696 = vmatpush1.bf16.msra.mxu0 0
        %1697 = vmatprep.subr.bf16.mxu0 0
        %1698 = vmatpush1.bf16.msra.mxu0 0
        %1699 = vmatprep.mubr.bf16.mxu0 0
        %1700 = vmatmul.mubr.bf16.gmra.mrb[0].mxu0 %v1661
        %v1701 = vpop.f32.mrb[0].mxu0
        %v1702 = vadd.f32 0.0, %v1701
        %v1703 = vpop.f32.mrb[0].mxu0
        %v1704 = vpop.f32.mrb[0].mxu0
        %v1705 = vpop.f32.mrb[0].mxu0
        %1706 = vdwg.mxu0
        %1708 = vrot.lane.b32.xlu0 %v1565, 120
        %v1709 = vpop.permute.xlu0 %1708
        %v1711 = vsel %vm794, %v1709, 0.0
        %1712 = vadd.xlane.f32.xlu0 %v1711
        %v1713 = vpop.xlane.xlu0 %1712
        %v1714 = vmax.f32 %v1713, 1e-24
        %v1715 = vrsqrt.pop %v1714
        %v1716 = vmul.f32 %v1506, %v1715
        %v1717 = vmul.f32 %v1716, %v1574
        %1720 = vrot.lane.b32.xlu0 %v1577, 120
        %v1721 = vpop.permute.xlu0 %1720
        %1722 = vrot.lane.b32.xlu0 %v1578, 120
        %v1723 = vpop.permute.xlu0 %1722
        %v1726 = vsel %vm794, %v1721, 0.0
        %1727 = vadd.xlane.f32.xlu0 %v1726
        %v1728 = vpop.xlane.xlu0 %1727
        %v1729 = vsel %vm1582, %v1723, 0.0
        %1730 = vadd.xlane.f32.xlu0 %v1729
        %v1731 = vpop.xlane.xlu0 %1730
        %v1732 = vmax.f32 %v1728, 1e-24
        %v1733 = vmax.f32 %v1731, 1e-24
        %v1734 = vrsqrt.pop %v1732
        %v1735 = vrsqrt.pop %v1733
        %v1736 = vmul.f32 %v1559, %v1734
        %v1737 = vmul.f32 %v1562, %v1735
        %v1738 = vpack.c.bf16 %v1717, %v1717
        %v1739 = vpack.c.bf16 %v1737, %v1736
        %1741 = vrot.lane.b32.xlu0 %v1738, 120
        %v1742 = vpop.permute.xlu0 %1741
        %1744 = vrot.lane.b32.xlu0 %v1739, 120
        %v1745 = vpop.permute.xlu0 %1744
        %v1747 = vsel %vm794, %v1742, 0
        %v1750 = vsel %vm794, %v1745, 0
        %1752 = vmatprep.subr.bf16.mxu0 0
        %1753 = vmatpush1.bf16.xpose.msra.mxu0 %v1750
        %1754 = vmatprep.subr.bf16.mxu0 0
        %1755 = vmatpush1.bf16.xpose.msra.mxu0 0
        %1756 = vmatprep.subr.bf16.mxu0 0
        %1757 = vmatpush1.bf16.xpose.msra.mxu0 0
        %1758 = vmatprep.subr.bf16.mxu0 0
        %1759 = vmatpush1.bf16.xpose.msra.mxu0 0
        %1760 = vmatprep.subr.bf16.mxu0 0
        %1761 = vmatpush1.bf16.xpose.msra.mxu0 0
        %1762 = vmatprep.subr.bf16.mxu0 0
        %1763 = vmatpush1.bf16.xpose.msra.mxu0 0
        %1764 = vmatprep.subr.bf16.mxu0 0
        %1765 = vmatpush1.bf16.xpose.msra.mxu0 0
        %1766 = vmatprep.subr.bf16.mxu0 0
        %1767 = vmatpush1.bf16.xpose.msra.mxu0 0
        %1768 = vmatprep.subr.bf16.mxu0 0
        %1769 = vmatpush1.bf16.xpose.msra.mxu0 0
        %1770 = vmatprep.subr.bf16.mxu0 0
        %1771 = vmatpush1.bf16.xpose.msra.mxu0 0
        %1772 = vmatprep.subr.bf16.mxu0 0
        %1773 = vmatpush1.bf16.xpose.msra.mxu0 0
        %1774 = vmatprep.subr.bf16.mxu0 0
        %1775 = vmatpush1.bf16.xpose.msra.mxu0 0
        %1776 = vmatprep.subr.bf16.mxu0 0
        %1777 = vmatpush1.bf16.xpose.msra.mxu0 0
        %1778 = vmatprep.subr.bf16.mxu0 0
        %1779 = vmatpush1.bf16.xpose.msra.mxu0 0
        %1780 = vmatprep.subr.bf16.mxu0 0
        %1781 = vmatpush1.bf16.xpose.msra.mxu0 0
        %1782 = vmatprep.subr.bf16.mxu0 0
        %1783 = vmatpush1.bf16.xpose.msra.mxu0 0
        %1784 = vmatprep.mubr.bf16.mxu0 0
        %1785 = vmatmul.mubr.bf16.gmra.mrb[0].mxu0 %v1747
        %v1786 = vpop.f32.mrb[0].mxu0
        %v1787 = vadd.f32 0.0, %v1786
        %v1788 = vpop.f32.mrb[0].mxu0
        %v1789 = vpop.f32.mrb[0].mxu0
        %v1790 = vpop.f32.mrb[0].mxu0
        %1791 = vdwg.mxu0
        %v1792 = vsel %vm1640, -1e+18, %v1787
        %v1793 = vsel %vm1642, %v1792, -inf
        %1794 = vmax.xlane.f32.xlu0 %v1793
        %v1795 = vpop.xlane.xlu0 %1794
        %v1796 = vsub.f32 %v1792, %v1795
        %v1797 = vmul.f32 %v1796, 1.442695
        %v1798 = vpow.pop %v1797
        %v1799 = vsel %vm1642, %v1798, 0.0
        %1800 = vadd.xlane.f32.xlu0 %v1799
        %v1801 = vpop.xlane.xlu0 %1800
        %v1802 = vrcp.pop %v1801
        %v1803 = vmul.f32 %v1798, %v1802
        %s1804 = scalar_lea.vmem %s641, 8 [#allocation2]
        %1805 = vst.msk [vmem:[%s1804] sm:$0xff] %vm1642, %v1803
        %v1806 = vpack.c.bf16 %v1803, %v1803
        %1807 = vrot.lane.b32.xlu0 %v1656, 88
        %v1808 = vpop.permute.xlu0 %1807
        %v1810 = vsel %vm1642, %v1806, 0
        %v1813 = vsel %vm1663, %v1808, 0
        %1815 = vmatprep.subr.bf16.mxu0 0
        %1816 = vmatpush1.bf16.msra.mxu0 %v1813
        %1817 = vmatprep.subr.bf16.mxu0 0
        %1818 = vmatpush1.bf16.msra.mxu0 0
        %1819 = vmatprep.subr.bf16.mxu0 0
        %1820 = vmatpush1.bf16.msra.mxu0 0
        %1821 = vmatprep.subr.bf16.mxu0 0
        %1822 = vmatpush1.bf16.msra.mxu0 0
        %1823 = vmatprep.subr.bf16.mxu0 0
        %1824 = vmatpush1.bf16.msra.mxu0 0
        %1825 = vmatprep.subr.bf16.mxu0 0
        %1826 = vmatpush1.bf16.msra.mxu0 0
        %1827 = vmatprep.subr.bf16.mxu0 0
        %1828 = vmatpush1.bf16.msra.mxu0 0
        %1829 = vmatprep.subr.bf16.mxu0 0
        %1830 = vmatpush1.bf16.msra.mxu0 0
        %1831 = vmatprep.subr.bf16.mxu0 0
        %1832 = vmatpush1.bf16.msra.mxu0 0
        %1833 = vmatprep.subr.bf16.mxu0 0
        %1834 = vmatpush1.bf16.msra.mxu0 0
        %1835 = vmatprep.subr.bf16.mxu0 0
        %1836 = vmatpush1.bf16.msra.mxu0 0
        %1837 = vmatprep.subr.bf16.mxu0 0
        %1838 = vmatpush1.bf16.msra.mxu0 0
        %1839 = vmatprep.subr.bf16.mxu0 0
        %1840 = vmatpush1.bf16.msra.mxu0 0
        %1841 = vmatprep.subr.bf16.mxu0 0
        %1842 = vmatpush1.bf16.msra.mxu0 0
        %1843 = vmatprep.subr.bf16.mxu0 0
        %1844 = vmatpush1.bf16.msra.mxu0 0
        %1845 = vmatprep.subr.bf16.mxu0 0
        %1846 = vmatpush1.bf16.msra.mxu0 0
        %1847 = vmatprep.mubr.bf16.mxu0 0
        %1848 = vmatmul.mubr.bf16.gmra.mrb[0].mxu0 %v1810
        %v1849 = vpop.f32.mrb[0].mxu0
        %v1850 = vadd.f32 0.0, %v1849
        %v1851 = vpop.f32.mrb[0].mxu0
        %v1852 = vpop.f32.mrb[0].mxu0
        %v1853 = vpop.f32.mrb[0].mxu0
        %1854 = vdwg.mxu0
        %1855 = vrot.lane.b32.xlu0 %v1565, 112
        %v1856 = vpop.permute.xlu0 %1855
        %v1858 = vsel %vm794, %v1856, 0.0
        %1859 = vadd.xlane.f32.xlu0 %v1858
        %v1860 = vpop.xlane.xlu0 %1859
        %v1861 = vmax.f32 %v1860, 1e-24
        %v1862 = vrsqrt.pop %v1861
        %v1863 = vmul.f32 %v1506, %v1862
        %v1864 = vmul.f32 %v1863, %v1574
        %1865 = vrot.lane.b32.xlu0 %v1577, 112
        %v1866 = vpop.permute.xlu0 %1865
        %1867 = vrot.lane.b32.xlu0 %v1578, 112
        %v1868 = vpop.permute.xlu0 %1867
        %v1871 = vsel %vm794, %v1866, 0.0
        %1872 = vadd.xlane.f32.xlu0 %v1871
        %v1873 = vpop.xlane.xlu0 %1872
        %v1874 = vsel %vm1582, %v1868, 0.0
        %1875 = vadd.xlane.f32.xlu0 %v1874
        %v1876 = vpop.xlane.xlu0 %1875
        %v1877 = vmax.f32 %v1873, 1e-24
        %v1878 = vmax.f32 %v1876, 1e-24
        %v1879 = vrsqrt.pop %v1877
        %v1880 = vrsqrt.pop %v1878
        %v1881 = vmul.f32 %v1559, %v1879
        %v1882 = vmul.f32 %v1562, %v1880
        %v1883 = vpack.c.bf16 %v1864, %v1864
        %v1884 = vpack.c.bf16 %v1882, %v1881
        %1886 = vrot.lane.b32.xlu0 %v1883, 112
        %v1887 = vpop.permute.xlu0 %1886
        %1889 = vrot.lane.b32.xlu0 %v1884, 112
        %v1890 = vpop.permute.xlu0 %1889
        %v1892 = vsel %vm794, %v1887, 0
        %v1895 = vsel %vm794, %v1890, 0
        %1897 = vmatprep.subr.bf16.mxu0 0
        %1898 = vmatpush1.bf16.xpose.msra.mxu0 %v1895
        %1899 = vmatprep.subr.bf16.mxu0 0
        %1900 = vmatpush1.bf16.xpose.msra.mxu0 0
        %1901 = vmatprep.subr.bf16.mxu0 0
        %1902 = vmatpush1.bf16.xpose.msra.mxu0 0
        %1903 = vmatprep.subr.bf16.mxu0 0
        %1904 = vmatpush1.bf16.xpose.msra.mxu0 0
        %1905 = vmatprep.subr.bf16.mxu0 0
        %1906 = vmatpush1.bf16.xpose.msra.mxu0 0
        %1907 = vmatprep.subr.bf16.mxu0 0
        %1908 = vmatpush1.bf16.xpose.msra.mxu0 0
        %1909 = vmatprep.subr.bf16.mxu0 0
        %1910 = vmatpush1.bf16.xpose.msra.mxu0 0
        %1911 = vmatprep.subr.bf16.mxu0 0
        %1912 = vmatpush1.bf16.xpose.msra.mxu0 0
        %1913 = vmatprep.subr.bf16.mxu0 0
        %1914 = vmatpush1.bf16.xpose.msra.mxu0 0
        %1915 = vmatprep.subr.bf16.mxu0 0
        %1916 = vmatpush1.bf16.xpose.msra.mxu0 0
        %1917 = vmatprep.subr.bf16.mxu0 0
        %1918 = vmatpush1.bf16.xpose.msra.mxu0 0
        %1919 = vmatprep.subr.bf16.mxu0 0
        %1920 = vmatpush1.bf16.xpose.msra.mxu0 0
        %1921 = vmatprep.subr.bf16.mxu0 0
        %1922 = vmatpush1.bf16.xpose.msra.mxu0 0
        %1923 = vmatprep.subr.bf16.mxu0 0
        %1924 = vmatpush1.bf16.xpose.msra.mxu0 0
        %1925 = vmatprep.subr.bf16.mxu0 0
        %1926 = vmatpush1.bf16.xpose.msra.mxu0 0
        %1927 = vmatprep.subr.bf16.mxu0 0
        %1928 = vmatpush1.bf16.xpose.msra.mxu0 0
        %1929 = vmatprep.mubr.bf16.mxu0 0
        %1930 = vmatmul.mubr.bf16.gmra.mrb[0].mxu0 %v1892
        %v1931 = vpop.f32.mrb[0].mxu0
        %v1932 = vadd.f32 0.0, %v1931
        %v1933 = vpop.f32.mrb[0].mxu0
        %v1934 = vpop.f32.mrb[0].mxu0
        %v1935 = vpop.f32.mrb[0].mxu0
        %1936 = vdwg.mxu0
        %v1937 = vsel %vm1640, -1e+18, %v1932
        %v1938 = vsel %vm1642, %v1937, -inf
        %1939 = vmax.xlane.f32.xlu0 %v1938
        %v1940 = vpop.xlane.xlu0 %1939
        %v1941 = vsub.f32 %v1937, %v1940
        %v1942 = vmul.f32 %v1941, 1.442695
        %v1943 = vpow.pop %v1942
        %v1944 = vsel %vm1642, %v1943, 0.0
        %1945 = vadd.xlane.f32.xlu0 %v1944
        %v1946 = vpop.xlane.xlu0 %1945
        %v1947 = vrcp.pop %v1946
        %v1948 = vmul.f32 %v1943, %v1947
        %s1949 = scalar_lea.vmem %s641, 16 [#allocation2]
        %1950 = vst.msk [vmem:[%s1949] sm:$0xff] %vm1642, %v1948
        %v1951 = vpack.c.bf16 %v1948, %v1948
        %1952 = vrot.lane.b32.xlu0 %v1656, 80
        %v1953 = vpop.permute.xlu0 %1952
        %v1955 = vsel %vm1642, %v1951, 0
        %v1958 = vsel %vm1663, %v1953, 0
        %1960 = vmatprep.subr.bf16.mxu0 0
        %1961 = vmatpush1.bf16.msra.mxu0 %v1958
        %1962 = vmatprep.subr.bf16.mxu0 0
        %1963 = vmatpush1.bf16.msra.mxu0 0
        %1964 = vmatprep.subr.bf16.mxu0 0
        %1965 = vmatpush1.bf16.msra.mxu0 0
        %1966 = vmatprep.subr.bf16.mxu0 0
        %1967 = vmatpush1.bf16.msra.mxu0 0
        %1968 = vmatprep.subr.bf16.mxu0 0
        %1969 = vmatpush1.bf16.msra.mxu0 0
        %1970 = vmatprep.subr.bf16.mxu0 0
        %1971 = vmatpush1.bf16.msra.mxu0 0
        %1972 = vmatprep.subr.bf16.mxu0 0
        %1973 = vmatpush1.bf16.msra.mxu0 0
        %1974 = vmatprep.subr.bf16.mxu0 0
        %1975 = vmatpush1.bf16.msra.mxu0 0
        %1976 = vmatprep.subr.bf16.mxu0 0
        %1977 = vmatpush1.bf16.msra.mxu0 0
        %1978 = vmatprep.subr.bf16.mxu0 0
        %1979 = vmatpush1.bf16.msra.mxu0 0
        %1980 = vmatprep.subr.bf16.mxu0 0
        %1981 = vmatpush1.bf16.msra.mxu0 0
        %1982 = vmatprep.subr.bf16.mxu0 0
        %1983 = vmatpush1.bf16.msra.mxu0 0
        %1984 = vmatprep.subr.bf16.mxu0 0
        %1985 = vmatpush1.bf16.msra.mxu0 0
        %1986 = vmatprep.subr.bf16.mxu0 0
        %1987 = vmatpush1.bf16.msra.mxu0 0
        %1988 = vmatprep.subr.bf16.mxu0 0
        %1989 = vmatpush1.bf16.msra.mxu0 0
        %1990 = vmatprep.subr.bf16.mxu0 0
        %1991 = vmatpush1.bf16.msra.mxu0 0
        %1992 = vmatprep.mubr.bf16.mxu0 0
        %1993 = vmatmul.mubr.bf16.gmra.mrb[0].mxu0 %v1955
        %v1994 = vpop.f32.mrb[0].mxu0
        %v1995 = vadd.f32 0.0, %v1994
        %v1996 = vpop.f32.mrb[0].mxu0
        %v1997 = vpop.f32.mrb[0].mxu0
        %v1998 = vpop.f32.mrb[0].mxu0
        %1999 = vdwg.mxu0
        %2000 = vrot.lane.b32.xlu0 %v1565, 104
        %v2001 = vpop.permute.xlu0 %2000
        %v2003 = vsel %vm794, %v2001, 0.0
        %2004 = vadd.xlane.f32.xlu0 %v2003
        %v2005 = vpop.xlane.xlu0 %2004
        %v2006 = vmax.f32 %v2005, 1e-24
        %v2007 = vrsqrt.pop %v2006
        %v2008 = vmul.f32 %v1506, %v2007
        %v2009 = vmul.f32 %v2008, %v1574
        %2010 = vrot.lane.b32.xlu0 %v1577, 104
        %v2011 = vpop.permute.xlu0 %2010
        %2012 = vrot.lane.b32.xlu0 %v1578, 104
        %v2013 = vpop.permute.xlu0 %2012
        %v2016 = vsel %vm794, %v2011, 0.0
        %2017 = vadd.xlane.f32.xlu0 %v2016
        %v2018 = vpop.xlane.xlu0 %2017
        %v2019 = vsel %vm1582, %v2013, 0.0
        %2020 = vadd.xlane.f32.xlu0 %v2019
        %v2021 = vpop.xlane.xlu0 %2020
        %v2022 = vmax.f32 %v2018, 1e-24
        %v2023 = vmax.f32 %v2021, 1e-24
        %v2024 = vrsqrt.pop %v2022
        %v2025 = vrsqrt.pop %v2023
        %v2026 = vmul.f32 %v1559, %v2024
        %v2027 = vmul.f32 %v1562, %v2025
        %v2028 = vpack.c.bf16 %v2009, %v2009
        %v2029 = vpack.c.bf16 %v2027, %v2026
        %2031 = vrot.lane.b32.xlu0 %v2028, 104
        %v2032 = vpop.permute.xlu0 %2031
        %2034 = vrot.lane.b32.xlu0 %v2029, 104
        %v2035 = vpop.permute.xlu0 %2034
        %v2037 = vsel %vm794, %v2032, 0
        %v2040 = vsel %vm794, %v2035, 0
        %2042 = vmatprep.subr.bf16.mxu0 0
        %2043 = vmatpush1.bf16.xpose.msra.mxu0 %v2040
        %2044 = vmatprep.subr.bf16.mxu0 0
        %2045 = vmatpush1.bf16.xpose.msra.mxu0 0
        %2046 = vmatprep.subr.bf16.mxu0 0
        %2047 = vmatpush1.bf16.xpose.msra.mxu0 0
        %2048 = vmatprep.subr.bf16.mxu0 0
        %2049 = vmatpush1.bf16.xpose.msra.mxu0 0
        %2050 = vmatprep.subr.bf16.mxu0 0
        %2051 = vmatpush1.bf16.xpose.msra.mxu0 0
        %2052 = vmatprep.subr.bf16.mxu0 0
        %2053 = vmatpush1.bf16.xpose.msra.mxu0 0
        %2054 = vmatprep.subr.bf16.mxu0 0
        %2055 = vmatpush1.bf16.xpose.msra.mxu0 0
        %2056 = vmatprep.subr.bf16.mxu0 0
        %2057 = vmatpush1.bf16.xpose.msra.mxu0 0
        %2058 = vmatprep.subr.bf16.mxu0 0
        %2059 = vmatpush1.bf16.xpose.msra.mxu0 0
        %2060 = vmatprep.subr.bf16.mxu0 0
        %2061 = vmatpush1.bf16.xpose.msra.mxu0 0
        %2062 = vmatprep.subr.bf16.mxu0 0
        %2063 = vmatpush1.bf16.xpose.msra.mxu0 0
        %2064 = vmatprep.subr.bf16.mxu0 0
        %2065 = vmatpush1.bf16.xpose.msra.mxu0 0
        %2066 = vmatprep.subr.bf16.mxu0 0
        %2067 = vmatpush1.bf16.xpose.msra.mxu0 0
        %2068 = vmatprep.subr.bf16.mxu0 0
        %2069 = vmatpush1.bf16.xpose.msra.mxu0 0
        %2070 = vmatprep.subr.bf16.mxu0 0
        %2071 = vmatpush1.bf16.xpose.msra.mxu0 0
        %2072 = vmatprep.subr.bf16.mxu0 0
        %2073 = vmatpush1.bf16.xpose.msra.mxu0 0
        %2074 = vmatprep.mubr.bf16.mxu0 0
        %2075 = vmatmul.mubr.bf16.gmra.mrb[0].mxu0 %v2037
        %v2076 = vpop.f32.mrb[0].mxu0
        %v2077 = vadd.f32 0.0, %v2076
        %v2078 = vpop.f32.mrb[0].mxu0
        %v2079 = vpop.f32.mrb[0].mxu0
        %v2080 = vpop.f32.mrb[0].mxu0
        %2081 = vdwg.mxu0
        %v2082 = vsel %vm1640, -1e+18, %v2077
        %v2083 = vsel %vm1642, %v2082, -inf
        %2084 = vmax.xlane.f32.xlu0 %v2083
        %v2085 = vpop.xlane.xlu0 %2084
        %v2086 = vsub.f32 %v2082, %v2085
        %v2087 = vmul.f32 %v2086, 1.442695
        %v2088 = vpow.pop %v2087
        %v2089 = vsel %vm1642, %v2088, 0.0
        %2090 = vadd.xlane.f32.xlu0 %v2089
        %v2091 = vpop.xlane.xlu0 %2090
        %v2092 = vrcp.pop %v2091
        %v2093 = vmul.f32 %v2088, %v2092
        %s2094 = scalar_lea.vmem %s641, 24 [#allocation2]
        %2095 = vst.msk [vmem:[%s2094] sm:$0xff] %vm1642, %v2093
        %v2096 = vpack.c.bf16 %v2093, %v2093
        %2097 = vrot.lane.b32.xlu0 %v1656, 72
        %v2098 = vpop.permute.xlu0 %2097
        %v2100 = vsel %vm1642, %v2096, 0
        %v2103 = vsel %vm1663, %v2098, 0
        %2105 = vmatprep.subr.bf16.mxu0 0
        %2106 = vmatpush1.bf16.msra.mxu0 %v2103
        %2107 = vmatprep.subr.bf16.mxu0 0
        %2108 = vmatpush1.bf16.msra.mxu0 0
        %2109 = vmatprep.subr.bf16.mxu0 0
        %2110 = vmatpush1.bf16.msra.mxu0 0
        %2111 = vmatprep.subr.bf16.mxu0 0
        %2112 = vmatpush1.bf16.msra.mxu0 0
        %2113 = vmatprep.subr.bf16.mxu0 0
        %2114 = vmatpush1.bf16.msra.mxu0 0
        %2115 = vmatprep.subr.bf16.mxu0 0
        %2116 = vmatpush1.bf16.msra.mxu0 0
        %2117 = vmatprep.subr.bf16.mxu0 0
        %2118 = vmatpush1.bf16.msra.mxu0 0
        %2119 = vmatprep.subr.bf16.mxu0 0
        %2120 = vmatpush1.bf16.msra.mxu0 0
        %2121 = vmatprep.subr.bf16.mxu0 0
        %2122 = vmatpush1.bf16.msra.mxu0 0
        %2123 = vmatprep.subr.bf16.mxu0 0
        %2124 = vmatpush1.bf16.msra.mxu0 0
        %2125 = vmatprep.subr.bf16.mxu0 0
        %2126 = vmatpush1.bf16.msra.mxu0 0
        %2127 = vmatprep.subr.bf16.mxu0 0
        %2128 = vmatpush1.bf16.msra.mxu0 0
        %2129 = vmatprep.subr.bf16.mxu0 0
        %2130 = vmatpush1.bf16.msra.mxu0 0
        %2131 = vmatprep.subr.bf16.mxu0 0
        %2132 = vmatpush1.bf16.msra.mxu0 0
        %2133 = vmatprep.subr.bf16.mxu0 0
        %2134 = vmatpush1.bf16.msra.mxu0 0
        %2135 = vmatprep.subr.bf16.mxu0 0
        %2136 = vmatpush1.bf16.msra.mxu0 0
        %2137 = vmatprep.mubr.bf16.mxu0 0
        %2138 = vmatmul.mubr.bf16.gmra.mrb[0].mxu0 %v2100
        %v2139 = vpop.f32.mrb[0].mxu0
        %v2140 = vadd.f32 0.0, %v2139
        %v2141 = vpop.f32.mrb[0].mxu0
        %v2142 = vpop.f32.mrb[0].mxu0
        %v2143 = vpop.f32.mrb[0].mxu0
        %2144 = vdwg.mxu0
        %2146 = vrot.lane.b32.xlu0 %v1850, 8
        %v2147 = vpop.permute.xlu0 %2146
        %2150 = vrot.lane.b32.xlu0 %v1995, 16
        %v2151 = vpop.permute.xlu0 %2150
        %2154 = vrot.lane.b32.xlu0 %v2140, 24
        %v2155 = vpop.permute.xlu0 %2154
        %v2157 = vsel %vm794, %v1702, %v2147
        %v2158 = vsel %vm1348, %v2157, %v2151
        %v2159 = vsel %vm1350, %v2158, %v2155
        %v2160 = vpack.c.bf16 %v2159, %v2159
        %v2162 = vlaneseq
        %v2163 = vshrl.u32 %v2162, 7
        %v2164 = vsub.s32 0, %v2163
        %v2165 = vrot.slane %v1448, %v2164
        %v2171 = vunpack.c.l.b16 %v1444
        %v2172 = vunpack.c.l.b16 %v1445
        %v2173 = vunpack.c.l.b16 %v1446
        %v2174 = vunpack.c.l.b16 %v1447
        %v2175 = vpack.c.b16 %v2172, %v2171
        %v2176 = vpack.c.b16 %v2174, %v2173
        %v2180 = vsel %vm700, %v2160, 0
        %2182 = vmatprep.subr.bf16.mxu0 0
        %2183 = vmatpush1.bf16.msra.mxu0 %v2175
        %2184 = vmatprep.subr.bf16.mxu0 0
        %2185 = vmatpush1.bf16.msra.mxu0 %v2176
        %2186 = vmatprep.subr.bf16.mxu0 0
        %2187 = vmatpush1.bf16.msra.mxu0 0
        %2188 = vmatprep.subr.bf16.mxu0 0
        %2189 = vmatpush1.bf16.msra.mxu0 0
        %2190 = vmatprep.subr.bf16.mxu0 0
        %2191 = vmatpush1.bf16.msra.mxu0 0
        %2192 = vmatprep.subr.bf16.mxu0 0
        %2193 = vmatpush1.bf16.msra.mxu0 0
        %2194 = vmatprep.subr.bf16.mxu0 0
        %2195 = vmatpush1.bf16.msra.mxu0 0
        %2196 = vmatprep.subr.bf16.mxu0 0
        %2197 = vmatpush1.bf16.msra.mxu0 0
        %2198 = vmatprep.subr.bf16.mxu0 0
        %2199 = vmatpush1.bf16.msra.mxu0 0
        %2200 = vmatprep.subr.bf16.mxu0 0
        %2201 = vmatpush1.bf16.msra.mxu0 0
        %2202 = vmatprep.subr.bf16.mxu0 0
        %2203 = vmatpush1.bf16.msra.mxu0 0
        %2204 = vmatprep.subr.bf16.mxu0 0
        %2205 = vmatpush1.bf16.msra.mxu0 0
        %2206 = vmatprep.subr.bf16.mxu0 0
        %2207 = vmatpush1.bf16.msra.mxu0 0
        %2208 = vmatprep.subr.bf16.mxu0 0
        %2209 = vmatpush1.bf16.msra.mxu0 0
        %2210 = vmatprep.subr.bf16.mxu0 0
        %2211 = vmatpush1.bf16.msra.mxu0 0
        %2212 = vmatprep.subr.bf16.mxu0 0
        %2213 = vmatpush1.bf16.msra.mxu0 0
        %2214 = vmatprep.mubr.bf16.mxu0 0
        %2215 = vmatmul.mubr.bf16.gmra.mrb[0].mxu0 %v2180
        %v2216 = vpop.f32.mrb[0].mxu0
        %v2217 = vadd.f32 %v2165, %v2216
        %v2218 = vpop.f32.mrb[0].mxu0
        %v2219 = vpop.f32.mrb[0].mxu0
        %v2220 = vpop.f32.mrb[0].mxu0
        %2221 = vdwg.mxu0
        %v2222 = vadd.f32 %v2217, %v1438
        %v2223 = vsel %vm700, %v2222, 0.0
        %2224 = vadd.xlane.f32.xlu0 %v2223
        %v2225 = vpop.xlane.xlu0 %2224
        %v2226 = vmul.f32 %v2225, %v1418
        %v2227 = vsub.f32 %v2222, %v2226
        %v2228 = vmul.f32 %v2227, %v2227
        %v2229 = vsel %vm700, %v2228, 0.0
        %2230 = vadd.xlane.f32.xlu0 %v2229
        %v2231 = vpop.xlane.xlu0 %2230
        %v2232 = vmul.f32 %v2231, %v1418
        %v2233 = vadd.f32 %v2232, 1e-05
        %v2234 = vrsqrt.pop %v2233
        %v2235 = vmul.f32 %v2227, %v2234
        %v2236 = vlaneseq
        %v2237 = vshrl.u32 %v2236, 7
        %v2238 = vsub.s32 2, %v2237
        %v2239 = vrot.slane %v669, %v2238
        %v2240 = vmul.f32 %v2235, %v2239
        %v2241 = vlaneseq
        %v2242 = vshrl.u32 %v2241, 7
        %v2243 = vsub.s32 3, %v2242
        %v2244 = vrot.slane %v669, %v2243
        %v2245 = vadd.f32 %v2240, %v2244
        %v2246 = vpack.c.bf16 %v2245, %v2245
        %v2247 = vld [vmem:[%s14] sm:$0xf]
        %v2248 = vld [vmem:[%s14 + $0x4] sm:$0xf]
        %v2249 = vld [vmem:[%s14 + $0x8] sm:$0xf]
        %v2250 = vld [vmem:[%s14 + $0xc] sm:$0xf]
        %v2251 = vld [vmem:[%s15] sm:$0x1]
        %v2253 = vlaneseq
        %v2254 = vshrl.u32 %v2253, 7
        %v2255 = vsub.s32 0, %v2254
        %v2256 = vrot.slane %v2251, %v2255
        %v2262 = vunpack.c.l.b16 %v2247
        %v2263 = vunpack.c.l.b16 %v2248
        %v2264 = vunpack.c.l.b16 %v2249
        %v2265 = vunpack.c.l.b16 %v2250
        %v2266 = vpack.c.b16 %v2263, %v2262
        %v2267 = vpack.c.b16 %v2265, %v2264
        %v2271 = vsel %vm700, %v2246, 0
        %2273 = vmatprep.subr.bf16.mxu0 0
        %2274 = vmatpush1.bf16.msra.mxu0 %v2266
        %2275 = vmatprep.subr.bf16.mxu0 0
        %2276 = vmatpush1.bf16.msra.mxu0 %v2267
        %2277 = vmatprep.subr.bf16.mxu0 0
        %2278 = vmatpush1.bf16.msra.mxu0 0
        %2279 = vmatprep.subr.bf16.mxu0 0
        %2280 = vmatpush1.bf16.msra.mxu0 0
        %2281 = vmatprep.subr.bf16.mxu0 0
        %2282 = vmatpush1.bf16.msra.mxu0 0
        %2283 = vmatprep.subr.bf16.mxu0 0
        %2284 = vmatpush1.bf16.msra.mxu0 0
        %2285 = vmatprep.subr.bf16.mxu0 0
        %2286 = vmatpush1.bf16.msra.mxu0 0
        %2287 = vmatprep.subr.bf16.mxu0 0
        %2288 = vmatpush1.bf16.msra.mxu0 0
        %2289 = vmatprep.subr.bf16.mxu0 0
        %2290 = vmatpush1.bf16.msra.mxu0 0
        %2291 = vmatprep.subr.bf16.mxu0 0
        %2292 = vmatpush1.bf16.msra.mxu0 0
        %2293 = vmatprep.subr.bf16.mxu0 0
        %2294 = vmatpush1.bf16.msra.mxu0 0
        %2295 = vmatprep.subr.bf16.mxu0 0
        %2296 = vmatpush1.bf16.msra.mxu0 0
        %2297 = vmatprep.subr.bf16.mxu0 0
        %2298 = vmatpush1.bf16.msra.mxu0 0
        %2299 = vmatprep.subr.bf16.mxu0 0
        %2300 = vmatpush1.bf16.msra.mxu0 0
        %2301 = vmatprep.subr.bf16.mxu0 0
        %2302 = vmatpush1.bf16.msra.mxu0 0
        %2303 = vmatprep.subr.bf16.mxu0 0
        %2304 = vmatpush1.bf16.msra.mxu0 0
        %2305 = vmatprep.mubr.bf16.mxu0 0
        %2306 = vmatmul.mubr.bf16.gmra.mrb[0].mxu0 %v2271
        %v2307 = vpop.f32.mrb[0].mxu0
        %v2308 = vadd.f32 %v2256, %v2307
        %v2309 = vpop.f32.mrb[0].mxu0
        %v2310 = vpop.f32.mrb[0].mxu0
        %v2311 = vpop.f32.mrb[0].mxu0
        %2312 = vdwg.mxu0
        %v2313 = vmax.f32 %v2308, 0.0
        %v2314 = vpack.c.bf16 %v2313, %v2313
        %v2315 = vld [vmem:[%s16] sm:$0xf]
        %v2316 = vld [vmem:[%s16 + $0x4] sm:$0xf]
        %v2317 = vld [vmem:[%s16 + $0x8] sm:$0xf]
        %v2318 = vld [vmem:[%s16 + $0xc] sm:$0xf]
        %v2319 = vld [vmem:[%s16 + $0x10] sm:$0xf]
        %v2320 = vld [vmem:[%s16 + $0x14] sm:$0xf]
        %v2321 = vld [vmem:[%s16 + $0x18] sm:$0xf]
        %v2322 = vld [vmem:[%s16 + $0x1c] sm:$0xf]
        %v2323 = vld [vmem:[%s17] sm:$0x1]
        %v2325 = vlaneseq
        %v2326 = vshrl.u32 %v2325, 7
        %v2327 = vsub.s32 0, %v2326
        %v2328 = vrot.slane %v2323, %v2327
        %v2338 = vunpack.c.l.b16 %v2315
        %v2339 = vunpack.c.l.b16 %v2316
        %v2340 = vunpack.c.l.b16 %v2317
        %v2341 = vunpack.c.l.b16 %v2318
        %v2342 = vunpack.c.l.b16 %v2319
        %v2343 = vunpack.c.l.b16 %v2320
        %v2344 = vunpack.c.l.b16 %v2321
        %v2345 = vunpack.c.l.b16 %v2322
        %v2346 = vpack.c.b16 %v2339, %v2338
        %v2347 = vpack.c.b16 %v2341, %v2340
        %v2348 = vpack.c.b16 %v2343, %v2342
        %v2349 = vpack.c.b16 %v2345, %v2344
        %vm2354 = vcmask 523264
        %v2356 = vsel %vm2354, %v2314, 0
        %2358 = vmatprep.subr.bf16.mxu0 0
        %2359 = vmatpush1.bf16.msra.mxu0 %v2346
        %2360 = vmatprep.subr.bf16.mxu0 0
        %2361 = vmatpush1.bf16.msra.mxu0 %v2347
        %2362 = vmatprep.subr.bf16.mxu0 0
        %2363 = vmatpush1.bf16.msra.mxu0 %v2348
        %2364 = vmatprep.subr.bf16.mxu0 0
        %2365 = vmatpush1.bf16.msra.mxu0 %v2349
        %2366 = vmatprep.subr.bf16.mxu0 0
        %2367 = vmatpush1.bf16.msra.mxu0 0
        %2368 = vmatprep.subr.bf16.mxu0 0
        %2369 = vmatpush1.bf16.msra.mxu0 0
        %2370 = vmatprep.subr.bf16.mxu0 0
        %2371 = vmatpush1.bf16.msra.mxu0 0
        %2372 = vmatprep.subr.bf16.mxu0 0
        %2373 = vmatpush1.bf16.msra.mxu0 0
        %2374 = vmatprep.subr.bf16.mxu0 0
        %2375 = vmatpush1.bf16.msra.mxu0 0
        %2376 = vmatprep.subr.bf16.mxu0 0
        %2377 = vmatpush1.bf16.msra.mxu0 0
        %2378 = vmatprep.subr.bf16.mxu0 0
        %2379 = vmatpush1.bf16.msra.mxu0 0
        %2380 = vmatprep.subr.bf16.mxu0 0
        %2381 = vmatpush1.bf16.msra.mxu0 0
        %2382 = vmatprep.subr.bf16.mxu0 0
        %2383 = vmatpush1.bf16.msra.mxu0 0
        %2384 = vmatprep.subr.bf16.mxu0 0
        %2385 = vmatpush1.bf16.msra.mxu0 0
        %2386 = vmatprep.subr.bf16.mxu0 0
        %2387 = vmatpush1.bf16.msra.mxu0 0
        %2388 = vmatprep.subr.bf16.mxu0 0
        %2389 = vmatpush1.bf16.msra.mxu0 0
        %2390 = vmatprep.mubr.bf16.mxu0 0
        %2391 = vmatmul.mubr.bf16.gmra.mrb[0].mxu0 %v2356
        %v2392 = vpop.f32.mrb[0].mxu0
        %v2393 = vadd.f32 %v2328, %v2392
        %v2394 = vpop.f32.mrb[0].mxu0
        %v2395 = vpop.f32.mrb[0].mxu0
        %v2396 = vpop.f32.mrb[0].mxu0
        %2397 = vdwg.mxu0
        %v2398 = vadd.f32 %v2393, %v2245
        %v2399 = vsel %vm700, %v2398, 0.0
        %2400 = vadd.xlane.f32.xlu0 %v2399
        %v2401 = vpop.xlane.xlu0 %2400
        %v2402 = vmul.f32 %v2401, %v1418
        %v2403 = vsub.f32 %v2398, %v2402
        %v2404 = vmul.f32 %v2403, %v2403
        %v2405 = vsel %vm700, %v2404, 0.0
        %2406 = vadd.xlane.f32.xlu0 %v2405
        %v2407 = vpop.xlane.xlu0 %2406
        %v2408 = vmul.f32 %v2407, %v1418
        %v2409 = vadd.f32 %v2408, 1e-05
        %v2410 = vrsqrt.pop %v2409
        %v2411 = vmul.f32 %v2403, %v2410
        %v2412 = vlaneseq
        %v2413 = vshrl.u32 %v2412, 7
        %v2414 = vsub.s32 4, %v2413
        %v2415 = vrot.slane %v669, %v2414
        %v2416 = vmul.f32 %v2411, %v2415
        %v2417 = vlaneseq
        %v2418 = vshrl.u32 %v2417, 7
        %v2419 = vsub.s32 5, %v2418
        %v2420 = vrot.slane %v669, %v2419
        %v2421 = vadd.f32 %v2416, %v2420
        %2422 = vst.msk [vmem:[%s662] sm:$0xff] %vm700, %v2421
        %p2423 = scmp.lt.s32.totalorder %s34, 1
        %s2424 = scalar_select %p2423, %s34, 1
        %s2425 = smul.addr %s2424, 8
        %s2426 = scalar_lea.vmem %s18, %s2425
        %s2427 = sand.u32 %s466, 1
        %s2428 = scalar_lea.sflag [#allocation3], %s2427
        %s2429 = sand.u32 %s466, 1
        %s2430 = smul.addr %s2429, 32
        %s2431 = scalar_lea.vmem [#allocation2], %s2430
        // Predicated region
        $region93: #{decoder_forward.4} parent=91 // pred_check
          %p2432 = pneg %p450
        $region94: #{decoder_forward.4} parent=91 // pred_check_branch
          %2434 = sbr.rel (%p2432) target = $region96
        $region95: #{decoder_forward.4} parent=91 // pred_region
          _
        $region96: #{decoder_forward.4} parent=91 // pred_fallthru
          _
        // Predicated region
        $region97: #{decoder_forward.4} parent=91 // pred_check
          %p2435 = pneg %p476
        $region98: #{decoder_forward.4} parent=91 // pred_check_branch
          %2437 = sbr.rel (%p2435) target = $region100
        $region99: #{decoder_forward.4} parent=91 // pred_region
          %s2439 = ssub.s32 512, 512
          %2440 = vsyncadd %s2428, %s2439
          %s2441 = smul.addr %s34, 4
          %s2442 = smul.addr %s2441, 128
          %s2443 = scalar_lea.hbm %s19, %s2442
          %s2444 = sshll.u32 %s2431, 4
          %s2445 = int_to_ptr.vmem [resolvable:$true] %s2444
          %2450 = dma.vmem_to_hbm [thread:$0]  %s2445, 512, %s2443, %s2428, 128, 128, 8
        $region100: #{decoder_forward.4} parent=91 // pred_fallthru
          _
      $region92: #{decoder_forward.4} parent=5 // pred_fallthru
        _
      %p2451 = scmp.le.s32.totalorder 2, %s29
      // Predicated region
      $region101: #{decoder_forward.4} parent=5 // pred_check
        %p2452 = pneg %p2451
      $region102: #{decoder_forward.4} parent=5 // pred_check_branch
        %2454 = sbr.rel (%p2452) target = $region104
      $region103: #{decoder_forward.4} parent=5 // pred_region
        %s2455 = ssub.s32 %s29, 2
        // Predicated region
        $region105: #{decoder_forward.4} parent=103 // pred_check
          %p2456 = pneg %p456
        $region106: #{decoder_forward.4} parent=103 // pred_check_branch
          %2458 = sbr.rel (%p2456) target = $region108
        $region107: #{decoder_forward.4} parent=103 // pred_region
          %p2459 = scmp.lt.s32.totalorder %s35, 1
          %s2460 = scalar_select %p2459, %s35, 1
          %s2461 = smul.addr %s2460, 8
          %s2462 = scalar_lea.vmem %s18, %s2461
        $region108: #{decoder_forward.4} parent=103 // pred_fallthru
          _
        // Predicated region
        $region109: #{decoder_forward.4} parent=103 // pred_check
          %p2463 = pneg %p482
        $region110: #{decoder_forward.4} parent=103 // pred_check_branch
          %2465 = sbr.rel (%p2463) target = $region112
        $region111: #{decoder_forward.4} parent=103 // pred_region
          %s2466 = sand.u32 %s467, 1
          %s2467 = scalar_lea.sflag [#allocation3], %s2466
          %s2468 = sand.u32 %s467, 1
          %s2469 = smul.addr %s2468, 32
          %s2470 = scalar_lea.vmem [#allocation2], %s2469
          %2471 = dma.done %s2467, 512
        $region112: #{decoder_forward.4} parent=103 // pred_fallthru
          _
      $region104: #{decoder_forward.4} parent=5 // pred_fallthru
        _
    $region6: #{decoder_forward.4} parent=1 // loop_footer
      %s33 = sadd.s32 1, %s29
    $region7: #{decoder_forward.4} parent=1 // loop_footer_branch
      %28 = sbr.rel target = $region3
    $region8: #{decoder_forward.4} parent=1 // loop_exit
      _
    %2472 = vsyncpa [#allocation3], 1
    %s2473 = scalar_lea.sflag [#allocation3], 1
    %2474 = vsyncpa %s2473, 1

</llo_original>
